<compile_context>
chip_gen: v7x
topology: tpu7x:2x2x1
jax: 0.10.0
libtpu: 0.0.40
codegen_flags: <defaults>
</compile_context>

<pallas_src>
import functools

import jax
import jax.numpy as jnp
from jax.experimental import pallas as pl
from jax.experimental.pallas import tpu as pltpu

LANE = 128
SUBLANE = 8

# bf16 feeds the MXU natively on v5e/v6e/v7x; f32 accumulation is kept via
# preferred_element_type.  Element-wise math stays f32.
MXU_DTYPE = jnp.bfloat16


def _rup(x, m):
    return ((x + m - 1) // m) * m


# ----------------------------------------------------------------------------
# In-kernel helpers
# ----------------------------------------------------------------------------

def _gelu_exact(x):
    # PyTorch nn.GELU() default = exact erf formulation.
    return 0.5 * x * (1.0 + jax.lax.erf(x * 0.7071067811865475))


def _dot(a, b):
    return jnp.dot(a, b, preferred_element_type=jnp.float32)


def _ffnn(x, w1, b1, w2, b2):
    # Linear -> GELU -> Linear.  Weights are bf16; activations cast at the MXU
    # boundary only; biases/activations stay f32.
    h = _gelu_exact(_dot(x.astype(MXU_DTYPE), w1) + b1)
    return _dot(h.astype(MXU_DTYPE), w2) + b2


# ----------------------------------------------------------------------------
# Fused GIN_VN kernel: single invocation, fully-unrolled hop loop.
# ----------------------------------------------------------------------------

def _make_gin_vn_kernel(num_hops, g_pad, inv_n):
    def kernel(x_in_ref, comb_ref, expand_ref, mask_ref, vn_ref,
               pre_w1, pre_b1, pre_w2, pre_b2,
               post_w1, post_b1, post_w2, post_b2,
               upd_w1, upd_b1, upd_w2, upd_b2,
               prop_w1, prop_b1, prop_w2, prop_b2,
               gin_w1, gin_b1, gin_w2, gin_b2,
               ffn_w1, ffn_b1, ffn_w2, ffn_b2,
               bn_g, bn_b,
               out_ref):
        mask = mask_ref[...]                       # [Np, 1]      f32 node mask
        comb = comb_ref[...]                       # [Gp+Np, Np]  bf16 [pool;adj]
        expand = expand_ref[...]                   # [Np, Gp]     bf16
        vn_param = vn_ref[...]                     # [1, 4H_p]    f32

        # x = preprocess(x.float()); mask kills bias leakage into padded rows.
        x = _ffnn(x_in_ref[...], pre_w1[...], pre_b1[...],
                  pre_w2[...], pre_b2[...]) * mask                  # [Np, Hp]

        # Fully-unrolled hop loop (num_hops static; all weights VMEM-resident,
        # static ref indexing => equivalent to fori_loop(unroll=True) but with
        # static slices).
        for h in range(num_hops):
            x_b = x.astype(MXU_DTYPE)
            # One fused matmul for [global_mean_pool ; GIN sum-aggregation].
            pa = _dot(comb, x_b)                                    # [Gp+Np, Hp]
            pooled = pa[:g_pad]                                     # [Gp, Hp]
            agg = pa[g_pad:]                                        # [Np, Hp]

            # vn = self.vn + update_vn[h](global_mean_pool(x, batch))
            # (self.vn is the per-hop residual; vn state is not carried across
            #  hops -- matches the PyTorch reference.)
            vn = vn_param + _ffnn(pooled, upd_w1[h], upd_b1[h],
                                  upd_w2[h], upd_b2[h])
            outvn = _ffnn(vn, prop_w1[h], prop_b1[h],
                          prop_w2[h], prop_b2[h])                   # [Gp, Hp]

            # GINConv (eps = 0): gin_ffn(x + aggregation), plus residual x.
            x = (_ffnn(x + agg, gin_w1[h], gin_b1[h],
                       gin_w2[h], gin_b2[h]) + x) * mask

            # BatchNorm1d (training-mode biased batch stats) over real rows.
            mean = jnp.sum(x, axis=0, keepdims=True) * inv_n
            xc = x - mean
            var = jnp.sum(xc * xc * mask, axis=0, keepdims=True) * inv_n
            x = (xc * jax.lax.rsqrt(var + 1e-5) * bn_g[h] + bn_b[h]) * mask

            # Broadcast virtual node to nodes (outvn[batch] as matmul) + FFNN.
            exp_vn = _dot(expand, outvn.astype(MXU_DTYPE))          # [Np, Hp]
            x = (_ffnn(exp_vn + x, ffn_w1[h], ffn_b1[h],
                       ffn_w2[h], ffn_b2[h]) + x) * mask
            # TODO(synk): F.dropout(p=0.1, training=True) is stochastic;
            # applied as identity (eval semantics) since torch RNG is not
            # reproducible here.

        # out = postprocess(global_mean_pool(x, batch))
        pooled_f = _dot(comb, x.astype(MXU_DTYPE))[:g_pad]
        out_ref[...] = _ffnn(pooled_f, post_w1[...], post_b1[...],
                             post_w2[...], post_b2[...])

    return kernel


# ----------------------------------------------------------------------------
# Forward wrapper (single pallas_call, no grid, everything VMEM-resident)
# ----------------------------------------------------------------------------

@functools.partial(jax.jit, static_argnames=("num_graphs", "output_dim"))
def gin_vn_forward(params, x, comb_op, expand_mat, node_mask,
                   num_graphs, output_dim):
    pre = params["pre"]
    post = params["post"]
    vn = params["vn"]
    hop_arrays = (list(params["upd"]) + list(params["prop"])
                  + list(params["gin"]) + list(params["ffn"])
                  + list(params["bn"]))
    num_hops = int(params["upd"][0].shape[0])

    n = x.shape[0]                      # real node count
    n_pad = expand_mat.shape[0]
    g_pad = expand_mat.shape[1]
    din_p = pre[0].shape[0]
    hp = pre[2].shape[1]
    d4p = params["upd"][2].shape[2]
    dout_p = post[2].shape[1]

    # Zero-pad node features to lane-aligned input width / sublane-aligned rows.
    x = x.astype(jnp.float32)
    x_pad = jnp.zeros((n_pad, din_p), jnp.float32).at[:n, :x.shape[1]].set(x)

    args = (x_pad, comb_op, expand_mat, node_mask, vn,
            *pre, *post, *hop_arrays)

    # Advisory cost estimate so XLA schedules around the custom call sensibly.
    mm = g_pad + n_pad
    flops_hop = (2 * mm * n_pad * hp                    # fused pool/adj matmul
                 + 2 * g_pad * (hp * hp + hp * d4p)     # update_vn FFNN
                 + 2 * g_pad * (d4p * hp + hp * hp)     # propagate_vn FFNN
                 + 2 * n_pad * (2 * hp * hp)            # GIN FFNN
                 + 2 * n_pad * g_pad * hp               # vn broadcast matmul
                 + 2 * n_pad * (2 * hp * hp))           # per-hop FFNN
    flops = (2 * n_pad * (din_p * hp + hp * hp)
             + num_hops * flops_hop
             + 2 * mm * n_pad * hp
             + 2 * g_pad * (hp * hp + hp * dout_p))
    trans = (n_pad * hp
             + num_hops * (2 * g_pad * hp + 2 * n_pad * hp)
             + g_pad * hp)
    bytes_acc = (sum(int(a.size) * int(a.dtype.itemsize) for a in args)
                 + g_pad * dout_p * 4)

    kernel = _make_gin_vn_kernel(num_hops, g_pad, 1.0 / float(n))

    out = pl.pallas_call(
        kernel,
        out_shape=jax.ShapeDtypeStruct((g_pad, dout_p), jnp.float32),
        in_specs=[pl.BlockSpec(memory_space=pltpu.MemorySpace.VMEM)
                  for _ in args],
        out_specs=pl.BlockSpec(memory_space=pltpu.MemorySpace.VMEM),
        compiler_params=pltpu.CompilerParams(
            # Raise the scoped VMEM budget above the v5e default; still far
            # below v7x's 64 MiB physical.  Re-derive (and tile the N x N
            # adjacency) before scaling N into the thousands.
            vmem_limit_bytes=32 << 20),
        cost_estimate=pl.CostEstimate(flops=flops, transcendentals=trans,
                                      bytes_accessed=bytes_acc),
    )(*args)

    return out[:num_graphs, :output_dim]


# ----------------------------------------------------------------------------
# Graph operators (built once, hoisted out of the forward)
# ----------------------------------------------------------------------------

def build_graph_operators(edge_index, batch, num_graphs, num_nodes):
    n_pad = _rup(num_nodes, SUBLANE)
    g_pad = _rup(num_graphs, SUBLANE)
    src, dst = edge_index[0], edge_index[1]
    # Dense GIN sum-aggregation matrix: A[i, j] = # edges j -> i (padded rows
    # and columns stay zero).
    adj = jnp.zeros((n_pad, n_pad), jnp.float32).at[dst, src].add(1.0)
    # global_mean_pool matrix P[g, i] = 1/|graph g| if batch[i] == g.
    onehot = (batch[None, :] == jnp.arange(num_graphs)[:, None]).astype(jnp.float32)
    counts = jnp.maximum(onehot.sum(axis=1, keepdims=True), 1.0)
    pool = onehot / counts                                          # [G, N]
    pool_pad = (jnp.zeros((g_pad, n_pad), jnp.float32)
                .at[:num_graphs, :num_nodes].set(pool))
    expand_pad = (jnp.zeros((n_pad, g_pad), jnp.float32)
                  .at[:num_nodes, :num_graphs].set(onehot.T))
    # Fused [pool ; adj] operator: one matmul per hop covers both aggregations.
    comb = jnp.concatenate([pool_pad, adj], axis=0).astype(MXU_DTYPE)
    node_mask = jnp.zeros((n_pad, 1), jnp.float32).at[:num_nodes, :].set(1.0)
    return comb, expand_pad.astype(MXU_DTYPE), node_mask


# ----------------------------------------------------------------------------
# Parameter init (mimics torch.nn.Linear default init shapes), zero-padded to
# lane-dense widths, per-hop weights stacked along a leading axis.  MXU-facing
# weights stored in bf16; biases / BN params / vn kept f32.
# ----------------------------------------------------------------------------

def init_linear(key, din, dout):
    kw, kb = jax.random.split(key)
    bound = 1.0 / jnp.sqrt(jnp.float32(din))
    w = jax.random.uniform(kw, (din, dout), jnp.float32, -bound, bound)
    b = jax.random.uniform(kb, (1, dout), jnp.float32, -bound, bound)
    return w, b


def init_ffnn(key, din, dhid, dout):
    k1, k2 = jax.random.split(key)
    w1, b1 = init_linear(k1, din, dhid)
    w2, b2 = init_linear(k2, dhid, dout)
    return (w1, b1, w2, b2)


def _pad2(a, rows, cols):
    r, c = a.shape
    return jnp.pad(a, ((0, rows - r), (0, cols - c)))


def _pad_ffnn(p, din_p, dhid_p, dout_p):
    w1, b1, w2, b2 = p
    return (_pad2(w1, din_p, dhid_p).astype(MXU_DTYPE),
            _pad2(b1, 1, dhid_p),
            _pad2(w2, dhid_p, dout_p).astype(MXU_DTYPE),
            _pad2(b2, 1, dout_p))


def init_gin_vn_params(key, input_dim, hidden_dim, output_dim, num_hops):
    h = hidden_dim
    hp = _rup(h, LANE)
    din_p = _rup(input_dim, LANE)
    dout_p = _rup(output_dim, LANE)
    d4 = 4 * h
    d4_p = _rup(d4, LANE)

    keys = iter(jax.random.split(key, 3 + 4 * num_hops))
    pre = _pad_ffnn(init_ffnn(next(keys), input_dim, h, h), din_p, hp, hp)
    post = _pad_ffnn(init_ffnn(next(keys), h, h, output_dim), hp, hp, dout_p)
    vn = _pad2(jax.random.normal(next(keys), (1, d4), jnp.float32), 1, d4_p)

    ffn, gin, upd, prop, bn_g, bn_b = [], [], [], [], [], []
    for _ in range(num_hops):
        ffn.append(_pad_ffnn(init_ffnn(next(keys), h, h, h), hp, hp, hp))
        gin.append(_pad_ffnn(init_ffnn(next(keys), h, h, h), hp, hp, hp))
        upd.append(_pad_ffnn(init_ffnn(next(keys), h, h, d4), hp, hp, d4_p))
        prop.append(_pad_ffnn(init_ffnn(next(keys), d4, h, h), d4_p, hp, hp))
        # gamma padded with 0 beyond the real channels keeps padded lanes at 0.
        bn_g.append(_pad2(jnp.ones((1, h), jnp.float32), 1, hp))
        bn_b.append(jnp.zeros((1, hp), jnp.float32))

    def stack_ffnn(lst):
        return tuple(jnp.stack([p[k] for p in lst]) for k in range(4))

    return {
        "pre": pre, "post": post, "vn": vn,
        "upd": stack_ffnn(upd), "prop": stack_ffnn(prop),
        "gin": stack_ffnn(gin), "ffn": stack_ffnn(ffn),
        "bn": (jnp.stack(bn_g), jnp.stack(bn_b)),
    }


# ----------------------------------------------------------------------------
# Driver
# ----------------------------------------------------------------------------

def _ring_edges(lo, hi):
    idx = jnp.arange(lo, hi, dtype=jnp.int32)
    nxt = jnp.concatenate([idx[1:], idx[:1]])
    src = jnp.concatenate([idx, nxt])
    dst = jnp.concatenate([nxt, idx])
    return src, dst


if __name__ == "__main__":
    N, INPUT_DIM, HIDDEN_DIM, OUTPUT_DIM = 16, 8, 32, 8
    NUM_HOPS, NUM_GRAPHS = 5, 2

    root = jax.random.PRNGKey(0)
    k_param, k_x = jax.random.split(root)

    params = init_gin_vn_params(k_param, INPUT_DIM, HIDDEN_DIM, OUTPUT_DIM,
                                NUM_HOPS)

    x = jax.random.normal(k_x, (N, INPUT_DIM), jnp.float32)
    batch = jnp.concatenate([jnp.zeros(N // 2, jnp.int32),
                             jnp.ones(N - N // 2, jnp.int32)])
    s0, d0 = _ring_edges(0, N // 2)
    s1, d1 = _ring_edges(N // 2, N)
    edge_index = jnp.stack([jnp.concatenate([s0, s1]),
                            jnp.concatenate([d0, d1])])        # [2, 32]

    # Graph operators are built once (hoisted out of the forward pass).
    comb_op, expand_mat, node_mask = build_graph_operators(
        edge_index, batch, NUM_GRAPHS, N)

    out = gin_vn_forward(params, x, comb_op, expand_mat, node_mask,
                         NUM_GRAPHS, OUTPUT_DIM)
    out = jax.block_until_ready(out)
    assert out.shape == (NUM_GRAPHS, OUTPUT_DIM)
    assert bool(jnp.all(jnp.isfinite(out)))
    print("KERNEL_OK")
</pallas_src>

<mosaic_0001>
module attributes {stable_mosaic.version = 11 : i64} {
  func.func @kernel(%arg0: memref<16x128xf32, #tpu.memory_space<vmem>>, %arg1: memref<24x16xbf16, #tpu.memory_space<vmem>>, %arg2: memref<16x8xbf16, #tpu.memory_space<vmem>>, %arg3: memref<16x1xf32, #tpu.memory_space<vmem>>, %arg4: memref<1x128xf32, #tpu.memory_space<vmem>>, %arg5: memref<128x128xbf16, #tpu.memory_space<vmem>>, %arg6: memref<1x128xf32, #tpu.memory_space<vmem>>, %arg7: memref<128x128xbf16, #tpu.memory_space<vmem>>, %arg8: memref<1x128xf32, #tpu.memory_space<vmem>>, %arg9: memref<128x128xbf16, #tpu.memory_space<vmem>>, %arg10: memref<1x128xf32, #tpu.memory_space<vmem>>, %arg11: memref<128x128xbf16, #tpu.memory_space<vmem>>, %arg12: memref<1x128xf32, #tpu.memory_space<vmem>>, %arg13: memref<5x128x128xbf16, #tpu.memory_space<vmem>>, %arg14: memref<5x1x128xf32, #tpu.memory_space<vmem>>, %arg15: memref<5x128x128xbf16, #tpu.memory_space<vmem>>, %arg16: memref<5x1x128xf32, #tpu.memory_space<vmem>>, %arg17: memref<5x128x128xbf16, #tpu.memory_space<vmem>>, %arg18: memref<5x1x128xf32, #tpu.memory_space<vmem>>, %arg19: memref<5x128x128xbf16, #tpu.memory_space<vmem>>, %arg20: memref<5x1x128xf32, #tpu.memory_space<vmem>>, %arg21: memref<5x128x128xbf16, #tpu.memory_space<vmem>>, %arg22: memref<5x1x128xf32, #tpu.memory_space<vmem>>, %arg23: memref<5x128x128xbf16, #tpu.memory_space<vmem>>, %arg24: memref<5x1x128xf32, #tpu.memory_space<vmem>>, %arg25: memref<5x128x128xbf16, #tpu.memory_space<vmem>>, %arg26: memref<5x1x128xf32, #tpu.memory_space<vmem>>, %arg27: memref<5x128x128xbf16, #tpu.memory_space<vmem>>, %arg28: memref<5x1x128xf32, #tpu.memory_space<vmem>>, %arg29: memref<5x1x128xf32, #tpu.memory_space<vmem>>, %arg30: memref<5x1x128xf32, #tpu.memory_space<vmem>>, %arg31: memref<8x128xf32, #tpu.memory_space<vmem>>) attributes {dimension_semantics = [], scalar_prefetch = 0 : i64, scratch_operands = 0 : i64, tpu.core_type = #tpu.core_type<tc>} {
    %c0 = arith.constant 0 : index
    %c0_0 = arith.constant 0 : index
    %0 = vector.load %arg3[%c0, %c0_0] : memref<16x1xf32, #tpu.memory_space<vmem>>, vector<16x1xf32>
    %c0_1 = arith.constant 0 : index
    %c0_2 = arith.constant 0 : index
    %1 = vector.load %arg1[%c0_1, %c0_2] : memref<24x16xbf16, #tpu.memory_space<vmem>>, vector<24x16xbf16>
    %c0_3 = arith.constant 0 : index
    %c0_4 = arith.constant 0 : index
    %2 = vector.load %arg2[%c0_3, %c0_4] : memref<16x8xbf16, #tpu.memory_space<vmem>>, vector<16x8xbf16>
    %c0_5 = arith.constant 0 : index
    %c0_6 = arith.constant 0 : index
    %3 = vector.load %arg4[%c0_5, %c0_6] : memref<1x128xf32, #tpu.memory_space<vmem>>, vector<1x128xf32>
    %c0_7 = arith.constant 0 : index
    %c0_8 = arith.constant 0 : index
    %4 = vector.load %arg0[%c0_7, %c0_8] : memref<16x128xf32, #tpu.memory_space<vmem>>, vector<16x128xf32>
    %c0_9 = arith.constant 0 : index
    %c0_10 = arith.constant 0 : index
    %5 = vector.load %arg5[%c0_9, %c0_10] : memref<128x128xbf16, #tpu.memory_space<vmem>>, vector<128x128xbf16>
    %c0_11 = arith.constant 0 : index
    %c0_12 = arith.constant 0 : index
    %6 = vector.load %arg6[%c0_11, %c0_12] : memref<1x128xf32, #tpu.memory_space<vmem>>, vector<1x128xf32>
    %c0_13 = arith.constant 0 : index
    %c0_14 = arith.constant 0 : index
    %7 = vector.load %arg7[%c0_13, %c0_14] : memref<128x128xbf16, #tpu.memory_space<vmem>>, vector<128x128xbf16>
    %c0_15 = arith.constant 0 : index
    %c0_16 = arith.constant 0 : index
    %8 = vector.load %arg8[%c0_15, %c0_16] : memref<1x128xf32, #tpu.memory_space<vmem>>, vector<1x128xf32>
    %9 = arith.truncf %4 : vector<16x128xf32> to vector<16x128xbf16>
    %cst = arith.constant dense<0.000000e+00> : vector<16x128xf32>
    %10 = tpu.matmul %9, %5, %cst {dimension_numbers = #tpu.dot_dimension_numbers<[1], [0], [0], [1], [0, 0, 1, 1], [], []>} : vector<16x128xbf16>, vector<128x128xbf16>, vector<16x128xf32> -> vector<16x128xf32>
    %11 = vector.broadcast %6 : vector<1x128xf32> to vector<16x128xf32>
    %12 = arith.addf %10, %11 : vector<16x128xf32>
    %cst_17 = arith.constant 5.000000e-01 : f32
    %13 = vector.broadcast %cst_17 : f32 to vector<16x128xf32>
    %14 = arith.mulf %13, %12 : vector<16x128xf32>
    %cst_18 = arith.constant 0.707106769 : f32
    %15 = vector.broadcast %cst_18 : f32 to vector<16x128xf32>
    %16 = arith.mulf %12, %15 : vector<16x128xf32>
    %17 = math.erf %16 : vector<16x128xf32>
    %cst_19 = arith.constant 1.000000e+00 : f32
    %18 = vector.broadcast %cst_19 : f32 to vector<16x128xf32>
    %19 = arith.addf %18, %17 : vector<16x128xf32>
    %20 = arith.mulf %14, %19 : vector<16x128xf32>
    %21 = arith.truncf %20 : vector<16x128xf32> to vector<16x128xbf16>
    %cst_20 = arith.constant dense<0.000000e+00> : vector<16x128xf32>
    %22 = tpu.matmul %21, %7, %cst_20 {dimension_numbers = #tpu.dot_dimension_numbers<[1], [0], [0], [1], [0, 0, 1, 1], [], []>} : vector<16x128xbf16>, vector<128x128xbf16>, vector<16x128xf32> -> vector<16x128xf32>
    %23 = vector.broadcast %8 : vector<1x128xf32> to vector<16x128xf32>
    %24 = arith.addf %22, %23 : vector<16x128xf32>
    %25 = vector.broadcast %0 : vector<16x1xf32> to vector<16x128xf32>
    %26 = arith.mulf %24, %25 : vector<16x128xf32>
    %27 = arith.truncf %26 : vector<16x128xf32> to vector<16x128xbf16>
    %cst_21 = arith.constant dense<0.000000e+00> : vector<24x128xf32>
    %28 = tpu.matmul %1, %27, %cst_21 {dimension_numbers = #tpu.dot_dimension_numbers<[1], [0], [0], [1], [0, 0, 1, 1], [], []>} : vector<24x16xbf16>, vector<16x128xbf16>, vector<24x128xf32> -> vector<24x128xf32>
    %29 = vector.extract_strided_slice %28 {offsets = [0, 0], sizes = [8, 128], strides = [1, 1]} : vector<24x128xf32> to vector<8x128xf32>
    %30 = vector.extract_strided_slice %28 {offsets = [8, 0], sizes = [16, 128], strides = [1, 1]} : vector<24x128xf32> to vector<16x128xf32>
    %c0_22 = arith.constant 0 : index
    %c0_23 = arith.constant 0 : index
    %c0_24 = arith.constant 0 : index
    %31 = vector.load %arg13[%c0_22, %c0_23, %c0_24] : memref<5x128x128xbf16, #tpu.memory_space<vmem>>, vector<1x128x128xbf16>
    %32 = vector.shape_cast %31 : vector<1x128x128xbf16> to vector<128x128xbf16>
    %c0_25 = arith.constant 0 : index
    %c0_26 = arith.constant 0 : index
    %c0_27 = arith.constant 0 : index
    %33 = vector.load %arg14[%c0_25, %c0_26, %c0_27] : memref<5x1x128xf32, #tpu.memory_space<vmem>>, vector<1x1x128xf32>
    %34 = vector.shape_cast %33 : vector<1x1x128xf32> to vector<1x128xf32>
    %c0_28 = arith.constant 0 : index
    %c0_29 = arith.constant 0 : index
    %c0_30 = arith.constant 0 : index
    %35 = vector.load %arg15[%c0_28, %c0_29, %c0_30] : memref<5x128x128xbf16, #tpu.memory_space<vmem>>, vector<1x128x128xbf16>
    %36 = vector.shape_cast %35 : vector<1x128x128xbf16> to vector<128x128xbf16>
    %c0_31 = arith.constant 0 : index
    %c0_32 = arith.constant 0 : index
    %c0_33 = arith.constant 0 : index
    %37 = vector.load %arg16[%c0_31, %c0_32, %c0_33] : memref<5x1x128xf32, #tpu.memory_space<vmem>>, vector<1x1x128xf32>
    %38 = vector.shape_cast %37 : vector<1x1x128xf32> to vector<1x128xf32>
    %39 = arith.truncf %29 : vector<8x128xf32> to vector<8x128xbf16>
    %cst_34 = arith.constant dense<0.000000e+00> : vector<8x128xf32>
    %40 = tpu.matmul %39, %32, %cst_34 {dimension_numbers = #tpu.dot_dimension_numbers<[1], [0], [0], [1], [0, 0, 1, 1], [], []>} : vector<8x128xbf16>, vector<128x128xbf16>, vector<8x128xf32> -> vector<8x128xf32>
    %41 = vector.broadcast %34 : vector<1x128xf32> to vector<8x128xf32>
    %42 = arith.addf %40, %41 : vector<8x128xf32>
    %cst_35 = arith.constant 5.000000e-01 : f32
    %43 = vector.broadcast %cst_35 : f32 to vector<8x128xf32>
    %44 = arith.mulf %43, %42 : vector<8x128xf32>
    %cst_36 = arith.constant 0.707106769 : f32
    %45 = vector.broadcast %cst_36 : f32 to vector<8x128xf32>
    %46 = arith.mulf %42, %45 : vector<8x128xf32>
    %47 = math.erf %46 : vector<8x128xf32>
    %cst_37 = arith.constant 1.000000e+00 : f32
    %48 = vector.broadcast %cst_37 : f32 to vector<8x128xf32>
    %49 = arith.addf %48, %47 : vector<8x128xf32>
    %50 = arith.mulf %44, %49 : vector<8x128xf32>
    %51 = arith.truncf %50 : vector<8x128xf32> to vector<8x128xbf16>
    %cst_38 = arith.constant dense<0.000000e+00> : vector<8x128xf32>
    %52 = tpu.matmul %51, %36, %cst_38 {dimension_numbers = #tpu.dot_dimension_numbers<[1], [0], [0], [1], [0, 0, 1, 1], [], []>} : vector<8x128xbf16>, vector<128x128xbf16>, vector<8x128xf32> -> vector<8x128xf32>
    %53 = vector.broadcast %38 : vector<1x128xf32> to vector<8x128xf32>
    %54 = arith.addf %52, %53 : vector<8x128xf32>
    %55 = vector.broadcast %3 : vector<1x128xf32> to vector<8x128xf32>
    %56 = arith.addf %55, %54 : vector<8x128xf32>
    %c0_39 = arith.constant 0 : index
    %c0_40 = arith.constant 0 : index
    %c0_41 = arith.constant 0 : index
    %57 = vector.load %arg17[%c0_39, %c0_40, %c0_41] : memref<5x128x128xbf16, #tpu.memory_space<vmem>>, vector<1x128x128xbf16>
    %58 = vector.shape_cast %57 : vector<1x128x128xbf16> to vector<128x128xbf16>
    %c0_42 = arith.constant 0 : index
    %c0_43 = arith.constant 0 : index
    %c0_44 = arith.constant 0 : index
    %59 = vector.load %arg18[%c0_42, %c0_43, %c0_44] : memref<5x1x128xf32, #tpu.memory_space<vmem>>, vector<1x1x128xf32>
    %60 = vector.shape_cast %59 : vector<1x1x128xf32> to vector<1x128xf32>
    %c0_45 = arith.constant 0 : index
    %c0_46 = arith.constant 0 : index
    %c0_47 = arith.constant 0 : index
    %61 = vector.load %arg19[%c0_45, %c0_46, %c0_47] : memref<5x128x128xbf16, #tpu.memory_space<vmem>>, vector<1x128x128xbf16>
    %62 = vector.shape_cast %61 : vector<1x128x128xbf16> to vector<128x128xbf16>
    %c0_48 = arith.constant 0 : index
    %c0_49 = arith.constant 0 : index
    %c0_50 = arith.constant 0 : index
    %63 = vector.load %arg20[%c0_48, %c0_49, %c0_50] : memref<5x1x128xf32, #tpu.memory_space<vmem>>, vector<1x1x128xf32>
    %64 = vector.shape_cast %63 : vector<1x1x128xf32> to vector<1x128xf32>
    %65 = arith.truncf %56 : vector<8x128xf32> to vector<8x128xbf16>
    %cst_51 = arith.constant dense<0.000000e+00> : vector<8x128xf32>
    %66 = tpu.matmul %65, %58, %cst_51 {dimension_numbers = #tpu.dot_dimension_numbers<[1], [0], [0], [1], [0, 0, 1, 1], [], []>} : vector<8x128xbf16>, vector<128x128xbf16>, vector<8x128xf32> -> vector<8x128xf32>
    %67 = vector.broadcast %60 : vector<1x128xf32> to vector<8x128xf32>
    %68 = arith.addf %66, %67 : vector<8x128xf32>
    %cst_52 = arith.constant 5.000000e-01 : f32
    %69 = vector.broadcast %cst_52 : f32 to vector<8x128xf32>
    %70 = arith.mulf %69, %68 : vector<8x128xf32>
    %cst_53 = arith.constant 0.707106769 : f32
    %71 = vector.broadcast %cst_53 : f32 to vector<8x128xf32>
    %72 = arith.mulf %68, %71 : vector<8x128xf32>
    %73 = math.erf %72 : vector<8x128xf32>
    %cst_54 = arith.constant 1.000000e+00 : f32
    %74 = vector.broadcast %cst_54 : f32 to vector<8x128xf32>
    %75 = arith.addf %74, %73 : vector<8x128xf32>
    %76 = arith.mulf %70, %75 : vector<8x128xf32>
    %77 = arith.truncf %76 : vector<8x128xf32> to vector<8x128xbf16>
    %cst_55 = arith.constant dense<0.000000e+00> : vector<8x128xf32>
    %78 = tpu.matmul %77, %62, %cst_55 {dimension_numbers = #tpu.dot_dimension_numbers<[1], [0], [0], [1], [0, 0, 1, 1], [], []>} : vector<8x128xbf16>, vector<128x128xbf16>, vector<8x128xf32> -> vector<8x128xf32>
    %79 = vector.broadcast %64 : vector<1x128xf32> to vector<8x128xf32>
    %80 = arith.addf %78, %79 : vector<8x128xf32>
    %81 = arith.addf %26, %30 : vector<16x128xf32>
    %c0_56 = arith.constant 0 : index
    %c0_57 = arith.constant 0 : index
    %c0_58 = arith.constant 0 : index
    %82 = vector.load %arg21[%c0_56, %c0_57, %c0_58] : memref<5x128x128xbf16, #tpu.memory_space<vmem>>, vector<1x128x128xbf16>
    %83 = vector.shape_cast %82 : vector<1x128x128xbf16> to vector<128x128xbf16>
    %c0_59 = arith.constant 0 : index
    %c0_60 = arith.constant 0 : index
    %c0_61 = arith.constant 0 : index
    %84 = vector.load %arg22[%c0_59, %c0_60, %c0_61] : memref<5x1x128xf32, #tpu.memory_space<vmem>>, vector<1x1x128xf32>
    %85 = vector.shape_cast %84 : vector<1x1x128xf32> to vector<1x128xf32>
    %c0_62 = arith.constant 0 : index
    %c0_63 = arith.constant 0 : index
    %c0_64 = arith.constant 0 : index
    %86 = vector.load %arg23[%c0_62, %c0_63, %c0_64] : memref<5x128x128xbf16, #tpu.memory_space<vmem>>, vector<1x128x128xbf16>
    %87 = vector.shape_cast %86 : vector<1x128x128xbf16> to vector<128x128xbf16>
    %c0_65 = arith.constant 0 : index
    %c0_66 = arith.constant 0 : index
    %c0_67 = arith.constant 0 : index
    %88 = vector.load %arg24[%c0_65, %c0_66, %c0_67] : memref<5x1x128xf32, #tpu.memory_space<vmem>>, vector<1x1x128xf32>
    %89 = vector.shape_cast %88 : vector<1x1x128xf32> to vector<1x128xf32>
    %90 = arith.truncf %81 : vector<16x128xf32> to vector<16x128xbf16>
    %cst_68 = arith.constant dense<0.000000e+00> : vector<16x128xf32>
    %91 = tpu.matmul %90, %83, %cst_68 {dimension_numbers = #tpu.dot_dimension_numbers<[1], [0], [0], [1], [0, 0, 1, 1], [], []>} : vector<16x128xbf16>, vector<128x128xbf16>, vector<16x128xf32> -> vector<16x128xf32>
    %92 = vector.broadcast %85 : vector<1x128xf32> to vector<16x128xf32>
    %93 = arith.addf %91, %92 : vector<16x128xf32>
    %cst_69 = arith.constant 5.000000e-01 : f32
    %94 = vector.broadcast %cst_69 : f32 to vector<16x128xf32>
    %95 = arith.mulf %94, %93 : vector<16x128xf32>
    %cst_70 = arith.constant 0.707106769 : f32
    %96 = vector.broadcast %cst_70 : f32 to vector<16x128xf32>
    %97 = arith.mulf %93, %96 : vector<16x128xf32>
    %98 = math.erf %97 : vector<16x128xf32>
    %cst_71 = arith.constant 1.000000e+00 : f32
    %99 = vector.broadcast %cst_71 : f32 to vector<16x128xf32>
    %100 = arith.addf %99, %98 : vector<16x128xf32>
    %101 = arith.mulf %95, %100 : vector<16x128xf32>
    %102 = arith.truncf %101 : vector<16x128xf32> to vector<16x128xbf16>
    %cst_72 = arith.constant dense<0.000000e+00> : vector<16x128xf32>
    %103 = tpu.matmul %102, %87, %cst_72 {dimension_numbers = #tpu.dot_dimension_numbers<[1], [0], [0], [1], [0, 0, 1, 1], [], []>} : vector<16x128xbf16>, vector<128x128xbf16>, vector<16x128xf32> -> vector<16x128xf32>
    %104 = vector.broadcast %89 : vector<1x128xf32> to vector<16x128xf32>
    %105 = arith.addf %103, %104 : vector<16x128xf32>
    %106 = arith.addf %105, %26 : vector<16x128xf32>
    %107 = vector.broadcast %0 : vector<16x1xf32> to vector<16x128xf32>
    %108 = arith.mulf %106, %107 : vector<16x128xf32>
    %cst_73 = arith.constant dense<0.000000e+00> : vector<128xf32>
    %109 = vector.multi_reduction <add>, %108, %cst_73 [0] : vector<16x128xf32> to vector<128xf32>
    %110 = vector.shape_cast %109 : vector<128xf32> to vector<1x128xf32>
    %cst_74 = arith.constant 6.250000e-02 : f32
    %111 = vector.broadcast %cst_74 : f32 to vector<1x128xf32>
    %112 = arith.mulf %110, %111 : vector<1x128xf32>
    %113 = vector.broadcast %112 : vector<1x128xf32> to vector<16x128xf32>
    %114 = arith.subf %108, %113 : vector<16x128xf32>
    %115 = arith.mulf %114, %114 : vector<16x128xf32>
    %116 = vector.broadcast %0 : vector<16x1xf32> to vector<16x128xf32>
    %117 = arith.mulf %115, %116 : vector<16x128xf32>
    %cst_75 = arith.constant dense<0.000000e+00> : vector<128xf32>
    %118 = vector.multi_reduction <add>, %117, %cst_75 [0] : vector<16x128xf32> to vector<128xf32>
    %119 = vector.shape_cast %118 : vector<128xf32> to vector<1x128xf32>
    %cst_76 = arith.constant 6.250000e-02 : f32
    %120 = vector.broadcast %cst_76 : f32 to vector<1x128xf32>
    %121 = arith.mulf %119, %120 : vector<1x128xf32>
    %cst_77 = arith.constant 9.99999974E-6 : f32
    %122 = vector.broadcast %cst_77 : f32 to vector<1x128xf32>
    %123 = arith.addf %121, %122 : vector<1x128xf32>
    %124 = math.rsqrt %123 : vector<1x128xf32>
    %125 = vector.broadcast %124 : vector<1x128xf32> to vector<16x128xf32>
    %126 = arith.mulf %114, %125 : vector<16x128xf32>
    %c0_78 = arith.constant 0 : index
    %c0_79 = arith.constant 0 : index
    %c0_80 = arith.constant 0 : index
    %127 = vector.load %arg29[%c0_78, %c0_79, %c0_80] : memref<5x1x128xf32, #tpu.memory_space<vmem>>, vector<1x1x128xf32>
    %128 = vector.shape_cast %127 : vector<1x1x128xf32> to vector<1x128xf32>
    %129 = vector.broadcast %128 : vector<1x128xf32> to vector<16x128xf32>
    %130 = arith.mulf %126, %129 : vector<16x128xf32>
    %c0_81 = arith.constant 0 : index
    %c0_82 = arith.constant 0 : index
    %c0_83 = arith.constant 0 : index
    %131 = vector.load %arg30[%c0_81, %c0_82, %c0_83] : memref<5x1x128xf32, #tpu.memory_space<vmem>>, vector<1x1x128xf32>
    %132 = vector.shape_cast %131 : vector<1x1x128xf32> to vector<1x128xf32>
    %133 = vector.broadcast %132 : vector<1x128xf32> to vector<16x128xf32>
    %134 = arith.addf %130, %133 : vector<16x128xf32>
    %135 = vector.broadcast %0 : vector<16x1xf32> to vector<16x128xf32>
    %136 = arith.mulf %134, %135 : vector<16x128xf32>
    %137 = arith.truncf %80 : vector<8x128xf32> to vector<8x128xbf16>
    %cst_84 = arith.constant dense<0.000000e+00> : vector<16x128xf32>
    %138 = tpu.matmul %2, %137, %cst_84 {dimension_numbers = #tpu.dot_dimension_numbers<[1], [0], [0], [1], [0, 0, 1, 1], [], []>} : vector<16x8xbf16>, vector<8x128xbf16>, vector<16x128xf32> -> vector<16x128xf32>
    %139 = arith.addf %138, %136 : vector<16x128xf32>
    %c0_85 = arith.constant 0 : index
    %c0_86 = arith.constant 0 : index
    %c0_87 = arith.constant 0 : index
    %140 = vector.load %arg25[%c0_85, %c0_86, %c0_87] : memref<5x128x128xbf16, #tpu.memory_space<vmem>>, vector<1x128x128xbf16>
    %141 = vector.shape_cast %140 : vector<1x128x128xbf16> to vector<128x128xbf16>
    %c0_88 = arith.constant 0 : index
    %c0_89 = arith.constant 0 : index
    %c0_90 = arith.constant 0 : index
    %142 = vector.load %arg26[%c0_88, %c0_89, %c0_90] : memref<5x1x128xf32, #tpu.memory_space<vmem>>, vector<1x1x128xf32>
    %143 = vector.shape_cast %142 : vector<1x1x128xf32> to vector<1x128xf32>
    %c0_91 = arith.constant 0 : index
    %c0_92 = arith.constant 0 : index
    %c0_93 = arith.constant 0 : index
    %144 = vector.load %arg27[%c0_91, %c0_92, %c0_93] : memref<5x128x128xbf16, #tpu.memory_space<vmem>>, vector<1x128x128xbf16>
    %145 = vector.shape_cast %144 : vector<1x128x128xbf16> to vector<128x128xbf16>
    %c0_94 = arith.constant 0 : index
    %c0_95 = arith.constant 0 : index
    %c0_96 = arith.constant 0 : index
    %146 = vector.load %arg28[%c0_94, %c0_95, %c0_96] : memref<5x1x128xf32, #tpu.memory_space<vmem>>, vector<1x1x128xf32>
    %147 = vector.shape_cast %146 : vector<1x1x128xf32> to vector<1x128xf32>
    %148 = arith.truncf %139 : vector<16x128xf32> to vector<16x128xbf16>
    %cst_97 = arith.constant dense<0.000000e+00> : vector<16x128xf32>
    %149 = tpu.matmul %148, %141, %cst_97 {dimension_numbers = #tpu.dot_dimension_numbers<[1], [0], [0], [1], [0, 0, 1, 1], [], []>} : vector<16x128xbf16>, vector<128x128xbf16>, vector<16x128xf32> -> vector<16x128xf32>
    %150 = vector.broadcast %143 : vector<1x128xf32> to vector<16x128xf32>
    %151 = arith.addf %149, %150 : vector<16x128xf32>
    %cst_98 = arith.constant 5.000000e-01 : f32
    %152 = vector.broadcast %cst_98 : f32 to vector<16x128xf32>
    %153 = arith.mulf %152, %151 : vector<16x128xf32>
    %cst_99 = arith.constant 0.707106769 : f32
    %154 = vector.broadcast %cst_99 : f32 to vector<16x128xf32>
    %155 = arith.mulf %151, %154 : vector<16x128xf32>
    %156 = math.erf %155 : vector<16x128xf32>
    %cst_100 = arith.constant 1.000000e+00 : f32
    %157 = vector.broadcast %cst_100 : f32 to vector<16x128xf32>
    %158 = arith.addf %157, %156 : vector<16x128xf32>
    %159 = arith.mulf %153, %158 : vector<16x128xf32>
    %160 = arith.truncf %159 : vector<16x128xf32> to vector<16x128xbf16>
    %cst_101 = arith.constant dense<0.000000e+00> : vector<16x128xf32>
    %161 = tpu.matmul %160, %145, %cst_101 {dimension_numbers = #tpu.dot_dimension_numbers<[1], [0], [0], [1], [0, 0, 1, 1], [], []>} : vector<16x128xbf16>, vector<128x128xbf16>, vector<16x128xf32> -> vector<16x128xf32>
    %162 = vector.broadcast %147 : vector<1x128xf32> to vector<16x128xf32>
    %163 = arith.addf %161, %162 : vector<16x128xf32>
    %164 = arith.addf %163, %136 : vector<16x128xf32>
    %165 = vector.broadcast %0 : vector<16x1xf32> to vector<16x128xf32>
    %166 = arith.mulf %164, %165 : vector<16x128xf32>
    %167 = arith.truncf %166 : vector<16x128xf32> to vector<16x128xbf16>
    %cst_102 = arith.constant dense<0.000000e+00> : vector<24x128xf32>
    %168 = tpu.matmul %1, %167, %cst_102 {dimension_numbers = #tpu.dot_dimension_numbers<[1], [0], [0], [1], [0, 0, 1, 1], [], []>} : vector<24x16xbf16>, vector<16x128xbf16>, vector<24x128xf32> -> vector<24x128xf32>
    %169 = vector.extract_strided_slice %168 {offsets = [0, 0], sizes = [8, 128], strides = [1, 1]} : vector<24x128xf32> to vector<8x128xf32>
    %170 = vector.extract_strided_slice %168 {offsets = [8, 0], sizes = [16, 128], strides = [1, 1]} : vector<24x128xf32> to vector<16x128xf32>
    %c1 = arith.constant 1 : index
    %c0_103 = arith.constant 0 : index
    %c0_104 = arith.constant 0 : index
    %171 = vector.load %arg13[%c1, %c0_103, %c0_104] : memref<5x128x128xbf16, #tpu.memory_space<vmem>>, vector<1x128x128xbf16>
    %172 = vector.shape_cast %171 : vector<1x128x128xbf16> to vector<128x128xbf16>
    %c1_105 = arith.constant 1 : index
    %c0_106 = arith.constant 0 : index
    %c0_107 = arith.constant 0 : index
    %173 = vector.load %arg14[%c1_105, %c0_106, %c0_107] : memref<5x1x128xf32, #tpu.memory_space<vmem>>, vector<1x1x128xf32>
    %174 = vector.shape_cast %173 : vector<1x1x128xf32> to vector<1x128xf32>
    %c1_108 = arith.constant 1 : index
    %c0_109 = arith.constant 0 : index
    %c0_110 = arith.constant 0 : index
    %175 = vector.load %arg15[%c1_108, %c0_109, %c0_110] : memref<5x128x128xbf16, #tpu.memory_space<vmem>>, vector<1x128x128xbf16>
    %176 = vector.shape_cast %175 : vector<1x128x128xbf16> to vector<128x128xbf16>
    %c1_111 = arith.constant 1 : index
    %c0_112 = arith.constant 0 : index
    %c0_113 = arith.constant 0 : index
    %177 = vector.load %arg16[%c1_111, %c0_112, %c0_113] : memref<5x1x128xf32, #tpu.memory_space<vmem>>, vector<1x1x128xf32>
    %178 = vector.shape_cast %177 : vector<1x1x128xf32> to vector<1x128xf32>
    %179 = arith.truncf %169 : vector<8x128xf32> to vector<8x128xbf16>
    %cst_114 = arith.constant dense<0.000000e+00> : vector<8x128xf32>
    %180 = tpu.matmul %179, %172, %cst_114 {dimension_numbers = #tpu.dot_dimension_numbers<[1], [0], [0], [1], [0, 0, 1, 1], [], []>} : vector<8x128xbf16>, vector<128x128xbf16>, vector<8x128xf32> -> vector<8x128xf32>
    %181 = vector.broadcast %174 : vector<1x128xf32> to vector<8x128xf32>
    %182 = arith.addf %180, %181 : vector<8x128xf32>
    %cst_115 = arith.constant 5.000000e-01 : f32
    %183 = vector.broadcast %cst_115 : f32 to vector<8x128xf32>
    %184 = arith.mulf %183, %182 : vector<8x128xf32>
    %cst_116 = arith.constant 0.707106769 : f32
    %185 = vector.broadcast %cst_116 : f32 to vector<8x128xf32>
    %186 = arith.mulf %182, %185 : vector<8x128xf32>
    %187 = math.erf %186 : vector<8x128xf32>
    %cst_117 = arith.constant 1.000000e+00 : f32
    %188 = vector.broadcast %cst_117 : f32 to vector<8x128xf32>
    %189 = arith.addf %188, %187 : vector<8x128xf32>
    %190 = arith.mulf %184, %189 : vector<8x128xf32>
    %191 = arith.truncf %190 : vector<8x128xf32> to vector<8x128xbf16>
    %cst_118 = arith.constant dense<0.000000e+00> : vector<8x128xf32>
    %192 = tpu.matmul %191, %176, %cst_118 {dimension_numbers = #tpu.dot_dimension_numbers<[1], [0], [0], [1], [0, 0, 1, 1], [], []>} : vector<8x128xbf16>, vector<128x128xbf16>, vector<8x128xf32> -> vector<8x128xf32>
    %193 = vector.broadcast %178 : vector<1x128xf32> to vector<8x128xf32>
    %194 = arith.addf %192, %193 : vector<8x128xf32>
    %195 = vector.broadcast %3 : vector<1x128xf32> to vector<8x128xf32>
    %196 = arith.addf %195, %194 : vector<8x128xf32>
    %c1_119 = arith.constant 1 : index
    %c0_120 = arith.constant 0 : index
    %c0_121 = arith.constant 0 : index
    %197 = vector.load %arg17[%c1_119, %c0_120, %c0_121] : memref<5x128x128xbf16, #tpu.memory_space<vmem>>, vector<1x128x128xbf16>
    %198 = vector.shape_cast %197 : vector<1x128x128xbf16> to vector<128x128xbf16>
    %c1_122 = arith.constant 1 : index
    %c0_123 = arith.constant 0 : index
    %c0_124 = arith.constant 0 : index
    %199 = vector.load %arg18[%c1_122, %c0_123, %c0_124] : memref<5x1x128xf32, #tpu.memory_space<vmem>>, vector<1x1x128xf32>
    %200 = vector.shape_cast %199 : vector<1x1x128xf32> to vector<1x128xf32>
    %c1_125 = arith.constant 1 : index
    %c0_126 = arith.constant 0 : index
    %c0_127 = arith.constant 0 : index
    %201 = vector.load %arg19[%c1_125, %c0_126, %c0_127] : memref<5x128x128xbf16, #tpu.memory_space<vmem>>, vector<1x128x128xbf16>
    %202 = vector.shape_cast %201 : vector<1x128x128xbf16> to vector<128x128xbf16>
    %c1_128 = arith.constant 1 : index
    %c0_129 = arith.constant 0 : index
    %c0_130 = arith.constant 0 : index
    %203 = vector.load %arg20[%c1_128, %c0_129, %c0_130] : memref<5x1x128xf32, #tpu.memory_space<vmem>>, vector<1x1x128xf32>
    %204 = vector.shape_cast %203 : vector<1x1x128xf32> to vector<1x128xf32>
    %205 = arith.truncf %196 : vector<8x128xf32> to vector<8x128xbf16>
    %cst_131 = arith.constant dense<0.000000e+00> : vector<8x128xf32>
    %206 = tpu.matmul %205, %198, %cst_131 {dimension_numbers = #tpu.dot_dimension_numbers<[1], [0], [0], [1], [0, 0, 1, 1], [], []>} : vector<8x128xbf16>, vector<128x128xbf16>, vector<8x128xf32> -> vector<8x128xf32>
    %207 = vector.broadcast %200 : vector<1x128xf32> to vector<8x128xf32>
    %208 = arith.addf %206, %207 : vector<8x128xf32>
    %cst_132 = arith.constant 5.000000e-01 : f32
    %209 = vector.broadcast %cst_132 : f32 to vector<8x128xf32>
    %210 = arith.mulf %209, %208 : vector<8x128xf32>
    %cst_133 = arith.constant 0.707106769 : f32
    %211 = vector.broadcast %cst_133 : f32 to vector<8x128xf32>
    %212 = arith.mulf %208, %211 : vector<8x128xf32>
    %213 = math.erf %212 : vector<8x128xf32>
    %cst_134 = arith.constant 1.000000e+00 : f32
    %214 = vector.broadcast %cst_134 : f32 to vector<8x128xf32>
    %215 = arith.addf %214, %213 : vector<8x128xf32>
    %216 = arith.mulf %210, %215 : vector<8x128xf32>
    %217 = arith.truncf %216 : vector<8x128xf32> to vector<8x128xbf16>
    %cst_135 = arith.constant dense<0.000000e+00> : vector<8x128xf32>
    %218 = tpu.matmul %217, %202, %cst_135 {dimension_numbers = #tpu.dot_dimension_numbers<[1], [0], [0], [1], [0, 0, 1, 1], [], []>} : vector<8x128xbf16>, vector<128x128xbf16>, vector<8x128xf32> -> vector<8x128xf32>
    %219 = vector.broadcast %204 : vector<1x128xf32> to vector<8x128xf32>
    %220 = arith.addf %218, %219 : vector<8x128xf32>
    %221 = arith.addf %166, %170 : vector<16x128xf32>
    %c1_136 = arith.constant 1 : index
    %c0_137 = arith.constant 0 : index
    %c0_138 = arith.constant 0 : index
    %222 = vector.load %arg21[%c1_136, %c0_137, %c0_138] : memref<5x128x128xbf16, #tpu.memory_space<vmem>>, vector<1x128x128xbf16>
    %223 = vector.shape_cast %222 : vector<1x128x128xbf16> to vector<128x128xbf16>
    %c1_139 = arith.constant 1 : index
    %c0_140 = arith.constant 0 : index
    %c0_141 = arith.constant 0 : index
    %224 = vector.load %arg22[%c1_139, %c0_140, %c0_141] : memref<5x1x128xf32, #tpu.memory_space<vmem>>, vector<1x1x128xf32>
    %225 = vector.shape_cast %224 : vector<1x1x128xf32> to vector<1x128xf32>
    %c1_142 = arith.constant 1 : index
    %c0_143 = arith.constant 0 : index
    %c0_144 = arith.constant 0 : index
    %226 = vector.load %arg23[%c1_142, %c0_143, %c0_144] : memref<5x128x128xbf16, #tpu.memory_space<vmem>>, vector<1x128x128xbf16>
    %227 = vector.shape_cast %226 : vector<1x128x128xbf16> to vector<128x128xbf16>
    %c1_145 = arith.constant 1 : index
    %c0_146 = arith.constant 0 : index
    %c0_147 = arith.constant 0 : index
    %228 = vector.load %arg24[%c1_145, %c0_146, %c0_147] : memref<5x1x128xf32, #tpu.memory_space<vmem>>, vector<1x1x128xf32>
    %229 = vector.shape_cast %228 : vector<1x1x128xf32> to vector<1x128xf32>
    %230 = arith.truncf %221 : vector<16x128xf32> to vector<16x128xbf16>
    %cst_148 = arith.constant dense<0.000000e+00> : vector<16x128xf32>
    %231 = tpu.matmul %230, %223, %cst_148 {dimension_numbers = #tpu.dot_dimension_numbers<[1], [0], [0], [1], [0, 0, 1, 1], [], []>} : vector<16x128xbf16>, vector<128x128xbf16>, vector<16x128xf32> -> vector<16x128xf32>
    %232 = vector.broadcast %225 : vector<1x128xf32> to vector<16x128xf32>
    %233 = arith.addf %231, %232 : vector<16x128xf32>
    %cst_149 = arith.constant 5.000000e-01 : f32
    %234 = vector.broadcast %cst_149 : f32 to vector<16x128xf32>
    %235 = arith.mulf %234, %233 : vector<16x128xf32>
    %cst_150 = arith.constant 0.707106769 : f32
    %236 = vector.broadcast %cst_150 : f32 to vector<16x128xf32>
    %237 = arith.mulf %233, %236 : vector<16x128xf32>
    %238 = math.erf %237 : vector<16x128xf32>
    %cst_151 = arith.constant 1.000000e+00 : f32
    %239 = vector.broadcast %cst_151 : f32 to vector<16x128xf32>
    %240 = arith.addf %239, %238 : vector<16x128xf32>
    %241 = arith.mulf %235, %240 : vector<16x128xf32>
    %242 = arith.truncf %241 : vector<16x128xf32> to vector<16x128xbf16>
    %cst_152 = arith.constant dense<0.000000e+00> : vector<16x128xf32>
    %243 = tpu.matmul %242, %227, %cst_152 {dimension_numbers = #tpu.dot_dimension_numbers<[1], [0], [0], [1], [0, 0, 1, 1], [], []>} : vector<16x128xbf16>, vector<128x128xbf16>, vector<16x128xf32> -> vector<16x128xf32>
    %244 = vector.broadcast %229 : vector<1x128xf32> to vector<16x128xf32>
    %245 = arith.addf %243, %244 : vector<16x128xf32>
    %246 = arith.addf %245, %166 : vector<16x128xf32>
    %247 = vector.broadcast %0 : vector<16x1xf32> to vector<16x128xf32>
    %248 = arith.mulf %246, %247 : vector<16x128xf32>
    %cst_153 = arith.constant dense<0.000000e+00> : vector<128xf32>
    %249 = vector.multi_reduction <add>, %248, %cst_153 [0] : vector<16x128xf32> to vector<128xf32>
    %250 = vector.shape_cast %249 : vector<128xf32> to vector<1x128xf32>
    %cst_154 = arith.constant 6.250000e-02 : f32
    %251 = vector.broadcast %cst_154 : f32 to vector<1x128xf32>
    %252 = arith.mulf %250, %251 : vector<1x128xf32>
    %253 = vector.broadcast %252 : vector<1x128xf32> to vector<16x128xf32>
    %254 = arith.subf %248, %253 : vector<16x128xf32>
    %255 = arith.mulf %254, %254 : vector<16x128xf32>
    %256 = vector.broadcast %0 : vector<16x1xf32> to vector<16x128xf32>
    %257 = arith.mulf %255, %256 : vector<16x128xf32>
    %cst_155 = arith.constant dense<0.000000e+00> : vector<128xf32>
    %258 = vector.multi_reduction <add>, %257, %cst_155 [0] : vector<16x128xf32> to vector<128xf32>
    %259 = vector.shape_cast %258 : vector<128xf32> to vector<1x128xf32>
    %cst_156 = arith.constant 6.250000e-02 : f32
    %260 = vector.broadcast %cst_156 : f32 to vector<1x128xf32>
    %261 = arith.mulf %259, %260 : vector<1x128xf32>
    %cst_157 = arith.constant 9.99999974E-6 : f32
    %262 = vector.broadcast %cst_157 : f32 to vector<1x128xf32>
    %263 = arith.addf %261, %262 : vector<1x128xf32>
    %264 = math.rsqrt %263 : vector<1x128xf32>
    %265 = vector.broadcast %264 : vector<1x128xf32> to vector<16x128xf32>
    %266 = arith.mulf %254, %265 : vector<16x128xf32>
    %c1_158 = arith.constant 1 : index
    %c0_159 = arith.constant 0 : index
    %c0_160 = arith.constant 0 : index
    %267 = vector.load %arg29[%c1_158, %c0_159, %c0_160] : memref<5x1x128xf32, #tpu.memory_space<vmem>>, vector<1x1x128xf32>
    %268 = vector.shape_cast %267 : vector<1x1x128xf32> to vector<1x128xf32>
    %269 = vector.broadcast %268 : vector<1x128xf32> to vector<16x128xf32>
    %270 = arith.mulf %266, %269 : vector<16x128xf32>
    %c1_161 = arith.constant 1 : index
    %c0_162 = arith.constant 0 : index
    %c0_163 = arith.constant 0 : index
    %271 = vector.load %arg30[%c1_161, %c0_162, %c0_163] : memref<5x1x128xf32, #tpu.memory_space<vmem>>, vector<1x1x128xf32>
    %272 = vector.shape_cast %271 : vector<1x1x128xf32> to vector<1x128xf32>
    %273 = vector.broadcast %272 : vector<1x128xf32> to vector<16x128xf32>
    %274 = arith.addf %270, %273 : vector<16x128xf32>
    %275 = vector.broadcast %0 : vector<16x1xf32> to vector<16x128xf32>
    %276 = arith.mulf %274, %275 : vector<16x128xf32>
    %277 = arith.truncf %220 : vector<8x128xf32> to vector<8x128xbf16>
    %cst_164 = arith.constant dense<0.000000e+00> : vector<16x128xf32>
    %278 = tpu.matmul %2, %277, %cst_164 {dimension_numbers = #tpu.dot_dimension_numbers<[1], [0], [0], [1], [0, 0, 1, 1], [], []>} : vector<16x8xbf16>, vector<8x128xbf16>, vector<16x128xf32> -> vector<16x128xf32>
    %279 = arith.addf %278, %276 : vector<16x128xf32>
    %c1_165 = arith.constant 1 : index
    %c0_166 = arith.constant 0 : index
    %c0_167 = arith.constant 0 : index
    %280 = vector.load %arg25[%c1_165, %c0_166, %c0_167] : memref<5x128x128xbf16, #tpu.memory_space<vmem>>, vector<1x128x128xbf16>
    %281 = vector.shape_cast %280 : vector<1x128x128xbf16> to vector<128x128xbf16>
    %c1_168 = arith.constant 1 : index
    %c0_169 = arith.constant 0 : index
    %c0_170 = arith.constant 0 : index
    %282 = vector.load %arg26[%c1_168, %c0_169, %c0_170] : memref<5x1x128xf32, #tpu.memory_space<vmem>>, vector<1x1x128xf32>
    %283 = vector.shape_cast %282 : vector<1x1x128xf32> to vector<1x128xf32>
    %c1_171 = arith.constant 1 : index
    %c0_172 = arith.constant 0 : index
    %c0_173 = arith.constant 0 : index
    %284 = vector.load %arg27[%c1_171, %c0_172, %c0_173] : memref<5x128x128xbf16, #tpu.memory_space<vmem>>, vector<1x128x128xbf16>
    %285 = vector.shape_cast %284 : vector<1x128x128xbf16> to vector<128x128xbf16>
    %c1_174 = arith.constant 1 : index
    %c0_175 = arith.constant 0 : index
    %c0_176 = arith.constant 0 : index
    %286 = vector.load %arg28[%c1_174, %c0_175, %c0_176] : memref<5x1x128xf32, #tpu.memory_space<vmem>>, vector<1x1x128xf32>
    %287 = vector.shape_cast %286 : vector<1x1x128xf32> to vector<1x128xf32>
    %288 = arith.truncf %279 : vector<16x128xf32> to vector<16x128xbf16>
    %cst_177 = arith.constant dense<0.000000e+00> : vector<16x128xf32>
    %289 = tpu.matmul %288, %281, %cst_177 {dimension_numbers = #tpu.dot_dimension_numbers<[1], [0], [0], [1], [0, 0, 1, 1], [], []>} : vector<16x128xbf16>, vector<128x128xbf16>, vector<16x128xf32> -> vector<16x128xf32>
    %290 = vector.broadcast %283 : vector<1x128xf32> to vector<16x128xf32>
    %291 = arith.addf %289, %290 : vector<16x128xf32>
    %cst_178 = arith.constant 5.000000e-01 : f32
    %292 = vector.broadcast %cst_178 : f32 to vector<16x128xf32>
    %293 = arith.mulf %292, %291 : vector<16x128xf32>
    %cst_179 = arith.constant 0.707106769 : f32
    %294 = vector.broadcast %cst_179 : f32 to vector<16x128xf32>
    %295 = arith.mulf %291, %294 : vector<16x128xf32>
    %296 = math.erf %295 : vector<16x128xf32>
    %cst_180 = arith.constant 1.000000e+00 : f32
    %297 = vector.broadcast %cst_180 : f32 to vector<16x128xf32>
    %298 = arith.addf %297, %296 : vector<16x128xf32>
    %299 = arith.mulf %293, %298 : vector<16x128xf32>
    %300 = arith.truncf %299 : vector<16x128xf32> to vector<16x128xbf16>
    %cst_181 = arith.constant dense<0.000000e+00> : vector<16x128xf32>
    %301 = tpu.matmul %300, %285, %cst_181 {dimension_numbers = #tpu.dot_dimension_numbers<[1], [0], [0], [1], [0, 0, 1, 1], [], []>} : vector<16x128xbf16>, vector<128x128xbf16>, vector<16x128xf32> -> vector<16x128xf32>
    %302 = vector.broadcast %287 : vector<1x128xf32> to vector<16x128xf32>
    %303 = arith.addf %301, %302 : vector<16x128xf32>
    %304 = arith.addf %303, %276 : vector<16x128xf32>
    %305 = vector.broadcast %0 : vector<16x1xf32> to vector<16x128xf32>
    %306 = arith.mulf %304, %305 : vector<16x128xf32>
    %307 = arith.truncf %306 : vector<16x128xf32> to vector<16x128xbf16>
    %cst_182 = arith.constant dense<0.000000e+00> : vector<24x128xf32>
    %308 = tpu.matmul %1, %307, %cst_182 {dimension_numbers = #tpu.dot_dimension_numbers<[1], [0], [0], [1], [0, 0, 1, 1], [], []>} : vector<24x16xbf16>, vector<16x128xbf16>, vector<24x128xf32> -> vector<24x128xf32>
    %309 = vector.extract_strided_slice %308 {offsets = [0, 0], sizes = [8, 128], strides = [1, 1]} : vector<24x128xf32> to vector<8x128xf32>
    %310 = vector.extract_strided_slice %308 {offsets = [8, 0], sizes = [16, 128], strides = [1, 1]} : vector<24x128xf32> to vector<16x128xf32>
    %c2 = arith.constant 2 : index
    %c0_183 = arith.constant 0 : index
    %c0_184 = arith.constant 0 : index
    %311 = vector.load %arg13[%c2, %c0_183, %c0_184] : memref<5x128x128xbf16, #tpu.memory_space<vmem>>, vector<1x128x128xbf16>
    %312 = vector.shape_cast %311 : vector<1x128x128xbf16> to vector<128x128xbf16>
    %c2_185 = arith.constant 2 : index
    %c0_186 = arith.constant 0 : index
    %c0_187 = arith.constant 0 : index
    %313 = vector.load %arg14[%c2_185, %c0_186, %c0_187] : memref<5x1x128xf32, #tpu.memory_space<vmem>>, vector<1x1x128xf32>
    %314 = vector.shape_cast %313 : vector<1x1x128xf32> to vector<1x128xf32>
    %c2_188 = arith.constant 2 : index
    %c0_189 = arith.constant 0 : index
    %c0_190 = arith.constant 0 : index
    %315 = vector.load %arg15[%c2_188, %c0_189, %c0_190] : memref<5x128x128xbf16, #tpu.memory_space<vmem>>, vector<1x128x128xbf16>
    %316 = vector.shape_cast %315 : vector<1x128x128xbf16> to vector<128x128xbf16>
    %c2_191 = arith.constant 2 : index
    %c0_192 = arith.constant 0 : index
    %c0_193 = arith.constant 0 : index
    %317 = vector.load %arg16[%c2_191, %c0_192, %c0_193] : memref<5x1x128xf32, #tpu.memory_space<vmem>>, vector<1x1x128xf32>
    %318 = vector.shape_cast %317 : vector<1x1x128xf32> to vector<1x128xf32>
    %319 = arith.truncf %309 : vector<8x128xf32> to vector<8x128xbf16>
    %cst_194 = arith.constant dense<0.000000e+00> : vector<8x128xf32>
    %320 = tpu.matmul %319, %312, %cst_194 {dimension_numbers = #tpu.dot_dimension_numbers<[1], [0], [0], [1], [0, 0, 1, 1], [], []>} : vector<8x128xbf16>, vector<128x128xbf16>, vector<8x128xf32> -> vector<8x128xf32>
    %321 = vector.broadcast %314 : vector<1x128xf32> to vector<8x128xf32>
    %322 = arith.addf %320, %321 : vector<8x128xf32>
    %cst_195 = arith.constant 5.000000e-01 : f32
    %323 = vector.broadcast %cst_195 : f32 to vector<8x128xf32>
    %324 = arith.mulf %323, %322 : vector<8x128xf32>
    %cst_196 = arith.constant 0.707106769 : f32
    %325 = vector.broadcast %cst_196 : f32 to vector<8x128xf32>
    %326 = arith.mulf %322, %325 : vector<8x128xf32>
    %327 = math.erf %326 : vector<8x128xf32>
    %cst_197 = arith.constant 1.000000e+00 : f32
    %328 = vector.broadcast %cst_197 : f32 to vector<8x128xf32>
    %329 = arith.addf %328, %327 : vector<8x128xf32>
    %330 = arith.mulf %324, %329 : vector<8x128xf32>
    %331 = arith.truncf %330 : vector<8x128xf32> to vector<8x128xbf16>
    %cst_198 = arith.constant dense<0.000000e+00> : vector<8x128xf32>
    %332 = tpu.matmul %331, %316, %cst_198 {dimension_numbers = #tpu.dot_dimension_numbers<[1], [0], [0], [1], [0, 0, 1, 1], [], []>} : vector<8x128xbf16>, vector<128x128xbf16>, vector<8x128xf32> -> vector<8x128xf32>
    %333 = vector.broadcast %318 : vector<1x128xf32> to vector<8x128xf32>
    %334 = arith.addf %332, %333 : vector<8x128xf32>
    %335 = vector.broadcast %3 : vector<1x128xf32> to vector<8x128xf32>
    %336 = arith.addf %335, %334 : vector<8x128xf32>
    %c2_199 = arith.constant 2 : index
    %c0_200 = arith.constant 0 : index
    %c0_201 = arith.constant 0 : index
    %337 = vector.load %arg17[%c2_199, %c0_200, %c0_201] : memref<5x128x128xbf16, #tpu.memory_space<vmem>>, vector<1x128x128xbf16>
    %338 = vector.shape_cast %337 : vector<1x128x128xbf16> to vector<128x128xbf16>
    %c2_202 = arith.constant 2 : index
    %c0_203 = arith.constant 0 : index
    %c0_204 = arith.constant 0 : index
    %339 = vector.load %arg18[%c2_202, %c0_203, %c0_204] : memref<5x1x128xf32, #tpu.memory_space<vmem>>, vector<1x1x128xf32>
    %340 = vector.shape_cast %339 : vector<1x1x128xf32> to vector<1x128xf32>
    %c2_205 = arith.constant 2 : index
    %c0_206 = arith.constant 0 : index
    %c0_207 = arith.constant 0 : index
    %341 = vector.load %arg19[%c2_205, %c0_206, %c0_207] : memref<5x128x128xbf16, #tpu.memory_space<vmem>>, vector<1x128x128xbf16>
    %342 = vector.shape_cast %341 : vector<1x128x128xbf16> to vector<128x128xbf16>
    %c2_208 = arith.constant 2 : index
    %c0_209 = arith.constant 0 : index
    %c0_210 = arith.constant 0 : index
    %343 = vector.load %arg20[%c2_208, %c0_209, %c0_210] : memref<5x1x128xf32, #tpu.memory_space<vmem>>, vector<1x1x128xf32>
    %344 = vector.shape_cast %343 : vector<1x1x128xf32> to vector<1x128xf32>
    %345 = arith.truncf %336 : vector<8x128xf32> to vector<8x128xbf16>
    %cst_211 = arith.constant dense<0.000000e+00> : vector<8x128xf32>
    %346 = tpu.matmul %345, %338, %cst_211 {dimension_numbers = #tpu.dot_dimension_numbers<[1], [0], [0], [1], [0, 0, 1, 1], [], []>} : vector<8x128xbf16>, vector<128x128xbf16>, vector<8x128xf32> -> vector<8x128xf32>
    %347 = vector.broadcast %340 : vector<1x128xf32> to vector<8x128xf32>
    %348 = arith.addf %346, %347 : vector<8x128xf32>
    %cst_212 = arith.constant 5.000000e-01 : f32
    %349 = vector.broadcast %cst_212 : f32 to vector<8x128xf32>
    %350 = arith.mulf %349, %348 : vector<8x128xf32>
    %cst_213 = arith.constant 0.707106769 : f32
    %351 = vector.broadcast %cst_213 : f32 to vector<8x128xf32>
    %352 = arith.mulf %348, %351 : vector<8x128xf32>
    %353 = math.erf %352 : vector<8x128xf32>
    %cst_214 = arith.constant 1.000000e+00 : f32
    %354 = vector.broadcast %cst_214 : f32 to vector<8x128xf32>
    %355 = arith.addf %354, %353 : vector<8x128xf32>
    %356 = arith.mulf %350, %355 : vector<8x128xf32>
    %357 = arith.truncf %356 : vector<8x128xf32> to vector<8x128xbf16>
    %cst_215 = arith.constant dense<0.000000e+00> : vector<8x128xf32>
    %358 = tpu.matmul %357, %342, %cst_215 {dimension_numbers = #tpu.dot_dimension_numbers<[1], [0], [0], [1], [0, 0, 1, 1], [], []>} : vector<8x128xbf16>, vector<128x128xbf16>, vector<8x128xf32> -> vector<8x128xf32>
    %359 = vector.broadcast %344 : vector<1x128xf32> to vector<8x128xf32>
    %360 = arith.addf %358, %359 : vector<8x128xf32>
    %361 = arith.addf %306, %310 : vector<16x128xf32>
    %c2_216 = arith.constant 2 : index
    %c0_217 = arith.constant 0 : index
    %c0_218 = arith.constant 0 : index
    %362 = vector.load %arg21[%c2_216, %c0_217, %c0_218] : memref<5x128x128xbf16, #tpu.memory_space<vmem>>, vector<1x128x128xbf16>
    %363 = vector.shape_cast %362 : vector<1x128x128xbf16> to vector<128x128xbf16>
    %c2_219 = arith.constant 2 : index
    %c0_220 = arith.constant 0 : index
    %c0_221 = arith.constant 0 : index
    %364 = vector.load %arg22[%c2_219, %c0_220, %c0_221] : memref<5x1x128xf32, #tpu.memory_space<vmem>>, vector<1x1x128xf32>
    %365 = vector.shape_cast %364 : vector<1x1x128xf32> to vector<1x128xf32>
    %c2_222 = arith.constant 2 : index
    %c0_223 = arith.constant 0 : index
    %c0_224 = arith.constant 0 : index
    %366 = vector.load %arg23[%c2_222, %c0_223, %c0_224] : memref<5x128x128xbf16, #tpu.memory_space<vmem>>, vector<1x128x128xbf16>
    %367 = vector.shape_cast %366 : vector<1x128x128xbf16> to vector<128x128xbf16>
    %c2_225 = arith.constant 2 : index
    %c0_226 = arith.constant 0 : index
    %c0_227 = arith.constant 0 : index
    %368 = vector.load %arg24[%c2_225, %c0_226, %c0_227] : memref<5x1x128xf32, #tpu.memory_space<vmem>>, vector<1x1x128xf32>
    %369 = vector.shape_cast %368 : vector<1x1x128xf32> to vector<1x128xf32>
    %370 = arith.truncf %361 : vector<16x128xf32> to vector<16x128xbf16>
    %cst_228 = arith.constant dense<0.000000e+00> : vector<16x128xf32>
    %371 = tpu.matmul %370, %363, %cst_228 {dimension_numbers = #tpu.dot_dimension_numbers<[1], [0], [0], [1], [0, 0, 1, 1], [], []>} : vector<16x128xbf16>, vector<128x128xbf16>, vector<16x128xf32> -> vector<16x128xf32>
    %372 = vector.broadcast %365 : vector<1x128xf32> to vector<16x128xf32>
    %373 = arith.addf %371, %372 : vector<16x128xf32>
    %cst_229 = arith.constant 5.000000e-01 : f32
    %374 = vector.broadcast %cst_229 : f32 to vector<16x128xf32>
    %375 = arith.mulf %374, %373 : vector<16x128xf32>
    %cst_230 = arith.constant 0.707106769 : f32
    %376 = vector.broadcast %cst_230 : f32 to vector<16x128xf32>
    %377 = arith.mulf %373, %376 : vector<16x128xf32>
    %378 = math.erf %377 : vector<16x128xf32>
    %cst_231 = arith.constant 1.000000e+00 : f32
    %379 = vector.broadcast %cst_231 : f32 to vector<16x128xf32>
    %380 = arith.addf %379, %378 : vector<16x128xf32>
    %381 = arith.mulf %375, %380 : vector<16x128xf32>
    %382 = arith.truncf %381 : vector<16x128xf32> to vector<16x128xbf16>
    %cst_232 = arith.constant dense<0.000000e+00> : vector<16x128xf32>
    %383 = tpu.matmul %382, %367, %cst_232 {dimension_numbers = #tpu.dot_dimension_numbers<[1], [0], [0], [1], [0, 0, 1, 1], [], []>} : vector<16x128xbf16>, vector<128x128xbf16>, vector<16x128xf32> -> vector<16x128xf32>
    %384 = vector.broadcast %369 : vector<1x128xf32> to vector<16x128xf32>
    %385 = arith.addf %383, %384 : vector<16x128xf32>
    %386 = arith.addf %385, %306 : vector<16x128xf32>
    %387 = vector.broadcast %0 : vector<16x1xf32> to vector<16x128xf32>
    %388 = arith.mulf %386, %387 : vector<16x128xf32>
    %cst_233 = arith.constant dense<0.000000e+00> : vector<128xf32>
    %389 = vector.multi_reduction <add>, %388, %cst_233 [0] : vector<16x128xf32> to vector<128xf32>
    %390 = vector.shape_cast %389 : vector<128xf32> to vector<1x128xf32>
    %cst_234 = arith.constant 6.250000e-02 : f32
    %391 = vector.broadcast %cst_234 : f32 to vector<1x128xf32>
    %392 = arith.mulf %390, %391 : vector<1x128xf32>
    %393 = vector.broadcast %392 : vector<1x128xf32> to vector<16x128xf32>
    %394 = arith.subf %388, %393 : vector<16x128xf32>
    %395 = arith.mulf %394, %394 : vector<16x128xf32>
    %396 = vector.broadcast %0 : vector<16x1xf32> to vector<16x128xf32>
    %397 = arith.mulf %395, %396 : vector<16x128xf32>
    %cst_235 = arith.constant dense<0.000000e+00> : vector<128xf32>
    %398 = vector.multi_reduction <add>, %397, %cst_235 [0] : vector<16x128xf32> to vector<128xf32>
    %399 = vector.shape_cast %398 : vector<128xf32> to vector<1x128xf32>
    %cst_236 = arith.constant 6.250000e-02 : f32
    %400 = vector.broadcast %cst_236 : f32 to vector<1x128xf32>
    %401 = arith.mulf %399, %400 : vector<1x128xf32>
    %cst_237 = arith.constant 9.99999974E-6 : f32
    %402 = vector.broadcast %cst_237 : f32 to vector<1x128xf32>
    %403 = arith.addf %401, %402 : vector<1x128xf32>
    %404 = math.rsqrt %403 : vector<1x128xf32>
    %405 = vector.broadcast %404 : vector<1x128xf32> to vector<16x128xf32>
    %406 = arith.mulf %394, %405 : vector<16x128xf32>
    %c2_238 = arith.constant 2 : index
    %c0_239 = arith.constant 0 : index
    %c0_240 = arith.constant 0 : index
    %407 = vector.load %arg29[%c2_238, %c0_239, %c0_240] : memref<5x1x128xf32, #tpu.memory_space<vmem>>, vector<1x1x128xf32>
    %408 = vector.shape_cast %407 : vector<1x1x128xf32> to vector<1x128xf32>
    %409 = vector.broadcast %408 : vector<1x128xf32> to vector<16x128xf32>
    %410 = arith.mulf %406, %409 : vector<16x128xf32>
    %c2_241 = arith.constant 2 : index
    %c0_242 = arith.constant 0 : index
    %c0_243 = arith.constant 0 : index
    %411 = vector.load %arg30[%c2_241, %c0_242, %c0_243] : memref<5x1x128xf32, #tpu.memory_space<vmem>>, vector<1x1x128xf32>
    %412 = vector.shape_cast %411 : vector<1x1x128xf32> to vector<1x128xf32>
    %413 = vector.broadcast %412 : vector<1x128xf32> to vector<16x128xf32>
    %414 = arith.addf %410, %413 : vector<16x128xf32>
    %415 = vector.broadcast %0 : vector<16x1xf32> to vector<16x128xf32>
    %416 = arith.mulf %414, %415 : vector<16x128xf32>
    %417 = arith.truncf %360 : vector<8x128xf32> to vector<8x128xbf16>
    %cst_244 = arith.constant dense<0.000000e+00> : vector<16x128xf32>
    %418 = tpu.matmul %2, %417, %cst_244 {dimension_numbers = #tpu.dot_dimension_numbers<[1], [0], [0], [1], [0, 0, 1, 1], [], []>} : vector<16x8xbf16>, vector<8x128xbf16>, vector<16x128xf32> -> vector<16x128xf32>
    %419 = arith.addf %418, %416 : vector<16x128xf32>
    %c2_245 = arith.constant 2 : index
    %c0_246 = arith.constant 0 : index
    %c0_247 = arith.constant 0 : index
    %420 = vector.load %arg25[%c2_245, %c0_246, %c0_247] : memref<5x128x128xbf16, #tpu.memory_space<vmem>>, vector<1x128x128xbf16>
    %421 = vector.shape_cast %420 : vector<1x128x128xbf16> to vector<128x128xbf16>
    %c2_248 = arith.constant 2 : index
    %c0_249 = arith.constant 0 : index
    %c0_250 = arith.constant 0 : index
    %422 = vector.load %arg26[%c2_248, %c0_249, %c0_250] : memref<5x1x128xf32, #tpu.memory_space<vmem>>, vector<1x1x128xf32>
    %423 = vector.shape_cast %422 : vector<1x1x128xf32> to vector<1x128xf32>
    %c2_251 = arith.constant 2 : index
    %c0_252 = arith.constant 0 : index
    %c0_253 = arith.constant 0 : index
    %424 = vector.load %arg27[%c2_251, %c0_252, %c0_253] : memref<5x128x128xbf16, #tpu.memory_space<vmem>>, vector<1x128x128xbf16>
    %425 = vector.shape_cast %424 : vector<1x128x128xbf16> to vector<128x128xbf16>
    %c2_254 = arith.constant 2 : index
    %c0_255 = arith.constant 0 : index
    %c0_256 = arith.constant 0 : index
    %426 = vector.load %arg28[%c2_254, %c0_255, %c0_256] : memref<5x1x128xf32, #tpu.memory_space<vmem>>, vector<1x1x128xf32>
    %427 = vector.shape_cast %426 : vector<1x1x128xf32> to vector<1x128xf32>
    %428 = arith.truncf %419 : vector<16x128xf32> to vector<16x128xbf16>
    %cst_257 = arith.constant dense<0.000000e+00> : vector<16x128xf32>
    %429 = tpu.matmul %428, %421, %cst_257 {dimension_numbers = #tpu.dot_dimension_numbers<[1], [0], [0], [1], [0, 0, 1, 1], [], []>} : vector<16x128xbf16>, vector<128x128xbf16>, vector<16x128xf32> -> vector<16x128xf32>
    %430 = vector.broadcast %423 : vector<1x128xf32> to vector<16x128xf32>
    %431 = arith.addf %429, %430 : vector<16x128xf32>
    %cst_258 = arith.constant 5.000000e-01 : f32
    %432 = vector.broadcast %cst_258 : f32 to vector<16x128xf32>
    %433 = arith.mulf %432, %431 : vector<16x128xf32>
    %cst_259 = arith.constant 0.707106769 : f32
    %434 = vector.broadcast %cst_259 : f32 to vector<16x128xf32>
    %435 = arith.mulf %431, %434 : vector<16x128xf32>
    %436 = math.erf %435 : vector<16x128xf32>
    %cst_260 = arith.constant 1.000000e+00 : f32
    %437 = vector.broadcast %cst_260 : f32 to vector<16x128xf32>
    %438 = arith.addf %437, %436 : vector<16x128xf32>
    %439 = arith.mulf %433, %438 : vector<16x128xf32>
    %440 = arith.truncf %439 : vector<16x128xf32> to vector<16x128xbf16>
    %cst_261 = arith.constant dense<0.000000e+00> : vector<16x128xf32>
    %441 = tpu.matmul %440, %425, %cst_261 {dimension_numbers = #tpu.dot_dimension_numbers<[1], [0], [0], [1], [0, 0, 1, 1], [], []>} : vector<16x128xbf16>, vector<128x128xbf16>, vector<16x128xf32> -> vector<16x128xf32>
    %442 = vector.broadcast %427 : vector<1x128xf32> to vector<16x128xf32>
    %443 = arith.addf %441, %442 : vector<16x128xf32>
    %444 = arith.addf %443, %416 : vector<16x128xf32>
    %445 = vector.broadcast %0 : vector<16x1xf32> to vector<16x128xf32>
    %446 = arith.mulf %444, %445 : vector<16x128xf32>
    %447 = arith.truncf %446 : vector<16x128xf32> to vector<16x128xbf16>
    %cst_262 = arith.constant dense<0.000000e+00> : vector<24x128xf32>
    %448 = tpu.matmul %1, %447, %cst_262 {dimension_numbers = #tpu.dot_dimension_numbers<[1], [0], [0], [1], [0, 0, 1, 1], [], []>} : vector<24x16xbf16>, vector<16x128xbf16>, vector<24x128xf32> -> vector<24x128xf32>
    %449 = vector.extract_strided_slice %448 {offsets = [0, 0], sizes = [8, 128], strides = [1, 1]} : vector<24x128xf32> to vector<8x128xf32>
    %450 = vector.extract_strided_slice %448 {offsets = [8, 0], sizes = [16, 128], strides = [1, 1]} : vector<24x128xf32> to vector<16x128xf32>
    %c3 = arith.constant 3 : index
    %c0_263 = arith.constant 0 : index
    %c0_264 = arith.constant 0 : index
    %451 = vector.load %arg13[%c3, %c0_263, %c0_264] : memref<5x128x128xbf16, #tpu.memory_space<vmem>>, vector<1x128x128xbf16>
    %452 = vector.shape_cast %451 : vector<1x128x128xbf16> to vector<128x128xbf16>
    %c3_265 = arith.constant 3 : index
    %c0_266 = arith.constant 0 : index
    %c0_267 = arith.constant 0 : index
    %453 = vector.load %arg14[%c3_265, %c0_266, %c0_267] : memref<5x1x128xf32, #tpu.memory_space<vmem>>, vector<1x1x128xf32>
    %454 = vector.shape_cast %453 : vector<1x1x128xf32> to vector<1x128xf32>
    %c3_268 = arith.constant 3 : index
    %c0_269 = arith.constant 0 : index
    %c0_270 = arith.constant 0 : index
    %455 = vector.load %arg15[%c3_268, %c0_269, %c0_270] : memref<5x128x128xbf16, #tpu.memory_space<vmem>>, vector<1x128x128xbf16>
    %456 = vector.shape_cast %455 : vector<1x128x128xbf16> to vector<128x128xbf16>
    %c3_271 = arith.constant 3 : index
    %c0_272 = arith.constant 0 : index
    %c0_273 = arith.constant 0 : index
    %457 = vector.load %arg16[%c3_271, %c0_272, %c0_273] : memref<5x1x128xf32, #tpu.memory_space<vmem>>, vector<1x1x128xf32>
    %458 = vector.shape_cast %457 : vector<1x1x128xf32> to vector<1x128xf32>
    %459 = arith.truncf %449 : vector<8x128xf32> to vector<8x128xbf16>
    %cst_274 = arith.constant dense<0.000000e+00> : vector<8x128xf32>
    %460 = tpu.matmul %459, %452, %cst_274 {dimension_numbers = #tpu.dot_dimension_numbers<[1], [0], [0], [1], [0, 0, 1, 1], [], []>} : vector<8x128xbf16>, vector<128x128xbf16>, vector<8x128xf32> -> vector<8x128xf32>
    %461 = vector.broadcast %454 : vector<1x128xf32> to vector<8x128xf32>
    %462 = arith.addf %460, %461 : vector<8x128xf32>
    %cst_275 = arith.constant 5.000000e-01 : f32
    %463 = vector.broadcast %cst_275 : f32 to vector<8x128xf32>
    %464 = arith.mulf %463, %462 : vector<8x128xf32>
    %cst_276 = arith.constant 0.707106769 : f32
    %465 = vector.broadcast %cst_276 : f32 to vector<8x128xf32>
    %466 = arith.mulf %462, %465 : vector<8x128xf32>
    %467 = math.erf %466 : vector<8x128xf32>
    %cst_277 = arith.constant 1.000000e+00 : f32
    %468 = vector.broadcast %cst_277 : f32 to vector<8x128xf32>
    %469 = arith.addf %468, %467 : vector<8x128xf32>
    %470 = arith.mulf %464, %469 : vector<8x128xf32>
    %471 = arith.truncf %470 : vector<8x128xf32> to vector<8x128xbf16>
    %cst_278 = arith.constant dense<0.000000e+00> : vector<8x128xf32>
    %472 = tpu.matmul %471, %456, %cst_278 {dimension_numbers = #tpu.dot_dimension_numbers<[1], [0], [0], [1], [0, 0, 1, 1], [], []>} : vector<8x128xbf16>, vector<128x128xbf16>, vector<8x128xf32> -> vector<8x128xf32>
    %473 = vector.broadcast %458 : vector<1x128xf32> to vector<8x128xf32>
    %474 = arith.addf %472, %473 : vector<8x128xf32>
    %475 = vector.broadcast %3 : vector<1x128xf32> to vector<8x128xf32>
    %476 = arith.addf %475, %474 : vector<8x128xf32>
    %c3_279 = arith.constant 3 : index
    %c0_280 = arith.constant 0 : index
    %c0_281 = arith.constant 0 : index
    %477 = vector.load %arg17[%c3_279, %c0_280, %c0_281] : memref<5x128x128xbf16, #tpu.memory_space<vmem>>, vector<1x128x128xbf16>
    %478 = vector.shape_cast %477 : vector<1x128x128xbf16> to vector<128x128xbf16>
    %c3_282 = arith.constant 3 : index
    %c0_283 = arith.constant 0 : index
    %c0_284 = arith.constant 0 : index
    %479 = vector.load %arg18[%c3_282, %c0_283, %c0_284] : memref<5x1x128xf32, #tpu.memory_space<vmem>>, vector<1x1x128xf32>
    %480 = vector.shape_cast %479 : vector<1x1x128xf32> to vector<1x128xf32>
    %c3_285 = arith.constant 3 : index
    %c0_286 = arith.constant 0 : index
    %c0_287 = arith.constant 0 : index
    %481 = vector.load %arg19[%c3_285, %c0_286, %c0_287] : memref<5x128x128xbf16, #tpu.memory_space<vmem>>, vector<1x128x128xbf16>
    %482 = vector.shape_cast %481 : vector<1x128x128xbf16> to vector<128x128xbf16>
    %c3_288 = arith.constant 3 : index
    %c0_289 = arith.constant 0 : index
    %c0_290 = arith.constant 0 : index
    %483 = vector.load %arg20[%c3_288, %c0_289, %c0_290] : memref<5x1x128xf32, #tpu.memory_space<vmem>>, vector<1x1x128xf32>
    %484 = vector.shape_cast %483 : vector<1x1x128xf32> to vector<1x128xf32>
    %485 = arith.truncf %476 : vector<8x128xf32> to vector<8x128xbf16>
    %cst_291 = arith.constant dense<0.000000e+00> : vector<8x128xf32>
    %486 = tpu.matmul %485, %478, %cst_291 {dimension_numbers = #tpu.dot_dimension_numbers<[1], [0], [0], [1], [0, 0, 1, 1], [], []>} : vector<8x128xbf16>, vector<128x128xbf16>, vector<8x128xf32> -> vector<8x128xf32>
    %487 = vector.broadcast %480 : vector<1x128xf32> to vector<8x128xf32>
    %488 = arith.addf %486, %487 : vector<8x128xf32>
    %cst_292 = arith.constant 5.000000e-01 : f32
    %489 = vector.broadcast %cst_292 : f32 to vector<8x128xf32>
    %490 = arith.mulf %489, %488 : vector<8x128xf32>
    %cst_293 = arith.constant 0.707106769 : f32
    %491 = vector.broadcast %cst_293 : f32 to vector<8x128xf32>
    %492 = arith.mulf %488, %491 : vector<8x128xf32>
    %493 = math.erf %492 : vector<8x128xf32>
    %cst_294 = arith.constant 1.000000e+00 : f32
    %494 = vector.broadcast %cst_294 : f32 to vector<8x128xf32>
    %495 = arith.addf %494, %493 : vector<8x128xf32>
    %496 = arith.mulf %490, %495 : vector<8x128xf32>
    %497 = arith.truncf %496 : vector<8x128xf32> to vector<8x128xbf16>
    %cst_295 = arith.constant dense<0.000000e+00> : vector<8x128xf32>
    %498 = tpu.matmul %497, %482, %cst_295 {dimension_numbers = #tpu.dot_dimension_numbers<[1], [0], [0], [1], [0, 0, 1, 1], [], []>} : vector<8x128xbf16>, vector<128x128xbf16>, vector<8x128xf32> -> vector<8x128xf32>
    %499 = vector.broadcast %484 : vector<1x128xf32> to vector<8x128xf32>
    %500 = arith.addf %498, %499 : vector<8x128xf32>
    %501 = arith.addf %446, %450 : vector<16x128xf32>
    %c3_296 = arith.constant 3 : index
    %c0_297 = arith.constant 0 : index
    %c0_298 = arith.constant 0 : index
    %502 = vector.load %arg21[%c3_296, %c0_297, %c0_298] : memref<5x128x128xbf16, #tpu.memory_space<vmem>>, vector<1x128x128xbf16>
    %503 = vector.shape_cast %502 : vector<1x128x128xbf16> to vector<128x128xbf16>
    %c3_299 = arith.constant 3 : index
    %c0_300 = arith.constant 0 : index
    %c0_301 = arith.constant 0 : index
    %504 = vector.load %arg22[%c3_299, %c0_300, %c0_301] : memref<5x1x128xf32, #tpu.memory_space<vmem>>, vector<1x1x128xf32>
    %505 = vector.shape_cast %504 : vector<1x1x128xf32> to vector<1x128xf32>
    %c3_302 = arith.constant 3 : index
    %c0_303 = arith.constant 0 : index
    %c0_304 = arith.constant 0 : index
    %506 = vector.load %arg23[%c3_302, %c0_303, %c0_304] : memref<5x128x128xbf16, #tpu.memory_space<vmem>>, vector<1x128x128xbf16>
    %507 = vector.shape_cast %506 : vector<1x128x128xbf16> to vector<128x128xbf16>
    %c3_305 = arith.constant 3 : index
    %c0_306 = arith.constant 0 : index
    %c0_307 = arith.constant 0 : index
    %508 = vector.load %arg24[%c3_305, %c0_306, %c0_307] : memref<5x1x128xf32, #tpu.memory_space<vmem>>, vector<1x1x128xf32>
    %509 = vector.shape_cast %508 : vector<1x1x128xf32> to vector<1x128xf32>
    %510 = arith.truncf %501 : vector<16x128xf32> to vector<16x128xbf16>
    %cst_308 = arith.constant dense<0.000000e+00> : vector<16x128xf32>
    %511 = tpu.matmul %510, %503, %cst_308 {dimension_numbers = #tpu.dot_dimension_numbers<[1], [0], [0], [1], [0, 0, 1, 1], [], []>} : vector<16x128xbf16>, vector<128x128xbf16>, vector<16x128xf32> -> vector<16x128xf32>
    %512 = vector.broadcast %505 : vector<1x128xf32> to vector<16x128xf32>
    %513 = arith.addf %511, %512 : vector<16x128xf32>
    %cst_309 = arith.constant 5.000000e-01 : f32
    %514 = vector.broadcast %cst_309 : f32 to vector<16x128xf32>
    %515 = arith.mulf %514, %513 : vector<16x128xf32>
    %cst_310 = arith.constant 0.707106769 : f32
    %516 = vector.broadcast %cst_310 : f32 to vector<16x128xf32>
    %517 = arith.mulf %513, %516 : vector<16x128xf32>
    %518 = math.erf %517 : vector<16x128xf32>
    %cst_311 = arith.constant 1.000000e+00 : f32
    %519 = vector.broadcast %cst_311 : f32 to vector<16x128xf32>
    %520 = arith.addf %519, %518 : vector<16x128xf32>
    %521 = arith.mulf %515, %520 : vector<16x128xf32>
    %522 = arith.truncf %521 : vector<16x128xf32> to vector<16x128xbf16>
    %cst_312 = arith.constant dense<0.000000e+00> : vector<16x128xf32>
    %523 = tpu.matmul %522, %507, %cst_312 {dimension_numbers = #tpu.dot_dimension_numbers<[1], [0], [0], [1], [0, 0, 1, 1], [], []>} : vector<16x128xbf16>, vector<128x128xbf16>, vector<16x128xf32> -> vector<16x128xf32>
    %524 = vector.broadcast %509 : vector<1x128xf32> to vector<16x128xf32>
    %525 = arith.addf %523, %524 : vector<16x128xf32>
    %526 = arith.addf %525, %446 : vector<16x128xf32>
    %527 = vector.broadcast %0 : vector<16x1xf32> to vector<16x128xf32>
    %528 = arith.mulf %526, %527 : vector<16x128xf32>
    %cst_313 = arith.constant dense<0.000000e+00> : vector<128xf32>
    %529 = vector.multi_reduction <add>, %528, %cst_313 [0] : vector<16x128xf32> to vector<128xf32>
    %530 = vector.shape_cast %529 : vector<128xf32> to vector<1x128xf32>
    %cst_314 = arith.constant 6.250000e-02 : f32
    %531 = vector.broadcast %cst_314 : f32 to vector<1x128xf32>
    %532 = arith.mulf %530, %531 : vector<1x128xf32>
    %533 = vector.broadcast %532 : vector<1x128xf32> to vector<16x128xf32>
    %534 = arith.subf %528, %533 : vector<16x128xf32>
    %535 = arith.mulf %534, %534 : vector<16x128xf32>
    %536 = vector.broadcast %0 : vector<16x1xf32> to vector<16x128xf32>
    %537 = arith.mulf %535, %536 : vector<16x128xf32>
    %cst_315 = arith.constant dense<0.000000e+00> : vector<128xf32>
    %538 = vector.multi_reduction <add>, %537, %cst_315 [0] : vector<16x128xf32> to vector<128xf32>
    %539 = vector.shape_cast %538 : vector<128xf32> to vector<1x128xf32>
    %cst_316 = arith.constant 6.250000e-02 : f32
    %540 = vector.broadcast %cst_316 : f32 to vector<1x128xf32>
    %541 = arith.mulf %539, %540 : vector<1x128xf32>
    %cst_317 = arith.constant 9.99999974E-6 : f32
    %542 = vector.broadcast %cst_317 : f32 to vector<1x128xf32>
    %543 = arith.addf %541, %542 : vector<1x128xf32>
    %544 = math.rsqrt %543 : vector<1x128xf32>
    %545 = vector.broadcast %544 : vector<1x128xf32> to vector<16x128xf32>
    %546 = arith.mulf %534, %545 : vector<16x128xf32>
    %c3_318 = arith.constant 3 : index
    %c0_319 = arith.constant 0 : index
    %c0_320 = arith.constant 0 : index
    %547 = vector.load %arg29[%c3_318, %c0_319, %c0_320] : memref<5x1x128xf32, #tpu.memory_space<vmem>>, vector<1x1x128xf32>
    %548 = vector.shape_cast %547 : vector<1x1x128xf32> to vector<1x128xf32>
    %549 = vector.broadcast %548 : vector<1x128xf32> to vector<16x128xf32>
    %550 = arith.mulf %546, %549 : vector<16x128xf32>
    %c3_321 = arith.constant 3 : index
    %c0_322 = arith.constant 0 : index
    %c0_323 = arith.constant 0 : index
    %551 = vector.load %arg30[%c3_321, %c0_322, %c0_323] : memref<5x1x128xf32, #tpu.memory_space<vmem>>, vector<1x1x128xf32>
    %552 = vector.shape_cast %551 : vector<1x1x128xf32> to vector<1x128xf32>
    %553 = vector.broadcast %552 : vector<1x128xf32> to vector<16x128xf32>
    %554 = arith.addf %550, %553 : vector<16x128xf32>
    %555 = vector.broadcast %0 : vector<16x1xf32> to vector<16x128xf32>
    %556 = arith.mulf %554, %555 : vector<16x128xf32>
    %557 = arith.truncf %500 : vector<8x128xf32> to vector<8x128xbf16>
    %cst_324 = arith.constant dense<0.000000e+00> : vector<16x128xf32>
    %558 = tpu.matmul %2, %557, %cst_324 {dimension_numbers = #tpu.dot_dimension_numbers<[1], [0], [0], [1], [0, 0, 1, 1], [], []>} : vector<16x8xbf16>, vector<8x128xbf16>, vector<16x128xf32> -> vector<16x128xf32>
    %559 = arith.addf %558, %556 : vector<16x128xf32>
    %c3_325 = arith.constant 3 : index
    %c0_326 = arith.constant 0 : index
    %c0_327 = arith.constant 0 : index
    %560 = vector.load %arg25[%c3_325, %c0_326, %c0_327] : memref<5x128x128xbf16, #tpu.memory_space<vmem>>, vector<1x128x128xbf16>
    %561 = vector.shape_cast %560 : vector<1x128x128xbf16> to vector<128x128xbf16>
    %c3_328 = arith.constant 3 : index
    %c0_329 = arith.constant 0 : index
    %c0_330 = arith.constant 0 : index
    %562 = vector.load %arg26[%c3_328, %c0_329, %c0_330] : memref<5x1x128xf32, #tpu.memory_space<vmem>>, vector<1x1x128xf32>
    %563 = vector.shape_cast %562 : vector<1x1x128xf32> to vector<1x128xf32>
    %c3_331 = arith.constant 3 : index
    %c0_332 = arith.constant 0 : index
    %c0_333 = arith.constant 0 : index
    %564 = vector.load %arg27[%c3_331, %c0_332, %c0_333] : memref<5x128x128xbf16, #tpu.memory_space<vmem>>, vector<1x128x128xbf16>
    %565 = vector.shape_cast %564 : vector<1x128x128xbf16> to vector<128x128xbf16>
    %c3_334 = arith.constant 3 : index
    %c0_335 = arith.constant 0 : index
    %c0_336 = arith.constant 0 : index
    %566 = vector.load %arg28[%c3_334, %c0_335, %c0_336] : memref<5x1x128xf32, #tpu.memory_space<vmem>>, vector<1x1x128xf32>
    %567 = vector.shape_cast %566 : vector<1x1x128xf32> to vector<1x128xf32>
    %568 = arith.truncf %559 : vector<16x128xf32> to vector<16x128xbf16>
    %cst_337 = arith.constant dense<0.000000e+00> : vector<16x128xf32>
    %569 = tpu.matmul %568, %561, %cst_337 {dimension_numbers = #tpu.dot_dimension_numbers<[1], [0], [0], [1], [0, 0, 1, 1], [], []>} : vector<16x128xbf16>, vector<128x128xbf16>, vector<16x128xf32> -> vector<16x128xf32>
    %570 = vector.broadcast %563 : vector<1x128xf32> to vector<16x128xf32>
    %571 = arith.addf %569, %570 : vector<16x128xf32>
    %cst_338 = arith.constant 5.000000e-01 : f32
    %572 = vector.broadcast %cst_338 : f32 to vector<16x128xf32>
    %573 = arith.mulf %572, %571 : vector<16x128xf32>
    %cst_339 = arith.constant 0.707106769 : f32
    %574 = vector.broadcast %cst_339 : f32 to vector<16x128xf32>
    %575 = arith.mulf %571, %574 : vector<16x128xf32>
    %576 = math.erf %575 : vector<16x128xf32>
    %cst_340 = arith.constant 1.000000e+00 : f32
    %577 = vector.broadcast %cst_340 : f32 to vector<16x128xf32>
    %578 = arith.addf %577, %576 : vector<16x128xf32>
    %579 = arith.mulf %573, %578 : vector<16x128xf32>
    %580 = arith.truncf %579 : vector<16x128xf32> to vector<16x128xbf16>
    %cst_341 = arith.constant dense<0.000000e+00> : vector<16x128xf32>
    %581 = tpu.matmul %580, %565, %cst_341 {dimension_numbers = #tpu.dot_dimension_numbers<[1], [0], [0], [1], [0, 0, 1, 1], [], []>} : vector<16x128xbf16>, vector<128x128xbf16>, vector<16x128xf32> -> vector<16x128xf32>
    %582 = vector.broadcast %567 : vector<1x128xf32> to vector<16x128xf32>
    %583 = arith.addf %581, %582 : vector<16x128xf32>
    %584 = arith.addf %583, %556 : vector<16x128xf32>
    %585 = vector.broadcast %0 : vector<16x1xf32> to vector<16x128xf32>
    %586 = arith.mulf %584, %585 : vector<16x128xf32>
    %587 = arith.truncf %586 : vector<16x128xf32> to vector<16x128xbf16>
    %cst_342 = arith.constant dense<0.000000e+00> : vector<24x128xf32>
    %588 = tpu.matmul %1, %587, %cst_342 {dimension_numbers = #tpu.dot_dimension_numbers<[1], [0], [0], [1], [0, 0, 1, 1], [], []>} : vector<24x16xbf16>, vector<16x128xbf16>, vector<24x128xf32> -> vector<24x128xf32>
    %589 = vector.extract_strided_slice %588 {offsets = [0, 0], sizes = [8, 128], strides = [1, 1]} : vector<24x128xf32> to vector<8x128xf32>
    %590 = vector.extract_strided_slice %588 {offsets = [8, 0], sizes = [16, 128], strides = [1, 1]} : vector<24x128xf32> to vector<16x128xf32>
    %c4 = arith.constant 4 : index
    %c0_343 = arith.constant 0 : index
    %c0_344 = arith.constant 0 : index
    %591 = vector.load %arg13[%c4, %c0_343, %c0_344] : memref<5x128x128xbf16, #tpu.memory_space<vmem>>, vector<1x128x128xbf16>
    %592 = vector.shape_cast %591 : vector<1x128x128xbf16> to vector<128x128xbf16>
    %c4_345 = arith.constant 4 : index
    %c0_346 = arith.constant 0 : index
    %c0_347 = arith.constant 0 : index
    %593 = vector.load %arg14[%c4_345, %c0_346, %c0_347] : memref<5x1x128xf32, #tpu.memory_space<vmem>>, vector<1x1x128xf32>
    %594 = vector.shape_cast %593 : vector<1x1x128xf32> to vector<1x128xf32>
    %c4_348 = arith.constant 4 : index
    %c0_349 = arith.constant 0 : index
    %c0_350 = arith.constant 0 : index
    %595 = vector.load %arg15[%c4_348, %c0_349, %c0_350] : memref<5x128x128xbf16, #tpu.memory_space<vmem>>, vector<1x128x128xbf16>
    %596 = vector.shape_cast %595 : vector<1x128x128xbf16> to vector<128x128xbf16>
    %c4_351 = arith.constant 4 : index
    %c0_352 = arith.constant 0 : index
    %c0_353 = arith.constant 0 : index
    %597 = vector.load %arg16[%c4_351, %c0_352, %c0_353] : memref<5x1x128xf32, #tpu.memory_space<vmem>>, vector<1x1x128xf32>
    %598 = vector.shape_cast %597 : vector<1x1x128xf32> to vector<1x128xf32>
    %599 = arith.truncf %589 : vector<8x128xf32> to vector<8x128xbf16>
    %cst_354 = arith.constant dense<0.000000e+00> : vector<8x128xf32>
    %600 = tpu.matmul %599, %592, %cst_354 {dimension_numbers = #tpu.dot_dimension_numbers<[1], [0], [0], [1], [0, 0, 1, 1], [], []>} : vector<8x128xbf16>, vector<128x128xbf16>, vector<8x128xf32> -> vector<8x128xf32>
    %601 = vector.broadcast %594 : vector<1x128xf32> to vector<8x128xf32>
    %602 = arith.addf %600, %601 : vector<8x128xf32>
    %cst_355 = arith.constant 5.000000e-01 : f32
    %603 = vector.broadcast %cst_355 : f32 to vector<8x128xf32>
    %604 = arith.mulf %603, %602 : vector<8x128xf32>
    %cst_356 = arith.constant 0.707106769 : f32
    %605 = vector.broadcast %cst_356 : f32 to vector<8x128xf32>
    %606 = arith.mulf %602, %605 : vector<8x128xf32>
    %607 = math.erf %606 : vector<8x128xf32>
    %cst_357 = arith.constant 1.000000e+00 : f32
    %608 = vector.broadcast %cst_357 : f32 to vector<8x128xf32>
    %609 = arith.addf %608, %607 : vector<8x128xf32>
    %610 = arith.mulf %604, %609 : vector<8x128xf32>
    %611 = arith.truncf %610 : vector<8x128xf32> to vector<8x128xbf16>
    %cst_358 = arith.constant dense<0.000000e+00> : vector<8x128xf32>
    %612 = tpu.matmul %611, %596, %cst_358 {dimension_numbers = #tpu.dot_dimension_numbers<[1], [0], [0], [1], [0, 0, 1, 1], [], []>} : vector<8x128xbf16>, vector<128x128xbf16>, vector<8x128xf32> -> vector<8x128xf32>
    %613 = vector.broadcast %598 : vector<1x128xf32> to vector<8x128xf32>
    %614 = arith.addf %612, %613 : vector<8x128xf32>
    %615 = vector.broadcast %3 : vector<1x128xf32> to vector<8x128xf32>
    %616 = arith.addf %615, %614 : vector<8x128xf32>
    %c4_359 = arith.constant 4 : index
    %c0_360 = arith.constant 0 : index
    %c0_361 = arith.constant 0 : index
    %617 = vector.load %arg17[%c4_359, %c0_360, %c0_361] : memref<5x128x128xbf16, #tpu.memory_space<vmem>>, vector<1x128x128xbf16>
    %618 = vector.shape_cast %617 : vector<1x128x128xbf16> to vector<128x128xbf16>
    %c4_362 = arith.constant 4 : index
    %c0_363 = arith.constant 0 : index
    %c0_364 = arith.constant 0 : index
    %619 = vector.load %arg18[%c4_362, %c0_363, %c0_364] : memref<5x1x128xf32, #tpu.memory_space<vmem>>, vector<1x1x128xf32>
    %620 = vector.shape_cast %619 : vector<1x1x128xf32> to vector<1x128xf32>
    %c4_365 = arith.constant 4 : index
    %c0_366 = arith.constant 0 : index
    %c0_367 = arith.constant 0 : index
    %621 = vector.load %arg19[%c4_365, %c0_366, %c0_367] : memref<5x128x128xbf16, #tpu.memory_space<vmem>>, vector<1x128x128xbf16>
    %622 = vector.shape_cast %621 : vector<1x128x128xbf16> to vector<128x128xbf16>
    %c4_368 = arith.constant 4 : index
    %c0_369 = arith.constant 0 : index
    %c0_370 = arith.constant 0 : index
    %623 = vector.load %arg20[%c4_368, %c0_369, %c0_370] : memref<5x1x128xf32, #tpu.memory_space<vmem>>, vector<1x1x128xf32>
    %624 = vector.shape_cast %623 : vector<1x1x128xf32> to vector<1x128xf32>
    %625 = arith.truncf %616 : vector<8x128xf32> to vector<8x128xbf16>
    %cst_371 = arith.constant dense<0.000000e+00> : vector<8x128xf32>
    %626 = tpu.matmul %625, %618, %cst_371 {dimension_numbers = #tpu.dot_dimension_numbers<[1], [0], [0], [1], [0, 0, 1, 1], [], []>} : vector<8x128xbf16>, vector<128x128xbf16>, vector<8x128xf32> -> vector<8x128xf32>
    %627 = vector.broadcast %620 : vector<1x128xf32> to vector<8x128xf32>
    %628 = arith.addf %626, %627 : vector<8x128xf32>
    %cst_372 = arith.constant 5.000000e-01 : f32
    %629 = vector.broadcast %cst_372 : f32 to vector<8x128xf32>
    %630 = arith.mulf %629, %628 : vector<8x128xf32>
    %cst_373 = arith.constant 0.707106769 : f32
    %631 = vector.broadcast %cst_373 : f32 to vector<8x128xf32>
    %632 = arith.mulf %628, %631 : vector<8x128xf32>
    %633 = math.erf %632 : vector<8x128xf32>
    %cst_374 = arith.constant 1.000000e+00 : f32
    %634 = vector.broadcast %cst_374 : f32 to vector<8x128xf32>
    %635 = arith.addf %634, %633 : vector<8x128xf32>
    %636 = arith.mulf %630, %635 : vector<8x128xf32>
    %637 = arith.truncf %636 : vector<8x128xf32> to vector<8x128xbf16>
    %cst_375 = arith.constant dense<0.000000e+00> : vector<8x128xf32>
    %638 = tpu.matmul %637, %622, %cst_375 {dimension_numbers = #tpu.dot_dimension_numbers<[1], [0], [0], [1], [0, 0, 1, 1], [], []>} : vector<8x128xbf16>, vector<128x128xbf16>, vector<8x128xf32> -> vector<8x128xf32>
    %639 = vector.broadcast %624 : vector<1x128xf32> to vector<8x128xf32>
    %640 = arith.addf %638, %639 : vector<8x128xf32>
    %641 = arith.addf %586, %590 : vector<16x128xf32>
    %c4_376 = arith.constant 4 : index
    %c0_377 = arith.constant 0 : index
    %c0_378 = arith.constant 0 : index
    %642 = vector.load %arg21[%c4_376, %c0_377, %c0_378] : memref<5x128x128xbf16, #tpu.memory_space<vmem>>, vector<1x128x128xbf16>
    %643 = vector.shape_cast %642 : vector<1x128x128xbf16> to vector<128x128xbf16>
    %c4_379 = arith.constant 4 : index
    %c0_380 = arith.constant 0 : index
    %c0_381 = arith.constant 0 : index
    %644 = vector.load %arg22[%c4_379, %c0_380, %c0_381] : memref<5x1x128xf32, #tpu.memory_space<vmem>>, vector<1x1x128xf32>
    %645 = vector.shape_cast %644 : vector<1x1x128xf32> to vector<1x128xf32>
    %c4_382 = arith.constant 4 : index
    %c0_383 = arith.constant 0 : index
    %c0_384 = arith.constant 0 : index
    %646 = vector.load %arg23[%c4_382, %c0_383, %c0_384] : memref<5x128x128xbf16, #tpu.memory_space<vmem>>, vector<1x128x128xbf16>
    %647 = vector.shape_cast %646 : vector<1x128x128xbf16> to vector<128x128xbf16>
    %c4_385 = arith.constant 4 : index
    %c0_386 = arith.constant 0 : index
    %c0_387 = arith.constant 0 : index
    %648 = vector.load %arg24[%c4_385, %c0_386, %c0_387] : memref<5x1x128xf32, #tpu.memory_space<vmem>>, vector<1x1x128xf32>
    %649 = vector.shape_cast %648 : vector<1x1x128xf32> to vector<1x128xf32>
    %650 = arith.truncf %641 : vector<16x128xf32> to vector<16x128xbf16>
    %cst_388 = arith.constant dense<0.000000e+00> : vector<16x128xf32>
    %651 = tpu.matmul %650, %643, %cst_388 {dimension_numbers = #tpu.dot_dimension_numbers<[1], [0], [0], [1], [0, 0, 1, 1], [], []>} : vector<16x128xbf16>, vector<128x128xbf16>, vector<16x128xf32> -> vector<16x128xf32>
    %652 = vector.broadcast %645 : vector<1x128xf32> to vector<16x128xf32>
    %653 = arith.addf %651, %652 : vector<16x128xf32>
    %cst_389 = arith.constant 5.000000e-01 : f32
    %654 = vector.broadcast %cst_389 : f32 to vector<16x128xf32>
    %655 = arith.mulf %654, %653 : vector<16x128xf32>
    %cst_390 = arith.constant 0.707106769 : f32
    %656 = vector.broadcast %cst_390 : f32 to vector<16x128xf32>
    %657 = arith.mulf %653, %656 : vector<16x128xf32>
    %658 = math.erf %657 : vector<16x128xf32>
    %cst_391 = arith.constant 1.000000e+00 : f32
    %659 = vector.broadcast %cst_391 : f32 to vector<16x128xf32>
    %660 = arith.addf %659, %658 : vector<16x128xf32>
    %661 = arith.mulf %655, %660 : vector<16x128xf32>
    %662 = arith.truncf %661 : vector<16x128xf32> to vector<16x128xbf16>
    %cst_392 = arith.constant dense<0.000000e+00> : vector<16x128xf32>
    %663 = tpu.matmul %662, %647, %cst_392 {dimension_numbers = #tpu.dot_dimension_numbers<[1], [0], [0], [1], [0, 0, 1, 1], [], []>} : vector<16x128xbf16>, vector<128x128xbf16>, vector<16x128xf32> -> vector<16x128xf32>
    %664 = vector.broadcast %649 : vector<1x128xf32> to vector<16x128xf32>
    %665 = arith.addf %663, %664 : vector<16x128xf32>
    %666 = arith.addf %665, %586 : vector<16x128xf32>
    %667 = vector.broadcast %0 : vector<16x1xf32> to vector<16x128xf32>
    %668 = arith.mulf %666, %667 : vector<16x128xf32>
    %cst_393 = arith.constant dense<0.000000e+00> : vector<128xf32>
    %669 = vector.multi_reduction <add>, %668, %cst_393 [0] : vector<16x128xf32> to vector<128xf32>
    %670 = vector.shape_cast %669 : vector<128xf32> to vector<1x128xf32>
    %cst_394 = arith.constant 6.250000e-02 : f32
    %671 = vector.broadcast %cst_394 : f32 to vector<1x128xf32>
    %672 = arith.mulf %670, %671 : vector<1x128xf32>
    %673 = vector.broadcast %672 : vector<1x128xf32> to vector<16x128xf32>
    %674 = arith.subf %668, %673 : vector<16x128xf32>
    %675 = arith.mulf %674, %674 : vector<16x128xf32>
    %676 = vector.broadcast %0 : vector<16x1xf32> to vector<16x128xf32>
    %677 = arith.mulf %675, %676 : vector<16x128xf32>
    %cst_395 = arith.constant dense<0.000000e+00> : vector<128xf32>
    %678 = vector.multi_reduction <add>, %677, %cst_395 [0] : vector<16x128xf32> to vector<128xf32>
    %679 = vector.shape_cast %678 : vector<128xf32> to vector<1x128xf32>
    %cst_396 = arith.constant 6.250000e-02 : f32
    %680 = vector.broadcast %cst_396 : f32 to vector<1x128xf32>
    %681 = arith.mulf %679, %680 : vector<1x128xf32>
    %cst_397 = arith.constant 9.99999974E-6 : f32
    %682 = vector.broadcast %cst_397 : f32 to vector<1x128xf32>
    %683 = arith.addf %681, %682 : vector<1x128xf32>
    %684 = math.rsqrt %683 : vector<1x128xf32>
    %685 = vector.broadcast %684 : vector<1x128xf32> to vector<16x128xf32>
    %686 = arith.mulf %674, %685 : vector<16x128xf32>
    %c4_398 = arith.constant 4 : index
    %c0_399 = arith.constant 0 : index
    %c0_400 = arith.constant 0 : index
    %687 = vector.load %arg29[%c4_398, %c0_399, %c0_400] : memref<5x1x128xf32, #tpu.memory_space<vmem>>, vector<1x1x128xf32>
    %688 = vector.shape_cast %687 : vector<1x1x128xf32> to vector<1x128xf32>
    %689 = vector.broadcast %688 : vector<1x128xf32> to vector<16x128xf32>
    %690 = arith.mulf %686, %689 : vector<16x128xf32>
    %c4_401 = arith.constant 4 : index
    %c0_402 = arith.constant 0 : index
    %c0_403 = arith.constant 0 : index
    %691 = vector.load %arg30[%c4_401, %c0_402, %c0_403] : memref<5x1x128xf32, #tpu.memory_space<vmem>>, vector<1x1x128xf32>
    %692 = vector.shape_cast %691 : vector<1x1x128xf32> to vector<1x128xf32>
    %693 = vector.broadcast %692 : vector<1x128xf32> to vector<16x128xf32>
    %694 = arith.addf %690, %693 : vector<16x128xf32>
    %695 = vector.broadcast %0 : vector<16x1xf32> to vector<16x128xf32>
    %696 = arith.mulf %694, %695 : vector<16x128xf32>
    %697 = arith.truncf %640 : vector<8x128xf32> to vector<8x128xbf16>
    %cst_404 = arith.constant dense<0.000000e+00> : vector<16x128xf32>
    %698 = tpu.matmul %2, %697, %cst_404 {dimension_numbers = #tpu.dot_dimension_numbers<[1], [0], [0], [1], [0, 0, 1, 1], [], []>} : vector<16x8xbf16>, vector<8x128xbf16>, vector<16x128xf32> -> vector<16x128xf32>
    %699 = arith.addf %698, %696 : vector<16x128xf32>
    %c4_405 = arith.constant 4 : index
    %c0_406 = arith.constant 0 : index
    %c0_407 = arith.constant 0 : index
    %700 = vector.load %arg25[%c4_405, %c0_406, %c0_407] : memref<5x128x128xbf16, #tpu.memory_space<vmem>>, vector<1x128x128xbf16>
    %701 = vector.shape_cast %700 : vector<1x128x128xbf16> to vector<128x128xbf16>
    %c4_408 = arith.constant 4 : index
    %c0_409 = arith.constant 0 : index
    %c0_410 = arith.constant 0 : index
    %702 = vector.load %arg26[%c4_408, %c0_409, %c0_410] : memref<5x1x128xf32, #tpu.memory_space<vmem>>, vector<1x1x128xf32>
    %703 = vector.shape_cast %702 : vector<1x1x128xf32> to vector<1x128xf32>
    %c4_411 = arith.constant 4 : index
    %c0_412 = arith.constant 0 : index
    %c0_413 = arith.constant 0 : index
    %704 = vector.load %arg27[%c4_411, %c0_412, %c0_413] : memref<5x128x128xbf16, #tpu.memory_space<vmem>>, vector<1x128x128xbf16>
    %705 = vector.shape_cast %704 : vector<1x128x128xbf16> to vector<128x128xbf16>
    %c4_414 = arith.constant 4 : index
    %c0_415 = arith.constant 0 : index
    %c0_416 = arith.constant 0 : index
    %706 = vector.load %arg28[%c4_414, %c0_415, %c0_416] : memref<5x1x128xf32, #tpu.memory_space<vmem>>, vector<1x1x128xf32>
    %707 = vector.shape_cast %706 : vector<1x1x128xf32> to vector<1x128xf32>
    %708 = arith.truncf %699 : vector<16x128xf32> to vector<16x128xbf16>
    %cst_417 = arith.constant dense<0.000000e+00> : vector<16x128xf32>
    %709 = tpu.matmul %708, %701, %cst_417 {dimension_numbers = #tpu.dot_dimension_numbers<[1], [0], [0], [1], [0, 0, 1, 1], [], []>} : vector<16x128xbf16>, vector<128x128xbf16>, vector<16x128xf32> -> vector<16x128xf32>
    %710 = vector.broadcast %703 : vector<1x128xf32> to vector<16x128xf32>
    %711 = arith.addf %709, %710 : vector<16x128xf32>
    %cst_418 = arith.constant 5.000000e-01 : f32
    %712 = vector.broadcast %cst_418 : f32 to vector<16x128xf32>
    %713 = arith.mulf %712, %711 : vector<16x128xf32>
    %cst_419 = arith.constant 0.707106769 : f32
    %714 = vector.broadcast %cst_419 : f32 to vector<16x128xf32>
    %715 = arith.mulf %711, %714 : vector<16x128xf32>
    %716 = math.erf %715 : vector<16x128xf32>
    %cst_420 = arith.constant 1.000000e+00 : f32
    %717 = vector.broadcast %cst_420 : f32 to vector<16x128xf32>
    %718 = arith.addf %717, %716 : vector<16x128xf32>
    %719 = arith.mulf %713, %718 : vector<16x128xf32>
    %720 = arith.truncf %719 : vector<16x128xf32> to vector<16x128xbf16>
    %cst_421 = arith.constant dense<0.000000e+00> : vector<16x128xf32>
    %721 = tpu.matmul %720, %705, %cst_421 {dimension_numbers = #tpu.dot_dimension_numbers<[1], [0], [0], [1], [0, 0, 1, 1], [], []>} : vector<16x128xbf16>, vector<128x128xbf16>, vector<16x128xf32> -> vector<16x128xf32>
    %722 = vector.broadcast %707 : vector<1x128xf32> to vector<16x128xf32>
    %723 = arith.addf %721, %722 : vector<16x128xf32>
    %724 = arith.addf %723, %696 : vector<16x128xf32>
    %725 = vector.broadcast %0 : vector<16x1xf32> to vector<16x128xf32>
    %726 = arith.mulf %724, %725 : vector<16x128xf32>
    %727 = arith.truncf %726 : vector<16x128xf32> to vector<16x128xbf16>
    %cst_422 = arith.constant dense<0.000000e+00> : vector<24x128xf32>
    %728 = tpu.matmul %1, %727, %cst_422 {dimension_numbers = #tpu.dot_dimension_numbers<[1], [0], [0], [1], [0, 0, 1, 1], [], []>} : vector<24x16xbf16>, vector<16x128xbf16>, vector<24x128xf32> -> vector<24x128xf32>
    %729 = vector.extract_strided_slice %728 {offsets = [0, 0], sizes = [8, 128], strides = [1, 1]} : vector<24x128xf32> to vector<8x128xf32>
    %c0_423 = arith.constant 0 : index
    %c0_424 = arith.constant 0 : index
    %730 = vector.load %arg9[%c0_423, %c0_424] : memref<128x128xbf16, #tpu.memory_space<vmem>>, vector<128x128xbf16>
    %c0_425 = arith.constant 0 : index
    %c0_426 = arith.constant 0 : index
    %731 = vector.load %arg10[%c0_425, %c0_426] : memref<1x128xf32, #tpu.memory_space<vmem>>, vector<1x128xf32>
    %c0_427 = arith.constant 0 : index
    %c0_428 = arith.constant 0 : index
    %732 = vector.load %arg11[%c0_427, %c0_428] : memref<128x128xbf16, #tpu.memory_space<vmem>>, vector<128x128xbf16>
    %c0_429 = arith.constant 0 : index
    %c0_430 = arith.constant 0 : index
    %733 = vector.load %arg12[%c0_429, %c0_430] : memref<1x128xf32, #tpu.memory_space<vmem>>, vector<1x128xf32>
    %734 = arith.truncf %729 : vector<8x128xf32> to vector<8x128xbf16>
    %cst_431 = arith.constant dense<0.000000e+00> : vector<8x128xf32>
    %735 = tpu.matmul %734, %730, %cst_431 {dimension_numbers = #tpu.dot_dimension_numbers<[1], [0], [0], [1], [0, 0, 1, 1], [], []>} : vector<8x128xbf16>, vector<128x128xbf16>, vector<8x128xf32> -> vector<8x128xf32>
    %736 = vector.broadcast %731 : vector<1x128xf32> to vector<8x128xf32>
    %737 = arith.addf %735, %736 : vector<8x128xf32>
    %cst_432 = arith.constant 5.000000e-01 : f32
    %738 = vector.broadcast %cst_432 : f32 to vector<8x128xf32>
    %739 = arith.mulf %738, %737 : vector<8x128xf32>
    %cst_433 = arith.constant 0.707106769 : f32
    %740 = vector.broadcast %cst_433 : f32 to vector<8x128xf32>
    %741 = arith.mulf %737, %740 : vector<8x128xf32>
    %742 = math.erf %741 : vector<8x128xf32>
    %cst_434 = arith.constant 1.000000e+00 : f32
    %743 = vector.broadcast %cst_434 : f32 to vector<8x128xf32>
    %744 = arith.addf %743, %742 : vector<8x128xf32>
    %745 = arith.mulf %739, %744 : vector<8x128xf32>
    %746 = arith.truncf %745 : vector<8x128xf32> to vector<8x128xbf16>
    %cst_435 = arith.constant dense<0.000000e+00> : vector<8x128xf32>
    %747 = tpu.matmul %746, %732, %cst_435 {dimension_numbers = #tpu.dot_dimension_numbers<[1], [0], [0], [1], [0, 0, 1, 1], [], []>} : vector<8x128xbf16>, vector<128x128xbf16>, vector<8x128xf32> -> vector<8x128xf32>
    %748 = vector.broadcast %733 : vector<1x128xf32> to vector<8x128xf32>
    %749 = arith.addf %747, %748 : vector<8x128xf32>
    %c0_436 = arith.constant 0 : index
    %c0_437 = arith.constant 0 : index
    %750 = vector.load %arg31[%c0_436, %c0_437] : memref<8x128xf32, #tpu.memory_space<vmem>>, vector<8x128xf32>
    tpu.vector_store %arg31[%c0_436, %c0_437], %749 {strides = array<i32>} : memref<8x128xf32, #tpu.memory_space<vmem>>, vector<8x128xf32>,
    return
  }
}

</mosaic_0001>

<llo_original>
// kernel: gin_vn_forward.1
$region0: #{gin_vn_forward.1}
  #allocation0 [shape = 'u32[]', space=smem, size = 0x4, offset = 0x4, fixed_abs, tag = 'smem constant byte address 0x4 - core index']
  #allocation1 [shape = 'u32[144,128]{1,0:T(1,128)}', space=vmem, size = 0x12000, scoped, tag = 'internal scratch']
  %s0 = inlined_call_operand.smem [shape: u32[32], index: -1, kind: input, shape index: {}]
  %s1 = sld [smem:[%s0]]
  %s2 = scalar_lea.smem %s0, 1
  %s3 = sld [smem:[%s2]]
  %s4 = scalar_lea.smem %s0, 2
  %s5 = sld [smem:[%s4]]
  %s6 = scalar_lea.smem %s0, 3
  %s7 = sld [smem:[%s6]]
  %s8 = scalar_lea.smem %s0, 4
  %s9 = sld [smem:[%s8]]
  %s10 = scalar_lea.smem %s0, 5
  %s11 = sld [smem:[%s10]]
  %s12 = scalar_lea.smem %s0, 6
  %s13 = sld [smem:[%s12]]
  %s14 = scalar_lea.smem %s0, 7
  %s15 = sld [smem:[%s14]]
  %s16 = scalar_lea.smem %s0, 8
  %s17 = sld [smem:[%s16]]
  %s18 = scalar_lea.smem %s0, 9
  %s19 = sld [smem:[%s18]]
  %s20 = scalar_lea.smem %s0, 10
  %s21 = sld [smem:[%s20]]
  %s22 = scalar_lea.smem %s0, 11
  %s23 = sld [smem:[%s22]]
  %s24 = scalar_lea.smem %s0, 12
  %s25 = sld [smem:[%s24]]
  %s26 = scalar_lea.smem %s0, 13
  %s27 = sld [smem:[%s26]]
  %s28 = scalar_lea.smem %s0, 14
  %s29 = sld [smem:[%s28]]
  %s30 = scalar_lea.smem %s0, 15
  %s31 = sld [smem:[%s30]]
  %s32 = scalar_lea.smem %s0, 16
  %s33 = sld [smem:[%s32]]
  %s34 = scalar_lea.smem %s0, 17
  %s35 = sld [smem:[%s34]]
  %s36 = scalar_lea.smem %s0, 18
  %s37 = sld [smem:[%s36]]
  %s38 = scalar_lea.smem %s0, 19
  %s39 = sld [smem:[%s38]]
  %s40 = scalar_lea.smem %s0, 20
  %s41 = sld [smem:[%s40]]
  %s42 = scalar_lea.smem %s0, 21
  %s43 = sld [smem:[%s42]]
  %s44 = scalar_lea.smem %s0, 22
  %s45 = sld [smem:[%s44]]
  %s46 = scalar_lea.smem %s0, 23
  %s47 = sld [smem:[%s46]]
  %s48 = scalar_lea.smem %s0, 24
  %s49 = sld [smem:[%s48]]
  %s50 = scalar_lea.smem %s0, 25
  %s51 = sld [smem:[%s50]]
  %s52 = scalar_lea.smem %s0, 26
  %s53 = sld [smem:[%s52]]
  %s54 = scalar_lea.smem %s0, 27
  %s55 = sld [smem:[%s54]]
  %s56 = scalar_lea.smem %s0, 28
  %s57 = sld [smem:[%s56]]
  %s58 = scalar_lea.smem %s0, 29
  %s59 = sld [smem:[%s58]]
  %s60 = scalar_lea.smem %s0, 30
  %s61 = sld [smem:[%s60]]
  %s62 = scalar_lea.smem %s0, 31
  %s63 = sld [smem:[%s62]]
  %s64 = sld [smem:[#allocation0]]
  $region190: #{gin_vn_forward.1} parent=0
    _
  %s66 = ssub.s32 1, %s64
  %s67 = scalar_select 0, %s66, %s64
  $region1: #{gin_vn_forward.1} parent=0
    #allocation2 [shape = 'u8[32768]{0}', space=vmem, size = 0x8000, scoped, tag = 'input window, operand 9, single buffered']
    #allocation3 [shape = 's32[1]{0}', space=sflag, size = 0x4, scoped, tag = 'scoped memory for gin_vn_forward.1']
    #allocation4 [shape = 'u8[32768]{0}', space=vmem, size = 0x8000, scoped, tag = 'input window, operand 11, single buffered']
    #allocation5 [shape = 's32[1]{0}', space=sflag, size = 0x4, scoped, tag = 'scoped memory for gin_vn_forward.1']
    #allocation6 [shape = 'u8[163840]{0}', space=vmem, size = 0x28000, scoped, tag = 'input window, operand 13, single buffered']
    #allocation7 [shape = 'u8[163840]{0}', space=vmem, size = 0x28000, scoped, tag = 'input window, operand 15, single buffered']
    #allocation8 [shape = 's32[1]{0}', space=sflag, size = 0x4, scoped, tag = 'scoped memory for gin_vn_forward.1']
    #allocation9 [shape = 'u8[163840]{0}', space=vmem, size = 0x28000, scoped, tag = 'input window, operand 17, single buffered']
    #allocation10 [shape = 'u8[163840]{0}', space=vmem, size = 0x28000, scoped, tag = 'input window, operand 19, single buffered']
    #allocation11 [shape = 's32[1]{0}', space=sflag, size = 0x4, scoped, tag = 'scoped memory for gin_vn_forward.1']
    #allocation12 [shape = 'u8[163840]{0}', space=vmem, size = 0x28000, scoped, tag = 'input window, operand 21, single buffered']
    #allocation13 [shape = 'u8[163840]{0}', space=vmem, size = 0x28000, scoped, tag = 'input window, operand 23, single buffered']
    #allocation14 [shape = 's32[1]{0}', space=sflag, size = 0x4, scoped, tag = 'scoped memory for gin_vn_forward.1']
    #allocation15 [shape = 'u8[163840]{0}', space=vmem, size = 0x28000, scoped, tag = 'input window, operand 25, single buffered']
    #allocation16 [shape = 'u8[2560]{0}', space=vmem, size = 0xc00, scoped, tag = 'input window, operand 26, single buffered']
    #allocation17 [shape = 's32[1]{0}', space=sflag, size = 0x4, scoped, tag = 'scoped memory for gin_vn_forward.1']
    #allocation18 [shape = 'u8[163840]{0}', space=vmem, size = 0x28000, scoped, tag = 'input window, operand 27, single buffered']
    #allocation19 [shape = 'u8[2560]{0}', space=vmem, size = 0xc00, scoped, tag = 'input window, operand 28, single buffered']
    #allocation20 [shape = 's32[1]{0}', space=sflag, size = 0x4, scoped, tag = 'scoped memory for gin_vn_forward.1']
    #allocation21 [shape = 'u8[2560]{0}', space=vmem, size = 0xc00, scoped, tag = 'input window, operand 29, single buffered']
    #allocation22 [shape = 'u8[2560]{0}', space=vmem, size = 0xc00, scoped, tag = 'input window, operand 30, single buffered']
    #allocation23 [shape = 's32[1]{0}', space=sflag, size = 0x4, scoped, tag = 'scoped memory for gin_vn_forward.1']
    %68 = vsyncpa [#allocation3], 0
    %69 = vsyncpa [#allocation5], 0
    %70 = vsyncpa [#allocation8], 0
    %71 = vsyncpa [#allocation11], 0
    %72 = vsyncpa [#allocation14], 0
    %73 = vsyncpa [#allocation17], 0
    %74 = vsyncpa [#allocation20], 0
    %75 = vsyncpa [#allocation23], 0
    // Predicated region
    $region2: #{gin_vn_forward.1} parent=1 // pred_check
      _
    $region3: #{gin_vn_forward.1} parent=1 // pred_check_branch
      %77 = sbr.rel (0) target = $region5
    $region4: #{gin_vn_forward.1} parent=1 // pred_region
      _
    $region5: #{gin_vn_forward.1} parent=1 // pred_fallthru
      _
    // Predicated region
    $region6: #{gin_vn_forward.1} parent=1 // pred_check
      _
    $region7: #{gin_vn_forward.1} parent=1 // pred_check_branch
      %79 = sbr.rel (0) target = $region9
    $region8: #{gin_vn_forward.1} parent=1 // pred_region
      _
    $region9: #{gin_vn_forward.1} parent=1 // pred_fallthru
      _
    // Predicated region
    $region10: #{gin_vn_forward.1} parent=1 // pred_check
      _
    $region11: #{gin_vn_forward.1} parent=1 // pred_check_branch
      %81 = sbr.rel (0) target = $region13
    $region12: #{gin_vn_forward.1} parent=1 // pred_region
      _
    $region13: #{gin_vn_forward.1} parent=1 // pred_fallthru
      _
    // Predicated region
    $region14: #{gin_vn_forward.1} parent=1 // pred_check
      _
    $region15: #{gin_vn_forward.1} parent=1 // pred_check_branch
      %83 = sbr.rel (0) target = $region17
    $region16: #{gin_vn_forward.1} parent=1 // pred_region
      _
    $region17: #{gin_vn_forward.1} parent=1 // pred_fallthru
      _
    // Predicated region
    $region18: #{gin_vn_forward.1} parent=1 // pred_check
      _
    $region19: #{gin_vn_forward.1} parent=1 // pred_check_branch
      %85 = sbr.rel (0) target = $region21
    $region20: #{gin_vn_forward.1} parent=1 // pred_region
      _
    $region21: #{gin_vn_forward.1} parent=1 // pred_fallthru
      _
    // Predicated region
    $region22: #{gin_vn_forward.1} parent=1 // pred_check
      _
    $region23: #{gin_vn_forward.1} parent=1 // pred_check_branch
      %87 = sbr.rel (0) target = $region25
    $region24: #{gin_vn_forward.1} parent=1 // pred_region
      _
    $region25: #{gin_vn_forward.1} parent=1 // pred_fallthru
      _
    // Predicated region
    $region26: #{gin_vn_forward.1} parent=1 // pred_check
      _
    $region27: #{gin_vn_forward.1} parent=1 // pred_check_branch
      %89 = sbr.rel (0) target = $region29
    $region28: #{gin_vn_forward.1} parent=1 // pred_region
      _
    $region29: #{gin_vn_forward.1} parent=1 // pred_fallthru
      _
    // Predicated region
    $region30: #{gin_vn_forward.1} parent=1 // pred_check
      _
    $region31: #{gin_vn_forward.1} parent=1 // pred_check_branch
      %91 = sbr.rel (0) target = $region33
    $region32: #{gin_vn_forward.1} parent=1 // pred_region
      _
    $region33: #{gin_vn_forward.1} parent=1 // pred_fallthru
      _
    // Predicated region
    $region34: #{gin_vn_forward.1} parent=1 // pred_check
      _
    $region35: #{gin_vn_forward.1} parent=1 // pred_check_branch
      %93 = sbr.rel (0) target = $region37
    $region36: #{gin_vn_forward.1} parent=1 // pred_region
      _
    $region37: #{gin_vn_forward.1} parent=1 // pred_fallthru
      _
    // Predicated region
    $region38: #{gin_vn_forward.1} parent=1 // pred_check
      _
    $region39: #{gin_vn_forward.1} parent=1 // pred_check_branch
      %95 = sbr.rel (0) target = $region41
    $region40: #{gin_vn_forward.1} parent=1 // pred_region
      %s97 = ssub.s32 1024, 1024
      %98 = vsyncadd [#allocation3], %s97
      %s99 = sshll.u32 [#allocation2], 4
      %s100 = int_to_ptr.vmem [resolvable:$true] %s99
      %105 = dma.hbm_to_vmem [thread:$0]  %s19, 1024, %s100, [#allocation3], 64, 64, 4
    $region41: #{gin_vn_forward.1} parent=1 // pred_fallthru
      _
    // Predicated region
    $region42: #{gin_vn_forward.1} parent=1 // pred_check
      _
    $region43: #{gin_vn_forward.1} parent=1 // pred_check_branch
      %107 = sbr.rel (0) target = $region45
    $region44: #{gin_vn_forward.1} parent=1 // pred_region
      _
    $region45: #{gin_vn_forward.1} parent=1 // pred_fallthru
      _
    // Predicated region
    $region46: #{gin_vn_forward.1} parent=1 // pred_check
      _
    $region47: #{gin_vn_forward.1} parent=1 // pred_check_branch
      %109 = sbr.rel (0) target = $region49
    $region48: #{gin_vn_forward.1} parent=1 // pred_region
      %s111 = ssub.s32 1024, 1024
      %112 = vsyncadd [#allocation5], %s111
      %s113 = sshll.u32 [#allocation4], 4
      %s114 = int_to_ptr.vmem [resolvable:$true] %s113
      %119 = dma.hbm_to_vmem [thread:$0]  %s23, 1024, %s114, [#allocation5], 64, 64, 4
    $region49: #{gin_vn_forward.1} parent=1 // pred_fallthru
      _
    // Predicated region
    $region50: #{gin_vn_forward.1} parent=1 // pred_check
      _
    $region51: #{gin_vn_forward.1} parent=1 // pred_check_branch
      %121 = sbr.rel (0) target = $region53
    $region52: #{gin_vn_forward.1} parent=1 // pred_region
      _
    $region53: #{gin_vn_forward.1} parent=1 // pred_fallthru
      _
    // Predicated region
    $region54: #{gin_vn_forward.1} parent=1 // pred_check
      _
    $region55: #{gin_vn_forward.1} parent=1 // pred_check_branch
      %123 = sbr.rel (0) target = $region57
    $region56: #{gin_vn_forward.1} parent=1 // pred_region
      %s125 = ssub.s32 5120, 5120
      %126 = vsyncadd [#allocation5], %s125
      %s127 = sshll.u32 [#allocation6], 4
      %s128 = int_to_ptr.vmem [resolvable:$true] %s127
      %133 = dma.hbm_to_vmem [thread:$0]  %s27, 5120, %s128, [#allocation5], 64, 64, 4
    $region57: #{gin_vn_forward.1} parent=1 // pred_fallthru
      _
    // Predicated region
    $region58: #{gin_vn_forward.1} parent=1 // pred_check
      _
    $region59: #{gin_vn_forward.1} parent=1 // pred_check_branch
      %135 = sbr.rel (0) target = $region61
    $region60: #{gin_vn_forward.1} parent=1 // pred_region
      _
    $region61: #{gin_vn_forward.1} parent=1 // pred_fallthru
      _
    // Predicated region
    $region62: #{gin_vn_forward.1} parent=1 // pred_check
      _
    $region63: #{gin_vn_forward.1} parent=1 // pred_check_branch
      %137 = sbr.rel (0) target = $region65
    $region64: #{gin_vn_forward.1} parent=1 // pred_region
      %s139 = ssub.s32 5120, 5120
      %140 = vsyncadd [#allocation8], %s139
      %s141 = sshll.u32 [#allocation7], 4
      %s142 = int_to_ptr.vmem [resolvable:$true] %s141
      %147 = dma.hbm_to_vmem [thread:$0]  %s31, 5120, %s142, [#allocation8], 64, 64, 4
    $region65: #{gin_vn_forward.1} parent=1 // pred_fallthru
      _
    // Predicated region
    $region66: #{gin_vn_forward.1} parent=1 // pred_check
      _
    $region67: #{gin_vn_forward.1} parent=1 // pred_check_branch
      %149 = sbr.rel (0) target = $region69
    $region68: #{gin_vn_forward.1} parent=1 // pred_region
      _
    $region69: #{gin_vn_forward.1} parent=1 // pred_fallthru
      _
    // Predicated region
    $region70: #{gin_vn_forward.1} parent=1 // pred_check
      _
    $region71: #{gin_vn_forward.1} parent=1 // pred_check_branch
      %151 = sbr.rel (0) target = $region73
    $region72: #{gin_vn_forward.1} parent=1 // pred_region
      %s153 = ssub.s32 5120, 5120
      %154 = vsyncadd [#allocation8], %s153
      %s155 = sshll.u32 [#allocation9], 4
      %s156 = int_to_ptr.vmem [resolvable:$true] %s155
      %161 = dma.hbm_to_vmem [thread:$0]  %s35, 5120, %s156, [#allocation8], 64, 64, 4
    $region73: #{gin_vn_forward.1} parent=1 // pred_fallthru
      _
    // Predicated region
    $region74: #{gin_vn_forward.1} parent=1 // pred_check
      _
    $region75: #{gin_vn_forward.1} parent=1 // pred_check_branch
      %163 = sbr.rel (0) target = $region77
    $region76: #{gin_vn_forward.1} parent=1 // pred_region
      _
    $region77: #{gin_vn_forward.1} parent=1 // pred_fallthru
      _
    // Predicated region
    $region78: #{gin_vn_forward.1} parent=1 // pred_check
      _
    $region79: #{gin_vn_forward.1} parent=1 // pred_check_branch
      %165 = sbr.rel (0) target = $region81
    $region80: #{gin_vn_forward.1} parent=1 // pred_region
      %s167 = ssub.s32 5120, 5120
      %168 = vsyncadd [#allocation11], %s167
      %s169 = sshll.u32 [#allocation10], 4
      %s170 = int_to_ptr.vmem [resolvable:$true] %s169
      %175 = dma.hbm_to_vmem [thread:$0]  %s39, 5120, %s170, [#allocation11], 64, 64, 4
    $region81: #{gin_vn_forward.1} parent=1 // pred_fallthru
      _
    // Predicated region
    $region82: #{gin_vn_forward.1} parent=1 // pred_check
      _
    $region83: #{gin_vn_forward.1} parent=1 // pred_check_branch
      %177 = sbr.rel (0) target = $region85
    $region84: #{gin_vn_forward.1} parent=1 // pred_region
      _
    $region85: #{gin_vn_forward.1} parent=1 // pred_fallthru
      _
    // Predicated region
    $region86: #{gin_vn_forward.1} parent=1 // pred_check
      _
    $region87: #{gin_vn_forward.1} parent=1 // pred_check_branch
      %179 = sbr.rel (0) target = $region89
    $region88: #{gin_vn_forward.1} parent=1 // pred_region
      %s181 = ssub.s32 5120, 5120
      %182 = vsyncadd [#allocation11], %s181
      %s183 = sshll.u32 [#allocation12], 4
      %s184 = int_to_ptr.vmem [resolvable:$true] %s183
      %189 = dma.hbm_to_vmem [thread:$0]  %s43, 5120, %s184, [#allocation11], 64, 64, 4
    $region89: #{gin_vn_forward.1} parent=1 // pred_fallthru
      _
    // Predicated region
    $region90: #{gin_vn_forward.1} parent=1 // pred_check
      _
    $region91: #{gin_vn_forward.1} parent=1 // pred_check_branch
      %191 = sbr.rel (0) target = $region93
    $region92: #{gin_vn_forward.1} parent=1 // pred_region
      _
    $region93: #{gin_vn_forward.1} parent=1 // pred_fallthru
      _
    // Predicated region
    $region94: #{gin_vn_forward.1} parent=1 // pred_check
      _
    $region95: #{gin_vn_forward.1} parent=1 // pred_check_branch
      %193 = sbr.rel (0) target = $region97
    $region96: #{gin_vn_forward.1} parent=1 // pred_region
      %s195 = ssub.s32 5120, 5120
      %196 = vsyncadd [#allocation14], %s195
      %s197 = sshll.u32 [#allocation13], 4
      %s198 = int_to_ptr.vmem [resolvable:$true] %s197
      %203 = dma.hbm_to_vmem [thread:$0]  %s47, 5120, %s198, [#allocation14], 64, 64, 4
    $region97: #{gin_vn_forward.1} parent=1 // pred_fallthru
      _
    // Predicated region
    $region98: #{gin_vn_forward.1} parent=1 // pred_check
      _
    $region99: #{gin_vn_forward.1} parent=1 // pred_check_branch
      %205 = sbr.rel (0) target = $region101
    $region100: #{gin_vn_forward.1} parent=1 // pred_region
      _
    $region101: #{gin_vn_forward.1} parent=1 // pred_fallthru
      _
    // Predicated region
    $region102: #{gin_vn_forward.1} parent=1 // pred_check
      _
    $region103: #{gin_vn_forward.1} parent=1 // pred_check_branch
      %207 = sbr.rel (0) target = $region105
    $region104: #{gin_vn_forward.1} parent=1 // pred_region
      %s209 = ssub.s32 5120, 5120
      %210 = vsyncadd [#allocation14], %s209
      %s211 = sshll.u32 [#allocation15], 4
      %s212 = int_to_ptr.vmem [resolvable:$true] %s211
      %217 = dma.hbm_to_vmem [thread:$0]  %s51, 5120, %s212, [#allocation14], 64, 64, 4
    $region105: #{gin_vn_forward.1} parent=1 // pred_fallthru
      _
    // Predicated region
    $region106: #{gin_vn_forward.1} parent=1 // pred_check
      _
    $region107: #{gin_vn_forward.1} parent=1 // pred_check_branch
      %219 = sbr.rel (0) target = $region109
    $region108: #{gin_vn_forward.1} parent=1 // pred_region
      %s221 = ssub.s32 80, 80
      %222 = vsyncadd [#allocation17], %s221
      %s223 = sshll.u32 [#allocation16], 4
      %s224 = int_to_ptr.vmem [resolvable:$true] %s223
      %229 = dma.hbm_to_vmem [thread:$0]  %s53, 80, %s224, [#allocation17], 16, 16, 1
    $region109: #{gin_vn_forward.1} parent=1 // pred_fallthru
      _
    // Predicated region
    $region110: #{gin_vn_forward.1} parent=1 // pred_check
      _
    $region111: #{gin_vn_forward.1} parent=1 // pred_check_branch
      %231 = sbr.rel (0) target = $region113
    $region112: #{gin_vn_forward.1} parent=1 // pred_region
      %s233 = ssub.s32 5120, 5120
      %234 = vsyncadd [#allocation17], %s233
      %s235 = sshll.u32 [#allocation18], 4
      %s236 = int_to_ptr.vmem [resolvable:$true] %s235
      %241 = dma.hbm_to_vmem [thread:$0]  %s55, 5120, %s236, [#allocation17], 64, 64, 4
    $region113: #{gin_vn_forward.1} parent=1 // pred_fallthru
      _
    // Predicated region
    $region114: #{gin_vn_forward.1} parent=1 // pred_check
      _
    $region115: #{gin_vn_forward.1} parent=1 // pred_check_branch
      %243 = sbr.rel (0) target = $region117
    $region116: #{gin_vn_forward.1} parent=1 // pred_region
      %s245 = ssub.s32 80, 80
      %246 = vsyncadd [#allocation20], %s245
      %s247 = sshll.u32 [#allocation19], 4
      %s248 = int_to_ptr.vmem [resolvable:$true] %s247
      %253 = dma.hbm_to_vmem [thread:$0]  %s57, 80, %s248, [#allocation20], 16, 16, 1
    $region117: #{gin_vn_forward.1} parent=1 // pred_fallthru
      _
    // Predicated region
    $region118: #{gin_vn_forward.1} parent=1 // pred_check
      _
    $region119: #{gin_vn_forward.1} parent=1 // pred_check_branch
      %255 = sbr.rel (0) target = $region121
    $region120: #{gin_vn_forward.1} parent=1 // pred_region
      %s257 = ssub.s32 80, 80
      %258 = vsyncadd [#allocation20], %s257
      %s259 = sshll.u32 [#allocation21], 4
      %s260 = int_to_ptr.vmem [resolvable:$true] %s259
      %265 = dma.hbm_to_vmem [thread:$0]  %s59, 80, %s260, [#allocation20], 16, 16, 1
    $region121: #{gin_vn_forward.1} parent=1 // pred_fallthru
      _
    // Predicated region
    $region122: #{gin_vn_forward.1} parent=1 // pred_check
      _
    $region123: #{gin_vn_forward.1} parent=1 // pred_check_branch
      %267 = sbr.rel (0) target = $region125
    $region124: #{gin_vn_forward.1} parent=1 // pred_region
      %s269 = ssub.s32 80, 80
      %270 = vsyncadd [#allocation23], %s269
      %s271 = sshll.u32 [#allocation22], 4
      %s272 = int_to_ptr.vmem [resolvable:$true] %s271
      %277 = dma.hbm_to_vmem [thread:$0]  %s61, 80, %s272, [#allocation23], 16, 16, 1
    $region125: #{gin_vn_forward.1} parent=1 // pred_fallthru
      _
    // Predicated region
    $region126: #{gin_vn_forward.1} parent=1 // pred_check
      _
    $region127: #{gin_vn_forward.1} parent=1 // pred_check_branch
      %279 = sbr.rel (0) target = $region129
    $region128: #{gin_vn_forward.1} parent=1 // pred_region
      %280 = dma.done [#allocation3], 1024
    $region129: #{gin_vn_forward.1} parent=1 // pred_fallthru
      _
    // Predicated region
    $region130: #{gin_vn_forward.1} parent=1 // pred_check
      _
    $region131: #{gin_vn_forward.1} parent=1 // pred_check_branch
      %282 = sbr.rel (0) target = $region133
    $region132: #{gin_vn_forward.1} parent=1 // pred_region
      %283 = dma.done [#allocation5], 1024
    $region133: #{gin_vn_forward.1} parent=1 // pred_fallthru
      _
    // Predicated region
    $region134: #{gin_vn_forward.1} parent=1 // pred_check
      _
    $region135: #{gin_vn_forward.1} parent=1 // pred_check_branch
      %285 = sbr.rel (0) target = $region137
    $region136: #{gin_vn_forward.1} parent=1 // pred_region
      %286 = dma.done [#allocation5], 5120
    $region137: #{gin_vn_forward.1} parent=1 // pred_fallthru
      _
    // Predicated region
    $region138: #{gin_vn_forward.1} parent=1 // pred_check
      _
    $region139: #{gin_vn_forward.1} parent=1 // pred_check_branch
      %288 = sbr.rel (0) target = $region141
    $region140: #{gin_vn_forward.1} parent=1 // pred_region
      %289 = dma.done [#allocation8], 5120
    $region141: #{gin_vn_forward.1} parent=1 // pred_fallthru
      _
    // Predicated region
    $region142: #{gin_vn_forward.1} parent=1 // pred_check
      _
    $region143: #{gin_vn_forward.1} parent=1 // pred_check_branch
      %291 = sbr.rel (0) target = $region145
    $region144: #{gin_vn_forward.1} parent=1 // pred_region
      %292 = dma.done [#allocation8], 5120
    $region145: #{gin_vn_forward.1} parent=1 // pred_fallthru
      _
    // Predicated region
    $region146: #{gin_vn_forward.1} parent=1 // pred_check
      _
    $region147: #{gin_vn_forward.1} parent=1 // pred_check_branch
      %294 = sbr.rel (0) target = $region149
    $region148: #{gin_vn_forward.1} parent=1 // pred_region
      %295 = dma.done [#allocation11], 5120
    $region149: #{gin_vn_forward.1} parent=1 // pred_fallthru
      _
    // Predicated region
    $region150: #{gin_vn_forward.1} parent=1 // pred_check
      _
    $region151: #{gin_vn_forward.1} parent=1 // pred_check_branch
      %297 = sbr.rel (0) target = $region153
    $region152: #{gin_vn_forward.1} parent=1 // pred_region
      %298 = dma.done [#allocation11], 5120
    $region153: #{gin_vn_forward.1} parent=1 // pred_fallthru
      _
    // Predicated region
    $region154: #{gin_vn_forward.1} parent=1 // pred_check
      _
    $region155: #{gin_vn_forward.1} parent=1 // pred_check_branch
      %300 = sbr.rel (0) target = $region157
    $region156: #{gin_vn_forward.1} parent=1 // pred_region
      %301 = dma.done [#allocation14], 5120
    $region157: #{gin_vn_forward.1} parent=1 // pred_fallthru
      _
    // Predicated region
    $region158: #{gin_vn_forward.1} parent=1 // pred_check
      _
    $region159: #{gin_vn_forward.1} parent=1 // pred_check_branch
      %303 = sbr.rel (0) target = $region161
    $region160: #{gin_vn_forward.1} parent=1 // pred_region
      %304 = dma.done [#allocation14], 5120
    $region161: #{gin_vn_forward.1} parent=1 // pred_fallthru
      _
    // Predicated region
    $region162: #{gin_vn_forward.1} parent=1 // pred_check
      _
    $region163: #{gin_vn_forward.1} parent=1 // pred_check_branch
      %306 = sbr.rel (0) target = $region165
    $region164: #{gin_vn_forward.1} parent=1 // pred_region
      %307 = dma.done [#allocation17], 80
    $region165: #{gin_vn_forward.1} parent=1 // pred_fallthru
      _
    // Predicated region
    $region166: #{gin_vn_forward.1} parent=1 // pred_check
      _
    $region167: #{gin_vn_forward.1} parent=1 // pred_check_branch
      %309 = sbr.rel (0) target = $region169
    $region168: #{gin_vn_forward.1} parent=1 // pred_region
      %310 = dma.done [#allocation17], 5120
    $region169: #{gin_vn_forward.1} parent=1 // pred_fallthru
      _
    // Predicated region
    $region170: #{gin_vn_forward.1} parent=1 // pred_check
      _
    $region171: #{gin_vn_forward.1} parent=1 // pred_check_branch
      %312 = sbr.rel (0) target = $region173
    $region172: #{gin_vn_forward.1} parent=1 // pred_region
      %313 = dma.done [#allocation20], 80
    $region173: #{gin_vn_forward.1} parent=1 // pred_fallthru
      _
    // Predicated region
    $region174: #{gin_vn_forward.1} parent=1 // pred_check
      _
    $region175: #{gin_vn_forward.1} parent=1 // pred_check_branch
      %315 = sbr.rel (0) target = $region177
    $region176: #{gin_vn_forward.1} parent=1 // pred_region
      %316 = dma.done [#allocation20], 80
    $region177: #{gin_vn_forward.1} parent=1 // pred_fallthru
      _
    // Predicated region
    $region178: #{gin_vn_forward.1} parent=1 // pred_check
      _
    $region179: #{gin_vn_forward.1} parent=1 // pred_check_branch
      %318 = sbr.rel (0) target = $region181
    $region180: #{gin_vn_forward.1} parent=1 // pred_region
      %319 = dma.done [#allocation23], 80
    $region181: #{gin_vn_forward.1} parent=1 // pred_fallthru
      _
    %v321 = vld [vmem:[%s7] sm:$0xff]
    %v322 = vld [vmem:[%s7 + $0x8] sm:$0xff]
    %v323 = vld [vmem:[%s3] sm:$0xf]
    %v324 = vld [vmem:[%s3 + $0x4] sm:$0xf]
    %v325 = vld [vmem:[%s3 + $0x8] sm:$0xf]
    %v326 = vld [vmem:[%s5] sm:$0xf]
    %v327 = vld [vmem:[%s5 + $0x4] sm:$0xf]
    %v328 = vld [vmem:[%s9] sm:$0x1]
    %v329 = vld [vmem:[%s1] sm:$0xff]
    %v330 = vld [vmem:[%s1 + $0x8] sm:$0xff]
    %v331 = vld [vmem:[%s11] sm:$0xf]
    %v332 = vld [vmem:[%s11 + $0x4] sm:$0xf]
    %v333 = vld [vmem:[%s11 + $0x8] sm:$0xf]
    %v334 = vld [vmem:[%s11 + $0xc] sm:$0xf]
    %v335 = vld [vmem:[%s11 + $0x10] sm:$0xf]
    %v336 = vld [vmem:[%s11 + $0x14] sm:$0xf]
    %v337 = vld [vmem:[%s11 + $0x18] sm:$0xf]
    %v338 = vld [vmem:[%s11 + $0x1c] sm:$0xf]
    %v339 = vld [vmem:[%s11 + $0x20] sm:$0xf]
    %v340 = vld [vmem:[%s11 + $0x24] sm:$0xf]
    %v341 = vld [vmem:[%s11 + $0x28] sm:$0xf]
    %v342 = vld [vmem:[%s11 + $0x2c] sm:$0xf]
    %v343 = vld [vmem:[%s11 + $0x30] sm:$0xf]
    %v344 = vld [vmem:[%s11 + $0x34] sm:$0xf]
    %v345 = vld [vmem:[%s11 + $0x38] sm:$0xf]
    %v346 = vld [vmem:[%s11 + $0x3c] sm:$0xf]
    %v347 = vld [vmem:[%s13] sm:$0x1]
    %v348 = vld [vmem:[%s15] sm:$0xf]
    %v349 = vld [vmem:[%s15 + $0x4] sm:$0xf]
    %v350 = vld [vmem:[%s15 + $0x8] sm:$0xf]
    %v351 = vld [vmem:[%s15 + $0xc] sm:$0xf]
    %v352 = vld [vmem:[%s15 + $0x10] sm:$0xf]
    %v353 = vld [vmem:[%s15 + $0x14] sm:$0xf]
    %v354 = vld [vmem:[%s15 + $0x18] sm:$0xf]
    %v355 = vld [vmem:[%s15 + $0x1c] sm:$0xf]
    %v356 = vld [vmem:[%s15 + $0x20] sm:$0xf]
    %v357 = vld [vmem:[%s15 + $0x24] sm:$0xf]
    %v358 = vld [vmem:[%s15 + $0x28] sm:$0xf]
    %v359 = vld [vmem:[%s15 + $0x2c] sm:$0xf]
    %v360 = vld [vmem:[%s15 + $0x30] sm:$0xf]
    %v361 = vld [vmem:[%s15 + $0x34] sm:$0xf]
    %v362 = vld [vmem:[%s15 + $0x38] sm:$0xf]
    %v363 = vld [vmem:[%s15 + $0x3c] sm:$0xf]
    %v364 = vld [vmem:[%s17] sm:$0x1]
    %v365 = vpack.c.bf16 %v330, %v329
    %v367 = vlaneseq
    %v368 = vshrl.u32 %v367, 7
    %v369 = vsub.s32 0, %v368
    %v370 = vrot.slane %v347, %v369
    %v388 = vunpack.c.l.b16 %v331
    %v389 = vunpack.c.l.b16 %v332
    %v390 = vunpack.c.l.b16 %v333
    %v391 = vunpack.c.l.b16 %v334
    %v392 = vunpack.c.l.b16 %v335
    %v393 = vunpack.c.l.b16 %v336
    %v394 = vunpack.c.l.b16 %v337
    %v395 = vunpack.c.l.b16 %v338
    %v396 = vunpack.c.l.b16 %v339
    %v397 = vunpack.c.l.b16 %v340
    %v398 = vunpack.c.l.b16 %v341
    %v399 = vunpack.c.l.b16 %v342
    %v400 = vunpack.c.l.b16 %v343
    %v401 = vunpack.c.l.b16 %v344
    %v402 = vunpack.c.l.b16 %v345
    %v403 = vunpack.c.l.b16 %v346
    %v404 = vpack.c.b16 %v389, %v388
    %v405 = vpack.c.b16 %v391, %v390
    %v406 = vpack.c.b16 %v393, %v392
    %v407 = vpack.c.b16 %v395, %v394
    %v408 = vpack.c.b16 %v397, %v396
    %v409 = vpack.c.b16 %v399, %v398
    %v410 = vpack.c.b16 %v401, %v400
    %v411 = vpack.c.b16 %v403, %v402
    %420 = vmatprep.subr.bf16.mxu0 0
    %421 = vmatpush1.bf16.msra.mxu0 %v404
    %422 = vmatprep.subr.bf16.mxu0 0
    %423 = vmatpush1.bf16.msra.mxu0 %v405
    %424 = vmatprep.subr.bf16.mxu0 0
    %425 = vmatpush1.bf16.msra.mxu0 %v406
    %426 = vmatprep.subr.bf16.mxu0 0
    %427 = vmatpush1.bf16.msra.mxu0 %v407
    %428 = vmatprep.subr.bf16.mxu0 0
    %429 = vmatpush1.bf16.msra.mxu0 %v408
    %430 = vmatprep.subr.bf16.mxu0 0
    %431 = vmatpush1.bf16.msra.mxu0 %v409
    %432 = vmatprep.subr.bf16.mxu0 0
    %433 = vmatpush1.bf16.msra.mxu0 %v410
    %434 = vmatprep.subr.bf16.mxu0 0
    %435 = vmatpush1.bf16.msra.mxu0 %v411
    %436 = vmatprep.subr.bf16.mxu0 0
    %437 = vmatpush1.bf16.msra.mxu0 0
    %438 = vmatprep.subr.bf16.mxu0 0
    %439 = vmatpush1.bf16.msra.mxu0 0
    %440 = vmatprep.subr.bf16.mxu0 0
    %441 = vmatpush1.bf16.msra.mxu0 0
    %442 = vmatprep.subr.bf16.mxu0 0
    %443 = vmatpush1.bf16.msra.mxu0 0
    %444 = vmatprep.subr.bf16.mxu0 0
    %445 = vmatpush1.bf16.msra.mxu0 0
    %446 = vmatprep.subr.bf16.mxu0 0
    %447 = vmatpush1.bf16.msra.mxu0 0
    %448 = vmatprep.subr.bf16.mxu0 0
    %449 = vmatpush1.bf16.msra.mxu0 0
    %450 = vmatprep.subr.bf16.mxu0 0
    %451 = vmatpush1.bf16.msra.mxu0 0
    %452 = vmatprep.mubr.bf16.mxu0 0
    %453 = vmatmul.mubr.bf16.gmra.mrb[0].mxu0 %v365
    %v454 = vpop.f32.mrb[0].mxu0
    %v455 = vadd.f32 %v370, %v454
    %v456 = vpop.f32.mrb[0].mxu0
    %v457 = vpop.f32.mrb[0].mxu0
    %v458 = vadd.f32 %v370, %v457
    %v459 = vpop.f32.mrb[0].mxu0
    %460 = vdwg.mxu0
    %v461 = vmul.f32 %v455, 0.5
    %v462 = vmul.f32 %v458, 0.5
    %v463 = vmul.f32 %v455, 0.70710677
    %v464 = vmul.f32 %v458, 0.70710677
    %v465 = verf.f32.pop %v463
    %v466 = verf.f32.pop %v464
    %v467 = vadd.f32 %v465, 1.0
    %v468 = vadd.f32 %v466, 1.0
    %v469 = vmul.f32 %v461, %v467
    %v470 = vmul.f32 %v462, %v468
    %v471 = vpack.c.bf16 %v470, %v469
    %v473 = vlaneseq
    %v474 = vshrl.u32 %v473, 7
    %v475 = vsub.s32 0, %v474
    %v476 = vrot.slane %v364, %v475
    %v494 = vunpack.c.l.b16 %v348
    %v495 = vunpack.c.l.b16 %v349
    %v496 = vunpack.c.l.b16 %v350
    %v497 = vunpack.c.l.b16 %v351
    %v498 = vunpack.c.l.b16 %v352
    %v499 = vunpack.c.l.b16 %v353
    %v500 = vunpack.c.l.b16 %v354
    %v501 = vunpack.c.l.b16 %v355
    %v502 = vunpack.c.l.b16 %v356
    %v503 = vunpack.c.l.b16 %v357
    %v504 = vunpack.c.l.b16 %v358
    %v505 = vunpack.c.l.b16 %v359
    %v506 = vunpack.c.l.b16 %v360
    %v507 = vunpack.c.l.b16 %v361
    %v508 = vunpack.c.l.b16 %v362
    %v509 = vunpack.c.l.b16 %v363
    %v510 = vpack.c.b16 %v495, %v494
    %v511 = vpack.c.b16 %v497, %v496
    %v512 = vpack.c.b16 %v499, %v498
    %v513 = vpack.c.b16 %v501, %v500
    %v514 = vpack.c.b16 %v503, %v502
    %v515 = vpack.c.b16 %v505, %v504
    %v516 = vpack.c.b16 %v507, %v506
    %v517 = vpack.c.b16 %v509, %v508
    %526 = vmatprep.subr.bf16.mxu0 0
    %527 = vmatpush1.bf16.msra.mxu0 %v510
    %528 = vmatprep.subr.bf16.mxu0 0
    %529 = vmatpush1.bf16.msra.mxu0 %v511
    %530 = vmatprep.subr.bf16.mxu0 0
    %531 = vmatpush1.bf16.msra.mxu0 %v512
    %532 = vmatprep.subr.bf16.mxu0 0
    %533 = vmatpush1.bf16.msra.mxu0 %v513
    %534 = vmatprep.subr.bf16.mxu0 0
    %535 = vmatpush1.bf16.msra.mxu0 %v514
    %536 = vmatprep.subr.bf16.mxu0 0
    %537 = vmatpush1.bf16.msra.mxu0 %v515
    %538 = vmatprep.subr.bf16.mxu0 0
    %539 = vmatpush1.bf16.msra.mxu0 %v516
    %540 = vmatprep.subr.bf16.mxu0 0
    %541 = vmatpush1.bf16.msra.mxu0 %v517
    %542 = vmatprep.subr.bf16.mxu0 0
    %543 = vmatpush1.bf16.msra.mxu0 0
    %544 = vmatprep.subr.bf16.mxu0 0
    %545 = vmatpush1.bf16.msra.mxu0 0
    %546 = vmatprep.subr.bf16.mxu0 0
    %547 = vmatpush1.bf16.msra.mxu0 0
    %548 = vmatprep.subr.bf16.mxu0 0
    %549 = vmatpush1.bf16.msra.mxu0 0
    %550 = vmatprep.subr.bf16.mxu0 0
    %551 = vmatpush1.bf16.msra.mxu0 0
    %552 = vmatprep.subr.bf16.mxu0 0
    %553 = vmatpush1.bf16.msra.mxu0 0
    %554 = vmatprep.subr.bf16.mxu0 0
    %555 = vmatpush1.bf16.msra.mxu0 0
    %556 = vmatprep.subr.bf16.mxu0 0
    %557 = vmatpush1.bf16.msra.mxu0 0
    %558 = vmatprep.mubr.bf16.mxu0 0
    %559 = vmatmul.mubr.bf16.gmra.mrb[0].mxu0 %v471
    %v560 = vpop.f32.mrb[0].mxu0
    %v561 = vadd.f32 %v476, %v560
    %v562 = vpop.f32.mrb[0].mxu0
    %v563 = vpop.f32.mrb[0].mxu0
    %v564 = vadd.f32 %v476, %v563
    %v565 = vpop.f32.mrb[0].mxu0
    %566 = vdwg.mxu0
    %568 = vset.pattern.permute.xlu0 0
    %569 = vperm.xlu0 %568, %v321
    %v570 = vpop.permute.xlu0 %569
    %573 = vset.pattern.permute.xlu0 0
    %574 = vperm.xlu0 %573, %v322
    %v575 = vpop.permute.xlu0 %574
    %v577 = vmul.f32 %v561, %v570
    %v578 = vmul.f32 %v564, %v575
    %v579 = vpack.c.bf16 %v578, %v577
    %v583 = vunpack.c.l.b16 %v323
    %v584 = vunpack.c.l.b16 %v324
    %v585 = vunpack.c.l.b16 %v325
    %v586 = vpack.c.b16 %v584, %v583
    %v587 = vpack.c.b16 %v585, %v585
    %vm588 = vcmask 130048
    %v590 = vsel %vm588, %v586, 0
    %v593 = vsel %vm588, %v587, 0
    %595 = vmatprep.subr.bf16.mxu0 0
    %596 = vmatpush1.bf16.msra.mxu0 %v579
    %597 = vmatprep.subr.bf16.mxu0 0
    %598 = vmatpush1.bf16.msra.mxu0 0
    %599 = vmatprep.subr.bf16.mxu0 0
    %600 = vmatpush1.bf16.msra.mxu0 0
    %601 = vmatprep.subr.bf16.mxu0 0
    %602 = vmatpush1.bf16.msra.mxu0 0
    %603 = vmatprep.subr.bf16.mxu0 0
    %604 = vmatpush1.bf16.msra.mxu0 0
    %605 = vmatprep.subr.bf16.mxu0 0
    %606 = vmatpush1.bf16.msra.mxu0 0
    %607 = vmatprep.subr.bf16.mxu0 0
    %608 = vmatpush1.bf16.msra.mxu0 0
    %609 = vmatprep.subr.bf16.mxu0 0
    %610 = vmatpush1.bf16.msra.mxu0 0
    %611 = vmatprep.subr.bf16.mxu0 0
    %612 = vmatpush1.bf16.msra.mxu0 0
    %613 = vmatprep.subr.bf16.mxu0 0
    %614 = vmatpush1.bf16.msra.mxu0 0
    %615 = vmatprep.subr.bf16.mxu0 0
    %616 = vmatpush1.bf16.msra.mxu0 0
    %617 = vmatprep.subr.bf16.mxu0 0
    %618 = vmatpush1.bf16.msra.mxu0 0
    %619 = vmatprep.subr.bf16.mxu0 0
    %620 = vmatpush1.bf16.msra.mxu0 0
    %621 = vmatprep.subr.bf16.mxu0 0
    %622 = vmatpush1.bf16.msra.mxu0 0
    %623 = vmatprep.subr.bf16.mxu0 0
    %624 = vmatpush1.bf16.msra.mxu0 0
    %625 = vmatprep.subr.bf16.mxu0 0
    %626 = vmatpush1.bf16.msra.mxu0 0
    %627 = vmatprep.mubr.bf16.mxu0 0
    %628 = vmatmul.mubr.bf16.gmra.mrb[0].mxu0 %v590
    %v629 = vpop.f32.mrb[0].mxu0
    %v630 = vadd.f32 0.0, %v629
    %v631 = vpop.f32.mrb[0].mxu0
    %v632 = vpop.f32.mrb[0].mxu0
    %v633 = vadd.f32 0.0, %v632
    %v634 = vpop.f32.mrb[0].mxu0
    %635 = vmatprep.mubr.bf16.mxu0 0
    %636 = vmatmul.mubr.bf16.gmra.mrb[0].mxu0 %v593
    %v637 = vpop.f32.mrb[0].mxu0
    %v638 = vadd.f32 0.0, %v637
    %v639 = vpop.f32.mrb[0].mxu0
    %v640 = vpop.f32.mrb[0].mxu0
    %v641 = vpop.f32.mrb[0].mxu0
    %642 = vdwg.mxu0
    %v643 = vld [vmem:[#allocation6] sm:$0xf]
    %v644 = vld [vmem:[#allocation6 + $0x4] sm:$0xf]
    %v645 = vld [vmem:[#allocation6 + $0x8] sm:$0xf]
    %v646 = vld [vmem:[#allocation6 + $0xc] sm:$0xf]
    %v647 = vld [vmem:[#allocation6 + $0x10] sm:$0xf]
    %v648 = vld [vmem:[#allocation6 + $0x14] sm:$0xf]
    %v649 = vld [vmem:[#allocation6 + $0x18] sm:$0xf]
    %v650 = vld [vmem:[#allocation6 + $0x1c] sm:$0xf]
    %v651 = vld [vmem:[#allocation6 + $0x20] sm:$0xf]
    %v652 = vld [vmem:[#allocation6 + $0x24] sm:$0xf]
    %v653 = vld [vmem:[#allocation6 + $0x28] sm:$0xf]
    %v654 = vld [vmem:[#allocation6 + $0x2c] sm:$0xf]
    %v655 = vld [vmem:[#allocation6 + $0x30] sm:$0xf]
    %v656 = vld [vmem:[#allocation6 + $0x34] sm:$0xf]
    %v657 = vld [vmem:[#allocation6 + $0x38] sm:$0xf]
    %v658 = vld [vmem:[#allocation6 + $0x3c] sm:$0xf]
    %v659 = vld [vmem:[%s29] sm:$0x1]
    %v660 = vld [vmem:[#allocation7] sm:$0xf]
    %v661 = vld [vmem:[#allocation7 + $0x4] sm:$0xf]
    %v662 = vld [vmem:[#allocation7 + $0x8] sm:$0xf]
    %v663 = vld [vmem:[#allocation7 + $0xc] sm:$0xf]
    %v664 = vld [vmem:[#allocation7 + $0x10] sm:$0xf]
    %v665 = vld [vmem:[#allocation7 + $0x14] sm:$0xf]
    %v666 = vld [vmem:[#allocation7 + $0x18] sm:$0xf]
    %v667 = vld [vmem:[#allocation7 + $0x1c] sm:$0xf]
    %v668 = vld [vmem:[#allocation7 + $0x20] sm:$0xf]
    %v669 = vld [vmem:[#allocation7 + $0x24] sm:$0xf]
    %v670 = vld [vmem:[#allocation7 + $0x28] sm:$0xf]
    %v671 = vld [vmem:[#allocation7 + $0x2c] sm:$0xf]
    %v672 = vld [vmem:[#allocation7 + $0x30] sm:$0xf]
    %v673 = vld [vmem:[#allocation7 + $0x34] sm:$0xf]
    %v674 = vld [vmem:[#allocation7 + $0x38] sm:$0xf]
    %v675 = vld [vmem:[#allocation7 + $0x3c] sm:$0xf]
    %v676 = vld [vmem:[%s33] sm:$0x1]
    %v677 = vpack.c.bf16 %v630, %v630
    %v679 = vlaneseq
    %v680 = vshrl.u32 %v679, 7
    %v681 = vsub.s32 0, %v680
    %v682 = vrot.slane %v659, %v681
    %v700 = vunpack.c.l.b16 %v643
    %v701 = vunpack.c.l.b16 %v644
    %v702 = vunpack.c.l.b16 %v645
    %v703 = vunpack.c.l.b16 %v646
    %v704 = vunpack.c.l.b16 %v647
    %v705 = vunpack.c.l.b16 %v648
    %v706 = vunpack.c.l.b16 %v649
    %v707 = vunpack.c.l.b16 %v650
    %v708 = vunpack.c.l.b16 %v651
    %v709 = vunpack.c.l.b16 %v652
    %v710 = vunpack.c.l.b16 %v653
    %v711 = vunpack.c.l.b16 %v654
    %v712 = vunpack.c.l.b16 %v655
    %v713 = vunpack.c.l.b16 %v656
    %v714 = vunpack.c.l.b16 %v657
    %v715 = vunpack.c.l.b16 %v658
    %v716 = vpack.c.b16 %v701, %v700
    %v717 = vpack.c.b16 %v703, %v702
    %v718 = vpack.c.b16 %v705, %v704
    %v719 = vpack.c.b16 %v707, %v706
    %v720 = vpack.c.b16 %v709, %v708
    %v721 = vpack.c.b16 %v711, %v710
    %v722 = vpack.c.b16 %v713, %v712
    %v723 = vpack.c.b16 %v715, %v714
    %732 = vmatprep.subr.bf16.mxu0 0
    %733 = vmatpush1.bf16.msra.mxu0 %v716
    %734 = vmatprep.subr.bf16.mxu0 0
    %735 = vmatpush1.bf16.msra.mxu0 %v717
    %736 = vmatprep.subr.bf16.mxu0 0
    %737 = vmatpush1.bf16.msra.mxu0 %v718
    %738 = vmatprep.subr.bf16.mxu0 0
    %739 = vmatpush1.bf16.msra.mxu0 %v719
    %740 = vmatprep.subr.bf16.mxu0 0
    %741 = vmatpush1.bf16.msra.mxu0 %v720
    %742 = vmatprep.subr.bf16.mxu0 0
    %743 = vmatpush1.bf16.msra.mxu0 %v721
    %744 = vmatprep.subr.bf16.mxu0 0
    %745 = vmatpush1.bf16.msra.mxu0 %v722
    %746 = vmatprep.subr.bf16.mxu0 0
    %747 = vmatpush1.bf16.msra.mxu0 %v723
    %748 = vmatprep.subr.bf16.mxu0 0
    %749 = vmatpush1.bf16.msra.mxu0 0
    %750 = vmatprep.subr.bf16.mxu0 0
    %751 = vmatpush1.bf16.msra.mxu0 0
    %752 = vmatprep.subr.bf16.mxu0 0
    %753 = vmatpush1.bf16.msra.mxu0 0
    %754 = vmatprep.subr.bf16.mxu0 0
    %755 = vmatpush1.bf16.msra.mxu0 0
    %756 = vmatprep.subr.bf16.mxu0 0
    %757 = vmatpush1.bf16.msra.mxu0 0
    %758 = vmatprep.subr.bf16.mxu0 0
    %759 = vmatpush1.bf16.msra.mxu0 0
    %760 = vmatprep.subr.bf16.mxu0 0
    %761 = vmatpush1.bf16.msra.mxu0 0
    %762 = vmatprep.subr.bf16.mxu0 0
    %763 = vmatpush1.bf16.msra.mxu0 0
    %764 = vmatprep.mubr.bf16.mxu0 0
    %765 = vmatmul.mubr.bf16.gmra.mrb[0].mxu0 %v677
    %v766 = vpop.f32.mrb[0].mxu0
    %v767 = vadd.f32 %v682, %v766
    %v768 = vpop.f32.mrb[0].mxu0
    %v769 = vpop.f32.mrb[0].mxu0
    %v770 = vpop.f32.mrb[0].mxu0
    %771 = vdwg.mxu0
    %v772 = vmul.f32 %v767, 0.5
    %v773 = vmul.f32 %v767, 0.70710677
    %v774 = verf.f32.pop %v773
    %v775 = vadd.f32 %v774, 1.0
    %v776 = vmul.f32 %v772, %v775
    %v777 = vpack.c.bf16 %v776, %v776
    %v779 = vlaneseq
    %v780 = vshrl.u32 %v779, 7
    %v781 = vsub.s32 0, %v780
    %v782 = vrot.slane %v676, %v781
    %v800 = vunpack.c.l.b16 %v660
    %v801 = vunpack.c.l.b16 %v661
    %v802 = vunpack.c.l.b16 %v662
    %v803 = vunpack.c.l.b16 %v663
    %v804 = vunpack.c.l.b16 %v664
    %v805 = vunpack.c.l.b16 %v665
    %v806 = vunpack.c.l.b16 %v666
    %v807 = vunpack.c.l.b16 %v667
    %v808 = vunpack.c.l.b16 %v668
    %v809 = vunpack.c.l.b16 %v669
    %v810 = vunpack.c.l.b16 %v670
    %v811 = vunpack.c.l.b16 %v671
    %v812 = vunpack.c.l.b16 %v672
    %v813 = vunpack.c.l.b16 %v673
    %v814 = vunpack.c.l.b16 %v674
    %v815 = vunpack.c.l.b16 %v675
    %v816 = vpack.c.b16 %v801, %v800
    %v817 = vpack.c.b16 %v803, %v802
    %v818 = vpack.c.b16 %v805, %v804
    %v819 = vpack.c.b16 %v807, %v806
    %v820 = vpack.c.b16 %v809, %v808
    %v821 = vpack.c.b16 %v811, %v810
    %v822 = vpack.c.b16 %v813, %v812
    %v823 = vpack.c.b16 %v815, %v814
    %832 = vmatprep.subr.bf16.mxu0 0
    %833 = vmatpush1.bf16.msra.mxu0 %v816
    %834 = vmatprep.subr.bf16.mxu0 0
    %835 = vmatpush1.bf16.msra.mxu0 %v817
    %836 = vmatprep.subr.bf16.mxu0 0
    %837 = vmatpush1.bf16.msra.mxu0 %v818
    %838 = vmatprep.subr.bf16.mxu0 0
    %839 = vmatpush1.bf16.msra.mxu0 %v819
    %840 = vmatprep.subr.bf16.mxu0 0
    %841 = vmatpush1.bf16.msra.mxu0 %v820
    %842 = vmatprep.subr.bf16.mxu0 0
    %843 = vmatpush1.bf16.msra.mxu0 %v821
    %844 = vmatprep.subr.bf16.mxu0 0
    %845 = vmatpush1.bf16.msra.mxu0 %v822
    %846 = vmatprep.subr.bf16.mxu0 0
    %847 = vmatpush1.bf16.msra.mxu0 %v823
    %848 = vmatprep.subr.bf16.mxu0 0
    %849 = vmatpush1.bf16.msra.mxu0 0
    %850 = vmatprep.subr.bf16.mxu0 0
    %851 = vmatpush1.bf16.msra.mxu0 0
    %852 = vmatprep.subr.bf16.mxu0 0
    %853 = vmatpush1.bf16.msra.mxu0 0
    %854 = vmatprep.subr.bf16.mxu0 0
    %855 = vmatpush1.bf16.msra.mxu0 0
    %856 = vmatprep.subr.bf16.mxu0 0
    %857 = vmatpush1.bf16.msra.mxu0 0
    %858 = vmatprep.subr.bf16.mxu0 0
    %859 = vmatpush1.bf16.msra.mxu0 0
    %860 = vmatprep.subr.bf16.mxu0 0
    %861 = vmatpush1.bf16.msra.mxu0 0
    %862 = vmatprep.subr.bf16.mxu0 0
    %863 = vmatpush1.bf16.msra.mxu0 0
    %864 = vmatprep.mubr.bf16.mxu0 0
    %865 = vmatmul.mubr.bf16.gmra.mrb[0].mxu0 %v777
    %v866 = vpop.f32.mrb[0].mxu0
    %v867 = vadd.f32 %v782, %v866
    %v868 = vpop.f32.mrb[0].mxu0
    %v869 = vpop.f32.mrb[0].mxu0
    %v870 = vpop.f32.mrb[0].mxu0
    %871 = vdwg.mxu0
    %v873 = vlaneseq
    %v874 = vshrl.u32 %v873, 7
    %v875 = vsub.s32 0, %v874
    %v876 = vrot.slane %v328, %v875
    %v878 = vadd.f32 %v876, %v867
    %v879 = vld [vmem:[#allocation9] sm:$0xf]
    %v880 = vld [vmem:[#allocation9 + $0x4] sm:$0xf]
    %v881 = vld [vmem:[#allocation9 + $0x8] sm:$0xf]
    %v882 = vld [vmem:[#allocation9 + $0xc] sm:$0xf]
    %v883 = vld [vmem:[#allocation9 + $0x10] sm:$0xf]
    %v884 = vld [vmem:[#allocation9 + $0x14] sm:$0xf]
    %v885 = vld [vmem:[#allocation9 + $0x18] sm:$0xf]
    %v886 = vld [vmem:[#allocation9 + $0x1c] sm:$0xf]
    %v887 = vld [vmem:[#allocation9 + $0x20] sm:$0xf]
    %v888 = vld [vmem:[#allocation9 + $0x24] sm:$0xf]
    %v889 = vld [vmem:[#allocation9 + $0x28] sm:$0xf]
    %v890 = vld [vmem:[#allocation9 + $0x2c] sm:$0xf]
    %v891 = vld [vmem:[#allocation9 + $0x30] sm:$0xf]
    %v892 = vld [vmem:[#allocation9 + $0x34] sm:$0xf]
    %v893 = vld [vmem:[#allocation9 + $0x38] sm:$0xf]
    %v894 = vld [vmem:[#allocation9 + $0x3c] sm:$0xf]
    %v895 = vld [vmem:[%s37] sm:$0x1]
    %v896 = vld [vmem:[#allocation10] sm:$0xf]
    %v897 = vld [vmem:[#allocation10 + $0x4] sm:$0xf]
    %v898 = vld [vmem:[#allocation10 + $0x8] sm:$0xf]
    %v899 = vld [vmem:[#allocation10 + $0xc] sm:$0xf]
    %v900 = vld [vmem:[#allocation10 + $0x10] sm:$0xf]
    %v901 = vld [vmem:[#allocation10 + $0x14] sm:$0xf]
    %v902 = vld [vmem:[#allocation10 + $0x18] sm:$0xf]
    %v903 = vld [vmem:[#allocation10 + $0x1c] sm:$0xf]
    %v904 = vld [vmem:[#allocation10 + $0x20] sm:$0xf]
    %v905 = vld [vmem:[#allocation10 + $0x24] sm:$0xf]
    %v906 = vld [vmem:[#allocation10 + $0x28] sm:$0xf]
    %v907 = vld [vmem:[#allocation10 + $0x2c] sm:$0xf]
    %v908 = vld [vmem:[#allocation10 + $0x30] sm:$0xf]
    %v909 = vld [vmem:[#allocation10 + $0x34] sm:$0xf]
    %v910 = vld [vmem:[#allocation10 + $0x38] sm:$0xf]
    %v911 = vld [vmem:[#allocation10 + $0x3c] sm:$0xf]
    %v912 = vld [vmem:[%s41] sm:$0x1]
    %v913 = vpack.c.bf16 %v878, %v878
    %v915 = vlaneseq
    %v916 = vshrl.u32 %v915, 7
    %v917 = vsub.s32 0, %v916
    %v918 = vrot.slane %v895, %v917
    %v936 = vunpack.c.l.b16 %v879
    %v937 = vunpack.c.l.b16 %v880
    %v938 = vunpack.c.l.b16 %v881
    %v939 = vunpack.c.l.b16 %v882
    %v940 = vunpack.c.l.b16 %v883
    %v941 = vunpack.c.l.b16 %v884
    %v942 = vunpack.c.l.b16 %v885
    %v943 = vunpack.c.l.b16 %v886
    %v944 = vunpack.c.l.b16 %v887
    %v945 = vunpack.c.l.b16 %v888
    %v946 = vunpack.c.l.b16 %v889
    %v947 = vunpack.c.l.b16 %v890
    %v948 = vunpack.c.l.b16 %v891
    %v949 = vunpack.c.l.b16 %v892
    %v950 = vunpack.c.l.b16 %v893
    %v951 = vunpack.c.l.b16 %v894
    %v952 = vpack.c.b16 %v937, %v936
    %v953 = vpack.c.b16 %v939, %v938
    %v954 = vpack.c.b16 %v941, %v940
    %v955 = vpack.c.b16 %v943, %v942
    %v956 = vpack.c.b16 %v945, %v944
    %v957 = vpack.c.b16 %v947, %v946
    %v958 = vpack.c.b16 %v949, %v948
    %v959 = vpack.c.b16 %v951, %v950
    %968 = vmatprep.subr.bf16.mxu0 0
    %969 = vmatpush1.bf16.msra.mxu0 %v952
    %970 = vmatprep.subr.bf16.mxu0 0
    %971 = vmatpush1.bf16.msra.mxu0 %v953
    %972 = vmatprep.subr.bf16.mxu0 0
    %973 = vmatpush1.bf16.msra.mxu0 %v954
    %974 = vmatprep.subr.bf16.mxu0 0
    %975 = vmatpush1.bf16.msra.mxu0 %v955
    %976 = vmatprep.subr.bf16.mxu0 0
    %977 = vmatpush1.bf16.msra.mxu0 %v956
    %978 = vmatprep.subr.bf16.mxu0 0
    %979 = vmatpush1.bf16.msra.mxu0 %v957
    %980 = vmatprep.subr.bf16.mxu0 0
    %981 = vmatpush1.bf16.msra.mxu0 %v958
    %982 = vmatprep.subr.bf16.mxu0 0
    %983 = vmatpush1.bf16.msra.mxu0 %v959
    %984 = vmatprep.subr.bf16.mxu0 0
    %985 = vmatpush1.bf16.msra.mxu0 0
    %986 = vmatprep.subr.bf16.mxu0 0
    %987 = vmatpush1.bf16.msra.mxu0 0
    %988 = vmatprep.subr.bf16.mxu0 0
    %989 = vmatpush1.bf16.msra.mxu0 0
    %990 = vmatprep.subr.bf16.mxu0 0
    %991 = vmatpush1.bf16.msra.mxu0 0
    %992 = vmatprep.subr.bf16.mxu0 0
    %993 = vmatpush1.bf16.msra.mxu0 0
    %994 = vmatprep.subr.bf16.mxu0 0
    %995 = vmatpush1.bf16.msra.mxu0 0
    %996 = vmatprep.subr.bf16.mxu0 0
    %997 = vmatpush1.bf16.msra.mxu0 0
    %998 = vmatprep.subr.bf16.mxu0 0
    %999 = vmatpush1.bf16.msra.mxu0 0
    %1000 = vmatprep.mubr.bf16.mxu0 0
    %1001 = vmatmul.mubr.bf16.gmra.mrb[0].mxu0 %v913
    %v1002 = vpop.f32.mrb[0].mxu0
    %v1003 = vadd.f32 %v918, %v1002
    %v1004 = vpop.f32.mrb[0].mxu0
    %v1005 = vpop.f32.mrb[0].mxu0
    %v1006 = vpop.f32.mrb[0].mxu0
    %1007 = vdwg.mxu0
    %v1008 = vmul.f32 %v1003, 0.5
    %v1009 = vmul.f32 %v1003, 0.70710677
    %v1010 = verf.f32.pop %v1009
    %v1011 = vadd.f32 %v1010, 1.0
    %v1012 = vmul.f32 %v1008, %v1011
    %v1013 = vpack.c.bf16 %v1012, %v1012
    %v1015 = vlaneseq
    %v1016 = vshrl.u32 %v1015, 7
    %v1017 = vsub.s32 0, %v1016
    %v1018 = vrot.slane %v912, %v1017
    %v1036 = vunpack.c.l.b16 %v896
    %v1037 = vunpack.c.l.b16 %v897
    %v1038 = vunpack.c.l.b16 %v898
    %v1039 = vunpack.c.l.b16 %v899
    %v1040 = vunpack.c.l.b16 %v900
    %v1041 = vunpack.c.l.b16 %v901
    %v1042 = vunpack.c.l.b16 %v902
    %v1043 = vunpack.c.l.b16 %v903
    %v1044 = vunpack.c.l.b16 %v904
    %v1045 = vunpack.c.l.b16 %v905
    %v1046 = vunpack.c.l.b16 %v906
    %v1047 = vunpack.c.l.b16 %v907
    %v1048 = vunpack.c.l.b16 %v908
    %v1049 = vunpack.c.l.b16 %v909
    %v1050 = vunpack.c.l.b16 %v910
    %v1051 = vunpack.c.l.b16 %v911
    %v1052 = vpack.c.b16 %v1037, %v1036
    %v1053 = vpack.c.b16 %v1039, %v1038
    %v1054 = vpack.c.b16 %v1041, %v1040
    %v1055 = vpack.c.b16 %v1043, %v1042
    %v1056 = vpack.c.b16 %v1045, %v1044
    %v1057 = vpack.c.b16 %v1047, %v1046
    %v1058 = vpack.c.b16 %v1049, %v1048
    %v1059 = vpack.c.b16 %v1051, %v1050
    %1068 = vmatprep.subr.bf16.mxu0 0
    %1069 = vmatpush1.bf16.msra.mxu0 %v1052
    %1070 = vmatprep.subr.bf16.mxu0 0
    %1071 = vmatpush1.bf16.msra.mxu0 %v1053
    %1072 = vmatprep.subr.bf16.mxu0 0
    %1073 = vmatpush1.bf16.msra.mxu0 %v1054
    %1074 = vmatprep.subr.bf16.mxu0 0
    %1075 = vmatpush1.bf16.msra.mxu0 %v1055
    %1076 = vmatprep.subr.bf16.mxu0 0
    %1077 = vmatpush1.bf16.msra.mxu0 %v1056
    %1078 = vmatprep.subr.bf16.mxu0 0
    %1079 = vmatpush1.bf16.msra.mxu0 %v1057
    %1080 = vmatprep.subr.bf16.mxu0 0
    %1081 = vmatpush1.bf16.msra.mxu0 %v1058
    %1082 = vmatprep.subr.bf16.mxu0 0
    %1083 = vmatpush1.bf16.msra.mxu0 %v1059
    %1084 = vmatprep.subr.bf16.mxu0 0
    %1085 = vmatpush1.bf16.msra.mxu0 0
    %1086 = vmatprep.subr.bf16.mxu0 0
    %1087 = vmatpush1.bf16.msra.mxu0 0
    %1088 = vmatprep.subr.bf16.mxu0 0
    %1089 = vmatpush1.bf16.msra.mxu0 0
    %1090 = vmatprep.subr.bf16.mxu0 0
    %1091 = vmatpush1.bf16.msra.mxu0 0
    %1092 = vmatprep.subr.bf16.mxu0 0
    %1093 = vmatpush1.bf16.msra.mxu0 0
    %1094 = vmatprep.subr.bf16.mxu0 0
    %1095 = vmatpush1.bf16.msra.mxu0 0
    %1096 = vmatprep.subr.bf16.mxu0 0
    %1097 = vmatpush1.bf16.msra.mxu0 0
    %1098 = vmatprep.subr.bf16.mxu0 0
    %1099 = vmatpush1.bf16.msra.mxu0 0
    %1100 = vmatprep.mubr.bf16.mxu0 0
    %1101 = vmatmul.mubr.bf16.gmra.mrb[0].mxu0 %v1013
    %v1102 = vpop.f32.mrb[0].mxu0
    %v1103 = vadd.f32 %v1018, %v1102
    %v1104 = vpop.f32.mrb[0].mxu0
    %v1105 = vpop.f32.mrb[0].mxu0
    %v1106 = vpop.f32.mrb[0].mxu0
    %1107 = vdwg.mxu0
    %v1108 = vadd.f32 %v577, %v633
    %v1109 = vadd.f32 %v578, %v638
    %v1110 = vld [vmem:[#allocation12] sm:$0xf]
    %v1111 = vld [vmem:[#allocation12 + $0x4] sm:$0xf]
    %v1112 = vld [vmem:[#allocation12 + $0x8] sm:$0xf]
    %v1113 = vld [vmem:[#allocation12 + $0xc] sm:$0xf]
    %v1114 = vld [vmem:[#allocation12 + $0x10] sm:$0xf]
    %v1115 = vld [vmem:[#allocation12 + $0x14] sm:$0xf]
    %v1116 = vld [vmem:[#allocation12 + $0x18] sm:$0xf]
    %v1117 = vld [vmem:[#allocation12 + $0x1c] sm:$0xf]
    %v1118 = vld [vmem:[#allocation12 + $0x20] sm:$0xf]
    %v1119 = vld [vmem:[#allocation12 + $0x24] sm:$0xf]
    %v1120 = vld [vmem:[#allocation12 + $0x28] sm:$0xf]
    %v1121 = vld [vmem:[#allocation12 + $0x2c] sm:$0xf]
    %v1122 = vld [vmem:[#allocation12 + $0x30] sm:$0xf]
    %v1123 = vld [vmem:[#allocation12 + $0x34] sm:$0xf]
    %v1124 = vld [vmem:[#allocation12 + $0x38] sm:$0xf]
    %v1125 = vld [vmem:[#allocation12 + $0x3c] sm:$0xf]
    %v1126 = vld [vmem:[%s45] sm:$0x1]
    %v1127 = vld [vmem:[#allocation13] sm:$0xf]
    %v1128 = vld [vmem:[#allocation13 + $0x4] sm:$0xf]
    %v1129 = vld [vmem:[#allocation13 + $0x8] sm:$0xf]
    %v1130 = vld [vmem:[#allocation13 + $0xc] sm:$0xf]
    %v1131 = vld [vmem:[#allocation13 + $0x10] sm:$0xf]
    %v1132 = vld [vmem:[#allocation13 + $0x14] sm:$0xf]
    %v1133 = vld [vmem:[#allocation13 + $0x18] sm:$0xf]
    %v1134 = vld [vmem:[#allocation13 + $0x1c] sm:$0xf]
    %v1135 = vld [vmem:[#allocation13 + $0x20] sm:$0xf]
    %v1136 = vld [vmem:[#allocation13 + $0x24] sm:$0xf]
    %v1137 = vld [vmem:[#allocation13 + $0x28] sm:$0xf]
    %v1138 = vld [vmem:[#allocation13 + $0x2c] sm:$0xf]
    %v1139 = vld [vmem:[#allocation13 + $0x30] sm:$0xf]
    %v1140 = vld [vmem:[#allocation13 + $0x34] sm:$0xf]
    %v1141 = vld [vmem:[#allocation13 + $0x38] sm:$0xf]
    %v1142 = vld [vmem:[#allocation13 + $0x3c] sm:$0xf]
    %v1143 = vld [vmem:[%s49] sm:$0x1]
    %v1144 = vpack.c.bf16 %v1109, %v1108
    %v1146 = vlaneseq
    %v1147 = vshrl.u32 %v1146, 7
    %v1148 = vsub.s32 0, %v1147
    %v1149 = vrot.slane %v1126, %v1148
    %v1167 = vunpack.c.l.b16 %v1110
    %v1168 = vunpack.c.l.b16 %v1111
    %v1169 = vunpack.c.l.b16 %v1112
    %v1170 = vunpack.c.l.b16 %v1113
    %v1171 = vunpack.c.l.b16 %v1114
    %v1172 = vunpack.c.l.b16 %v1115
    %v1173 = vunpack.c.l.b16 %v1116
    %v1174 = vunpack.c.l.b16 %v1117
    %v1175 = vunpack.c.l.b16 %v1118
    %v1176 = vunpack.c.l.b16 %v1119
    %v1177 = vunpack.c.l.b16 %v1120
    %v1178 = vunpack.c.l.b16 %v1121
    %v1179 = vunpack.c.l.b16 %v1122
    %v1180 = vunpack.c.l.b16 %v1123
    %v1181 = vunpack.c.l.b16 %v1124
    %v1182 = vunpack.c.l.b16 %v1125
    %v1183 = vpack.c.b16 %v1168, %v1167
    %v1184 = vpack.c.b16 %v1170, %v1169
    %v1185 = vpack.c.b16 %v1172, %v1171
    %v1186 = vpack.c.b16 %v1174, %v1173
    %v1187 = vpack.c.b16 %v1176, %v1175
    %v1188 = vpack.c.b16 %v1178, %v1177
    %v1189 = vpack.c.b16 %v1180, %v1179
    %v1190 = vpack.c.b16 %v1182, %v1181
    %1199 = vmatprep.subr.bf16.mxu0 0
    %1200 = vmatpush1.bf16.msra.mxu0 %v1183
    %1201 = vmatprep.subr.bf16.mxu0 0
    %1202 = vmatpush1.bf16.msra.mxu0 %v1184
    %1203 = vmatprep.subr.bf16.mxu0 0
    %1204 = vmatpush1.bf16.msra.mxu0 %v1185
    %1205 = vmatprep.subr.bf16.mxu0 0
    %1206 = vmatpush1.bf16.msra.mxu0 %v1186
    %1207 = vmatprep.subr.bf16.mxu0 0
    %1208 = vmatpush1.bf16.msra.mxu0 %v1187
    %1209 = vmatprep.subr.bf16.mxu0 0
    %1210 = vmatpush1.bf16.msra.mxu0 %v1188
    %1211 = vmatprep.subr.bf16.mxu0 0
    %1212 = vmatpush1.bf16.msra.mxu0 %v1189
    %1213 = vmatprep.subr.bf16.mxu0 0
    %1214 = vmatpush1.bf16.msra.mxu0 %v1190
    %1215 = vmatprep.subr.bf16.mxu0 0
    %1216 = vmatpush1.bf16.msra.mxu0 0
    %1217 = vmatprep.subr.bf16.mxu0 0
    %1218 = vmatpush1.bf16.msra.mxu0 0
    %1219 = vmatprep.subr.bf16.mxu0 0
    %1220 = vmatpush1.bf16.msra.mxu0 0
    %1221 = vmatprep.subr.bf16.mxu0 0
    %1222 = vmatpush1.bf16.msra.mxu0 0
    %1223 = vmatprep.subr.bf16.mxu0 0
    %1224 = vmatpush1.bf16.msra.mxu0 0
    %1225 = vmatprep.subr.bf16.mxu0 0
    %1226 = vmatpush1.bf16.msra.mxu0 0
    %1227 = vmatprep.subr.bf16.mxu0 0
    %1228 = vmatpush1.bf16.msra.mxu0 0
    %1229 = vmatprep.subr.bf16.mxu0 0
    %1230 = vmatpush1.bf16.msra.mxu0 0
    %1231 = vmatprep.mubr.bf16.mxu0 0
    %1232 = vmatmul.mubr.bf16.gmra.mrb[0].mxu0 %v1144
    %v1233 = vpop.f32.mrb[0].mxu0
    %v1234 = vadd.f32 %v1149, %v1233
    %v1235 = vpop.f32.mrb[0].mxu0
    %v1236 = vpop.f32.mrb[0].mxu0
    %v1237 = vadd.f32 %v1149, %v1236
    %v1238 = vpop.f32.mrb[0].mxu0
    %1239 = vdwg.mxu0
    %v1240 = vmul.f32 %v1234, 0.5
    %v1241 = vmul.f32 %v1237, 0.5
    %v1242 = vmul.f32 %v1234, 0.70710677
    %v1243 = vmul.f32 %v1237, 0.70710677
    %v1244 = verf.f32.pop %v1242
    %v1245 = verf.f32.pop %v1243
    %v1246 = vadd.f32 %v1244, 1.0
    %v1247 = vadd.f32 %v1245, 1.0
    %v1248 = vmul.f32 %v1240, %v1246
    %v1249 = vmul.f32 %v1241, %v1247
    %v1250 = vpack.c.bf16 %v1249, %v1248
    %v1252 = vlaneseq
    %v1253 = vshrl.u32 %v1252, 7
    %v1254 = vsub.s32 0, %v1253
    %v1255 = vrot.slane %v1143, %v1254
    %v1273 = vunpack.c.l.b16 %v1127
    %v1274 = vunpack.c.l.b16 %v1128
    %v1275 = vunpack.c.l.b16 %v1129
    %v1276 = vunpack.c.l.b16 %v1130
    %v1277 = vunpack.c.l.b16 %v1131
    %v1278 = vunpack.c.l.b16 %v1132
    %v1279 = vunpack.c.l.b16 %v1133
    %v1280 = vunpack.c.l.b16 %v1134
    %v1281 = vunpack.c.l.b16 %v1135
    %v1282 = vunpack.c.l.b16 %v1136
    %v1283 = vunpack.c.l.b16 %v1137
    %v1284 = vunpack.c.l.b16 %v1138
    %v1285 = vunpack.c.l.b16 %v1139
    %v1286 = vunpack.c.l.b16 %v1140
    %v1287 = vunpack.c.l.b16 %v1141
    %v1288 = vunpack.c.l.b16 %v1142
    %v1289 = vpack.c.b16 %v1274, %v1273
    %v1290 = vpack.c.b16 %v1276, %v1275
    %v1291 = vpack.c.b16 %v1278, %v1277
    %v1292 = vpack.c.b16 %v1280, %v1279
    %v1293 = vpack.c.b16 %v1282, %v1281
    %v1294 = vpack.c.b16 %v1284, %v1283
    %v1295 = vpack.c.b16 %v1286, %v1285
    %v1296 = vpack.c.b16 %v1288, %v1287
    %1305 = vmatprep.subr.bf16.mxu0 0
    %1306 = vmatpush1.bf16.msra.mxu0 %v1289
    %1307 = vmatprep.subr.bf16.mxu0 0
    %1308 = vmatpush1.bf16.msra.mxu0 %v1290
    %1309 = vmatprep.subr.bf16.mxu0 0
    %1310 = vmatpush1.bf16.msra.mxu0 %v1291
    %1311 = vmatprep.subr.bf16.mxu0 0
    %1312 = vmatpush1.bf16.msra.mxu0 %v1292
    %1313 = vmatprep.subr.bf16.mxu0 0
    %1314 = vmatpush1.bf16.msra.mxu0 %v1293
    %1315 = vmatprep.subr.bf16.mxu0 0
    %1316 = vmatpush1.bf16.msra.mxu0 %v1294
    %1317 = vmatprep.subr.bf16.mxu0 0
    %1318 = vmatpush1.bf16.msra.mxu0 %v1295
    %1319 = vmatprep.subr.bf16.mxu0 0
    %1320 = vmatpush1.bf16.msra.mxu0 %v1296
    %1321 = vmatprep.subr.bf16.mxu0 0
    %1322 = vmatpush1.bf16.msra.mxu0 0
    %1323 = vmatprep.subr.bf16.mxu0 0
    %1324 = vmatpush1.bf16.msra.mxu0 0
    %1325 = vmatprep.subr.bf16.mxu0 0
    %1326 = vmatpush1.bf16.msra.mxu0 0
    %1327 = vmatprep.subr.bf16.mxu0 0
    %1328 = vmatpush1.bf16.msra.mxu0 0
    %1329 = vmatprep.subr.bf16.mxu0 0
    %1330 = vmatpush1.bf16.msra.mxu0 0
    %1331 = vmatprep.subr.bf16.mxu0 0
    %1332 = vmatpush1.bf16.msra.mxu0 0
    %1333 = vmatprep.subr.bf16.mxu0 0
    %1334 = vmatpush1.bf16.msra.mxu0 0
    %1335 = vmatprep.subr.bf16.mxu0 0
    %1336 = vmatpush1.bf16.msra.mxu0 0
    %1337 = vmatprep.mubr.bf16.mxu0 0
    %1338 = vmatmul.mubr.bf16.gmra.mrb[0].mxu0 %v1250
    %v1339 = vpop.f32.mrb[0].mxu0
    %v1340 = vadd.f32 %v1255, %v1339
    %v1341 = vpop.f32.mrb[0].mxu0
    %v1342 = vpop.f32.mrb[0].mxu0
    %v1343 = vadd.f32 %v1255, %v1342
    %v1344 = vpop.f32.mrb[0].mxu0
    %1345 = vdwg.mxu0
    %v1346 = vadd.f32 %v1340, %v577
    %v1347 = vadd.f32 %v1343, %v578
    %v1348 = vmul.f32 %v1346, %v570
    %v1349 = vmul.f32 %v1347, %v575
    %v1350 = vadd.f32 %v1348, %v1349
    %v1351 = vrot.slane %v1350, 4
    %v1352 = vadd.f32 %v1350, %v1351
    %v1353 = vrot.slane %v1352, 2
    %v1354 = vadd.f32 %v1352, %v1353
    %v1355 = vrot.slane %v1354, 1
    %v1356 = vadd.f32 %v1354, %v1355
    %v1357 = vmul.f32 %v1356, 0.0625
    %v1358 = vsub.f32 %v1348, %v1357
    %v1359 = vsub.f32 %v1349, %v1357
    %v1360 = vmul.f32 %v1358, %v1358
    %v1361 = vmul.f32 %v1359, %v1359
    %v1362 = vmul.f32 %v1360, %v570
    %v1363 = vmul.f32 %v1361, %v575
    %v1364 = vadd.f32 %v1362, %v1363
    %v1365 = vrot.slane %v1364, 4
    %v1366 = vadd.f32 %v1364, %v1365
    %v1367 = vrot.slane %v1366, 2
    %v1368 = vadd.f32 %v1366, %v1367
    %v1369 = vrot.slane %v1368, 1
    %v1370 = vadd.f32 %v1368, %v1369
    %v1371 = vmul.f32 %v1370, 0.0625
    %v1372 = vadd.f32 %v1371, 1e-05
    %v1373 = vrsqrt.pop %v1372
    %v1374 = vmul.f32 %v1358, %v1373
    %v1375 = vmul.f32 %v1359, %v1373
    %v1376 = vld [vmem:[#allocation21] sm:$0x1]
    %v1378 = vlaneseq
    %v1379 = vshrl.u32 %v1378, 7
    %v1380 = vsub.s32 0, %v1379
    %v1381 = vrot.slane %v1376, %v1380
    %v1383 = vmul.f32 %v1374, %v1381
    %v1384 = vmul.f32 %v1375, %v1381
    %v1385 = vld [vmem:[#allocation22] sm:$0x1]
    %v1387 = vlaneseq
    %v1388 = vshrl.u32 %v1387, 7
    %v1389 = vsub.s32 0, %v1388
    %v1390 = vrot.slane %v1385, %v1389
    %v1392 = vadd.f32 %v1383, %v1390
    %v1393 = vadd.f32 %v1384, %v1390
    %v1394 = vmul.f32 %v1392, %v570
    %v1395 = vmul.f32 %v1393, %v575
    %v1396 = vpack.c.bf16 %v1103, %v1103
    %v1399 = vunpack.c.l.b16 %v326
    %v1400 = vunpack.c.l.b16 %v327
    %v1401 = vpack.c.b16 %v1400, %v1399
    %vm1402 = vcmask 64512
    %v1404 = vsel %vm1402, %v1401, 0
    %vm1406 = vcmask 1043456
    %v1408 = vsel %vm1406, %v1396, 0
    %1410 = vmatprep.subr.bf16.mxu0 0
    %1411 = vmatpush1.bf16.msra.mxu0 %v1408
    %1412 = vmatprep.subr.bf16.mxu0 0
    %1413 = vmatpush1.bf16.msra.mxu0 0
    %1414 = vmatprep.subr.bf16.mxu0 0
    %1415 = vmatpush1.bf16.msra.mxu0 0
    %1416 = vmatprep.subr.bf16.mxu0 0
    %1417 = vmatpush1.bf16.msra.mxu0 0
    %1418 = vmatprep.subr.bf16.mxu0 0
    %1419 = vmatpush1.bf16.msra.mxu0 0
    %1420 = vmatprep.subr.bf16.mxu0 0
    %1421 = vmatpush1.bf16.msra.mxu0 0
    %1422 = vmatprep.subr.bf16.mxu0 0
    %1423 = vmatpush1.bf16.msra.mxu0 0
    %1424 = vmatprep.subr.bf16.mxu0 0
    %1425 = vmatpush1.bf16.msra.mxu0 0
    %1426 = vmatprep.subr.bf16.mxu0 0
    %1427 = vmatpush1.bf16.msra.mxu0 0
    %1428 = vmatprep.subr.bf16.mxu0 0
    %1429 = vmatpush1.bf16.msra.mxu0 0
    %1430 = vmatprep.subr.bf16.mxu0 0
    %1431 = vmatpush1.bf16.msra.mxu0 0
    %1432 = vmatprep.subr.bf16.mxu0 0
    %1433 = vmatpush1.bf16.msra.mxu0 0
    %1434 = vmatprep.subr.bf16.mxu0 0
    %1435 = vmatpush1.bf16.msra.mxu0 0
    %1436 = vmatprep.subr.bf16.mxu0 0
    %1437 = vmatpush1.bf16.msra.mxu0 0
    %1438 = vmatprep.subr.bf16.mxu0 0
    %1439 = vmatpush1.bf16.msra.mxu0 0
    %1440 = vmatprep.subr.bf16.mxu0 0
    %1441 = vmatpush1.bf16.msra.mxu0 0
    %1442 = vmatprep.mubr.bf16.mxu0 0
    %1443 = vmatmul.mubr.bf16.gmra.mrb[0].mxu0 %v1404
    %v1444 = vpop.f32.mrb[0].mxu0
    %v1445 = vadd.f32 %v1394, %v1444
    %v1446 = vpop.f32.mrb[0].mxu0
    %v1447 = vpop.f32.mrb[0].mxu0
    %v1448 = vadd.f32 %v1395, %v1447
    %v1449 = vpop.f32.mrb[0].mxu0
    %1450 = vdwg.mxu0
    %v1451 = vld [vmem:[#allocation15] sm:$0xf]
    %v1452 = vld [vmem:[#allocation15 + $0x4] sm:$0xf]
    %v1453 = vld [vmem:[#allocation15 + $0x8] sm:$0xf]
    %v1454 = vld [vmem:[#allocation15 + $0xc] sm:$0xf]
    %v1455 = vld [vmem:[#allocation15 + $0x10] sm:$0xf]
    %v1456 = vld [vmem:[#allocation15 + $0x14] sm:$0xf]
    %v1457 = vld [vmem:[#allocation15 + $0x18] sm:$0xf]
    %v1458 = vld [vmem:[#allocation15 + $0x1c] sm:$0xf]
    %v1459 = vld [vmem:[#allocation15 + $0x20] sm:$0xf]
    %v1460 = vld [vmem:[#allocation15 + $0x24] sm:$0xf]
    %v1461 = vld [vmem:[#allocation15 + $0x28] sm:$0xf]
    %v1462 = vld [vmem:[#allocation15 + $0x2c] sm:$0xf]
    %v1463 = vld [vmem:[#allocation15 + $0x30] sm:$0xf]
    %v1464 = vld [vmem:[#allocation15 + $0x34] sm:$0xf]
    %v1465 = vld [vmem:[#allocation15 + $0x38] sm:$0xf]
    %v1466 = vld [vmem:[#allocation15 + $0x3c] sm:$0xf]
    %v1467 = vld [vmem:[#allocation16] sm:$0x1]
    %v1468 = vld [vmem:[#allocation18] sm:$0xf]
    %v1469 = vld [vmem:[#allocation18 + $0x4] sm:$0xf]
    %v1470 = vld [vmem:[#allocation18 + $0x8] sm:$0xf]
    %v1471 = vld [vmem:[#allocation18 + $0xc] sm:$0xf]
    %v1472 = vld [vmem:[#allocation18 + $0x10] sm:$0xf]
    %v1473 = vld [vmem:[#allocation18 + $0x14] sm:$0xf]
    %v1474 = vld [vmem:[#allocation18 + $0x18] sm:$0xf]
    %v1475 = vld [vmem:[#allocation18 + $0x1c] sm:$0xf]
    %v1476 = vld [vmem:[#allocation18 + $0x20] sm:$0xf]
    %v1477 = vld [vmem:[#allocation18 + $0x24] sm:$0xf]
    %v1478 = vld [vmem:[#allocation18 + $0x28] sm:$0xf]
    %v1479 = vld [vmem:[#allocation18 + $0x2c] sm:$0xf]
    %v1480 = vld [vmem:[#allocation18 + $0x30] sm:$0xf]
    %v1481 = vld [vmem:[#allocation18 + $0x34] sm:$0xf]
    %v1482 = vld [vmem:[#allocation18 + $0x38] sm:$0xf]
    %v1483 = vld [vmem:[#allocation18 + $0x3c] sm:$0xf]
    %v1484 = vld [vmem:[#allocation19] sm:$0x1]
    %v1485 = vpack.c.bf16 %v1448, %v1445
    %v1487 = vlaneseq
    %v1488 = vshrl.u32 %v1487, 7
    %v1489 = vsub.s32 0, %v1488
    %v1490 = vrot.slane %v1467, %v1489
    %v1508 = vunpack.c.l.b16 %v1451
    %v1509 = vunpack.c.l.b16 %v1452
    %v1510 = vunpack.c.l.b16 %v1453
    %v1511 = vunpack.c.l.b16 %v1454
    %v1512 = vunpack.c.l.b16 %v1455
    %v1513 = vunpack.c.l.b16 %v1456
    %v1514 = vunpack.c.l.b16 %v1457
    %v1515 = vunpack.c.l.b16 %v1458
    %v1516 = vunpack.c.l.b16 %v1459
    %v1517 = vunpack.c.l.b16 %v1460
    %v1518 = vunpack.c.l.b16 %v1461
    %v1519 = vunpack.c.l.b16 %v1462
    %v1520 = vunpack.c.l.b16 %v1463
    %v1521 = vunpack.c.l.b16 %v1464
    %v1522 = vunpack.c.l.b16 %v1465
    %v1523 = vunpack.c.l.b16 %v1466
    %v1524 = vpack.c.b16 %v1509, %v1508
    %v1525 = vpack.c.b16 %v1511, %v1510
    %v1526 = vpack.c.b16 %v1513, %v1512
    %v1527 = vpack.c.b16 %v1515, %v1514
    %v1528 = vpack.c.b16 %v1517, %v1516
    %v1529 = vpack.c.b16 %v1519, %v1518
    %v1530 = vpack.c.b16 %v1521, %v1520
    %v1531 = vpack.c.b16 %v1523, %v1522
    %1540 = vmatprep.subr.bf16.mxu0 0
    %1541 = vmatpush1.bf16.msra.mxu0 %v1524
    %1542 = vmatprep.subr.bf16.mxu0 0
    %1543 = vmatpush1.bf16.msra.mxu0 %v1525
    %1544 = vmatprep.subr.bf16.mxu0 0
    %1545 = vmatpush1.bf16.msra.mxu0 %v1526
    %1546 = vmatprep.subr.bf16.mxu0 0
    %1547 = vmatpush1.bf16.msra.mxu0 %v1527
    %1548 = vmatprep.subr.bf16.mxu0 0
    %1549 = vmatpush1.bf16.msra.mxu0 %v1528
    %1550 = vmatprep.subr.bf16.mxu0 0
    %1551 = vmatpush1.bf16.msra.mxu0 %v1529
    %1552 = vmatprep.subr.bf16.mxu0 0
    %1553 = vmatpush1.bf16.msra.mxu0 %v1530
    %1554 = vmatprep.subr.bf16.mxu0 0
    %1555 = vmatpush1.bf16.msra.mxu0 %v1531
    %1556 = vmatprep.subr.bf16.mxu0 0
    %1557 = vmatpush1.bf16.msra.mxu0 0
    %1558 = vmatprep.subr.bf16.mxu0 0
    %1559 = vmatpush1.bf16.msra.mxu0 0
    %1560 = vmatprep.subr.bf16.mxu0 0
    %1561 = vmatpush1.bf16.msra.mxu0 0
    %1562 = vmatprep.subr.bf16.mxu0 0
    %1563 = vmatpush1.bf16.msra.mxu0 0
    %1564 = vmatprep.subr.bf16.mxu0 0
    %1565 = vmatpush1.bf16.msra.mxu0 0
    %1566 = vmatprep.subr.bf16.mxu0 0
    %1567 = vmatpush1.bf16.msra.mxu0 0
    %1568 = vmatprep.subr.bf16.mxu0 0
    %1569 = vmatpush1.bf16.msra.mxu0 0
    %1570 = vmatprep.subr.bf16.mxu0 0
    %1571 = vmatpush1.bf16.msra.mxu0 0
    %1572 = vmatprep.mubr.bf16.mxu0 0
    %1573 = vmatmul.mubr.bf16.gmra.mrb[0].mxu0 %v1485
    %v1574 = vpop.f32.mrb[0].mxu0
    %v1575 = vadd.f32 %v1490, %v1574
    %v1576 = vpop.f32.mrb[0].mxu0
    %v1577 = vpop.f32.mrb[0].mxu0
    %v1578 = vadd.f32 %v1490, %v1577
    %v1579 = vpop.f32.mrb[0].mxu0
    %1580 = vdwg.mxu0
    %v1581 = vmul.f32 %v1575, 0.5
    %v1582 = vmul.f32 %v1578, 0.5
    %v1583 = vmul.f32 %v1575, 0.70710677
    %v1584 = vmul.f32 %v1578, 0.70710677
    %v1585 = verf.f32.pop %v1583
    %v1586 = verf.f32.pop %v1584
    %v1587 = vadd.f32 %v1585, 1.0
    %v1588 = vadd.f32 %v1586, 1.0
    %v1589 = vmul.f32 %v1581, %v1587
    %v1590 = vmul.f32 %v1582, %v1588
    %v1591 = vpack.c.bf16 %v1590, %v1589
    %v1593 = vlaneseq
    %v1594 = vshrl.u32 %v1593, 7
    %v1595 = vsub.s32 0, %v1594
    %v1596 = vrot.slane %v1484, %v1595
    %v1614 = vunpack.c.l.b16 %v1468
    %v1615 = vunpack.c.l.b16 %v1469
    %v1616 = vunpack.c.l.b16 %v1470
    %v1617 = vunpack.c.l.b16 %v1471
    %v1618 = vunpack.c.l.b16 %v1472
    %v1619 = vunpack.c.l.b16 %v1473
    %v1620 = vunpack.c.l.b16 %v1474
    %v1621 = vunpack.c.l.b16 %v1475
    %v1622 = vunpack.c.l.b16 %v1476
    %v1623 = vunpack.c.l.b16 %v1477
    %v1624 = vunpack.c.l.b16 %v1478
    %v1625 = vunpack.c.l.b16 %v1479
    %v1626 = vunpack.c.l.b16 %v1480
    %v1627 = vunpack.c.l.b16 %v1481
    %v1628 = vunpack.c.l.b16 %v1482
    %v1629 = vunpack.c.l.b16 %v1483
    %v1630 = vpack.c.b16 %v1615, %v1614
    %v1631 = vpack.c.b16 %v1617, %v1616
    %v1632 = vpack.c.b16 %v1619, %v1618
    %v1633 = vpack.c.b16 %v1621, %v1620
    %v1634 = vpack.c.b16 %v1623, %v1622
    %v1635 = vpack.c.b16 %v1625, %v1624
    %v1636 = vpack.c.b16 %v1627, %v1626
    %v1637 = vpack.c.b16 %v1629, %v1628
    %1646 = vmatprep.subr.bf16.mxu0 0
    %1647 = vmatpush1.bf16.msra.mxu0 %v1630
    %1648 = vmatprep.subr.bf16.mxu0 0
    %1649 = vmatpush1.bf16.msra.mxu0 %v1631
    %1650 = vmatprep.subr.bf16.mxu0 0
    %1651 = vmatpush1.bf16.msra.mxu0 %v1632
    %1652 = vmatprep.subr.bf16.mxu0 0
    %1653 = vmatpush1.bf16.msra.mxu0 %v1633
    %1654 = vmatprep.subr.bf16.mxu0 0
    %1655 = vmatpush1.bf16.msra.mxu0 %v1634
    %1656 = vmatprep.subr.bf16.mxu0 0
    %1657 = vmatpush1.bf16.msra.mxu0 %v1635
    %1658 = vmatprep.subr.bf16.mxu0 0
    %1659 = vmatpush1.bf16.msra.mxu0 %v1636
    %1660 = vmatprep.subr.bf16.mxu0 0
    %1661 = vmatpush1.bf16.msra.mxu0 %v1637
    %1662 = vmatprep.subr.bf16.mxu0 0
    %1663 = vmatpush1.bf16.msra.mxu0 0
    %1664 = vmatprep.subr.bf16.mxu0 0
    %1665 = vmatpush1.bf16.msra.mxu0 0
    %1666 = vmatprep.subr.bf16.mxu0 0
    %1667 = vmatpush1.bf16.msra.mxu0 0
    %1668 = vmatprep.subr.bf16.mxu0 0
    %1669 = vmatpush1.bf16.msra.mxu0 0
    %1670 = vmatprep.subr.bf16.mxu0 0
    %1671 = vmatpush1.bf16.msra.mxu0 0
    %1672 = vmatprep.subr.bf16.mxu0 0
    %1673 = vmatpush1.bf16.msra.mxu0 0
    %1674 = vmatprep.subr.bf16.mxu0 0
    %1675 = vmatpush1.bf16.msra.mxu0 0
    %1676 = vmatprep.subr.bf16.mxu0 0
    %1677 = vmatpush1.bf16.msra.mxu0 0
    %1678 = vmatprep.mubr.bf16.mxu0 0
    %1679 = vmatmul.mubr.bf16.gmra.mrb[0].mxu0 %v1591
    %v1680 = vpop.f32.mrb[0].mxu0
    %v1681 = vadd.f32 %v1596, %v1680
    %v1682 = vpop.f32.mrb[0].mxu0
    %v1683 = vpop.f32.mrb[0].mxu0
    %v1684 = vadd.f32 %v1596, %v1683
    %v1685 = vpop.f32.mrb[0].mxu0
    %1686 = vdwg.mxu0
    %v1687 = vadd.f32 %v1681, %v1394
    %v1688 = vadd.f32 %v1684, %v1395
    %v1689 = vmul.f32 %v1687, %v570
    %v1690 = vmul.f32 %v1688, %v575
    %v1691 = vpack.c.bf16 %v1690, %v1689
    %1692 = vmatprep.subr.bf16.mxu0 0
    %1693 = vmatpush1.bf16.msra.mxu0 %v1691
    %1694 = vmatprep.subr.bf16.mxu0 0
    %1695 = vmatpush1.bf16.msra.mxu0 0
    %1696 = vmatprep.subr.bf16.mxu0 0
    %1697 = vmatpush1.bf16.msra.mxu0 0
    %1698 = vmatprep.subr.bf16.mxu0 0
    %1699 = vmatpush1.bf16.msra.mxu0 0
    %1700 = vmatprep.subr.bf16.mxu0 0
    %1701 = vmatpush1.bf16.msra.mxu0 0
    %1702 = vmatprep.subr.bf16.mxu0 0
    %1703 = vmatpush1.bf16.msra.mxu0 0
    %1704 = vmatprep.subr.bf16.mxu0 0
    %1705 = vmatpush1.bf16.msra.mxu0 0
    %1706 = vmatprep.subr.bf16.mxu0 0
    %1707 = vmatpush1.bf16.msra.mxu0 0
    %1708 = vmatprep.subr.bf16.mxu0 0
    %1709 = vmatpush1.bf16.msra.mxu0 0
    %1710 = vmatprep.subr.bf16.mxu0 0
    %1711 = vmatpush1.bf16.msra.mxu0 0
    %1712 = vmatprep.subr.bf16.mxu0 0
    %1713 = vmatpush1.bf16.msra.mxu0 0
    %1714 = vmatprep.subr.bf16.mxu0 0
    %1715 = vmatpush1.bf16.msra.mxu0 0
    %1716 = vmatprep.subr.bf16.mxu0 0
    %1717 = vmatpush1.bf16.msra.mxu0 0
    %1718 = vmatprep.subr.bf16.mxu0 0
    %1719 = vmatpush1.bf16.msra.mxu0 0
    %1720 = vmatprep.subr.bf16.mxu0 0
    %1721 = vmatpush1.bf16.msra.mxu0 0
    %1722 = vmatprep.subr.bf16.mxu0 0
    %1723 = vmatpush1.bf16.msra.mxu0 0
    %1724 = vmatprep.mubr.bf16.mxu0 0
    %1725 = vmatmul.mubr.bf16.gmra.mrb[0].mxu0 %v590
    %v1726 = vpop.f32.mrb[0].mxu0
    %v1727 = vadd.f32 0.0, %v1726
    %v1728 = vpop.f32.mrb[0].mxu0
    %v1729 = vpop.f32.mrb[0].mxu0
    %v1730 = vadd.f32 0.0, %v1729
    %v1731 = vpop.f32.mrb[0].mxu0
    %1732 = vmatprep.mubr.bf16.mxu0 0
    %1733 = vmatmul.mubr.bf16.gmra.mrb[0].mxu0 %v593
    %v1734 = vpop.f32.mrb[0].mxu0
    %v1735 = vadd.f32 0.0, %v1734
    %v1736 = vpop.f32.mrb[0].mxu0
    %v1737 = vpop.f32.mrb[0].mxu0
    %v1738 = vpop.f32.mrb[0].mxu0
    %1739 = vdwg.mxu0
    %s1740 = scalar_lea.vmem [#allocation6], 64
    %v1741 = vld [vmem:[%s1740] sm:$0xf]
    %v1742 = vld [vmem:[%s1740 + $0x4] sm:$0xf]
    %v1743 = vld [vmem:[%s1740 + $0x8] sm:$0xf]
    %v1744 = vld [vmem:[%s1740 + $0xc] sm:$0xf]
    %v1745 = vld [vmem:[%s1740 + $0x10] sm:$0xf]
    %v1746 = vld [vmem:[%s1740 + $0x14] sm:$0xf]
    %v1747 = vld [vmem:[%s1740 + $0x18] sm:$0xf]
    %v1748 = vld [vmem:[%s1740 + $0x1c] sm:$0xf]
    %v1749 = vld [vmem:[%s1740 + $0x20] sm:$0xf]
    %v1750 = vld [vmem:[%s1740 + $0x24] sm:$0xf]
    %v1751 = vld [vmem:[%s1740 + $0x28] sm:$0xf]
    %v1752 = vld [vmem:[%s1740 + $0x2c] sm:$0xf]
    %v1753 = vld [vmem:[%s1740 + $0x30] sm:$0xf]
    %v1754 = vld [vmem:[%s1740 + $0x34] sm:$0xf]
    %v1755 = vld [vmem:[%s1740 + $0x38] sm:$0xf]
    %v1756 = vld [vmem:[%s1740 + $0x3c] sm:$0xf]
    %s1757 = scalar_lea.vmem %s29, 1
    %v1758 = vld [vmem:[%s1757] sm:$0x1]
    %s1759 = scalar_lea.vmem [#allocation7], 64
    %v1760 = vld [vmem:[%s1759] sm:$0xf]
    %v1761 = vld [vmem:[%s1759 + $0x4] sm:$0xf]
    %v1762 = vld [vmem:[%s1759 + $0x8] sm:$0xf]
    %v1763 = vld [vmem:[%s1759 + $0xc] sm:$0xf]
    %v1764 = vld [vmem:[%s1759 + $0x10] sm:$0xf]
    %v1765 = vld [vmem:[%s1759 + $0x14] sm:$0xf]
    %v1766 = vld [vmem:[%s1759 + $0x18] sm:$0xf]
    %v1767 = vld [vmem:[%s1759 + $0x1c] sm:$0xf]
    %v1768 = vld [vmem:[%s1759 + $0x20] sm:$0xf]
    %v1769 = vld [vmem:[%s1759 + $0x24] sm:$0xf]
    %v1770 = vld [vmem:[%s1759 + $0x28] sm:$0xf]
    %v1771 = vld [vmem:[%s1759 + $0x2c] sm:$0xf]
    %v1772 = vld [vmem:[%s1759 + $0x30] sm:$0xf]
    %v1773 = vld [vmem:[%s1759 + $0x34] sm:$0xf]
    %v1774 = vld [vmem:[%s1759 + $0x38] sm:$0xf]
    %v1775 = vld [vmem:[%s1759 + $0x3c] sm:$0xf]
    %s1776 = scalar_lea.vmem %s33, 1
    %v1777 = vld [vmem:[%s1776] sm:$0x1]
    %v1778 = vpack.c.bf16 %v1727, %v1727
    %v1780 = vlaneseq
    %v1781 = vshrl.u32 %v1780, 7
    %v1782 = vsub.s32 0, %v1781
    %v1783 = vrot.slane %v1758, %v1782
    %v1801 = vunpack.c.l.b16 %v1741
    %v1802 = vunpack.c.l.b16 %v1742
    %v1803 = vunpack.c.l.b16 %v1743
    %v1804 = vunpack.c.l.b16 %v1744
    %v1805 = vunpack.c.l.b16 %v1745
    %v1806 = vunpack.c.l.b16 %v1746
    %v1807 = vunpack.c.l.b16 %v1747
    %v1808 = vunpack.c.l.b16 %v1748
    %v1809 = vunpack.c.l.b16 %v1749
    %v1810 = vunpack.c.l.b16 %v1750
    %v1811 = vunpack.c.l.b16 %v1751
    %v1812 = vunpack.c.l.b16 %v1752
    %v1813 = vunpack.c.l.b16 %v1753
    %v1814 = vunpack.c.l.b16 %v1754
    %v1815 = vunpack.c.l.b16 %v1755
    %v1816 = vunpack.c.l.b16 %v1756
    %v1817 = vpack.c.b16 %v1802, %v1801
    %v1818 = vpack.c.b16 %v1804, %v1803
    %v1819 = vpack.c.b16 %v1806, %v1805
    %v1820 = vpack.c.b16 %v1808, %v1807
    %v1821 = vpack.c.b16 %v1810, %v1809
    %v1822 = vpack.c.b16 %v1812, %v1811
    %v1823 = vpack.c.b16 %v1814, %v1813
    %v1824 = vpack.c.b16 %v1816, %v1815
    %1833 = vmatprep.subr.bf16.mxu0 0
    %1834 = vmatpush1.bf16.msra.mxu0 %v1817
    %1835 = vmatprep.subr.bf16.mxu0 0
    %1836 = vmatpush1.bf16.msra.mxu0 %v1818
    %1837 = vmatprep.subr.bf16.mxu0 0
    %1838 = vmatpush1.bf16.msra.mxu0 %v1819
    %1839 = vmatprep.subr.bf16.mxu0 0
    %1840 = vmatpush1.bf16.msra.mxu0 %v1820
    %1841 = vmatprep.subr.bf16.mxu0 0
    %1842 = vmatpush1.bf16.msra.mxu0 %v1821
    %1843 = vmatprep.subr.bf16.mxu0 0
    %1844 = vmatpush1.bf16.msra.mxu0 %v1822
    %1845 = vmatprep.subr.bf16.mxu0 0
    %1846 = vmatpush1.bf16.msra.mxu0 %v1823
    %1847 = vmatprep.subr.bf16.mxu0 0
    %1848 = vmatpush1.bf16.msra.mxu0 %v1824
    %1849 = vmatprep.subr.bf16.mxu0 0
    %1850 = vmatpush1.bf16.msra.mxu0 0
    %1851 = vmatprep.subr.bf16.mxu0 0
    %1852 = vmatpush1.bf16.msra.mxu0 0
    %1853 = vmatprep.subr.bf16.mxu0 0
    %1854 = vmatpush1.bf16.msra.mxu0 0
    %1855 = vmatprep.subr.bf16.mxu0 0
    %1856 = vmatpush1.bf16.msra.mxu0 0
    %1857 = vmatprep.subr.bf16.mxu0 0
    %1858 = vmatpush1.bf16.msra.mxu0 0
    %1859 = vmatprep.subr.bf16.mxu0 0
    %1860 = vmatpush1.bf16.msra.mxu0 0
    %1861 = vmatprep.subr.bf16.mxu0 0
    %1862 = vmatpush1.bf16.msra.mxu0 0
    %1863 = vmatprep.subr.bf16.mxu0 0
    %1864 = vmatpush1.bf16.msra.mxu0 0
    %1865 = vmatprep.mubr.bf16.mxu0 0
    %1866 = vmatmul.mubr.bf16.gmra.mrb[0].mxu0 %v1778
    %v1867 = vpop.f32.mrb[0].mxu0
    %v1868 = vadd.f32 %v1783, %v1867
    %v1869 = vpop.f32.mrb[0].mxu0
    %v1870 = vpop.f32.mrb[0].mxu0
    %v1871 = vpop.f32.mrb[0].mxu0
    %1872 = vdwg.mxu0
    %v1873 = vmul.f32 %v1868, 0.5
    %v1874 = vmul.f32 %v1868, 0.70710677
    %v1875 = verf.f32.pop %v1874
    %v1876 = vadd.f32 %v1875, 1.0
    %v1877 = vmul.f32 %v1873, %v1876
    %v1878 = vpack.c.bf16 %v1877, %v1877
    %v1880 = vlaneseq
    %v1881 = vshrl.u32 %v1880, 7
    %v1882 = vsub.s32 0, %v1881
    %v1883 = vrot.slane %v1777, %v1882
    %v1901 = vunpack.c.l.b16 %v1760
    %v1902 = vunpack.c.l.b16 %v1761
    %v1903 = vunpack.c.l.b16 %v1762
    %v1904 = vunpack.c.l.b16 %v1763
    %v1905 = vunpack.c.l.b16 %v1764
    %v1906 = vunpack.c.l.b16 %v1765
    %v1907 = vunpack.c.l.b16 %v1766
    %v1908 = vunpack.c.l.b16 %v1767
    %v1909 = vunpack.c.l.b16 %v1768
    %v1910 = vunpack.c.l.b16 %v1769
    %v1911 = vunpack.c.l.b16 %v1770
    %v1912 = vunpack.c.l.b16 %v1771
    %v1913 = vunpack.c.l.b16 %v1772
    %v1914 = vunpack.c.l.b16 %v1773
    %v1915 = vunpack.c.l.b16 %v1774
    %v1916 = vunpack.c.l.b16 %v1775
    %v1917 = vpack.c.b16 %v1902, %v1901
    %v1918 = vpack.c.b16 %v1904, %v1903
    %v1919 = vpack.c.b16 %v1906, %v1905
    %v1920 = vpack.c.b16 %v1908, %v1907
    %v1921 = vpack.c.b16 %v1910, %v1909
    %v1922 = vpack.c.b16 %v1912, %v1911
    %v1923 = vpack.c.b16 %v1914, %v1913
    %v1924 = vpack.c.b16 %v1916, %v1915
    %1933 = vmatprep.subr.bf16.mxu0 0
    %1934 = vmatpush1.bf16.msra.mxu0 %v1917
    %1935 = vmatprep.subr.bf16.mxu0 0
    %1936 = vmatpush1.bf16.msra.mxu0 %v1918
    %1937 = vmatprep.subr.bf16.mxu0 0
    %1938 = vmatpush1.bf16.msra.mxu0 %v1919
    %1939 = vmatprep.subr.bf16.mxu0 0
    %1940 = vmatpush1.bf16.msra.mxu0 %v1920
    %1941 = vmatprep.subr.bf16.mxu0 0
    %1942 = vmatpush1.bf16.msra.mxu0 %v1921
    %1943 = vmatprep.subr.bf16.mxu0 0
    %1944 = vmatpush1.bf16.msra.mxu0 %v1922
    %1945 = vmatprep.subr.bf16.mxu0 0
    %1946 = vmatpush1.bf16.msra.mxu0 %v1923
    %1947 = vmatprep.subr.bf16.mxu0 0
    %1948 = vmatpush1.bf16.msra.mxu0 %v1924
    %1949 = vmatprep.subr.bf16.mxu0 0
    %1950 = vmatpush1.bf16.msra.mxu0 0
    %1951 = vmatprep.subr.bf16.mxu0 0
    %1952 = vmatpush1.bf16.msra.mxu0 0
    %1953 = vmatprep.subr.bf16.mxu0 0
    %1954 = vmatpush1.bf16.msra.mxu0 0
    %1955 = vmatprep.subr.bf16.mxu0 0
    %1956 = vmatpush1.bf16.msra.mxu0 0
    %1957 = vmatprep.subr.bf16.mxu0 0
    %1958 = vmatpush1.bf16.msra.mxu0 0
    %1959 = vmatprep.subr.bf16.mxu0 0
    %1960 = vmatpush1.bf16.msra.mxu0 0
    %1961 = vmatprep.subr.bf16.mxu0 0
    %1962 = vmatpush1.bf16.msra.mxu0 0
    %1963 = vmatprep.subr.bf16.mxu0 0
    %1964 = vmatpush1.bf16.msra.mxu0 0
    %1965 = vmatprep.mubr.bf16.mxu0 0
    %1966 = vmatmul.mubr.bf16.gmra.mrb[0].mxu0 %v1878
    %v1967 = vpop.f32.mrb[0].mxu0
    %v1968 = vadd.f32 %v1883, %v1967
    %v1969 = vpop.f32.mrb[0].mxu0
    %v1970 = vpop.f32.mrb[0].mxu0
    %v1971 = vpop.f32.mrb[0].mxu0
    %1972 = vdwg.mxu0
    %v1973 = vadd.f32 %v876, %v1968
    %s1974 = scalar_lea.vmem [#allocation9], 64
    %v1975 = vld [vmem:[%s1974] sm:$0xf]
    %v1976 = vld [vmem:[%s1974 + $0x4] sm:$0xf]
    %v1977 = vld [vmem:[%s1974 + $0x8] sm:$0xf]
    %v1978 = vld [vmem:[%s1974 + $0xc] sm:$0xf]
    %v1979 = vld [vmem:[%s1974 + $0x10] sm:$0xf]
    %v1980 = vld [vmem:[%s1974 + $0x14] sm:$0xf]
    %v1981 = vld [vmem:[%s1974 + $0x18] sm:$0xf]
    %v1982 = vld [vmem:[%s1974 + $0x1c] sm:$0xf]
    %v1983 = vld [vmem:[%s1974 + $0x20] sm:$0xf]
    %v1984 = vld [vmem:[%s1974 + $0x24] sm:$0xf]
    %v1985 = vld [vmem:[%s1974 + $0x28] sm:$0xf]
    %v1986 = vld [vmem:[%s1974 + $0x2c] sm:$0xf]
    %v1987 = vld [vmem:[%s1974 + $0x30] sm:$0xf]
    %v1988 = vld [vmem:[%s1974 + $0x34] sm:$0xf]
    %v1989 = vld [vmem:[%s1974 + $0x38] sm:$0xf]
    %v1990 = vld [vmem:[%s1974 + $0x3c] sm:$0xf]
    %s1991 = scalar_lea.vmem %s37, 1
    %v1992 = vld [vmem:[%s1991] sm:$0x1]
    %s1993 = scalar_lea.vmem [#allocation10], 64
    %v1994 = vld [vmem:[%s1993] sm:$0xf]
    %v1995 = vld [vmem:[%s1993 + $0x4] sm:$0xf]
    %v1996 = vld [vmem:[%s1993 + $0x8] sm:$0xf]
    %v1997 = vld [vmem:[%s1993 + $0xc] sm:$0xf]
    %v1998 = vld [vmem:[%s1993 + $0x10] sm:$0xf]
    %v1999 = vld [vmem:[%s1993 + $0x14] sm:$0xf]
    %v2000 = vld [vmem:[%s1993 + $0x18] sm:$0xf]
    %v2001 = vld [vmem:[%s1993 + $0x1c] sm:$0xf]
    %v2002 = vld [vmem:[%s1993 + $0x20] sm:$0xf]
    %v2003 = vld [vmem:[%s1993 + $0x24] sm:$0xf]
    %v2004 = vld [vmem:[%s1993 + $0x28] sm:$0xf]
    %v2005 = vld [vmem:[%s1993 + $0x2c] sm:$0xf]
    %v2006 = vld [vmem:[%s1993 + $0x30] sm:$0xf]
    %v2007 = vld [vmem:[%s1993 + $0x34] sm:$0xf]
    %v2008 = vld [vmem:[%s1993 + $0x38] sm:$0xf]
    %v2009 = vld [vmem:[%s1993 + $0x3c] sm:$0xf]
    %s2010 = scalar_lea.vmem %s41, 1
    %v2011 = vld [vmem:[%s2010] sm:$0x1]
    %v2012 = vpack.c.bf16 %v1973, %v1973
    %v2014 = vlaneseq
    %v2015 = vshrl.u32 %v2014, 7
    %v2016 = vsub.s32 0, %v2015
    %v2017 = vrot.slane %v1992, %v2016
    %v2035 = vunpack.c.l.b16 %v1975
    %v2036 = vunpack.c.l.b16 %v1976
    %v2037 = vunpack.c.l.b16 %v1977
    %v2038 = vunpack.c.l.b16 %v1978
    %v2039 = vunpack.c.l.b16 %v1979
    %v2040 = vunpack.c.l.b16 %v1980
    %v2041 = vunpack.c.l.b16 %v1981
    %v2042 = vunpack.c.l.b16 %v1982
    %v2043 = vunpack.c.l.b16 %v1983
    %v2044 = vunpack.c.l.b16 %v1984
    %v2045 = vunpack.c.l.b16 %v1985
    %v2046 = vunpack.c.l.b16 %v1986
    %v2047 = vunpack.c.l.b16 %v1987
    %v2048 = vunpack.c.l.b16 %v1988
    %v2049 = vunpack.c.l.b16 %v1989
    %v2050 = vunpack.c.l.b16 %v1990
    %v2051 = vpack.c.b16 %v2036, %v2035
    %v2052 = vpack.c.b16 %v2038, %v2037
    %v2053 = vpack.c.b16 %v2040, %v2039
    %v2054 = vpack.c.b16 %v2042, %v2041
    %v2055 = vpack.c.b16 %v2044, %v2043
    %v2056 = vpack.c.b16 %v2046, %v2045
    %v2057 = vpack.c.b16 %v2048, %v2047
    %v2058 = vpack.c.b16 %v2050, %v2049
    %2067 = vmatprep.subr.bf16.mxu0 0
    %2068 = vmatpush1.bf16.msra.mxu0 %v2051
    %2069 = vmatprep.subr.bf16.mxu0 0
    %2070 = vmatpush1.bf16.msra.mxu0 %v2052
    %2071 = vmatprep.subr.bf16.mxu0 0
    %2072 = vmatpush1.bf16.msra.mxu0 %v2053
    %2073 = vmatprep.subr.bf16.mxu0 0
    %2074 = vmatpush1.bf16.msra.mxu0 %v2054
    %2075 = vmatprep.subr.bf16.mxu0 0
    %2076 = vmatpush1.bf16.msra.mxu0 %v2055
    %2077 = vmatprep.subr.bf16.mxu0 0
    %2078 = vmatpush1.bf16.msra.mxu0 %v2056
    %2079 = vmatprep.subr.bf16.mxu0 0
    %2080 = vmatpush1.bf16.msra.mxu0 %v2057
    %2081 = vmatprep.subr.bf16.mxu0 0
    %2082 = vmatpush1.bf16.msra.mxu0 %v2058
    %2083 = vmatprep.subr.bf16.mxu0 0
    %2084 = vmatpush1.bf16.msra.mxu0 0
    %2085 = vmatprep.subr.bf16.mxu0 0
    %2086 = vmatpush1.bf16.msra.mxu0 0
    %2087 = vmatprep.subr.bf16.mxu0 0
    %2088 = vmatpush1.bf16.msra.mxu0 0
    %2089 = vmatprep.subr.bf16.mxu0 0
    %2090 = vmatpush1.bf16.msra.mxu0 0
    %2091 = vmatprep.subr.bf16.mxu0 0
    %2092 = vmatpush1.bf16.msra.mxu0 0
    %2093 = vmatprep.subr.bf16.mxu0 0
    %2094 = vmatpush1.bf16.msra.mxu0 0
    %2095 = vmatprep.subr.bf16.mxu0 0
    %2096 = vmatpush1.bf16.msra.mxu0 0
    %2097 = vmatprep.subr.bf16.mxu0 0
    %2098 = vmatpush1.bf16.msra.mxu0 0
    %2099 = vmatprep.mubr.bf16.mxu0 0
    %2100 = vmatmul.mubr.bf16.gmra.mrb[0].mxu0 %v2012
    %v2101 = vpop.f32.mrb[0].mxu0
    %v2102 = vadd.f32 %v2017, %v2101
    %v2103 = vpop.f32.mrb[0].mxu0
    %v2104 = vpop.f32.mrb[0].mxu0
    %v2105 = vpop.f32.mrb[0].mxu0
    %2106 = vdwg.mxu0
    %v2107 = vmul.f32 %v2102, 0.5
    %v2108 = vmul.f32 %v2102, 0.70710677
    %v2109 = verf.f32.pop %v2108
    %v2110 = vadd.f32 %v2109, 1.0
    %v2111 = vmul.f32 %v2107, %v2110
    %v2112 = vpack.c.bf16 %v2111, %v2111
    %v2114 = vlaneseq
    %v2115 = vshrl.u32 %v2114, 7
    %v2116 = vsub.s32 0, %v2115
    %v2117 = vrot.slane %v2011, %v2116
    %v2135 = vunpack.c.l.b16 %v1994
    %v2136 = vunpack.c.l.b16 %v1995
    %v2137 = vunpack.c.l.b16 %v1996
    %v2138 = vunpack.c.l.b16 %v1997
    %v2139 = vunpack.c.l.b16 %v1998
    %v2140 = vunpack.c.l.b16 %v1999
    %v2141 = vunpack.c.l.b16 %v2000
    %v2142 = vunpack.c.l.b16 %v2001
    %v2143 = vunpack.c.l.b16 %v2002
    %v2144 = vunpack.c.l.b16 %v2003
    %v2145 = vunpack.c.l.b16 %v2004
    %v2146 = vunpack.c.l.b16 %v2005
    %v2147 = vunpack.c.l.b16 %v2006
    %v2148 = vunpack.c.l.b16 %v2007
    %v2149 = vunpack.c.l.b16 %v2008
    %v2150 = vunpack.c.l.b16 %v2009
    %v2151 = vpack.c.b16 %v2136, %v2135
    %v2152 = vpack.c.b16 %v2138, %v2137
    %v2153 = vpack.c.b16 %v2140, %v2139
    %v2154 = vpack.c.b16 %v2142, %v2141
    %v2155 = vpack.c.b16 %v2144, %v2143
    %v2156 = vpack.c.b16 %v2146, %v2145
    %v2157 = vpack.c.b16 %v2148, %v2147
    %v2158 = vpack.c.b16 %v2150, %v2149
    %2167 = vmatprep.subr.bf16.mxu0 0
    %2168 = vmatpush1.bf16.msra.mxu0 %v2151
    %2169 = vmatprep.subr.bf16.mxu0 0
    %2170 = vmatpush1.bf16.msra.mxu0 %v2152
    %2171 = vmatprep.subr.bf16.mxu0 0
    %2172 = vmatpush1.bf16.msra.mxu0 %v2153
    %2173 = vmatprep.subr.bf16.mxu0 0
    %2174 = vmatpush1.bf16.msra.mxu0 %v2154
    %2175 = vmatprep.subr.bf16.mxu0 0
    %2176 = vmatpush1.bf16.msra.mxu0 %v2155
    %2177 = vmatprep.subr.bf16.mxu0 0
    %2178 = vmatpush1.bf16.msra.mxu0 %v2156
    %2179 = vmatprep.subr.bf16.mxu0 0
    %2180 = vmatpush1.bf16.msra.mxu0 %v2157
    %2181 = vmatprep.subr.bf16.mxu0 0
    %2182 = vmatpush1.bf16.msra.mxu0 %v2158
    %2183 = vmatprep.subr.bf16.mxu0 0
    %2184 = vmatpush1.bf16.msra.mxu0 0
    %2185 = vmatprep.subr.bf16.mxu0 0
    %2186 = vmatpush1.bf16.msra.mxu0 0
    %2187 = vmatprep.subr.bf16.mxu0 0
    %2188 = vmatpush1.bf16.msra.mxu0 0
    %2189 = vmatprep.subr.bf16.mxu0 0
    %2190 = vmatpush1.bf16.msra.mxu0 0
    %2191 = vmatprep.subr.bf16.mxu0 0
    %2192 = vmatpush1.bf16.msra.mxu0 0
    %2193 = vmatprep.subr.bf16.mxu0 0
    %2194 = vmatpush1.bf16.msra.mxu0 0
    %2195 = vmatprep.subr.bf16.mxu0 0
    %2196 = vmatpush1.bf16.msra.mxu0 0
    %2197 = vmatprep.subr.bf16.mxu0 0
    %2198 = vmatpush1.bf16.msra.mxu0 0
    %2199 = vmatprep.mubr.bf16.mxu0 0
    %2200 = vmatmul.mubr.bf16.gmra.mrb[0].mxu0 %v2112
    %v2201 = vpop.f32.mrb[0].mxu0
    %v2202 = vadd.f32 %v2117, %v2201
    %v2203 = vpop.f32.mrb[0].mxu0
    %v2204 = vpop.f32.mrb[0].mxu0
    %v2205 = vpop.f32.mrb[0].mxu0
    %2206 = vdwg.mxu0
    %v2207 = vadd.f32 %v1689, %v1730
    %v2208 = vadd.f32 %v1690, %v1735
    %s2209 = scalar_lea.vmem [#allocation12], 64
    %v2210 = vld [vmem:[%s2209] sm:$0xf]
    %v2211 = vld [vmem:[%s2209 + $0x4] sm:$0xf]
    %v2212 = vld [vmem:[%s2209 + $0x8] sm:$0xf]
    %v2213 = vld [vmem:[%s2209 + $0xc] sm:$0xf]
    %v2214 = vld [vmem:[%s2209 + $0x10] sm:$0xf]
    %v2215 = vld [vmem:[%s2209 + $0x14] sm:$0xf]
    %v2216 = vld [vmem:[%s2209 + $0x18] sm:$0xf]
    %v2217 = vld [vmem:[%s2209 + $0x1c] sm:$0xf]
    %v2218 = vld [vmem:[%s2209 + $0x20] sm:$0xf]
    %v2219 = vld [vmem:[%s2209 + $0x24] sm:$0xf]
    %v2220 = vld [vmem:[%s2209 + $0x28] sm:$0xf]
    %v2221 = vld [vmem:[%s2209 + $0x2c] sm:$0xf]
    %v2222 = vld [vmem:[%s2209 + $0x30] sm:$0xf]
    %v2223 = vld [vmem:[%s2209 + $0x34] sm:$0xf]
    %v2224 = vld [vmem:[%s2209 + $0x38] sm:$0xf]
    %v2225 = vld [vmem:[%s2209 + $0x3c] sm:$0xf]
    %s2226 = scalar_lea.vmem %s45, 1
    %v2227 = vld [vmem:[%s2226] sm:$0x1]
    %s2228 = scalar_lea.vmem [#allocation13], 64
    %v2229 = vld [vmem:[%s2228] sm:$0xf]
    %v2230 = vld [vmem:[%s2228 + $0x4] sm:$0xf]
    %v2231 = vld [vmem:[%s2228 + $0x8] sm:$0xf]
    %v2232 = vld [vmem:[%s2228 + $0xc] sm:$0xf]
    %v2233 = vld [vmem:[%s2228 + $0x10] sm:$0xf]
    %v2234 = vld [vmem:[%s2228 + $0x14] sm:$0xf]
    %v2235 = vld [vmem:[%s2228 + $0x18] sm:$0xf]
    %v2236 = vld [vmem:[%s2228 + $0x1c] sm:$0xf]
    %v2237 = vld [vmem:[%s2228 + $0x20] sm:$0xf]
    %v2238 = vld [vmem:[%s2228 + $0x24] sm:$0xf]
    %v2239 = vld [vmem:[%s2228 + $0x28] sm:$0xf]
    %v2240 = vld [vmem:[%s2228 + $0x2c] sm:$0xf]
    %v2241 = vld [vmem:[%s2228 + $0x30] sm:$0xf]
    %v2242 = vld [vmem:[%s2228 + $0x34] sm:$0xf]
    %v2243 = vld [vmem:[%s2228 + $0x38] sm:$0xf]
    %v2244 = vld [vmem:[%s2228 + $0x3c] sm:$0xf]
    %s2245 = scalar_lea.vmem %s49, 1
    %v2246 = vld [vmem:[%s2245] sm:$0x1]
    %v2247 = vpack.c.bf16 %v2208, %v2207
    %v2249 = vlaneseq
    %v2250 = vshrl.u32 %v2249, 7
    %v2251 = vsub.s32 0, %v2250
    %v2252 = vrot.slane %v2227, %v2251
    %v2270 = vunpack.c.l.b16 %v2210
    %v2271 = vunpack.c.l.b16 %v2211
    %v2272 = vunpack.c.l.b16 %v2212
    %v2273 = vunpack.c.l.b16 %v2213
    %v2274 = vunpack.c.l.b16 %v2214
    %v2275 = vunpack.c.l.b16 %v2215
    %v2276 = vunpack.c.l.b16 %v2216
    %v2277 = vunpack.c.l.b16 %v2217
    %v2278 = vunpack.c.l.b16 %v2218
    %v2279 = vunpack.c.l.b16 %v2219
    %v2280 = vunpack.c.l.b16 %v2220
    %v2281 = vunpack.c.l.b16 %v2221
    %v2282 = vunpack.c.l.b16 %v2222
    %v2283 = vunpack.c.l.b16 %v2223
    %v2284 = vunpack.c.l.b16 %v2224
    %v2285 = vunpack.c.l.b16 %v2225
    %v2286 = vpack.c.b16 %v2271, %v2270
    %v2287 = vpack.c.b16 %v2273, %v2272
    %v2288 = vpack.c.b16 %v2275, %v2274
    %v2289 = vpack.c.b16 %v2277, %v2276
    %v2290 = vpack.c.b16 %v2279, %v2278
    %v2291 = vpack.c.b16 %v2281, %v2280
    %v2292 = vpack.c.b16 %v2283, %v2282
    %v2293 = vpack.c.b16 %v2285, %v2284
    %2302 = vmatprep.subr.bf16.mxu0 0
    %2303 = vmatpush1.bf16.msra.mxu0 %v2286
    %2304 = vmatprep.subr.bf16.mxu0 0
    %2305 = vmatpush1.bf16.msra.mxu0 %v2287
    %2306 = vmatprep.subr.bf16.mxu0 0
    %2307 = vmatpush1.bf16.msra.mxu0 %v2288
    %2308 = vmatprep.subr.bf16.mxu0 0
    %2309 = vmatpush1.bf16.msra.mxu0 %v2289
    %2310 = vmatprep.subr.bf16.mxu0 0
    %2311 = vmatpush1.bf16.msra.mxu0 %v2290
    %2312 = vmatprep.subr.bf16.mxu0 0
    %2313 = vmatpush1.bf16.msra.mxu0 %v2291
    %2314 = vmatprep.subr.bf16.mxu0 0
    %2315 = vmatpush1.bf16.msra.mxu0 %v2292
    %2316 = vmatprep.subr.bf16.mxu0 0
    %2317 = vmatpush1.bf16.msra.mxu0 %v2293
    %2318 = vmatprep.subr.bf16.mxu0 0
    %2319 = vmatpush1.bf16.msra.mxu0 0
    %2320 = vmatprep.subr.bf16.mxu0 0
    %2321 = vmatpush1.bf16.msra.mxu0 0
    %2322 = vmatprep.subr.bf16.mxu0 0
    %2323 = vmatpush1.bf16.msra.mxu0 0
    %2324 = vmatprep.subr.bf16.mxu0 0
    %2325 = vmatpush1.bf16.msra.mxu0 0
    %2326 = vmatprep.subr.bf16.mxu0 0
    %2327 = vmatpush1.bf16.msra.mxu0 0
    %2328 = vmatprep.subr.bf16.mxu0 0
    %2329 = vmatpush1.bf16.msra.mxu0 0
    %2330 = vmatprep.subr.bf16.mxu0 0
    %2331 = vmatpush1.bf16.msra.mxu0 0
    %2332 = vmatprep.subr.bf16.mxu0 0
    %2333 = vmatpush1.bf16.msra.mxu0 0
    %2334 = vmatprep.mubr.bf16.mxu0 0
    %2335 = vmatmul.mubr.bf16.gmra.mrb[0].mxu0 %v2247
    %v2336 = vpop.f32.mrb[0].mxu0
    %v2337 = vadd.f32 %v2252, %v2336
    %v2338 = vpop.f32.mrb[0].mxu0
    %v2339 = vpop.f32.mrb[0].mxu0
    %v2340 = vadd.f32 %v2252, %v2339
    %v2341 = vpop.f32.mrb[0].mxu0
    %2342 = vdwg.mxu0
    %v2343 = vmul.f32 %v2337, 0.5
    %v2344 = vmul.f32 %v2340, 0.5
    %v2345 = vmul.f32 %v2337, 0.70710677
    %v2346 = vmul.f32 %v2340, 0.70710677
    %v2347 = verf.f32.pop %v2345
    %v2348 = verf.f32.pop %v2346
    %v2349 = vadd.f32 %v2347, 1.0
    %v2350 = vadd.f32 %v2348, 1.0
    %v2351 = vmul.f32 %v2343, %v2349
    %v2352 = vmul.f32 %v2344, %v2350
    %v2353 = vpack.c.bf16 %v2352, %v2351
    %v2355 = vlaneseq
    %v2356 = vshrl.u32 %v2355, 7
    %v2357 = vsub.s32 0, %v2356
    %v2358 = vrot.slane %v2246, %v2357
    %v2376 = vunpack.c.l.b16 %v2229
    %v2377 = vunpack.c.l.b16 %v2230
    %v2378 = vunpack.c.l.b16 %v2231
    %v2379 = vunpack.c.l.b16 %v2232
    %v2380 = vunpack.c.l.b16 %v2233
    %v2381 = vunpack.c.l.b16 %v2234
    %v2382 = vunpack.c.l.b16 %v2235
    %v2383 = vunpack.c.l.b16 %v2236
    %v2384 = vunpack.c.l.b16 %v2237
    %v2385 = vunpack.c.l.b16 %v2238
    %v2386 = vunpack.c.l.b16 %v2239
    %v2387 = vunpack.c.l.b16 %v2240
    %v2388 = vunpack.c.l.b16 %v2241
    %v2389 = vunpack.c.l.b16 %v2242
    %v2390 = vunpack.c.l.b16 %v2243
    %v2391 = vunpack.c.l.b16 %v2244
    %v2392 = vpack.c.b16 %v2377, %v2376
    %v2393 = vpack.c.b16 %v2379, %v2378
    %v2394 = vpack.c.b16 %v2381, %v2380
    %v2395 = vpack.c.b16 %v2383, %v2382
    %v2396 = vpack.c.b16 %v2385, %v2384
    %v2397 = vpack.c.b16 %v2387, %v2386
    %v2398 = vpack.c.b16 %v2389, %v2388
    %v2399 = vpack.c.b16 %v2391, %v2390
    %2408 = vmatprep.subr.bf16.mxu0 0
    %2409 = vmatpush1.bf16.msra.mxu0 %v2392
    %2410 = vmatprep.subr.bf16.mxu0 0
    %2411 = vmatpush1.bf16.msra.mxu0 %v2393
    %2412 = vmatprep.subr.bf16.mxu0 0
    %2413 = vmatpush1.bf16.msra.mxu0 %v2394
    %2414 = vmatprep.subr.bf16.mxu0 0
    %2415 = vmatpush1.bf16.msra.mxu0 %v2395
    %2416 = vmatprep.subr.bf16.mxu0 0
    %2417 = vmatpush1.bf16.msra.mxu0 %v2396
    %2418 = vmatprep.subr.bf16.mxu0 0
    %2419 = vmatpush1.bf16.msra.mxu0 %v2397
    %2420 = vmatprep.subr.bf16.mxu0 0
    %2421 = vmatpush1.bf16.msra.mxu0 %v2398
    %2422 = vmatprep.subr.bf16.mxu0 0
    %2423 = vmatpush1.bf16.msra.mxu0 %v2399
    %2424 = vmatprep.subr.bf16.mxu0 0
    %2425 = vmatpush1.bf16.msra.mxu0 0
    %2426 = vmatprep.subr.bf16.mxu0 0
    %2427 = vmatpush1.bf16.msra.mxu0 0
    %2428 = vmatprep.subr.bf16.mxu0 0
    %2429 = vmatpush1.bf16.msra.mxu0 0
    %2430 = vmatprep.subr.bf16.mxu0 0
    %2431 = vmatpush1.bf16.msra.mxu0 0
    %2432 = vmatprep.subr.bf16.mxu0 0
    %2433 = vmatpush1.bf16.msra.mxu0 0
    %2434 = vmatprep.subr.bf16.mxu0 0
    %2435 = vmatpush1.bf16.msra.mxu0 0
    %2436 = vmatprep.subr.bf16.mxu0 0
    %2437 = vmatpush1.bf16.msra.mxu0 0
    %2438 = vmatprep.subr.bf16.mxu0 0
    %2439 = vmatpush1.bf16.msra.mxu0 0
    %2440 = vmatprep.mubr.bf16.mxu0 0
    %2441 = vmatmul.mubr.bf16.gmra.mrb[0].mxu0 %v2353
    %v2442 = vpop.f32.mrb[0].mxu0
    %v2443 = vadd.f32 %v2358, %v2442
    %v2444 = vpop.f32.mrb[0].mxu0
    %v2445 = vpop.f32.mrb[0].mxu0
    %v2446 = vadd.f32 %v2358, %v2445
    %v2447 = vpop.f32.mrb[0].mxu0
    %2448 = vdwg.mxu0
    %v2449 = vadd.f32 %v2443, %v1689
    %v2450 = vadd.f32 %v2446, %v1690
    %v2451 = vmul.f32 %v2449, %v570
    %v2452 = vmul.f32 %v2450, %v575
    %v2453 = vadd.f32 %v2451, %v2452
    %v2454 = vrot.slane %v2453, 4
    %v2455 = vadd.f32 %v2453, %v2454
    %v2456 = vrot.slane %v2455, 2
    %v2457 = vadd.f32 %v2455, %v2456
    %v2458 = vrot.slane %v2457, 1
    %v2459 = vadd.f32 %v2457, %v2458
    %v2460 = vmul.f32 %v2459, 0.0625
    %v2461 = vsub.f32 %v2451, %v2460
    %v2462 = vsub.f32 %v2452, %v2460
    %v2463 = vmul.f32 %v2461, %v2461
    %v2464 = vmul.f32 %v2462, %v2462
    %v2465 = vmul.f32 %v2463, %v570
    %v2466 = vmul.f32 %v2464, %v575
    %v2467 = vadd.f32 %v2465, %v2466
    %v2468 = vrot.slane %v2467, 4
    %v2469 = vadd.f32 %v2467, %v2468
    %v2470 = vrot.slane %v2469, 2
    %v2471 = vadd.f32 %v2469, %v2470
    %v2472 = vrot.slane %v2471, 1
    %v2473 = vadd.f32 %v2471, %v2472
    %v2474 = vmul.f32 %v2473, 0.0625
    %v2475 = vadd.f32 %v2474, 1e-05
    %v2476 = vrsqrt.pop %v2475
    %v2477 = vmul.f32 %v2461, %v2476
    %v2478 = vmul.f32 %v2462, %v2476
    %s2479 = scalar_lea.vmem [#allocation21], 1
    %v2480 = vld [vmem:[%s2479] sm:$0x1]
    %v2482 = vlaneseq
    %v2483 = vshrl.u32 %v2482, 7
    %v2484 = vsub.s32 0, %v2483
    %v2485 = vrot.slane %v2480, %v2484
    %v2487 = vmul.f32 %v2477, %v2485
    %v2488 = vmul.f32 %v2478, %v2485
    %s2489 = scalar_lea.vmem [#allocation22], 1
    %v2490 = vld [vmem:[%s2489] sm:$0x1]
    %v2492 = vlaneseq
    %v2493 = vshrl.u32 %v2492, 7
    %v2494 = vsub.s32 0, %v2493
    %v2495 = vrot.slane %v2490, %v2494
    %v2497 = vadd.f32 %v2487, %v2495
    %v2498 = vadd.f32 %v2488, %v2495
    %v2499 = vmul.f32 %v2497, %v570
    %v2500 = vmul.f32 %v2498, %v575
    %v2501 = vpack.c.bf16 %v2202, %v2202
    %v2503 = vsel %vm1406, %v2501, 0
    %2505 = vmatprep.subr.bf16.mxu0 0
    %2506 = vmatpush1.bf16.msra.mxu0 %v2503
    %2507 = vmatprep.subr.bf16.mxu0 0
    %2508 = vmatpush1.bf16.msra.mxu0 0
    %2509 = vmatprep.subr.bf16.mxu0 0
    %2510 = vmatpush1.bf16.msra.mxu0 0
    %2511 = vmatprep.subr.bf16.mxu0 0
    %2512 = vmatpush1.bf16.msra.mxu0 0
    %2513 = vmatprep.subr.bf16.mxu0 0
    %2514 = vmatpush1.bf16.msra.mxu0 0
    %2515 = vmatprep.subr.bf16.mxu0 0
    %2516 = vmatpush1.bf16.msra.mxu0 0
    %2517 = vmatprep.subr.bf16.mxu0 0
    %2518 = vmatpush1.bf16.msra.mxu0 0
    %2519 = vmatprep.subr.bf16.mxu0 0
    %2520 = vmatpush1.bf16.msra.mxu0 0
    %2521 = vmatprep.subr.bf16.mxu0 0
    %2522 = vmatpush1.bf16.msra.mxu0 0
    %2523 = vmatprep.subr.bf16.mxu0 0
    %2524 = vmatpush1.bf16.msra.mxu0 0
    %2525 = vmatprep.subr.bf16.mxu0 0
    %2526 = vmatpush1.bf16.msra.mxu0 0
    %2527 = vmatprep.subr.bf16.mxu0 0
    %2528 = vmatpush1.bf16.msra.mxu0 0
    %2529 = vmatprep.subr.bf16.mxu0 0
    %2530 = vmatpush1.bf16.msra.mxu0 0
    %2531 = vmatprep.subr.bf16.mxu0 0
    %2532 = vmatpush1.bf16.msra.mxu0 0
    %2533 = vmatprep.subr.bf16.mxu0 0
    %2534 = vmatpush1.bf16.msra.mxu0 0
    %2535 = vmatprep.subr.bf16.mxu0 0
    %2536 = vmatpush1.bf16.msra.mxu0 0
    %2537 = vmatprep.mubr.bf16.mxu0 0
    %2538 = vmatmul.mubr.bf16.gmra.mrb[0].mxu0 %v1404
    %v2539 = vpop.f32.mrb[0].mxu0
    %v2540 = vadd.f32 %v2499, %v2539
    %v2541 = vpop.f32.mrb[0].mxu0
    %v2542 = vpop.f32.mrb[0].mxu0
    %v2543 = vadd.f32 %v2500, %v2542
    %v2544 = vpop.f32.mrb[0].mxu0
    %2545 = vdwg.mxu0
    %s2546 = scalar_lea.vmem [#allocation15], 64
    %v2547 = vld [vmem:[%s2546] sm:$0xf]
    %v2548 = vld [vmem:[%s2546 + $0x4] sm:$0xf]
    %v2549 = vld [vmem:[%s2546 + $0x8] sm:$0xf]
    %v2550 = vld [vmem:[%s2546 + $0xc] sm:$0xf]
    %v2551 = vld [vmem:[%s2546 + $0x10] sm:$0xf]
    %v2552 = vld [vmem:[%s2546 + $0x14] sm:$0xf]
    %v2553 = vld [vmem:[%s2546 + $0x18] sm:$0xf]
    %v2554 = vld [vmem:[%s2546 + $0x1c] sm:$0xf]
    %v2555 = vld [vmem:[%s2546 + $0x20] sm:$0xf]
    %v2556 = vld [vmem:[%s2546 + $0x24] sm:$0xf]
    %v2557 = vld [vmem:[%s2546 + $0x28] sm:$0xf]
    %v2558 = vld [vmem:[%s2546 + $0x2c] sm:$0xf]
    %v2559 = vld [vmem:[%s2546 + $0x30] sm:$0xf]
    %v2560 = vld [vmem:[%s2546 + $0x34] sm:$0xf]
    %v2561 = vld [vmem:[%s2546 + $0x38] sm:$0xf]
    %v2562 = vld [vmem:[%s2546 + $0x3c] sm:$0xf]
    %s2563 = scalar_lea.vmem [#allocation16], 1
    %v2564 = vld [vmem:[%s2563] sm:$0x1]
    %s2565 = scalar_lea.vmem [#allocation18], 64
    %v2566 = vld [vmem:[%s2565] sm:$0xf]
    %v2567 = vld [vmem:[%s2565 + $0x4] sm:$0xf]
    %v2568 = vld [vmem:[%s2565 + $0x8] sm:$0xf]
    %v2569 = vld [vmem:[%s2565 + $0xc] sm:$0xf]
    %v2570 = vld [vmem:[%s2565 + $0x10] sm:$0xf]
    %v2571 = vld [vmem:[%s2565 + $0x14] sm:$0xf]
    %v2572 = vld [vmem:[%s2565 + $0x18] sm:$0xf]
    %v2573 = vld [vmem:[%s2565 + $0x1c] sm:$0xf]
    %v2574 = vld [vmem:[%s2565 + $0x20] sm:$0xf]
    %v2575 = vld [vmem:[%s2565 + $0x24] sm:$0xf]
    %v2576 = vld [vmem:[%s2565 + $0x28] sm:$0xf]
    %v2577 = vld [vmem:[%s2565 + $0x2c] sm:$0xf]
    %v2578 = vld [vmem:[%s2565 + $0x30] sm:$0xf]
    %v2579 = vld [vmem:[%s2565 + $0x34] sm:$0xf]
    %v2580 = vld [vmem:[%s2565 + $0x38] sm:$0xf]
    %v2581 = vld [vmem:[%s2565 + $0x3c] sm:$0xf]
    %s2582 = scalar_lea.vmem [#allocation19], 1
    %v2583 = vld [vmem:[%s2582] sm:$0x1]
    %v2584 = vpack.c.bf16 %v2543, %v2540
    %v2586 = vlaneseq
    %v2587 = vshrl.u32 %v2586, 7
    %v2588 = vsub.s32 0, %v2587
    %v2589 = vrot.slane %v2564, %v2588
    %v2607 = vunpack.c.l.b16 %v2547
    %v2608 = vunpack.c.l.b16 %v2548
    %v2609 = vunpack.c.l.b16 %v2549
    %v2610 = vunpack.c.l.b16 %v2550
    %v2611 = vunpack.c.l.b16 %v2551
    %v2612 = vunpack.c.l.b16 %v2552
    %v2613 = vunpack.c.l.b16 %v2553
    %v2614 = vunpack.c.l.b16 %v2554
    %v2615 = vunpack.c.l.b16 %v2555
    %v2616 = vunpack.c.l.b16 %v2556
    %v2617 = vunpack.c.l.b16 %v2557
    %v2618 = vunpack.c.l.b16 %v2558
    %v2619 = vunpack.c.l.b16 %v2559
    %v2620 = vunpack.c.l.b16 %v2560
    %v2621 = vunpack.c.l.b16 %v2561
    %v2622 = vunpack.c.l.b16 %v2562
    %v2623 = vpack.c.b16 %v2608, %v2607
    %v2624 = vpack.c.b16 %v2610, %v2609
    %v2625 = vpack.c.b16 %v2612, %v2611
    %v2626 = vpack.c.b16 %v2614, %v2613
    %v2627 = vpack.c.b16 %v2616, %v2615
    %v2628 = vpack.c.b16 %v2618, %v2617
    %v2629 = vpack.c.b16 %v2620, %v2619
    %v2630 = vpack.c.b16 %v2622, %v2621
    %2639 = vmatprep.subr.bf16.mxu0 0
    %2640 = vmatpush1.bf16.msra.mxu0 %v2623
    %2641 = vmatprep.subr.bf16.mxu0 0
    %2642 = vmatpush1.bf16.msra.mxu0 %v2624
    %2643 = vmatprep.subr.bf16.mxu0 0
    %2644 = vmatpush1.bf16.msra.mxu0 %v2625
    %2645 = vmatprep.subr.bf16.mxu0 0
    %2646 = vmatpush1.bf16.msra.mxu0 %v2626
    %2647 = vmatprep.subr.bf16.mxu0 0
    %2648 = vmatpush1.bf16.msra.mxu0 %v2627
    %2649 = vmatprep.subr.bf16.mxu0 0
    %2650 = vmatpush1.bf16.msra.mxu0 %v2628
    %2651 = vmatprep.subr.bf16.mxu0 0
    %2652 = vmatpush1.bf16.msra.mxu0 %v2629
    %2653 = vmatprep.subr.bf16.mxu0 0
    %2654 = vmatpush1.bf16.msra.mxu0 %v2630
    %2655 = vmatprep.subr.bf16.mxu0 0
    %2656 = vmatpush1.bf16.msra.mxu0 0
    %2657 = vmatprep.subr.bf16.mxu0 0
    %2658 = vmatpush1.bf16.msra.mxu0 0
    %2659 = vmatprep.subr.bf16.mxu0 0
    %2660 = vmatpush1.bf16.msra.mxu0 0
    %2661 = vmatprep.subr.bf16.mxu0 0
    %2662 = vmatpush1.bf16.msra.mxu0 0
    %2663 = vmatprep.subr.bf16.mxu0 0
    %2664 = vmatpush1.bf16.msra.mxu0 0
    %2665 = vmatprep.subr.bf16.mxu0 0
    %2666 = vmatpush1.bf16.msra.mxu0 0
    %2667 = vmatprep.subr.bf16.mxu0 0
    %2668 = vmatpush1.bf16.msra.mxu0 0
    %2669 = vmatprep.subr.bf16.mxu0 0
    %2670 = vmatpush1.bf16.msra.mxu0 0
    %2671 = vmatprep.mubr.bf16.mxu0 0
    %2672 = vmatmul.mubr.bf16.gmra.mrb[0].mxu0 %v2584
    %v2673 = vpop.f32.mrb[0].mxu0
    %v2674 = vadd.f32 %v2589, %v2673
    %v2675 = vpop.f32.mrb[0].mxu0
    %v2676 = vpop.f32.mrb[0].mxu0
    %v2677 = vadd.f32 %v2589, %v2676
    %v2678 = vpop.f32.mrb[0].mxu0
    %2679 = vdwg.mxu0
    %v2680 = vmul.f32 %v2674, 0.5
    %v2681 = vmul.f32 %v2677, 0.5
    %v2682 = vmul.f32 %v2674, 0.70710677
    %v2683 = vmul.f32 %v2677, 0.70710677
    %v2684 = verf.f32.pop %v2682
    %v2685 = verf.f32.pop %v2683
    %v2686 = vadd.f32 %v2684, 1.0
    %v2687 = vadd.f32 %v2685, 1.0
    %v2688 = vmul.f32 %v2680, %v2686
    %v2689 = vmul.f32 %v2681, %v2687
    %v2690 = vpack.c.bf16 %v2689, %v2688
    %v2692 = vlaneseq
    %v2693 = vshrl.u32 %v2692, 7
    %v2694 = vsub.s32 0, %v2693
    %v2695 = vrot.slane %v2583, %v2694
    %v2713 = vunpack.c.l.b16 %v2566
    %v2714 = vunpack.c.l.b16 %v2567
    %v2715 = vunpack.c.l.b16 %v2568
    %v2716 = vunpack.c.l.b16 %v2569
    %v2717 = vunpack.c.l.b16 %v2570
    %v2718 = vunpack.c.l.b16 %v2571
    %v2719 = vunpack.c.l.b16 %v2572
    %v2720 = vunpack.c.l.b16 %v2573
    %v2721 = vunpack.c.l.b16 %v2574
    %v2722 = vunpack.c.l.b16 %v2575
    %v2723 = vunpack.c.l.b16 %v2576
    %v2724 = vunpack.c.l.b16 %v2577
    %v2725 = vunpack.c.l.b16 %v2578
    %v2726 = vunpack.c.l.b16 %v2579
    %v2727 = vunpack.c.l.b16 %v2580
    %v2728 = vunpack.c.l.b16 %v2581
    %v2729 = vpack.c.b16 %v2714, %v2713
    %v2730 = vpack.c.b16 %v2716, %v2715
    %v2731 = vpack.c.b16 %v2718, %v2717
    %v2732 = vpack.c.b16 %v2720, %v2719
    %v2733 = vpack.c.b16 %v2722, %v2721
    %v2734 = vpack.c.b16 %v2724, %v2723
    %v2735 = vpack.c.b16 %v2726, %v2725
    %v2736 = vpack.c.b16 %v2728, %v2727
    %2745 = vmatprep.subr.bf16.mxu0 0
    %2746 = vmatpush1.bf16.msra.mxu0 %v2729
    %2747 = vmatprep.subr.bf16.mxu0 0
    %2748 = vmatpush1.bf16.msra.mxu0 %v2730
    %2749 = vmatprep.subr.bf16.mxu0 0
    %2750 = vmatpush1.bf16.msra.mxu0 %v2731
    %2751 = vmatprep.subr.bf16.mxu0 0
    %2752 = vmatpush1.bf16.msra.mxu0 %v2732
    %2753 = vmatprep.subr.bf16.mxu0 0
    %2754 = vmatpush1.bf16.msra.mxu0 %v2733
    %2755 = vmatprep.subr.bf16.mxu0 0
    %2756 = vmatpush1.bf16.msra.mxu0 %v2734
    %2757 = vmatprep.subr.bf16.mxu0 0
    %2758 = vmatpush1.bf16.msra.mxu0 %v2735
    %2759 = vmatprep.subr.bf16.mxu0 0
    %2760 = vmatpush1.bf16.msra.mxu0 %v2736
    %2761 = vmatprep.subr.bf16.mxu0 0
    %2762 = vmatpush1.bf16.msra.mxu0 0
    %2763 = vmatprep.subr.bf16.mxu0 0
    %2764 = vmatpush1.bf16.msra.mxu0 0
    %2765 = vmatprep.subr.bf16.mxu0 0
    %2766 = vmatpush1.bf16.msra.mxu0 0
    %2767 = vmatprep.subr.bf16.mxu0 0
    %2768 = vmatpush1.bf16.msra.mxu0 0
    %2769 = vmatprep.subr.bf16.mxu0 0
    %2770 = vmatpush1.bf16.msra.mxu0 0
    %2771 = vmatprep.subr.bf16.mxu0 0
    %2772 = vmatpush1.bf16.msra.mxu0 0
    %2773 = vmatprep.subr.bf16.mxu0 0
    %2774 = vmatpush1.bf16.msra.mxu0 0
    %2775 = vmatprep.subr.bf16.mxu0 0
    %2776 = vmatpush1.bf16.msra.mxu0 0
    %2777 = vmatprep.mubr.bf16.mxu0 0
    %2778 = vmatmul.mubr.bf16.gmra.mrb[0].mxu0 %v2690
    %v2779 = vpop.f32.mrb[0].mxu0
    %v2780 = vadd.f32 %v2695, %v2779
    %v2781 = vpop.f32.mrb[0].mxu0
    %v2782 = vpop.f32.mrb[0].mxu0
    %v2783 = vadd.f32 %v2695, %v2782
    %v2784 = vpop.f32.mrb[0].mxu0
    %2785 = vdwg.mxu0
    %v2786 = vadd.f32 %v2780, %v2499
    %v2787 = vadd.f32 %v2783, %v2500
    %v2788 = vmul.f32 %v2786, %v570
    %v2789 = vmul.f32 %v2787, %v575
    %v2790 = vpack.c.bf16 %v2789, %v2788
    %2791 = vmatprep.subr.bf16.mxu0 0
    %2792 = vmatpush1.bf16.msra.mxu0 %v2790
    %2793 = vmatprep.subr.bf16.mxu0 0
    %2794 = vmatpush1.bf16.msra.mxu0 0
    %2795 = vmatprep.subr.bf16.mxu0 0
    %2796 = vmatpush1.bf16.msra.mxu0 0
    %2797 = vmatprep.subr.bf16.mxu0 0
    %2798 = vmatpush1.bf16.msra.mxu0 0
    %2799 = vmatprep.subr.bf16.mxu0 0
    %2800 = vmatpush1.bf16.msra.mxu0 0
    %2801 = vmatprep.subr.bf16.mxu0 0
    %2802 = vmatpush1.bf16.msra.mxu0 0
    %2803 = vmatprep.subr.bf16.mxu0 0
    %2804 = vmatpush1.bf16.msra.mxu0 0
    %2805 = vmatprep.subr.bf16.mxu0 0
    %2806 = vmatpush1.bf16.msra.mxu0 0
    %2807 = vmatprep.subr.bf16.mxu0 0
    %2808 = vmatpush1.bf16.msra.mxu0 0
    %2809 = vmatprep.subr.bf16.mxu0 0
    %2810 = vmatpush1.bf16.msra.mxu0 0
    %2811 = vmatprep.subr.bf16.mxu0 0
    %2812 = vmatpush1.bf16.msra.mxu0 0
    %2813 = vmatprep.subr.bf16.mxu0 0
    %2814 = vmatpush1.bf16.msra.mxu0 0
    %2815 = vmatprep.subr.bf16.mxu0 0
    %2816 = vmatpush1.bf16.msra.mxu0 0
    %2817 = vmatprep.subr.bf16.mxu0 0
    %2818 = vmatpush1.bf16.msra.mxu0 0
    %2819 = vmatprep.subr.bf16.mxu0 0
    %2820 = vmatpush1.bf16.msra.mxu0 0
    %2821 = vmatprep.subr.bf16.mxu0 0
    %2822 = vmatpush1.bf16.msra.mxu0 0
    %2823 = vmatprep.mubr.bf16.mxu0 0
    %2824 = vmatmul.mubr.bf16.gmra.mrb[0].mxu0 %v590
    %v2825 = vpop.f32.mrb[0].mxu0
    %v2826 = vadd.f32 0.0, %v2825
    %v2827 = vpop.f32.mrb[0].mxu0
    %v2828 = vpop.f32.mrb[0].mxu0
    %v2829 = vadd.f32 0.0, %v2828
    %v2830 = vpop.f32.mrb[0].mxu0
    %2831 = vmatprep.mubr.bf16.mxu0 0
    %2832 = vmatmul.mubr.bf16.gmra.mrb[0].mxu0 %v593
    %v2833 = vpop.f32.mrb[0].mxu0
    %v2834 = vadd.f32 0.0, %v2833
    %v2835 = vpop.f32.mrb[0].mxu0
    %v2836 = vpop.f32.mrb[0].mxu0
    %v2837 = vpop.f32.mrb[0].mxu0
    %2838 = vdwg.mxu0
    %s2839 = scalar_lea.vmem [#allocation6], 128
    %v2840 = vld [vmem:[%s2839] sm:$0xf]
    %v2841 = vld [vmem:[%s2839 + $0x4] sm:$0xf]
    %v2842 = vld [vmem:[%s2839 + $0x8] sm:$0xf]
    %v2843 = vld [vmem:[%s2839 + $0xc] sm:$0xf]
    %v2844 = vld [vmem:[%s2839 + $0x10] sm:$0xf]
    %v2845 = vld [vmem:[%s2839 + $0x14] sm:$0xf]
    %v2846 = vld [vmem:[%s2839 + $0x18] sm:$0xf]
    %v2847 = vld [vmem:[%s2839 + $0x1c] sm:$0xf]
    %v2848 = vld [vmem:[%s2839 + $0x20] sm:$0xf]
    %v2849 = vld [vmem:[%s2839 + $0x24] sm:$0xf]
    %v2850 = vld [vmem:[%s2839 + $0x28] sm:$0xf]
    %v2851 = vld [vmem:[%s2839 + $0x2c] sm:$0xf]
    %v2852 = vld [vmem:[%s2839 + $0x30] sm:$0xf]
    %v2853 = vld [vmem:[%s2839 + $0x34] sm:$0xf]
    %v2854 = vld [vmem:[%s2839 + $0x38] sm:$0xf]
    %v2855 = vld [vmem:[%s2839 + $0x3c] sm:$0xf]
    %s2856 = scalar_lea.vmem %s29, 2
    %v2857 = vld [vmem:[%s2856] sm:$0x1]
    %s2858 = scalar_lea.vmem [#allocation7], 128
    %v2859 = vld [vmem:[%s2858] sm:$0xf]
    %v2860 = vld [vmem:[%s2858 + $0x4] sm:$0xf]
    %v2861 = vld [vmem:[%s2858 + $0x8] sm:$0xf]
    %v2862 = vld [vmem:[%s2858 + $0xc] sm:$0xf]
    %v2863 = vld [vmem:[%s2858 + $0x10] sm:$0xf]
    %v2864 = vld [vmem:[%s2858 + $0x14] sm:$0xf]
    %v2865 = vld [vmem:[%s2858 + $0x18] sm:$0xf]
    %v2866 = vld [vmem:[%s2858 + $0x1c] sm:$0xf]
    %v2867 = vld [vmem:[%s2858 + $0x20] sm:$0xf]
    %v2868 = vld [vmem:[%s2858 + $0x24] sm:$0xf]
    %v2869 = vld [vmem:[%s2858 + $0x28] sm:$0xf]
    %v2870 = vld [vmem:[%s2858 + $0x2c] sm:$0xf]
    %v2871 = vld [vmem:[%s2858 + $0x30] sm:$0xf]
    %v2872 = vld [vmem:[%s2858 + $0x34] sm:$0xf]
    %v2873 = vld [vmem:[%s2858 + $0x38] sm:$0xf]
    %v2874 = vld [vmem:[%s2858 + $0x3c] sm:$0xf]
    %s2875 = scalar_lea.vmem %s33, 2
    %v2876 = vld [vmem:[%s2875] sm:$0x1]
    %v2877 = vpack.c.bf16 %v2826, %v2826
    %v2879 = vlaneseq
    %v2880 = vshrl.u32 %v2879, 7
    %v2881 = vsub.s32 0, %v2880
    %v2882 = vrot.slane %v2857, %v2881
    %v2900 = vunpack.c.l.b16 %v2840
    %v2901 = vunpack.c.l.b16 %v2841
    %v2902 = vunpack.c.l.b16 %v2842
    %v2903 = vunpack.c.l.b16 %v2843
    %v2904 = vunpack.c.l.b16 %v2844
    %v2905 = vunpack.c.l.b16 %v2845
    %v2906 = vunpack.c.l.b16 %v2846
    %v2907 = vunpack.c.l.b16 %v2847
    %v2908 = vunpack.c.l.b16 %v2848
    %v2909 = vunpack.c.l.b16 %v2849
    %v2910 = vunpack.c.l.b16 %v2850
    %v2911 = vunpack.c.l.b16 %v2851
    %v2912 = vunpack.c.l.b16 %v2852
    %v2913 = vunpack.c.l.b16 %v2853
    %v2914 = vunpack.c.l.b16 %v2854
    %v2915 = vunpack.c.l.b16 %v2855
    %v2916 = vpack.c.b16 %v2901, %v2900
    %v2917 = vpack.c.b16 %v2903, %v2902
    %v2918 = vpack.c.b16 %v2905, %v2904
    %v2919 = vpack.c.b16 %v2907, %v2906
    %v2920 = vpack.c.b16 %v2909, %v2908
    %v2921 = vpack.c.b16 %v2911, %v2910
    %v2922 = vpack.c.b16 %v2913, %v2912
    %v2923 = vpack.c.b16 %v2915, %v2914
    %2932 = vmatprep.subr.bf16.mxu0 0
    %2933 = vmatpush1.bf16.msra.mxu0 %v2916
    %2934 = vmatprep.subr.bf16.mxu0 0
    %2935 = vmatpush1.bf16.msra.mxu0 %v2917
    %2936 = vmatprep.subr.bf16.mxu0 0
    %2937 = vmatpush1.bf16.msra.mxu0 %v2918
    %2938 = vmatprep.subr.bf16.mxu0 0
    %2939 = vmatpush1.bf16.msra.mxu0 %v2919
    %2940 = vmatprep.subr.bf16.mxu0 0
    %2941 = vmatpush1.bf16.msra.mxu0 %v2920
    %2942 = vmatprep.subr.bf16.mxu0 0
    %2943 = vmatpush1.bf16.msra.mxu0 %v2921
    %2944 = vmatprep.subr.bf16.mxu0 0
    %2945 = vmatpush1.bf16.msra.mxu0 %v2922
    %2946 = vmatprep.subr.bf16.mxu0 0
    %2947 = vmatpush1.bf16.msra.mxu0 %v2923
    %2948 = vmatprep.subr.bf16.mxu0 0
    %2949 = vmatpush1.bf16.msra.mxu0 0
    %2950 = vmatprep.subr.bf16.mxu0 0
    %2951 = vmatpush1.bf16.msra.mxu0 0
    %2952 = vmatprep.subr.bf16.mxu0 0
    %2953 = vmatpush1.bf16.msra.mxu0 0
    %2954 = vmatprep.subr.bf16.mxu0 0
    %2955 = vmatpush1.bf16.msra.mxu0 0
    %2956 = vmatprep.subr.bf16.mxu0 0
    %2957 = vmatpush1.bf16.msra.mxu0 0
    %2958 = vmatprep.subr.bf16.mxu0 0
    %2959 = vmatpush1.bf16.msra.mxu0 0
    %2960 = vmatprep.subr.bf16.mxu0 0
    %2961 = vmatpush1.bf16.msra.mxu0 0
    %2962 = vmatprep.subr.bf16.mxu0 0
    %2963 = vmatpush1.bf16.msra.mxu0 0
    %2964 = vmatprep.mubr.bf16.mxu0 0
    %2965 = vmatmul.mubr.bf16.gmra.mrb[0].mxu0 %v2877
    %v2966 = vpop.f32.mrb[0].mxu0
    %v2967 = vadd.f32 %v2882, %v2966
    %v2968 = vpop.f32.mrb[0].mxu0
    %v2969 = vpop.f32.mrb[0].mxu0
    %v2970 = vpop.f32.mrb[0].mxu0
    %2971 = vdwg.mxu0
    %v2972 = vmul.f32 %v2967, 0.5
    %v2973 = vmul.f32 %v2967, 0.70710677
    %v2974 = verf.f32.pop %v2973
    %v2975 = vadd.f32 %v2974, 1.0
    %v2976 = vmul.f32 %v2972, %v2975
    %v2977 = vpack.c.bf16 %v2976, %v2976
    %v2979 = vlaneseq
    %v2980 = vshrl.u32 %v2979, 7
    %v2981 = vsub.s32 0, %v2980
    %v2982 = vrot.slane %v2876, %v2981
    %v3000 = vunpack.c.l.b16 %v2859
    %v3001 = vunpack.c.l.b16 %v2860
    %v3002 = vunpack.c.l.b16 %v2861
    %v3003 = vunpack.c.l.b16 %v2862
    %v3004 = vunpack.c.l.b16 %v2863
    %v3005 = vunpack.c.l.b16 %v2864
    %v3006 = vunpack.c.l.b16 %v2865
    %v3007 = vunpack.c.l.b16 %v2866
    %v3008 = vunpack.c.l.b16 %v2867
    %v3009 = vunpack.c.l.b16 %v2868
    %v3010 = vunpack.c.l.b16 %v2869
    %v3011 = vunpack.c.l.b16 %v2870
    %v3012 = vunpack.c.l.b16 %v2871
    %v3013 = vunpack.c.l.b16 %v2872
    %v3014 = vunpack.c.l.b16 %v2873
    %v3015 = vunpack.c.l.b16 %v2874
    %v3016 = vpack.c.b16 %v3001, %v3000
    %v3017 = vpack.c.b16 %v3003, %v3002
    %v3018 = vpack.c.b16 %v3005, %v3004
    %v3019 = vpack.c.b16 %v3007, %v3006
    %v3020 = vpack.c.b16 %v3009, %v3008
    %v3021 = vpack.c.b16 %v3011, %v3010
    %v3022 = vpack.c.b16 %v3013, %v3012
    %v3023 = vpack.c.b16 %v3015, %v3014
    %3032 = vmatprep.subr.bf16.mxu0 0
    %3033 = vmatpush1.bf16.msra.mxu0 %v3016
    %3034 = vmatprep.subr.bf16.mxu0 0
    %3035 = vmatpush1.bf16.msra.mxu0 %v3017
    %3036 = vmatprep.subr.bf16.mxu0 0
    %3037 = vmatpush1.bf16.msra.mxu0 %v3018
    %3038 = vmatprep.subr.bf16.mxu0 0
    %3039 = vmatpush1.bf16.msra.mxu0 %v3019
    %3040 = vmatprep.subr.bf16.mxu0 0
    %3041 = vmatpush1.bf16.msra.mxu0 %v3020
    %3042 = vmatprep.subr.bf16.mxu0 0
    %3043 = vmatpush1.bf16.msra.mxu0 %v3021
    %3044 = vmatprep.subr.bf16.mxu0 0
    %3045 = vmatpush1.bf16.msra.mxu0 %v3022
    %3046 = vmatprep.subr.bf16.mxu0 0
    %3047 = vmatpush1.bf16.msra.mxu0 %v3023
    %3048 = vmatprep.subr.bf16.mxu0 0
    %3049 = vmatpush1.bf16.msra.mxu0 0
    %3050 = vmatprep.subr.bf16.mxu0 0
    %3051 = vmatpush1.bf16.msra.mxu0 0
    %3052 = vmatprep.subr.bf16.mxu0 0
    %3053 = vmatpush1.bf16.msra.mxu0 0
    %3054 = vmatprep.subr.bf16.mxu0 0
    %3055 = vmatpush1.bf16.msra.mxu0 0
    %3056 = vmatprep.subr.bf16.mxu0 0
    %3057 = vmatpush1.bf16.msra.mxu0 0
    %3058 = vmatprep.subr.bf16.mxu0 0
    %3059 = vmatpush1.bf16.msra.mxu0 0
    %3060 = vmatprep.subr.bf16.mxu0 0
    %3061 = vmatpush1.bf16.msra.mxu0 0
    %3062 = vmatprep.subr.bf16.mxu0 0
    %3063 = vmatpush1.bf16.msra.mxu0 0
    %3064 = vmatprep.mubr.bf16.mxu0 0
    %3065 = vmatmul.mubr.bf16.gmra.mrb[0].mxu0 %v2977
    %v3066 = vpop.f32.mrb[0].mxu0
    %v3067 = vadd.f32 %v2982, %v3066
    %v3068 = vpop.f32.mrb[0].mxu0
    %v3069 = vpop.f32.mrb[0].mxu0
    %v3070 = vpop.f32.mrb[0].mxu0
    %3071 = vdwg.mxu0
    %v3072 = vadd.f32 %v876, %v3067
    %s3073 = scalar_lea.vmem [#allocation9], 128
    %v3074 = vld [vmem:[%s3073] sm:$0xf]
    %v3075 = vld [vmem:[%s3073 + $0x4] sm:$0xf]
    %v3076 = vld [vmem:[%s3073 + $0x8] sm:$0xf]
    %v3077 = vld [vmem:[%s3073 + $0xc] sm:$0xf]
    %v3078 = vld [vmem:[%s3073 + $0x10] sm:$0xf]
    %v3079 = vld [vmem:[%s3073 + $0x14] sm:$0xf]
    %v3080 = vld [vmem:[%s3073 + $0x18] sm:$0xf]
    %v3081 = vld [vmem:[%s3073 + $0x1c] sm:$0xf]
    %v3082 = vld [vmem:[%s3073 + $0x20] sm:$0xf]
    %v3083 = vld [vmem:[%s3073 + $0x24] sm:$0xf]
    %v3084 = vld [vmem:[%s3073 + $0x28] sm:$0xf]
    %v3085 = vld [vmem:[%s3073 + $0x2c] sm:$0xf]
    %v3086 = vld [vmem:[%s3073 + $0x30] sm:$0xf]
    %v3087 = vld [vmem:[%s3073 + $0x34] sm:$0xf]
    %v3088 = vld [vmem:[%s3073 + $0x38] sm:$0xf]
    %v3089 = vld [vmem:[%s3073 + $0x3c] sm:$0xf]
    %s3090 = scalar_lea.vmem %s37, 2
    %v3091 = vld [vmem:[%s3090] sm:$0x1]
    %s3092 = scalar_lea.vmem [#allocation10], 128
    %v3093 = vld [vmem:[%s3092] sm:$0xf]
    %v3094 = vld [vmem:[%s3092 + $0x4] sm:$0xf]
    %v3095 = vld [vmem:[%s3092 + $0x8] sm:$0xf]
    %v3096 = vld [vmem:[%s3092 + $0xc] sm:$0xf]
    %v3097 = vld [vmem:[%s3092 + $0x10] sm:$0xf]
    %v3098 = vld [vmem:[%s3092 + $0x14] sm:$0xf]
    %v3099 = vld [vmem:[%s3092 + $0x18] sm:$0xf]
    %v3100 = vld [vmem:[%s3092 + $0x1c] sm:$0xf]
    %v3101 = vld [vmem:[%s3092 + $0x20] sm:$0xf]
    %v3102 = vld [vmem:[%s3092 + $0x24] sm:$0xf]
    %v3103 = vld [vmem:[%s3092 + $0x28] sm:$0xf]
    %v3104 = vld [vmem:[%s3092 + $0x2c] sm:$0xf]
    %v3105 = vld [vmem:[%s3092 + $0x30] sm:$0xf]
    %v3106 = vld [vmem:[%s3092 + $0x34] sm:$0xf]
    %v3107 = vld [vmem:[%s3092 + $0x38] sm:$0xf]
    %v3108 = vld [vmem:[%s3092 + $0x3c] sm:$0xf]
    %s3109 = scalar_lea.vmem %s41, 2
    %v3110 = vld [vmem:[%s3109] sm:$0x1]
    %v3111 = vpack.c.bf16 %v3072, %v3072
    %v3113 = vlaneseq
    %v3114 = vshrl.u32 %v3113, 7
    %v3115 = vsub.s32 0, %v3114
    %v3116 = vrot.slane %v3091, %v3115
    %v3134 = vunpack.c.l.b16 %v3074
    %v3135 = vunpack.c.l.b16 %v3075
    %v3136 = vunpack.c.l.b16 %v3076
    %v3137 = vunpack.c.l.b16 %v3077
    %v3138 = vunpack.c.l.b16 %v3078
    %v3139 = vunpack.c.l.b16 %v3079
    %v3140 = vunpack.c.l.b16 %v3080
    %v3141 = vunpack.c.l.b16 %v3081
    %v3142 = vunpack.c.l.b16 %v3082
    %v3143 = vunpack.c.l.b16 %v3083
    %v3144 = vunpack.c.l.b16 %v3084
    %v3145 = vunpack.c.l.b16 %v3085
    %v3146 = vunpack.c.l.b16 %v3086
    %v3147 = vunpack.c.l.b16 %v3087
    %v3148 = vunpack.c.l.b16 %v3088
    %v3149 = vunpack.c.l.b16 %v3089
    %v3150 = vpack.c.b16 %v3135, %v3134
    %v3151 = vpack.c.b16 %v3137, %v3136
    %v3152 = vpack.c.b16 %v3139, %v3138
    %v3153 = vpack.c.b16 %v3141, %v3140
    %v3154 = vpack.c.b16 %v3143, %v3142
    %v3155 = vpack.c.b16 %v3145, %v3144
    %v3156 = vpack.c.b16 %v3147, %v3146
    %v3157 = vpack.c.b16 %v3149, %v3148
    %3166 = vmatprep.subr.bf16.mxu0 0
    %3167 = vmatpush1.bf16.msra.mxu0 %v3150
    %3168 = vmatprep.subr.bf16.mxu0 0
    %3169 = vmatpush1.bf16.msra.mxu0 %v3151
    %3170 = vmatprep.subr.bf16.mxu0 0
    %3171 = vmatpush1.bf16.msra.mxu0 %v3152
    %3172 = vmatprep.subr.bf16.mxu0 0
    %3173 = vmatpush1.bf16.msra.mxu0 %v3153
    %3174 = vmatprep.subr.bf16.mxu0 0
    %3175 = vmatpush1.bf16.msra.mxu0 %v3154
    %3176 = vmatprep.subr.bf16.mxu0 0
    %3177 = vmatpush1.bf16.msra.mxu0 %v3155
    %3178 = vmatprep.subr.bf16.mxu0 0
    %3179 = vmatpush1.bf16.msra.mxu0 %v3156
    %3180 = vmatprep.subr.bf16.mxu0 0
    %3181 = vmatpush1.bf16.msra.mxu0 %v3157
    %3182 = vmatprep.subr.bf16.mxu0 0
    %3183 = vmatpush1.bf16.msra.mxu0 0
    %3184 = vmatprep.subr.bf16.mxu0 0
    %3185 = vmatpush1.bf16.msra.mxu0 0
    %3186 = vmatprep.subr.bf16.mxu0 0
    %3187 = vmatpush1.bf16.msra.mxu0 0
    %3188 = vmatprep.subr.bf16.mxu0 0
    %3189 = vmatpush1.bf16.msra.mxu0 0
    %3190 = vmatprep.subr.bf16.mxu0 0
    %3191 = vmatpush1.bf16.msra.mxu0 0
    %3192 = vmatprep.subr.bf16.mxu0 0
    %3193 = vmatpush1.bf16.msra.mxu0 0
    %3194 = vmatprep.subr.bf16.mxu0 0
    %3195 = vmatpush1.bf16.msra.mxu0 0
    %3196 = vmatprep.subr.bf16.mxu0 0
    %3197 = vmatpush1.bf16.msra.mxu0 0
    %3198 = vmatprep.mubr.bf16.mxu0 0
    %3199 = vmatmul.mubr.bf16.gmra.mrb[0].mxu0 %v3111
    %v3200 = vpop.f32.mrb[0].mxu0
    %v3201 = vadd.f32 %v3116, %v3200
    %v3202 = vpop.f32.mrb[0].mxu0
    %v3203 = vpop.f32.mrb[0].mxu0
    %v3204 = vpop.f32.mrb[0].mxu0
    %3205 = vdwg.mxu0
    %v3206 = vmul.f32 %v3201, 0.5
    %v3207 = vmul.f32 %v3201, 0.70710677
    %v3208 = verf.f32.pop %v3207
    %v3209 = vadd.f32 %v3208, 1.0
    %v3210 = vmul.f32 %v3206, %v3209
    %v3211 = vpack.c.bf16 %v3210, %v3210
    %v3213 = vlaneseq
    %v3214 = vshrl.u32 %v3213, 7
    %v3215 = vsub.s32 0, %v3214
    %v3216 = vrot.slane %v3110, %v3215
    %v3234 = vunpack.c.l.b16 %v3093
    %v3235 = vunpack.c.l.b16 %v3094
    %v3236 = vunpack.c.l.b16 %v3095
    %v3237 = vunpack.c.l.b16 %v3096
    %v3238 = vunpack.c.l.b16 %v3097
    %v3239 = vunpack.c.l.b16 %v3098
    %v3240 = vunpack.c.l.b16 %v3099
    %v3241 = vunpack.c.l.b16 %v3100
    %v3242 = vunpack.c.l.b16 %v3101
    %v3243 = vunpack.c.l.b16 %v3102
    %v3244 = vunpack.c.l.b16 %v3103
    %v3245 = vunpack.c.l.b16 %v3104
    %v3246 = vunpack.c.l.b16 %v3105
    %v3247 = vunpack.c.l.b16 %v3106
    %v3248 = vunpack.c.l.b16 %v3107
    %v3249 = vunpack.c.l.b16 %v3108
    %v3250 = vpack.c.b16 %v3235, %v3234
    %v3251 = vpack.c.b16 %v3237, %v3236
    %v3252 = vpack.c.b16 %v3239, %v3238
    %v3253 = vpack.c.b16 %v3241, %v3240
    %v3254 = vpack.c.b16 %v3243, %v3242
    %v3255 = vpack.c.b16 %v3245, %v3244
    %v3256 = vpack.c.b16 %v3247, %v3246
    %v3257 = vpack.c.b16 %v3249, %v3248
    %3266 = vmatprep.subr.bf16.mxu0 0
    %3267 = vmatpush1.bf16.msra.mxu0 %v3250
    %3268 = vmatprep.subr.bf16.mxu0 0
    %3269 = vmatpush1.bf16.msra.mxu0 %v3251
    %3270 = vmatprep.subr.bf16.mxu0 0
    %3271 = vmatpush1.bf16.msra.mxu0 %v3252
    %3272 = vmatprep.subr.bf16.mxu0 0
    %3273 = vmatpush1.bf16.msra.mxu0 %v3253
    %3274 = vmatprep.subr.bf16.mxu0 0
    %3275 = vmatpush1.bf16.msra.mxu0 %v3254
    %3276 = vmatprep.subr.bf16.mxu0 0
    %3277 = vmatpush1.bf16.msra.mxu0 %v3255
    %3278 = vmatprep.subr.bf16.mxu0 0
    %3279 = vmatpush1.bf16.msra.mxu0 %v3256
    %3280 = vmatprep.subr.bf16.mxu0 0
    %3281 = vmatpush1.bf16.msra.mxu0 %v3257
    %3282 = vmatprep.subr.bf16.mxu0 0
    %3283 = vmatpush1.bf16.msra.mxu0 0
    %3284 = vmatprep.subr.bf16.mxu0 0
    %3285 = vmatpush1.bf16.msra.mxu0 0
    %3286 = vmatprep.subr.bf16.mxu0 0
    %3287 = vmatpush1.bf16.msra.mxu0 0
    %3288 = vmatprep.subr.bf16.mxu0 0
    %3289 = vmatpush1.bf16.msra.mxu0 0
    %3290 = vmatprep.subr.bf16.mxu0 0
    %3291 = vmatpush1.bf16.msra.mxu0 0
    %3292 = vmatprep.subr.bf16.mxu0 0
    %3293 = vmatpush1.bf16.msra.mxu0 0
    %3294 = vmatprep.subr.bf16.mxu0 0
    %3295 = vmatpush1.bf16.msra.mxu0 0
    %3296 = vmatprep.subr.bf16.mxu0 0
    %3297 = vmatpush1.bf16.msra.mxu0 0
    %3298 = vmatprep.mubr.bf16.mxu0 0
    %3299 = vmatmul.mubr.bf16.gmra.mrb[0].mxu0 %v3211
    %v3300 = vpop.f32.mrb[0].mxu0
    %v3301 = vadd.f32 %v3216, %v3300
    %v3302 = vpop.f32.mrb[0].mxu0
    %v3303 = vpop.f32.mrb[0].mxu0
    %v3304 = vpop.f32.mrb[0].mxu0
    %3305 = vdwg.mxu0
    %v3306 = vadd.f32 %v2788, %v2829
    %v3307 = vadd.f32 %v2789, %v2834
    %s3308 = scalar_lea.vmem [#allocation12], 128
    %v3309 = vld [vmem:[%s3308] sm:$0xf]
    %v3310 = vld [vmem:[%s3308 + $0x4] sm:$0xf]
    %v3311 = vld [vmem:[%s3308 + $0x8] sm:$0xf]
    %v3312 = vld [vmem:[%s3308 + $0xc] sm:$0xf]
    %v3313 = vld [vmem:[%s3308 + $0x10] sm:$0xf]
    %v3314 = vld [vmem:[%s3308 + $0x14] sm:$0xf]
    %v3315 = vld [vmem:[%s3308 + $0x18] sm:$0xf]
    %v3316 = vld [vmem:[%s3308 + $0x1c] sm:$0xf]
    %v3317 = vld [vmem:[%s3308 + $0x20] sm:$0xf]
    %v3318 = vld [vmem:[%s3308 + $0x24] sm:$0xf]
    %v3319 = vld [vmem:[%s3308 + $0x28] sm:$0xf]
    %v3320 = vld [vmem:[%s3308 + $0x2c] sm:$0xf]
    %v3321 = vld [vmem:[%s3308 + $0x30] sm:$0xf]
    %v3322 = vld [vmem:[%s3308 + $0x34] sm:$0xf]
    %v3323 = vld [vmem:[%s3308 + $0x38] sm:$0xf]
    %v3324 = vld [vmem:[%s3308 + $0x3c] sm:$0xf]
    %s3325 = scalar_lea.vmem %s45, 2
    %v3326 = vld [vmem:[%s3325] sm:$0x1]
    %s3327 = scalar_lea.vmem [#allocation13], 128
    %v3328 = vld [vmem:[%s3327] sm:$0xf]
    %v3329 = vld [vmem:[%s3327 + $0x4] sm:$0xf]
    %v3330 = vld [vmem:[%s3327 + $0x8] sm:$0xf]
    %v3331 = vld [vmem:[%s3327 + $0xc] sm:$0xf]
    %v3332 = vld [vmem:[%s3327 + $0x10] sm:$0xf]
    %v3333 = vld [vmem:[%s3327 + $0x14] sm:$0xf]
    %v3334 = vld [vmem:[%s3327 + $0x18] sm:$0xf]
    %v3335 = vld [vmem:[%s3327 + $0x1c] sm:$0xf]
    %v3336 = vld [vmem:[%s3327 + $0x20] sm:$0xf]
    %v3337 = vld [vmem:[%s3327 + $0x24] sm:$0xf]
    %v3338 = vld [vmem:[%s3327 + $0x28] sm:$0xf]
    %v3339 = vld [vmem:[%s3327 + $0x2c] sm:$0xf]
    %v3340 = vld [vmem:[%s3327 + $0x30] sm:$0xf]
    %v3341 = vld [vmem:[%s3327 + $0x34] sm:$0xf]
    %v3342 = vld [vmem:[%s3327 + $0x38] sm:$0xf]
    %v3343 = vld [vmem:[%s3327 + $0x3c] sm:$0xf]
    %s3344 = scalar_lea.vmem %s49, 2
    %v3345 = vld [vmem:[%s3344] sm:$0x1]
    %v3346 = vpack.c.bf16 %v3307, %v3306
    %v3348 = vlaneseq
    %v3349 = vshrl.u32 %v3348, 7
    %v3350 = vsub.s32 0, %v3349
    %v3351 = vrot.slane %v3326, %v3350
    %v3369 = vunpack.c.l.b16 %v3309
    %v3370 = vunpack.c.l.b16 %v3310
    %v3371 = vunpack.c.l.b16 %v3311
    %v3372 = vunpack.c.l.b16 %v3312
    %v3373 = vunpack.c.l.b16 %v3313
    %v3374 = vunpack.c.l.b16 %v3314
    %v3375 = vunpack.c.l.b16 %v3315
    %v3376 = vunpack.c.l.b16 %v3316
    %v3377 = vunpack.c.l.b16 %v3317
    %v3378 = vunpack.c.l.b16 %v3318
    %v3379 = vunpack.c.l.b16 %v3319
    %v3380 = vunpack.c.l.b16 %v3320
    %v3381 = vunpack.c.l.b16 %v3321
    %v3382 = vunpack.c.l.b16 %v3322
    %v3383 = vunpack.c.l.b16 %v3323
    %v3384 = vunpack.c.l.b16 %v3324
    %v3385 = vpack.c.b16 %v3370, %v3369
    %v3386 = vpack.c.b16 %v3372, %v3371
    %v3387 = vpack.c.b16 %v3374, %v3373
    %v3388 = vpack.c.b16 %v3376, %v3375
    %v3389 = vpack.c.b16 %v3378, %v3377
    %v3390 = vpack.c.b16 %v3380, %v3379
    %v3391 = vpack.c.b16 %v3382, %v3381
    %v3392 = vpack.c.b16 %v3384, %v3383
    %3401 = vmatprep.subr.bf16.mxu0 0
    %3402 = vmatpush1.bf16.msra.mxu0 %v3385
    %3403 = vmatprep.subr.bf16.mxu0 0
    %3404 = vmatpush1.bf16.msra.mxu0 %v3386
    %3405 = vmatprep.subr.bf16.mxu0 0
    %3406 = vmatpush1.bf16.msra.mxu0 %v3387
    %3407 = vmatprep.subr.bf16.mxu0 0
    %3408 = vmatpush1.bf16.msra.mxu0 %v3388
    %3409 = vmatprep.subr.bf16.mxu0 0
    %3410 = vmatpush1.bf16.msra.mxu0 %v3389
    %3411 = vmatprep.subr.bf16.mxu0 0
    %3412 = vmatpush1.bf16.msra.mxu0 %v3390
    %3413 = vmatprep.subr.bf16.mxu0 0
    %3414 = vmatpush1.bf16.msra.mxu0 %v3391
    %3415 = vmatprep.subr.bf16.mxu0 0
    %3416 = vmatpush1.bf16.msra.mxu0 %v3392
    %3417 = vmatprep.subr.bf16.mxu0 0
    %3418 = vmatpush1.bf16.msra.mxu0 0
    %3419 = vmatprep.subr.bf16.mxu0 0
    %3420 = vmatpush1.bf16.msra.mxu0 0
    %3421 = vmatprep.subr.bf16.mxu0 0
    %3422 = vmatpush1.bf16.msra.mxu0 0
    %3423 = vmatprep.subr.bf16.mxu0 0
    %3424 = vmatpush1.bf16.msra.mxu0 0
    %3425 = vmatprep.subr.bf16.mxu0 0
    %3426 = vmatpush1.bf16.msra.mxu0 0
    %3427 = vmatprep.subr.bf16.mxu0 0
    %3428 = vmatpush1.bf16.msra.mxu0 0
    %3429 = vmatprep.subr.bf16.mxu0 0
    %3430 = vmatpush1.bf16.msra.mxu0 0
    %3431 = vmatprep.subr.bf16.mxu0 0
    %3432 = vmatpush1.bf16.msra.mxu0 0
    %3433 = vmatprep.mubr.bf16.mxu0 0
    %3434 = vmatmul.mubr.bf16.gmra.mrb[0].mxu0 %v3346
    %v3435 = vpop.f32.mrb[0].mxu0
    %v3436 = vadd.f32 %v3351, %v3435
    %v3437 = vpop.f32.mrb[0].mxu0
    %v3438 = vpop.f32.mrb[0].mxu0
    %v3439 = vadd.f32 %v3351, %v3438
    %v3440 = vpop.f32.mrb[0].mxu0
    %3441 = vdwg.mxu0
    %v3442 = vmul.f32 %v3436, 0.5
    %v3443 = vmul.f32 %v3439, 0.5
    %v3444 = vmul.f32 %v3436, 0.70710677
    %v3445 = vmul.f32 %v3439, 0.70710677
    %v3446 = verf.f32.pop %v3444
    %v3447 = verf.f32.pop %v3445
    %v3448 = vadd.f32 %v3446, 1.0
    %v3449 = vadd.f32 %v3447, 1.0
    %v3450 = vmul.f32 %v3442, %v3448
    %v3451 = vmul.f32 %v3443, %v3449
    %v3452 = vpack.c.bf16 %v3451, %v3450
    %v3454 = vlaneseq
    %v3455 = vshrl.u32 %v3454, 7
    %v3456 = vsub.s32 0, %v3455
    %v3457 = vrot.slane %v3345, %v3456
    %v3475 = vunpack.c.l.b16 %v3328
    %v3476 = vunpack.c.l.b16 %v3329
    %v3477 = vunpack.c.l.b16 %v3330
    %v3478 = vunpack.c.l.b16 %v3331
    %v3479 = vunpack.c.l.b16 %v3332
    %v3480 = vunpack.c.l.b16 %v3333
    %v3481 = vunpack.c.l.b16 %v3334
    %v3482 = vunpack.c.l.b16 %v3335
    %v3483 = vunpack.c.l.b16 %v3336
    %v3484 = vunpack.c.l.b16 %v3337
    %v3485 = vunpack.c.l.b16 %v3338
    %v3486 = vunpack.c.l.b16 %v3339
    %v3487 = vunpack.c.l.b16 %v3340
    %v3488 = vunpack.c.l.b16 %v3341
    %v3489 = vunpack.c.l.b16 %v3342
    %v3490 = vunpack.c.l.b16 %v3343
    %v3491 = vpack.c.b16 %v3476, %v3475
    %v3492 = vpack.c.b16 %v3478, %v3477
    %v3493 = vpack.c.b16 %v3480, %v3479
    %v3494 = vpack.c.b16 %v3482, %v3481
    %v3495 = vpack.c.b16 %v3484, %v3483
    %v3496 = vpack.c.b16 %v3486, %v3485
    %v3497 = vpack.c.b16 %v3488, %v3487
    %v3498 = vpack.c.b16 %v3490, %v3489
    %3507 = vmatprep.subr.bf16.mxu0 0
    %3508 = vmatpush1.bf16.msra.mxu0 %v3491
    %3509 = vmatprep.subr.bf16.mxu0 0
    %3510 = vmatpush1.bf16.msra.mxu0 %v3492
    %3511 = vmatprep.subr.bf16.mxu0 0
    %3512 = vmatpush1.bf16.msra.mxu0 %v3493
    %3513 = vmatprep.subr.bf16.mxu0 0
    %3514 = vmatpush1.bf16.msra.mxu0 %v3494
    %3515 = vmatprep.subr.bf16.mxu0 0
    %3516 = vmatpush1.bf16.msra.mxu0 %v3495
    %3517 = vmatprep.subr.bf16.mxu0 0
    %3518 = vmatpush1.bf16.msra.mxu0 %v3496
    %3519 = vmatprep.subr.bf16.mxu0 0
    %3520 = vmatpush1.bf16.msra.mxu0 %v3497
    %3521 = vmatprep.subr.bf16.mxu0 0
    %3522 = vmatpush1.bf16.msra.mxu0 %v3498
    %3523 = vmatprep.subr.bf16.mxu0 0
    %3524 = vmatpush1.bf16.msra.mxu0 0
    %3525 = vmatprep.subr.bf16.mxu0 0
    %3526 = vmatpush1.bf16.msra.mxu0 0
    %3527 = vmatprep.subr.bf16.mxu0 0
    %3528 = vmatpush1.bf16.msra.mxu0 0
    %3529 = vmatprep.subr.bf16.mxu0 0
    %3530 = vmatpush1.bf16.msra.mxu0 0
    %3531 = vmatprep.subr.bf16.mxu0 0
    %3532 = vmatpush1.bf16.msra.mxu0 0
    %3533 = vmatprep.subr.bf16.mxu0 0
    %3534 = vmatpush1.bf16.msra.mxu0 0
    %3535 = vmatprep.subr.bf16.mxu0 0
    %3536 = vmatpush1.bf16.msra.mxu0 0
    %3537 = vmatprep.subr.bf16.mxu0 0
    %3538 = vmatpush1.bf16.msra.mxu0 0
    %3539 = vmatprep.mubr.bf16.mxu0 0
    %3540 = vmatmul.mubr.bf16.gmra.mrb[0].mxu0 %v3452
    %v3541 = vpop.f32.mrb[0].mxu0
    %v3542 = vadd.f32 %v3457, %v3541
    %v3543 = vpop.f32.mrb[0].mxu0
    %v3544 = vpop.f32.mrb[0].mxu0
    %v3545 = vadd.f32 %v3457, %v3544
    %v3546 = vpop.f32.mrb[0].mxu0
    %3547 = vdwg.mxu0
    %v3548 = vadd.f32 %v3542, %v2788
    %v3549 = vadd.f32 %v3545, %v2789
    %v3550 = vmul.f32 %v3548, %v570
    %v3551 = vmul.f32 %v3549, %v575
    %v3552 = vadd.f32 %v3550, %v3551
    %v3553 = vrot.slane %v3552, 4
    %v3554 = vadd.f32 %v3552, %v3553
    %v3555 = vrot.slane %v3554, 2
    %v3556 = vadd.f32 %v3554, %v3555
    %v3557 = vrot.slane %v3556, 1
    %v3558 = vadd.f32 %v3556, %v3557
    %v3559 = vmul.f32 %v3558, 0.0625
    %v3560 = vsub.f32 %v3550, %v3559
    %v3561 = vsub.f32 %v3551, %v3559
    %v3562 = vmul.f32 %v3560, %v3560
    %v3563 = vmul.f32 %v3561, %v3561
    %v3564 = vmul.f32 %v3562, %v570
    %v3565 = vmul.f32 %v3563, %v575
    %v3566 = vadd.f32 %v3564, %v3565
    %v3567 = vrot.slane %v3566, 4
    %v3568 = vadd.f32 %v3566, %v3567
    %v3569 = vrot.slane %v3568, 2
    %v3570 = vadd.f32 %v3568, %v3569
    %v3571 = vrot.slane %v3570, 1
    %v3572 = vadd.f32 %v3570, %v3571
    %v3573 = vmul.f32 %v3572, 0.0625
    %v3574 = vadd.f32 %v3573, 1e-05
    %v3575 = vrsqrt.pop %v3574
    %v3576 = vmul.f32 %v3560, %v3575
    %v3577 = vmul.f32 %v3561, %v3575
    %s3578 = scalar_lea.vmem [#allocation21], 2
    %v3579 = vld [vmem:[%s3578] sm:$0x1]
    %v3581 = vlaneseq
    %v3582 = vshrl.u32 %v3581, 7
    %v3583 = vsub.s32 0, %v3582
    %v3584 = vrot.slane %v3579, %v3583
    %v3586 = vmul.f32 %v3576, %v3584
    %v3587 = vmul.f32 %v3577, %v3584
    %s3588 = scalar_lea.vmem [#allocation22], 2
    %v3589 = vld [vmem:[%s3588] sm:$0x1]
    %v3591 = vlaneseq
    %v3592 = vshrl.u32 %v3591, 7
    %v3593 = vsub.s32 0, %v3592
    %v3594 = vrot.slane %v3589, %v3593
    %v3596 = vadd.f32 %v3586, %v3594
    %v3597 = vadd.f32 %v3587, %v3594
    %v3598 = vmul.f32 %v3596, %v570
    %v3599 = vmul.f32 %v3597, %v575
    %v3600 = vpack.c.bf16 %v3301, %v3301
    %v3602 = vsel %vm1406, %v3600, 0
    %3604 = vmatprep.subr.bf16.mxu0 0
    %3605 = vmatpush1.bf16.msra.mxu0 %v3602
    %3606 = vmatprep.subr.bf16.mxu0 0
    %3607 = vmatpush1.bf16.msra.mxu0 0
    %3608 = vmatprep.subr.bf16.mxu0 0
    %3609 = vmatpush1.bf16.msra.mxu0 0
    %3610 = vmatprep.subr.bf16.mxu0 0
    %3611 = vmatpush1.bf16.msra.mxu0 0
    %3612 = vmatprep.subr.bf16.mxu0 0
    %3613 = vmatpush1.bf16.msra.mxu0 0
    %3614 = vmatprep.subr.bf16.mxu0 0
    %3615 = vmatpush1.bf16.msra.mxu0 0
    %3616 = vmatprep.subr.bf16.mxu0 0
    %3617 = vmatpush1.bf16.msra.mxu0 0
    %3618 = vmatprep.subr.bf16.mxu0 0
    %3619 = vmatpush1.bf16.msra.mxu0 0
    %3620 = vmatprep.subr.bf16.mxu0 0
    %3621 = vmatpush1.bf16.msra.mxu0 0
    %3622 = vmatprep.subr.bf16.mxu0 0
    %3623 = vmatpush1.bf16.msra.mxu0 0
    %3624 = vmatprep.subr.bf16.mxu0 0
    %3625 = vmatpush1.bf16.msra.mxu0 0
    %3626 = vmatprep.subr.bf16.mxu0 0
    %3627 = vmatpush1.bf16.msra.mxu0 0
    %3628 = vmatprep.subr.bf16.mxu0 0
    %3629 = vmatpush1.bf16.msra.mxu0 0
    %3630 = vmatprep.subr.bf16.mxu0 0
    %3631 = vmatpush1.bf16.msra.mxu0 0
    %3632 = vmatprep.subr.bf16.mxu0 0
    %3633 = vmatpush1.bf16.msra.mxu0 0
    %3634 = vmatprep.subr.bf16.mxu0 0
    %3635 = vmatpush1.bf16.msra.mxu0 0
    %3636 = vmatprep.mubr.bf16.mxu0 0
    %3637 = vmatmul.mubr.bf16.gmra.mrb[0].mxu0 %v1404
    %v3638 = vpop.f32.mrb[0].mxu0
    %v3639 = vadd.f32 %v3598, %v3638
    %v3640 = vpop.f32.mrb[0].mxu0
    %v3641 = vpop.f32.mrb[0].mxu0
    %v3642 = vadd.f32 %v3599, %v3641
    %v3643 = vpop.f32.mrb[0].mxu0
    %3644 = vdwg.mxu0
    %s3645 = scalar_lea.vmem [#allocation15], 128
    %v3646 = vld [vmem:[%s3645] sm:$0xf]
    %v3647 = vld [vmem:[%s3645 + $0x4] sm:$0xf]
    %v3648 = vld [vmem:[%s3645 + $0x8] sm:$0xf]
    %v3649 = vld [vmem:[%s3645 + $0xc] sm:$0xf]
    %v3650 = vld [vmem:[%s3645 + $0x10] sm:$0xf]
    %v3651 = vld [vmem:[%s3645 + $0x14] sm:$0xf]
    %v3652 = vld [vmem:[%s3645 + $0x18] sm:$0xf]
    %v3653 = vld [vmem:[%s3645 + $0x1c] sm:$0xf]
    %v3654 = vld [vmem:[%s3645 + $0x20] sm:$0xf]
    %v3655 = vld [vmem:[%s3645 + $0x24] sm:$0xf]
    %v3656 = vld [vmem:[%s3645 + $0x28] sm:$0xf]
    %v3657 = vld [vmem:[%s3645 + $0x2c] sm:$0xf]
    %v3658 = vld [vmem:[%s3645 + $0x30] sm:$0xf]
    %v3659 = vld [vmem:[%s3645 + $0x34] sm:$0xf]
    %v3660 = vld [vmem:[%s3645 + $0x38] sm:$0xf]
    %v3661 = vld [vmem:[%s3645 + $0x3c] sm:$0xf]
    %s3662 = scalar_lea.vmem [#allocation16], 2
    %v3663 = vld [vmem:[%s3662] sm:$0x1]
    %s3664 = scalar_lea.vmem [#allocation18], 128
    %v3665 = vld [vmem:[%s3664] sm:$0xf]
    %v3666 = vld [vmem:[%s3664 + $0x4] sm:$0xf]
    %v3667 = vld [vmem:[%s3664 + $0x8] sm:$0xf]
    %v3668 = vld [vmem:[%s3664 + $0xc] sm:$0xf]
    %v3669 = vld [vmem:[%s3664 + $0x10] sm:$0xf]
    %v3670 = vld [vmem:[%s3664 + $0x14] sm:$0xf]
    %v3671 = vld [vmem:[%s3664 + $0x18] sm:$0xf]
    %v3672 = vld [vmem:[%s3664 + $0x1c] sm:$0xf]
    %v3673 = vld [vmem:[%s3664 + $0x20] sm:$0xf]
    %v3674 = vld [vmem:[%s3664 + $0x24] sm:$0xf]
    %v3675 = vld [vmem:[%s3664 + $0x28] sm:$0xf]
    %v3676 = vld [vmem:[%s3664 + $0x2c] sm:$0xf]
    %v3677 = vld [vmem:[%s3664 + $0x30] sm:$0xf]
    %v3678 = vld [vmem:[%s3664 + $0x34] sm:$0xf]
    %v3679 = vld [vmem:[%s3664 + $0x38] sm:$0xf]
    %v3680 = vld [vmem:[%s3664 + $0x3c] sm:$0xf]
    %s3681 = scalar_lea.vmem [#allocation19], 2
    %v3682 = vld [vmem:[%s3681] sm:$0x1]
    %v3683 = vpack.c.bf16 %v3642, %v3639
    %v3685 = vlaneseq
    %v3686 = vshrl.u32 %v3685, 7
    %v3687 = vsub.s32 0, %v3686
    %v3688 = vrot.slane %v3663, %v3687
    %v3706 = vunpack.c.l.b16 %v3646
    %v3707 = vunpack.c.l.b16 %v3647
    %v3708 = vunpack.c.l.b16 %v3648
    %v3709 = vunpack.c.l.b16 %v3649
    %v3710 = vunpack.c.l.b16 %v3650
    %v3711 = vunpack.c.l.b16 %v3651
    %v3712 = vunpack.c.l.b16 %v3652
    %v3713 = vunpack.c.l.b16 %v3653
    %v3714 = vunpack.c.l.b16 %v3654
    %v3715 = vunpack.c.l.b16 %v3655
    %v3716 = vunpack.c.l.b16 %v3656
    %v3717 = vunpack.c.l.b16 %v3657
    %v3718 = vunpack.c.l.b16 %v3658
    %v3719 = vunpack.c.l.b16 %v3659
    %v3720 = vunpack.c.l.b16 %v3660
    %v3721 = vunpack.c.l.b16 %v3661
    %v3722 = vpack.c.b16 %v3707, %v3706
    %v3723 = vpack.c.b16 %v3709, %v3708
    %v3724 = vpack.c.b16 %v3711, %v3710
    %v3725 = vpack.c.b16 %v3713, %v3712
    %v3726 = vpack.c.b16 %v3715, %v3714
    %v3727 = vpack.c.b16 %v3717, %v3716
    %v3728 = vpack.c.b16 %v3719, %v3718
    %v3729 = vpack.c.b16 %v3721, %v3720
    %3738 = vmatprep.subr.bf16.mxu0 0
    %3739 = vmatpush1.bf16.msra.mxu0 %v3722
    %3740 = vmatprep.subr.bf16.mxu0 0
    %3741 = vmatpush1.bf16.msra.mxu0 %v3723
    %3742 = vmatprep.subr.bf16.mxu0 0
    %3743 = vmatpush1.bf16.msra.mxu0 %v3724
    %3744 = vmatprep.subr.bf16.mxu0 0
    %3745 = vmatpush1.bf16.msra.mxu0 %v3725
    %3746 = vmatprep.subr.bf16.mxu0 0
    %3747 = vmatpush1.bf16.msra.mxu0 %v3726
    %3748 = vmatprep.subr.bf16.mxu0 0
    %3749 = vmatpush1.bf16.msra.mxu0 %v3727
    %3750 = vmatprep.subr.bf16.mxu0 0
    %3751 = vmatpush1.bf16.msra.mxu0 %v3728
    %3752 = vmatprep.subr.bf16.mxu0 0
    %3753 = vmatpush1.bf16.msra.mxu0 %v3729
    %3754 = vmatprep.subr.bf16.mxu0 0
    %3755 = vmatpush1.bf16.msra.mxu0 0
    %3756 = vmatprep.subr.bf16.mxu0 0
    %3757 = vmatpush1.bf16.msra.mxu0 0
    %3758 = vmatprep.subr.bf16.mxu0 0
    %3759 = vmatpush1.bf16.msra.mxu0 0
    %3760 = vmatprep.subr.bf16.mxu0 0
    %3761 = vmatpush1.bf16.msra.mxu0 0
    %3762 = vmatprep.subr.bf16.mxu0 0
    %3763 = vmatpush1.bf16.msra.mxu0 0
    %3764 = vmatprep.subr.bf16.mxu0 0
    %3765 = vmatpush1.bf16.msra.mxu0 0
    %3766 = vmatprep.subr.bf16.mxu0 0
    %3767 = vmatpush1.bf16.msra.mxu0 0
    %3768 = vmatprep.subr.bf16.mxu0 0
    %3769 = vmatpush1.bf16.msra.mxu0 0
    %3770 = vmatprep.mubr.bf16.mxu0 0
    %3771 = vmatmul.mubr.bf16.gmra.mrb[0].mxu0 %v3683
    %v3772 = vpop.f32.mrb[0].mxu0
    %v3773 = vadd.f32 %v3688, %v3772
    %v3774 = vpop.f32.mrb[0].mxu0
    %v3775 = vpop.f32.mrb[0].mxu0
    %v3776 = vadd.f32 %v3688, %v3775
    %v3777 = vpop.f32.mrb[0].mxu0
    %3778 = vdwg.mxu0
    %v3779 = vmul.f32 %v3773, 0.5
    %v3780 = vmul.f32 %v3776, 0.5
    %v3781 = vmul.f32 %v3773, 0.70710677
    %v3782 = vmul.f32 %v3776, 0.70710677
    %v3783 = verf.f32.pop %v3781
    %v3784 = verf.f32.pop %v3782
    %v3785 = vadd.f32 %v3783, 1.0
    %v3786 = vadd.f32 %v3784, 1.0
    %v3787 = vmul.f32 %v3779, %v3785
    %v3788 = vmul.f32 %v3780, %v3786
    %v3789 = vpack.c.bf16 %v3788, %v3787
    %v3791 = vlaneseq
    %v3792 = vshrl.u32 %v3791, 7
    %v3793 = vsub.s32 0, %v3792
    %v3794 = vrot.slane %v3682, %v3793
    %v3812 = vunpack.c.l.b16 %v3665
    %v3813 = vunpack.c.l.b16 %v3666
    %v3814 = vunpack.c.l.b16 %v3667
    %v3815 = vunpack.c.l.b16 %v3668
    %v3816 = vunpack.c.l.b16 %v3669
    %v3817 = vunpack.c.l.b16 %v3670
    %v3818 = vunpack.c.l.b16 %v3671
    %v3819 = vunpack.c.l.b16 %v3672
    %v3820 = vunpack.c.l.b16 %v3673
    %v3821 = vunpack.c.l.b16 %v3674
    %v3822 = vunpack.c.l.b16 %v3675
    %v3823 = vunpack.c.l.b16 %v3676
    %v3824 = vunpack.c.l.b16 %v3677
    %v3825 = vunpack.c.l.b16 %v3678
    %v3826 = vunpack.c.l.b16 %v3679
    %v3827 = vunpack.c.l.b16 %v3680
    %v3828 = vpack.c.b16 %v3813, %v3812
    %v3829 = vpack.c.b16 %v3815, %v3814
    %v3830 = vpack.c.b16 %v3817, %v3816
    %v3831 = vpack.c.b16 %v3819, %v3818
    %v3832 = vpack.c.b16 %v3821, %v3820
    %v3833 = vpack.c.b16 %v3823, %v3822
    %v3834 = vpack.c.b16 %v3825, %v3824
    %v3835 = vpack.c.b16 %v3827, %v3826
    %3844 = vmatprep.subr.bf16.mxu0 0
    %3845 = vmatpush1.bf16.msra.mxu0 %v3828
    %3846 = vmatprep.subr.bf16.mxu0 0
    %3847 = vmatpush1.bf16.msra.mxu0 %v3829
    %3848 = vmatprep.subr.bf16.mxu0 0
    %3849 = vmatpush1.bf16.msra.mxu0 %v3830
    %3850 = vmatprep.subr.bf16.mxu0 0
    %3851 = vmatpush1.bf16.msra.mxu0 %v3831
    %3852 = vmatprep.subr.bf16.mxu0 0
    %3853 = vmatpush1.bf16.msra.mxu0 %v3832
    %3854 = vmatprep.subr.bf16.mxu0 0
    %3855 = vmatpush1.bf16.msra.mxu0 %v3833
    %3856 = vmatprep.subr.bf16.mxu0 0
    %3857 = vmatpush1.bf16.msra.mxu0 %v3834
    %3858 = vmatprep.subr.bf16.mxu0 0
    %3859 = vmatpush1.bf16.msra.mxu0 %v3835
    %3860 = vmatprep.subr.bf16.mxu0 0
    %3861 = vmatpush1.bf16.msra.mxu0 0
    %3862 = vmatprep.subr.bf16.mxu0 0
    %3863 = vmatpush1.bf16.msra.mxu0 0
    %3864 = vmatprep.subr.bf16.mxu0 0
    %3865 = vmatpush1.bf16.msra.mxu0 0
    %3866 = vmatprep.subr.bf16.mxu0 0
    %3867 = vmatpush1.bf16.msra.mxu0 0
    %3868 = vmatprep.subr.bf16.mxu0 0
    %3869 = vmatpush1.bf16.msra.mxu0 0
    %3870 = vmatprep.subr.bf16.mxu0 0
    %3871 = vmatpush1.bf16.msra.mxu0 0
    %3872 = vmatprep.subr.bf16.mxu0 0
    %3873 = vmatpush1.bf16.msra.mxu0 0
    %3874 = vmatprep.subr.bf16.mxu0 0
    %3875 = vmatpush1.bf16.msra.mxu0 0
    %3876 = vmatprep.mubr.bf16.mxu0 0
    %3877 = vmatmul.mubr.bf16.gmra.mrb[0].mxu0 %v3789
    %v3878 = vpop.f32.mrb[0].mxu0
    %v3879 = vadd.f32 %v3794, %v3878
    %v3880 = vpop.f32.mrb[0].mxu0
    %v3881 = vpop.f32.mrb[0].mxu0
    %v3882 = vadd.f32 %v3794, %v3881
    %v3883 = vpop.f32.mrb[0].mxu0
    %3884 = vdwg.mxu0
    %v3885 = vadd.f32 %v3879, %v3598
    %v3886 = vadd.f32 %v3882, %v3599
    %v3887 = vmul.f32 %v3885, %v570
    %v3888 = vmul.f32 %v3886, %v575
    %v3889 = vpack.c.bf16 %v3888, %v3887
    %3890 = vmatprep.subr.bf16.mxu0 0
    %3891 = vmatpush1.bf16.msra.mxu0 %v3889
    %3892 = vmatprep.subr.bf16.mxu0 0
    %3893 = vmatpush1.bf16.msra.mxu0 0
    %3894 = vmatprep.subr.bf16.mxu0 0
    %3895 = vmatpush1.bf16.msra.mxu0 0
    %3896 = vmatprep.subr.bf16.mxu0 0
    %3897 = vmatpush1.bf16.msra.mxu0 0
    %3898 = vmatprep.subr.bf16.mxu0 0
    %3899 = vmatpush1.bf16.msra.mxu0 0
    %3900 = vmatprep.subr.bf16.mxu0 0
    %3901 = vmatpush1.bf16.msra.mxu0 0
    %3902 = vmatprep.subr.bf16.mxu0 0
    %3903 = vmatpush1.bf16.msra.mxu0 0
    %3904 = vmatprep.subr.bf16.mxu0 0
    %3905 = vmatpush1.bf16.msra.mxu0 0
    %3906 = vmatprep.subr.bf16.mxu0 0
    %3907 = vmatpush1.bf16.msra.mxu0 0
    %3908 = vmatprep.subr.bf16.mxu0 0
    %3909 = vmatpush1.bf16.msra.mxu0 0
    %3910 = vmatprep.subr.bf16.mxu0 0
    %3911 = vmatpush1.bf16.msra.mxu0 0
    %3912 = vmatprep.subr.bf16.mxu0 0
    %3913 = vmatpush1.bf16.msra.mxu0 0
    %3914 = vmatprep.subr.bf16.mxu0 0
    %3915 = vmatpush1.bf16.msra.mxu0 0
    %3916 = vmatprep.subr.bf16.mxu0 0
    %3917 = vmatpush1.bf16.msra.mxu0 0
    %3918 = vmatprep.subr.bf16.mxu0 0
    %3919 = vmatpush1.bf16.msra.mxu0 0
    %3920 = vmatprep.subr.bf16.mxu0 0
    %3921 = vmatpush1.bf16.msra.mxu0 0
    %3922 = vmatprep.mubr.bf16.mxu0 0
    %3923 = vmatmul.mubr.bf16.gmra.mrb[0].mxu0 %v590
    %v3924 = vpop.f32.mrb[0].mxu0
    %v3925 = vadd.f32 0.0, %v3924
    %v3926 = vpop.f32.mrb[0].mxu0
    %v3927 = vpop.f32.mrb[0].mxu0
    %v3928 = vadd.f32 0.0, %v3927
    %v3929 = vpop.f32.mrb[0].mxu0
    %3930 = vmatprep.mubr.bf16.mxu0 0
    %3931 = vmatmul.mubr.bf16.gmra.mrb[0].mxu0 %v593
    %v3932 = vpop.f32.mrb[0].mxu0
    %v3933 = vadd.f32 0.0, %v3932
    %v3934 = vpop.f32.mrb[0].mxu0
    %v3935 = vpop.f32.mrb[0].mxu0
    %v3936 = vpop.f32.mrb[0].mxu0
    %3937 = vdwg.mxu0
    %s3938 = scalar_lea.vmem [#allocation6], 192
    %v3939 = vld [vmem:[%s3938] sm:$0xf]
    %v3940 = vld [vmem:[%s3938 + $0x4] sm:$0xf]
    %v3941 = vld [vmem:[%s3938 + $0x8] sm:$0xf]
    %v3942 = vld [vmem:[%s3938 + $0xc] sm:$0xf]
    %v3943 = vld [vmem:[%s3938 + $0x10] sm:$0xf]
    %v3944 = vld [vmem:[%s3938 + $0x14] sm:$0xf]
    %v3945 = vld [vmem:[%s3938 + $0x18] sm:$0xf]
    %v3946 = vld [vmem:[%s3938 + $0x1c] sm:$0xf]
    %v3947 = vld [vmem:[%s3938 + $0x20] sm:$0xf]
    %v3948 = vld [vmem:[%s3938 + $0x24] sm:$0xf]
    %v3949 = vld [vmem:[%s3938 + $0x28] sm:$0xf]
    %v3950 = vld [vmem:[%s3938 + $0x2c] sm:$0xf]
    %v3951 = vld [vmem:[%s3938 + $0x30] sm:$0xf]
    %v3952 = vld [vmem:[%s3938 + $0x34] sm:$0xf]
    %v3953 = vld [vmem:[%s3938 + $0x38] sm:$0xf]
    %v3954 = vld [vmem:[%s3938 + $0x3c] sm:$0xf]
    %s3955 = scalar_lea.vmem %s29, 3
    %v3956 = vld [vmem:[%s3955] sm:$0x1]
    %s3957 = scalar_lea.vmem [#allocation7], 192
    %v3958 = vld [vmem:[%s3957] sm:$0xf]
    %v3959 = vld [vmem:[%s3957 + $0x4] sm:$0xf]
    %v3960 = vld [vmem:[%s3957 + $0x8] sm:$0xf]
    %v3961 = vld [vmem:[%s3957 + $0xc] sm:$0xf]
    %v3962 = vld [vmem:[%s3957 + $0x10] sm:$0xf]
    %v3963 = vld [vmem:[%s3957 + $0x14] sm:$0xf]
    %v3964 = vld [vmem:[%s3957 + $0x18] sm:$0xf]
    %v3965 = vld [vmem:[%s3957 + $0x1c] sm:$0xf]
    %v3966 = vld [vmem:[%s3957 + $0x20] sm:$0xf]
    %v3967 = vld [vmem:[%s3957 + $0x24] sm:$0xf]
    %v3968 = vld [vmem:[%s3957 + $0x28] sm:$0xf]
    %v3969 = vld [vmem:[%s3957 + $0x2c] sm:$0xf]
    %v3970 = vld [vmem:[%s3957 + $0x30] sm:$0xf]
    %v3971 = vld [vmem:[%s3957 + $0x34] sm:$0xf]
    %v3972 = vld [vmem:[%s3957 + $0x38] sm:$0xf]
    %v3973 = vld [vmem:[%s3957 + $0x3c] sm:$0xf]
    %s3974 = scalar_lea.vmem %s33, 3
    %v3975 = vld [vmem:[%s3974] sm:$0x1]
    %v3976 = vpack.c.bf16 %v3925, %v3925
    %v3978 = vlaneseq
    %v3979 = vshrl.u32 %v3978, 7
    %v3980 = vsub.s32 0, %v3979
    %v3981 = vrot.slane %v3956, %v3980
    %v3999 = vunpack.c.l.b16 %v3939
    %v4000 = vunpack.c.l.b16 %v3940
    %v4001 = vunpack.c.l.b16 %v3941
    %v4002 = vunpack.c.l.b16 %v3942
    %v4003 = vunpack.c.l.b16 %v3943
    %v4004 = vunpack.c.l.b16 %v3944
    %v4005 = vunpack.c.l.b16 %v3945
    %v4006 = vunpack.c.l.b16 %v3946
    %v4007 = vunpack.c.l.b16 %v3947
    %v4008 = vunpack.c.l.b16 %v3948
    %v4009 = vunpack.c.l.b16 %v3949
    %v4010 = vunpack.c.l.b16 %v3950
    %v4011 = vunpack.c.l.b16 %v3951
    %v4012 = vunpack.c.l.b16 %v3952
    %v4013 = vunpack.c.l.b16 %v3953
    %v4014 = vunpack.c.l.b16 %v3954
    %v4015 = vpack.c.b16 %v4000, %v3999
    %v4016 = vpack.c.b16 %v4002, %v4001
    %v4017 = vpack.c.b16 %v4004, %v4003
    %v4018 = vpack.c.b16 %v4006, %v4005
    %v4019 = vpack.c.b16 %v4008, %v4007
    %v4020 = vpack.c.b16 %v4010, %v4009
    %v4021 = vpack.c.b16 %v4012, %v4011
    %v4022 = vpack.c.b16 %v4014, %v4013
    %4031 = vmatprep.subr.bf16.mxu0 0
    %4032 = vmatpush1.bf16.msra.mxu0 %v4015
    %4033 = vmatprep.subr.bf16.mxu0 0
    %4034 = vmatpush1.bf16.msra.mxu0 %v4016
    %4035 = vmatprep.subr.bf16.mxu0 0
    %4036 = vmatpush1.bf16.msra.mxu0 %v4017
    %4037 = vmatprep.subr.bf16.mxu0 0
    %4038 = vmatpush1.bf16.msra.mxu0 %v4018
    %4039 = vmatprep.subr.bf16.mxu0 0
    %4040 = vmatpush1.bf16.msra.mxu0 %v4019
    %4041 = vmatprep.subr.bf16.mxu0 0
    %4042 = vmatpush1.bf16.msra.mxu0 %v4020
    %4043 = vmatprep.subr.bf16.mxu0 0
    %4044 = vmatpush1.bf16.msra.mxu0 %v4021
    %4045 = vmatprep.subr.bf16.mxu0 0
    %4046 = vmatpush1.bf16.msra.mxu0 %v4022
    %4047 = vmatprep.subr.bf16.mxu0 0
    %4048 = vmatpush1.bf16.msra.mxu0 0
    %4049 = vmatprep.subr.bf16.mxu0 0
    %4050 = vmatpush1.bf16.msra.mxu0 0
    %4051 = vmatprep.subr.bf16.mxu0 0
    %4052 = vmatpush1.bf16.msra.mxu0 0
    %4053 = vmatprep.subr.bf16.mxu0 0
    %4054 = vmatpush1.bf16.msra.mxu0 0
    %4055 = vmatprep.subr.bf16.mxu0 0
    %4056 = vmatpush1.bf16.msra.mxu0 0
    %4057 = vmatprep.subr.bf16.mxu0 0
    %4058 = vmatpush1.bf16.msra.mxu0 0
    %4059 = vmatprep.subr.bf16.mxu0 0
    %4060 = vmatpush1.bf16.msra.mxu0 0
    %4061 = vmatprep.subr.bf16.mxu0 0
    %4062 = vmatpush1.bf16.msra.mxu0 0
    %4063 = vmatprep.mubr.bf16.mxu0 0
    %4064 = vmatmul.mubr.bf16.gmra.mrb[0].mxu0 %v3976
    %v4065 = vpop.f32.mrb[0].mxu0
    %v4066 = vadd.f32 %v3981, %v4065
    %v4067 = vpop.f32.mrb[0].mxu0
    %v4068 = vpop.f32.mrb[0].mxu0
    %v4069 = vpop.f32.mrb[0].mxu0
    %4070 = vdwg.mxu0
    %v4071 = vmul.f32 %v4066, 0.5
    %v4072 = vmul.f32 %v4066, 0.70710677
    %v4073 = verf.f32.pop %v4072
    %v4074 = vadd.f32 %v4073, 1.0
    %v4075 = vmul.f32 %v4071, %v4074
    %v4076 = vpack.c.bf16 %v4075, %v4075
    %v4078 = vlaneseq
    %v4079 = vshrl.u32 %v4078, 7
    %v4080 = vsub.s32 0, %v4079
    %v4081 = vrot.slane %v3975, %v4080
    %v4099 = vunpack.c.l.b16 %v3958
    %v4100 = vunpack.c.l.b16 %v3959
    %v4101 = vunpack.c.l.b16 %v3960
    %v4102 = vunpack.c.l.b16 %v3961
    %v4103 = vunpack.c.l.b16 %v3962
    %v4104 = vunpack.c.l.b16 %v3963
    %v4105 = vunpack.c.l.b16 %v3964
    %v4106 = vunpack.c.l.b16 %v3965
    %v4107 = vunpack.c.l.b16 %v3966
    %v4108 = vunpack.c.l.b16 %v3967
    %v4109 = vunpack.c.l.b16 %v3968
    %v4110 = vunpack.c.l.b16 %v3969
    %v4111 = vunpack.c.l.b16 %v3970
    %v4112 = vunpack.c.l.b16 %v3971
    %v4113 = vunpack.c.l.b16 %v3972
    %v4114 = vunpack.c.l.b16 %v3973
    %v4115 = vpack.c.b16 %v4100, %v4099
    %v4116 = vpack.c.b16 %v4102, %v4101
    %v4117 = vpack.c.b16 %v4104, %v4103
    %v4118 = vpack.c.b16 %v4106, %v4105
    %v4119 = vpack.c.b16 %v4108, %v4107
    %v4120 = vpack.c.b16 %v4110, %v4109
    %v4121 = vpack.c.b16 %v4112, %v4111
    %v4122 = vpack.c.b16 %v4114, %v4113
    %4131 = vmatprep.subr.bf16.mxu0 0
    %4132 = vmatpush1.bf16.msra.mxu0 %v4115
    %4133 = vmatprep.subr.bf16.mxu0 0
    %4134 = vmatpush1.bf16.msra.mxu0 %v4116
    %4135 = vmatprep.subr.bf16.mxu0 0
    %4136 = vmatpush1.bf16.msra.mxu0 %v4117
    %4137 = vmatprep.subr.bf16.mxu0 0
    %4138 = vmatpush1.bf16.msra.mxu0 %v4118
    %4139 = vmatprep.subr.bf16.mxu0 0
    %4140 = vmatpush1.bf16.msra.mxu0 %v4119
    %4141 = vmatprep.subr.bf16.mxu0 0
    %4142 = vmatpush1.bf16.msra.mxu0 %v4120
    %4143 = vmatprep.subr.bf16.mxu0 0
    %4144 = vmatpush1.bf16.msra.mxu0 %v4121
    %4145 = vmatprep.subr.bf16.mxu0 0
    %4146 = vmatpush1.bf16.msra.mxu0 %v4122
    %4147 = vmatprep.subr.bf16.mxu0 0
    %4148 = vmatpush1.bf16.msra.mxu0 0
    %4149 = vmatprep.subr.bf16.mxu0 0
    %4150 = vmatpush1.bf16.msra.mxu0 0
    %4151 = vmatprep.subr.bf16.mxu0 0
    %4152 = vmatpush1.bf16.msra.mxu0 0
    %4153 = vmatprep.subr.bf16.mxu0 0
    %4154 = vmatpush1.bf16.msra.mxu0 0
    %4155 = vmatprep.subr.bf16.mxu0 0
    %4156 = vmatpush1.bf16.msra.mxu0 0
    %4157 = vmatprep.subr.bf16.mxu0 0
    %4158 = vmatpush1.bf16.msra.mxu0 0
    %4159 = vmatprep.subr.bf16.mxu0 0
    %4160 = vmatpush1.bf16.msra.mxu0 0
    %4161 = vmatprep.subr.bf16.mxu0 0
    %4162 = vmatpush1.bf16.msra.mxu0 0
    %4163 = vmatprep.mubr.bf16.mxu0 0
    %4164 = vmatmul.mubr.bf16.gmra.mrb[0].mxu0 %v4076
    %v4165 = vpop.f32.mrb[0].mxu0
    %v4166 = vadd.f32 %v4081, %v4165
    %v4167 = vpop.f32.mrb[0].mxu0
    %v4168 = vpop.f32.mrb[0].mxu0
    %v4169 = vpop.f32.mrb[0].mxu0
    %4170 = vdwg.mxu0
    %v4171 = vadd.f32 %v876, %v4166
    %s4172 = scalar_lea.vmem [#allocation9], 192
    %v4173 = vld [vmem:[%s4172] sm:$0xf]
    %v4174 = vld [vmem:[%s4172 + $0x4] sm:$0xf]
    %v4175 = vld [vmem:[%s4172 + $0x8] sm:$0xf]
    %v4176 = vld [vmem:[%s4172 + $0xc] sm:$0xf]
    %v4177 = vld [vmem:[%s4172 + $0x10] sm:$0xf]
    %v4178 = vld [vmem:[%s4172 + $0x14] sm:$0xf]
    %v4179 = vld [vmem:[%s4172 + $0x18] sm:$0xf]
    %v4180 = vld [vmem:[%s4172 + $0x1c] sm:$0xf]
    %v4181 = vld [vmem:[%s4172 + $0x20] sm:$0xf]
    %v4182 = vld [vmem:[%s4172 + $0x24] sm:$0xf]
    %v4183 = vld [vmem:[%s4172 + $0x28] sm:$0xf]
    %v4184 = vld [vmem:[%s4172 + $0x2c] sm:$0xf]
    %v4185 = vld [vmem:[%s4172 + $0x30] sm:$0xf]
    %v4186 = vld [vmem:[%s4172 + $0x34] sm:$0xf]
    %v4187 = vld [vmem:[%s4172 + $0x38] sm:$0xf]
    %v4188 = vld [vmem:[%s4172 + $0x3c] sm:$0xf]
    %s4189 = scalar_lea.vmem %s37, 3
    %v4190 = vld [vmem:[%s4189] sm:$0x1]
    %s4191 = scalar_lea.vmem [#allocation10], 192
    %v4192 = vld [vmem:[%s4191] sm:$0xf]
    %v4193 = vld [vmem:[%s4191 + $0x4] sm:$0xf]
    %v4194 = vld [vmem:[%s4191 + $0x8] sm:$0xf]
    %v4195 = vld [vmem:[%s4191 + $0xc] sm:$0xf]
    %v4196 = vld [vmem:[%s4191 + $0x10] sm:$0xf]
    %v4197 = vld [vmem:[%s4191 + $0x14] sm:$0xf]
    %v4198 = vld [vmem:[%s4191 + $0x18] sm:$0xf]
    %v4199 = vld [vmem:[%s4191 + $0x1c] sm:$0xf]
    %v4200 = vld [vmem:[%s4191 + $0x20] sm:$0xf]
    %v4201 = vld [vmem:[%s4191 + $0x24] sm:$0xf]
    %v4202 = vld [vmem:[%s4191 + $0x28] sm:$0xf]
    %v4203 = vld [vmem:[%s4191 + $0x2c] sm:$0xf]
    %v4204 = vld [vmem:[%s4191 + $0x30] sm:$0xf]
    %v4205 = vld [vmem:[%s4191 + $0x34] sm:$0xf]
    %v4206 = vld [vmem:[%s4191 + $0x38] sm:$0xf]
    %v4207 = vld [vmem:[%s4191 + $0x3c] sm:$0xf]
    %s4208 = scalar_lea.vmem %s41, 3
    %v4209 = vld [vmem:[%s4208] sm:$0x1]
    %v4210 = vpack.c.bf16 %v4171, %v4171
    %v4212 = vlaneseq
    %v4213 = vshrl.u32 %v4212, 7
    %v4214 = vsub.s32 0, %v4213
    %v4215 = vrot.slane %v4190, %v4214
    %v4233 = vunpack.c.l.b16 %v4173
    %v4234 = vunpack.c.l.b16 %v4174
    %v4235 = vunpack.c.l.b16 %v4175
    %v4236 = vunpack.c.l.b16 %v4176
    %v4237 = vunpack.c.l.b16 %v4177
    %v4238 = vunpack.c.l.b16 %v4178
    %v4239 = vunpack.c.l.b16 %v4179
    %v4240 = vunpack.c.l.b16 %v4180
    %v4241 = vunpack.c.l.b16 %v4181
    %v4242 = vunpack.c.l.b16 %v4182
    %v4243 = vunpack.c.l.b16 %v4183
    %v4244 = vunpack.c.l.b16 %v4184
    %v4245 = vunpack.c.l.b16 %v4185
    %v4246 = vunpack.c.l.b16 %v4186
    %v4247 = vunpack.c.l.b16 %v4187
    %v4248 = vunpack.c.l.b16 %v4188
    %v4249 = vpack.c.b16 %v4234, %v4233
    %v4250 = vpack.c.b16 %v4236, %v4235
    %v4251 = vpack.c.b16 %v4238, %v4237
    %v4252 = vpack.c.b16 %v4240, %v4239
    %v4253 = vpack.c.b16 %v4242, %v4241
    %v4254 = vpack.c.b16 %v4244, %v4243
    %v4255 = vpack.c.b16 %v4246, %v4245
    %v4256 = vpack.c.b16 %v4248, %v4247
    %4265 = vmatprep.subr.bf16.mxu0 0
    %4266 = vmatpush1.bf16.msra.mxu0 %v4249
    %4267 = vmatprep.subr.bf16.mxu0 0
    %4268 = vmatpush1.bf16.msra.mxu0 %v4250
    %4269 = vmatprep.subr.bf16.mxu0 0
    %4270 = vmatpush1.bf16.msra.mxu0 %v4251
    %4271 = vmatprep.subr.bf16.mxu0 0
    %4272 = vmatpush1.bf16.msra.mxu0 %v4252
    %4273 = vmatprep.subr.bf16.mxu0 0
    %4274 = vmatpush1.bf16.msra.mxu0 %v4253
    %4275 = vmatprep.subr.bf16.mxu0 0
    %4276 = vmatpush1.bf16.msra.mxu0 %v4254
    %4277 = vmatprep.subr.bf16.mxu0 0
    %4278 = vmatpush1.bf16.msra.mxu0 %v4255
    %4279 = vmatprep.subr.bf16.mxu0 0
    %4280 = vmatpush1.bf16.msra.mxu0 %v4256
    %4281 = vmatprep.subr.bf16.mxu0 0
    %4282 = vmatpush1.bf16.msra.mxu0 0
    %4283 = vmatprep.subr.bf16.mxu0 0
    %4284 = vmatpush1.bf16.msra.mxu0 0
    %4285 = vmatprep.subr.bf16.mxu0 0
    %4286 = vmatpush1.bf16.msra.mxu0 0
    %4287 = vmatprep.subr.bf16.mxu0 0
    %4288 = vmatpush1.bf16.msra.mxu0 0
    %4289 = vmatprep.subr.bf16.mxu0 0
    %4290 = vmatpush1.bf16.msra.mxu0 0
    %4291 = vmatprep.subr.bf16.mxu0 0
    %4292 = vmatpush1.bf16.msra.mxu0 0
    %4293 = vmatprep.subr.bf16.mxu0 0
    %4294 = vmatpush1.bf16.msra.mxu0 0
    %4295 = vmatprep.subr.bf16.mxu0 0
    %4296 = vmatpush1.bf16.msra.mxu0 0
    %4297 = vmatprep.mubr.bf16.mxu0 0
    %4298 = vmatmul.mubr.bf16.gmra.mrb[0].mxu0 %v4210
    %v4299 = vpop.f32.mrb[0].mxu0
    %v4300 = vadd.f32 %v4215, %v4299
    %v4301 = vpop.f32.mrb[0].mxu0
    %v4302 = vpop.f32.mrb[0].mxu0
    %v4303 = vpop.f32.mrb[0].mxu0
    %4304 = vdwg.mxu0
    %v4305 = vmul.f32 %v4300, 0.5
    %v4306 = vmul.f32 %v4300, 0.70710677
    %v4307 = verf.f32.pop %v4306
    %v4308 = vadd.f32 %v4307, 1.0
    %v4309 = vmul.f32 %v4305, %v4308
    %v4310 = vpack.c.bf16 %v4309, %v4309
    %v4312 = vlaneseq
    %v4313 = vshrl.u32 %v4312, 7
    %v4314 = vsub.s32 0, %v4313
    %v4315 = vrot.slane %v4209, %v4314
    %v4333 = vunpack.c.l.b16 %v4192
    %v4334 = vunpack.c.l.b16 %v4193
    %v4335 = vunpack.c.l.b16 %v4194
    %v4336 = vunpack.c.l.b16 %v4195
    %v4337 = vunpack.c.l.b16 %v4196
    %v4338 = vunpack.c.l.b16 %v4197
    %v4339 = vunpack.c.l.b16 %v4198
    %v4340 = vunpack.c.l.b16 %v4199
    %v4341 = vunpack.c.l.b16 %v4200
    %v4342 = vunpack.c.l.b16 %v4201
    %v4343 = vunpack.c.l.b16 %v4202
    %v4344 = vunpack.c.l.b16 %v4203
    %v4345 = vunpack.c.l.b16 %v4204
    %v4346 = vunpack.c.l.b16 %v4205
    %v4347 = vunpack.c.l.b16 %v4206
    %v4348 = vunpack.c.l.b16 %v4207
    %v4349 = vpack.c.b16 %v4334, %v4333
    %v4350 = vpack.c.b16 %v4336, %v4335
    %v4351 = vpack.c.b16 %v4338, %v4337
    %v4352 = vpack.c.b16 %v4340, %v4339
    %v4353 = vpack.c.b16 %v4342, %v4341
    %v4354 = vpack.c.b16 %v4344, %v4343
    %v4355 = vpack.c.b16 %v4346, %v4345
    %v4356 = vpack.c.b16 %v4348, %v4347
    %4365 = vmatprep.subr.bf16.mxu0 0
    %4366 = vmatpush1.bf16.msra.mxu0 %v4349
    %4367 = vmatprep.subr.bf16.mxu0 0
    %4368 = vmatpush1.bf16.msra.mxu0 %v4350
    %4369 = vmatprep.subr.bf16.mxu0 0
    %4370 = vmatpush1.bf16.msra.mxu0 %v4351
    %4371 = vmatprep.subr.bf16.mxu0 0
    %4372 = vmatpush1.bf16.msra.mxu0 %v4352
    %4373 = vmatprep.subr.bf16.mxu0 0
    %4374 = vmatpush1.bf16.msra.mxu0 %v4353
    %4375 = vmatprep.subr.bf16.mxu0 0
    %4376 = vmatpush1.bf16.msra.mxu0 %v4354
    %4377 = vmatprep.subr.bf16.mxu0 0
    %4378 = vmatpush1.bf16.msra.mxu0 %v4355
    %4379 = vmatprep.subr.bf16.mxu0 0
    %4380 = vmatpush1.bf16.msra.mxu0 %v4356
    %4381 = vmatprep.subr.bf16.mxu0 0
    %4382 = vmatpush1.bf16.msra.mxu0 0
    %4383 = vmatprep.subr.bf16.mxu0 0
    %4384 = vmatpush1.bf16.msra.mxu0 0
    %4385 = vmatprep.subr.bf16.mxu0 0
    %4386 = vmatpush1.bf16.msra.mxu0 0
    %4387 = vmatprep.subr.bf16.mxu0 0
    %4388 = vmatpush1.bf16.msra.mxu0 0
    %4389 = vmatprep.subr.bf16.mxu0 0
    %4390 = vmatpush1.bf16.msra.mxu0 0
    %4391 = vmatprep.subr.bf16.mxu0 0
    %4392 = vmatpush1.bf16.msra.mxu0 0
    %4393 = vmatprep.subr.bf16.mxu0 0
    %4394 = vmatpush1.bf16.msra.mxu0 0
    %4395 = vmatprep.subr.bf16.mxu0 0
    %4396 = vmatpush1.bf16.msra.mxu0 0
    %4397 = vmatprep.mubr.bf16.mxu0 0
    %4398 = vmatmul.mubr.bf16.gmra.mrb[0].mxu0 %v4310
    %v4399 = vpop.f32.mrb[0].mxu0
    %v4400 = vadd.f32 %v4315, %v4399
    %v4401 = vpop.f32.mrb[0].mxu0
    %v4402 = vpop.f32.mrb[0].mxu0
    %v4403 = vpop.f32.mrb[0].mxu0
    %4404 = vdwg.mxu0
    %v4405 = vadd.f32 %v3887, %v3928
    %v4406 = vadd.f32 %v3888, %v3933
    %s4407 = scalar_lea.vmem [#allocation12], 192
    %v4408 = vld [vmem:[%s4407] sm:$0xf]
    %v4409 = vld [vmem:[%s4407 + $0x4] sm:$0xf]
    %v4410 = vld [vmem:[%s4407 + $0x8] sm:$0xf]
    %v4411 = vld [vmem:[%s4407 + $0xc] sm:$0xf]
    %v4412 = vld [vmem:[%s4407 + $0x10] sm:$0xf]
    %v4413 = vld [vmem:[%s4407 + $0x14] sm:$0xf]
    %v4414 = vld [vmem:[%s4407 + $0x18] sm:$0xf]
    %v4415 = vld [vmem:[%s4407 + $0x1c] sm:$0xf]
    %v4416 = vld [vmem:[%s4407 + $0x20] sm:$0xf]
    %v4417 = vld [vmem:[%s4407 + $0x24] sm:$0xf]
    %v4418 = vld [vmem:[%s4407 + $0x28] sm:$0xf]
    %v4419 = vld [vmem:[%s4407 + $0x2c] sm:$0xf]
    %v4420 = vld [vmem:[%s4407 + $0x30] sm:$0xf]
    %v4421 = vld [vmem:[%s4407 + $0x34] sm:$0xf]
    %v4422 = vld [vmem:[%s4407 + $0x38] sm:$0xf]
    %v4423 = vld [vmem:[%s4407 + $0x3c] sm:$0xf]
    %s4424 = scalar_lea.vmem %s45, 3
    %v4425 = vld [vmem:[%s4424] sm:$0x1]
    %s4426 = scalar_lea.vmem [#allocation13], 192
    %v4427 = vld [vmem:[%s4426] sm:$0xf]
    %v4428 = vld [vmem:[%s4426 + $0x4] sm:$0xf]
    %v4429 = vld [vmem:[%s4426 + $0x8] sm:$0xf]
    %v4430 = vld [vmem:[%s4426 + $0xc] sm:$0xf]
    %v4431 = vld [vmem:[%s4426 + $0x10] sm:$0xf]
    %v4432 = vld [vmem:[%s4426 + $0x14] sm:$0xf]
    %v4433 = vld [vmem:[%s4426 + $0x18] sm:$0xf]
    %v4434 = vld [vmem:[%s4426 + $0x1c] sm:$0xf]
    %v4435 = vld [vmem:[%s4426 + $0x20] sm:$0xf]
    %v4436 = vld [vmem:[%s4426 + $0x24] sm:$0xf]
    %v4437 = vld [vmem:[%s4426 + $0x28] sm:$0xf]
    %v4438 = vld [vmem:[%s4426 + $0x2c] sm:$0xf]
    %v4439 = vld [vmem:[%s4426 + $0x30] sm:$0xf]
    %v4440 = vld [vmem:[%s4426 + $0x34] sm:$0xf]
    %v4441 = vld [vmem:[%s4426 + $0x38] sm:$0xf]
    %v4442 = vld [vmem:[%s4426 + $0x3c] sm:$0xf]
    %s4443 = scalar_lea.vmem %s49, 3
    %v4444 = vld [vmem:[%s4443] sm:$0x1]
    %v4445 = vpack.c.bf16 %v4406, %v4405
    %v4447 = vlaneseq
    %v4448 = vshrl.u32 %v4447, 7
    %v4449 = vsub.s32 0, %v4448
    %v4450 = vrot.slane %v4425, %v4449
    %v4468 = vunpack.c.l.b16 %v4408
    %v4469 = vunpack.c.l.b16 %v4409
    %v4470 = vunpack.c.l.b16 %v4410
    %v4471 = vunpack.c.l.b16 %v4411
    %v4472 = vunpack.c.l.b16 %v4412
    %v4473 = vunpack.c.l.b16 %v4413
    %v4474 = vunpack.c.l.b16 %v4414
    %v4475 = vunpack.c.l.b16 %v4415
    %v4476 = vunpack.c.l.b16 %v4416
    %v4477 = vunpack.c.l.b16 %v4417
    %v4478 = vunpack.c.l.b16 %v4418
    %v4479 = vunpack.c.l.b16 %v4419
    %v4480 = vunpack.c.l.b16 %v4420
    %v4481 = vunpack.c.l.b16 %v4421
    %v4482 = vunpack.c.l.b16 %v4422
    %v4483 = vunpack.c.l.b16 %v4423
    %v4484 = vpack.c.b16 %v4469, %v4468
    %v4485 = vpack.c.b16 %v4471, %v4470
    %v4486 = vpack.c.b16 %v4473, %v4472
    %v4487 = vpack.c.b16 %v4475, %v4474
    %v4488 = vpack.c.b16 %v4477, %v4476
    %v4489 = vpack.c.b16 %v4479, %v4478
    %v4490 = vpack.c.b16 %v4481, %v4480
    %v4491 = vpack.c.b16 %v4483, %v4482
    %4500 = vmatprep.subr.bf16.mxu0 0
    %4501 = vmatpush1.bf16.msra.mxu0 %v4484
    %4502 = vmatprep.subr.bf16.mxu0 0
    %4503 = vmatpush1.bf16.msra.mxu0 %v4485
    %4504 = vmatprep.subr.bf16.mxu0 0
    %4505 = vmatpush1.bf16.msra.mxu0 %v4486
    %4506 = vmatprep.subr.bf16.mxu0 0
    %4507 = vmatpush1.bf16.msra.mxu0 %v4487
    %4508 = vmatprep.subr.bf16.mxu0 0
    %4509 = vmatpush1.bf16.msra.mxu0 %v4488
    %4510 = vmatprep.subr.bf16.mxu0 0
    %4511 = vmatpush1.bf16.msra.mxu0 %v4489
    %4512 = vmatprep.subr.bf16.mxu0 0
    %4513 = vmatpush1.bf16.msra.mxu0 %v4490
    %4514 = vmatprep.subr.bf16.mxu0 0
    %4515 = vmatpush1.bf16.msra.mxu0 %v4491
    %4516 = vmatprep.subr.bf16.mxu0 0
    %4517 = vmatpush1.bf16.msra.mxu0 0
    %4518 = vmatprep.subr.bf16.mxu0 0
    %4519 = vmatpush1.bf16.msra.mxu0 0
    %4520 = vmatprep.subr.bf16.mxu0 0
    %4521 = vmatpush1.bf16.msra.mxu0 0
    %4522 = vmatprep.subr.bf16.mxu0 0
    %4523 = vmatpush1.bf16.msra.mxu0 0
    %4524 = vmatprep.subr.bf16.mxu0 0
    %4525 = vmatpush1.bf16.msra.mxu0 0
    %4526 = vmatprep.subr.bf16.mxu0 0
    %4527 = vmatpush1.bf16.msra.mxu0 0
    %4528 = vmatprep.subr.bf16.mxu0 0
    %4529 = vmatpush1.bf16.msra.mxu0 0
    %4530 = vmatprep.subr.bf16.mxu0 0
    %4531 = vmatpush1.bf16.msra.mxu0 0
    %4532 = vmatprep.mubr.bf16.mxu0 0
    %4533 = vmatmul.mubr.bf16.gmra.mrb[0].mxu0 %v4445
    %v4534 = vpop.f32.mrb[0].mxu0
    %v4535 = vadd.f32 %v4450, %v4534
    %v4536 = vpop.f32.mrb[0].mxu0
    %v4537 = vpop.f32.mrb[0].mxu0
    %v4538 = vadd.f32 %v4450, %v4537
    %v4539 = vpop.f32.mrb[0].mxu0
    %4540 = vdwg.mxu0
    %v4541 = vmul.f32 %v4535, 0.5
    %v4542 = vmul.f32 %v4538, 0.5
    %v4543 = vmul.f32 %v4535, 0.70710677
    %v4544 = vmul.f32 %v4538, 0.70710677
    %v4545 = verf.f32.pop %v4543
    %v4546 = verf.f32.pop %v4544
    %v4547 = vadd.f32 %v4545, 1.0
    %v4548 = vadd.f32 %v4546, 1.0
    %v4549 = vmul.f32 %v4541, %v4547
    %v4550 = vmul.f32 %v4542, %v4548
    %v4551 = vpack.c.bf16 %v4550, %v4549
    %v4553 = vlaneseq
    %v4554 = vshrl.u32 %v4553, 7
    %v4555 = vsub.s32 0, %v4554
    %v4556 = vrot.slane %v4444, %v4555
    %v4574 = vunpack.c.l.b16 %v4427
    %v4575 = vunpack.c.l.b16 %v4428
    %v4576 = vunpack.c.l.b16 %v4429
    %v4577 = vunpack.c.l.b16 %v4430
    %v4578 = vunpack.c.l.b16 %v4431
    %v4579 = vunpack.c.l.b16 %v4432
    %v4580 = vunpack.c.l.b16 %v4433
    %v4581 = vunpack.c.l.b16 %v4434
    %v4582 = vunpack.c.l.b16 %v4435
    %v4583 = vunpack.c.l.b16 %v4436
    %v4584 = vunpack.c.l.b16 %v4437
    %v4585 = vunpack.c.l.b16 %v4438
    %v4586 = vunpack.c.l.b16 %v4439
    %v4587 = vunpack.c.l.b16 %v4440
    %v4588 = vunpack.c.l.b16 %v4441
    %v4589 = vunpack.c.l.b16 %v4442
    %v4590 = vpack.c.b16 %v4575, %v4574
    %v4591 = vpack.c.b16 %v4577, %v4576
    %v4592 = vpack.c.b16 %v4579, %v4578
    %v4593 = vpack.c.b16 %v4581, %v4580
    %v4594 = vpack.c.b16 %v4583, %v4582
    %v4595 = vpack.c.b16 %v4585, %v4584
    %v4596 = vpack.c.b16 %v4587, %v4586
    %v4597 = vpack.c.b16 %v4589, %v4588
    %4606 = vmatprep.subr.bf16.mxu0 0
    %4607 = vmatpush1.bf16.msra.mxu0 %v4590
    %4608 = vmatprep.subr.bf16.mxu0 0
    %4609 = vmatpush1.bf16.msra.mxu0 %v4591
    %4610 = vmatprep.subr.bf16.mxu0 0
    %4611 = vmatpush1.bf16.msra.mxu0 %v4592
    %4612 = vmatprep.subr.bf16.mxu0 0
    %4613 = vmatpush1.bf16.msra.mxu0 %v4593
    %4614 = vmatprep.subr.bf16.mxu0 0
    %4615 = vmatpush1.bf16.msra.mxu0 %v4594
    %4616 = vmatprep.subr.bf16.mxu0 0
    %4617 = vmatpush1.bf16.msra.mxu0 %v4595
    %4618 = vmatprep.subr.bf16.mxu0 0
    %4619 = vmatpush1.bf16.msra.mxu0 %v4596
    %4620 = vmatprep.subr.bf16.mxu0 0
    %4621 = vmatpush1.bf16.msra.mxu0 %v4597
    %4622 = vmatprep.subr.bf16.mxu0 0
    %4623 = vmatpush1.bf16.msra.mxu0 0
    %4624 = vmatprep.subr.bf16.mxu0 0
    %4625 = vmatpush1.bf16.msra.mxu0 0
    %4626 = vmatprep.subr.bf16.mxu0 0
    %4627 = vmatpush1.bf16.msra.mxu0 0
    %4628 = vmatprep.subr.bf16.mxu0 0
    %4629 = vmatpush1.bf16.msra.mxu0 0
    %4630 = vmatprep.subr.bf16.mxu0 0
    %4631 = vmatpush1.bf16.msra.mxu0 0
    %4632 = vmatprep.subr.bf16.mxu0 0
    %4633 = vmatpush1.bf16.msra.mxu0 0
    %4634 = vmatprep.subr.bf16.mxu0 0
    %4635 = vmatpush1.bf16.msra.mxu0 0
    %4636 = vmatprep.subr.bf16.mxu0 0
    %4637 = vmatpush1.bf16.msra.mxu0 0
    %4638 = vmatprep.mubr.bf16.mxu0 0
    %4639 = vmatmul.mubr.bf16.gmra.mrb[0].mxu0 %v4551
    %v4640 = vpop.f32.mrb[0].mxu0
    %v4641 = vadd.f32 %v4556, %v4640
    %v4642 = vpop.f32.mrb[0].mxu0
    %v4643 = vpop.f32.mrb[0].mxu0
    %v4644 = vadd.f32 %v4556, %v4643
    %v4645 = vpop.f32.mrb[0].mxu0
    %4646 = vdwg.mxu0
    %v4647 = vadd.f32 %v4641, %v3887
    %v4648 = vadd.f32 %v4644, %v3888
    %v4649 = vmul.f32 %v4647, %v570
    %v4650 = vmul.f32 %v4648, %v575
    %v4651 = vadd.f32 %v4649, %v4650
    %v4652 = vrot.slane %v4651, 4
    %v4653 = vadd.f32 %v4651, %v4652
    %v4654 = vrot.slane %v4653, 2
    %v4655 = vadd.f32 %v4653, %v4654
    %v4656 = vrot.slane %v4655, 1
    %v4657 = vadd.f32 %v4655, %v4656
    %v4658 = vmul.f32 %v4657, 0.0625
    %v4659 = vsub.f32 %v4649, %v4658
    %v4660 = vsub.f32 %v4650, %v4658
    %v4661 = vmul.f32 %v4659, %v4659
    %v4662 = vmul.f32 %v4660, %v4660
    %v4663 = vmul.f32 %v4661, %v570
    %v4664 = vmul.f32 %v4662, %v575
    %v4665 = vadd.f32 %v4663, %v4664
    %v4666 = vrot.slane %v4665, 4
    %v4667 = vadd.f32 %v4665, %v4666
    %v4668 = vrot.slane %v4667, 2
    %v4669 = vadd.f32 %v4667, %v4668
    %v4670 = vrot.slane %v4669, 1
    %v4671 = vadd.f32 %v4669, %v4670
    %v4672 = vmul.f32 %v4671, 0.0625
    %v4673 = vadd.f32 %v4672, 1e-05
    %v4674 = vrsqrt.pop %v4673
    %v4675 = vmul.f32 %v4659, %v4674
    %v4676 = vmul.f32 %v4660, %v4674
    %s4677 = scalar_lea.vmem [#allocation21], 3
    %v4678 = vld [vmem:[%s4677] sm:$0x1]
    %v4680 = vlaneseq
    %v4681 = vshrl.u32 %v4680, 7
    %v4682 = vsub.s32 0, %v4681
    %v4683 = vrot.slane %v4678, %v4682
    %v4685 = vmul.f32 %v4675, %v4683
    %v4686 = vmul.f32 %v4676, %v4683
    %s4687 = scalar_lea.vmem [#allocation22], 3
    %v4688 = vld [vmem:[%s4687] sm:$0x1]
    %v4690 = vlaneseq
    %v4691 = vshrl.u32 %v4690, 7
    %v4692 = vsub.s32 0, %v4691
    %v4693 = vrot.slane %v4688, %v4692
    %v4695 = vadd.f32 %v4685, %v4693
    %v4696 = vadd.f32 %v4686, %v4693
    %v4697 = vmul.f32 %v4695, %v570
    %v4698 = vmul.f32 %v4696, %v575
    %v4699 = vpack.c.bf16 %v4400, %v4400
    %v4701 = vsel %vm1406, %v4699, 0
    %4703 = vmatprep.subr.bf16.mxu0 0
    %4704 = vmatpush1.bf16.msra.mxu0 %v4701
    %4705 = vmatprep.subr.bf16.mxu0 0
    %4706 = vmatpush1.bf16.msra.mxu0 0
    %4707 = vmatprep.subr.bf16.mxu0 0
    %4708 = vmatpush1.bf16.msra.mxu0 0
    %4709 = vmatprep.subr.bf16.mxu0 0
    %4710 = vmatpush1.bf16.msra.mxu0 0
    %4711 = vmatprep.subr.bf16.mxu0 0
    %4712 = vmatpush1.bf16.msra.mxu0 0
    %4713 = vmatprep.subr.bf16.mxu0 0
    %4714 = vmatpush1.bf16.msra.mxu0 0
    %4715 = vmatprep.subr.bf16.mxu0 0
    %4716 = vmatpush1.bf16.msra.mxu0 0
    %4717 = vmatprep.subr.bf16.mxu0 0
    %4718 = vmatpush1.bf16.msra.mxu0 0
    %4719 = vmatprep.subr.bf16.mxu0 0
    %4720 = vmatpush1.bf16.msra.mxu0 0
    %4721 = vmatprep.subr.bf16.mxu0 0
    %4722 = vmatpush1.bf16.msra.mxu0 0
    %4723 = vmatprep.subr.bf16.mxu0 0
    %4724 = vmatpush1.bf16.msra.mxu0 0
    %4725 = vmatprep.subr.bf16.mxu0 0
    %4726 = vmatpush1.bf16.msra.mxu0 0
    %4727 = vmatprep.subr.bf16.mxu0 0
    %4728 = vmatpush1.bf16.msra.mxu0 0
    %4729 = vmatprep.subr.bf16.mxu0 0
    %4730 = vmatpush1.bf16.msra.mxu0 0
    %4731 = vmatprep.subr.bf16.mxu0 0
    %4732 = vmatpush1.bf16.msra.mxu0 0
    %4733 = vmatprep.subr.bf16.mxu0 0
    %4734 = vmatpush1.bf16.msra.mxu0 0
    %4735 = vmatprep.mubr.bf16.mxu0 0
    %4736 = vmatmul.mubr.bf16.gmra.mrb[0].mxu0 %v1404
    %v4737 = vpop.f32.mrb[0].mxu0
    %v4738 = vadd.f32 %v4697, %v4737
    %v4739 = vpop.f32.mrb[0].mxu0
    %v4740 = vpop.f32.mrb[0].mxu0
    %v4741 = vadd.f32 %v4698, %v4740
    %v4742 = vpop.f32.mrb[0].mxu0
    %4743 = vdwg.mxu0
    %s4744 = scalar_lea.vmem [#allocation15], 192
    %v4745 = vld [vmem:[%s4744] sm:$0xf]
    %v4746 = vld [vmem:[%s4744 + $0x4] sm:$0xf]
    %v4747 = vld [vmem:[%s4744 + $0x8] sm:$0xf]
    %v4748 = vld [vmem:[%s4744 + $0xc] sm:$0xf]
    %v4749 = vld [vmem:[%s4744 + $0x10] sm:$0xf]
    %v4750 = vld [vmem:[%s4744 + $0x14] sm:$0xf]
    %v4751 = vld [vmem:[%s4744 + $0x18] sm:$0xf]
    %v4752 = vld [vmem:[%s4744 + $0x1c] sm:$0xf]
    %v4753 = vld [vmem:[%s4744 + $0x20] sm:$0xf]
    %v4754 = vld [vmem:[%s4744 + $0x24] sm:$0xf]
    %v4755 = vld [vmem:[%s4744 + $0x28] sm:$0xf]
    %v4756 = vld [vmem:[%s4744 + $0x2c] sm:$0xf]
    %v4757 = vld [vmem:[%s4744 + $0x30] sm:$0xf]
    %v4758 = vld [vmem:[%s4744 + $0x34] sm:$0xf]
    %v4759 = vld [vmem:[%s4744 + $0x38] sm:$0xf]
    %v4760 = vld [vmem:[%s4744 + $0x3c] sm:$0xf]
    %s4761 = scalar_lea.vmem [#allocation16], 3
    %v4762 = vld [vmem:[%s4761] sm:$0x1]
    %s4763 = scalar_lea.vmem [#allocation18], 192
    %v4764 = vld [vmem:[%s4763] sm:$0xf]
    %v4765 = vld [vmem:[%s4763 + $0x4] sm:$0xf]
    %v4766 = vld [vmem:[%s4763 + $0x8] sm:$0xf]
    %v4767 = vld [vmem:[%s4763 + $0xc] sm:$0xf]
    %v4768 = vld [vmem:[%s4763 + $0x10] sm:$0xf]
    %v4769 = vld [vmem:[%s4763 + $0x14] sm:$0xf]
    %v4770 = vld [vmem:[%s4763 + $0x18] sm:$0xf]
    %v4771 = vld [vmem:[%s4763 + $0x1c] sm:$0xf]
    %v4772 = vld [vmem:[%s4763 + $0x20] sm:$0xf]
    %v4773 = vld [vmem:[%s4763 + $0x24] sm:$0xf]
    %v4774 = vld [vmem:[%s4763 + $0x28] sm:$0xf]
    %v4775 = vld [vmem:[%s4763 + $0x2c] sm:$0xf]
    %v4776 = vld [vmem:[%s4763 + $0x30] sm:$0xf]
    %v4777 = vld [vmem:[%s4763 + $0x34] sm:$0xf]
    %v4778 = vld [vmem:[%s4763 + $0x38] sm:$0xf]
    %v4779 = vld [vmem:[%s4763 + $0x3c] sm:$0xf]
    %s4780 = scalar_lea.vmem [#allocation19], 3
    %v4781 = vld [vmem:[%s4780] sm:$0x1]
    %v4782 = vpack.c.bf16 %v4741, %v4738
    %v4784 = vlaneseq
    %v4785 = vshrl.u32 %v4784, 7
    %v4786 = vsub.s32 0, %v4785
    %v4787 = vrot.slane %v4762, %v4786
    %v4805 = vunpack.c.l.b16 %v4745
    %v4806 = vunpack.c.l.b16 %v4746
    %v4807 = vunpack.c.l.b16 %v4747
    %v4808 = vunpack.c.l.b16 %v4748
    %v4809 = vunpack.c.l.b16 %v4749
    %v4810 = vunpack.c.l.b16 %v4750
    %v4811 = vunpack.c.l.b16 %v4751
    %v4812 = vunpack.c.l.b16 %v4752
    %v4813 = vunpack.c.l.b16 %v4753
    %v4814 = vunpack.c.l.b16 %v4754
    %v4815 = vunpack.c.l.b16 %v4755
    %v4816 = vunpack.c.l.b16 %v4756
    %v4817 = vunpack.c.l.b16 %v4757
    %v4818 = vunpack.c.l.b16 %v4758
    %v4819 = vunpack.c.l.b16 %v4759
    %v4820 = vunpack.c.l.b16 %v4760
    %v4821 = vpack.c.b16 %v4806, %v4805
    %v4822 = vpack.c.b16 %v4808, %v4807
    %v4823 = vpack.c.b16 %v4810, %v4809
    %v4824 = vpack.c.b16 %v4812, %v4811
    %v4825 = vpack.c.b16 %v4814, %v4813
    %v4826 = vpack.c.b16 %v4816, %v4815
    %v4827 = vpack.c.b16 %v4818, %v4817
    %v4828 = vpack.c.b16 %v4820, %v4819
    %4837 = vmatprep.subr.bf16.mxu0 0
    %4838 = vmatpush1.bf16.msra.mxu0 %v4821
    %4839 = vmatprep.subr.bf16.mxu0 0
    %4840 = vmatpush1.bf16.msra.mxu0 %v4822
    %4841 = vmatprep.subr.bf16.mxu0 0
    %4842 = vmatpush1.bf16.msra.mxu0 %v4823
    %4843 = vmatprep.subr.bf16.mxu0 0
    %4844 = vmatpush1.bf16.msra.mxu0 %v4824
    %4845 = vmatprep.subr.bf16.mxu0 0
    %4846 = vmatpush1.bf16.msra.mxu0 %v4825
    %4847 = vmatprep.subr.bf16.mxu0 0
    %4848 = vmatpush1.bf16.msra.mxu0 %v4826
    %4849 = vmatprep.subr.bf16.mxu0 0
    %4850 = vmatpush1.bf16.msra.mxu0 %v4827
    %4851 = vmatprep.subr.bf16.mxu0 0
    %4852 = vmatpush1.bf16.msra.mxu0 %v4828
    %4853 = vmatprep.subr.bf16.mxu0 0
    %4854 = vmatpush1.bf16.msra.mxu0 0
    %4855 = vmatprep.subr.bf16.mxu0 0
    %4856 = vmatpush1.bf16.msra.mxu0 0
    %4857 = vmatprep.subr.bf16.mxu0 0
    %4858 = vmatpush1.bf16.msra.mxu0 0
    %4859 = vmatprep.subr.bf16.mxu0 0
    %4860 = vmatpush1.bf16.msra.mxu0 0
    %4861 = vmatprep.subr.bf16.mxu0 0
    %4862 = vmatpush1.bf16.msra.mxu0 0
    %4863 = vmatprep.subr.bf16.mxu0 0
    %4864 = vmatpush1.bf16.msra.mxu0 0
    %4865 = vmatprep.subr.bf16.mxu0 0
    %4866 = vmatpush1.bf16.msra.mxu0 0
    %4867 = vmatprep.subr.bf16.mxu0 0
    %4868 = vmatpush1.bf16.msra.mxu0 0
    %4869 = vmatprep.mubr.bf16.mxu0 0
    %4870 = vmatmul.mubr.bf16.gmra.mrb[0].mxu0 %v4782
    %v4871 = vpop.f32.mrb[0].mxu0
    %v4872 = vadd.f32 %v4787, %v4871
    %v4873 = vpop.f32.mrb[0].mxu0
    %v4874 = vpop.f32.mrb[0].mxu0
    %v4875 = vadd.f32 %v4787, %v4874
    %v4876 = vpop.f32.mrb[0].mxu0
    %4877 = vdwg.mxu0
    %v4878 = vmul.f32 %v4872, 0.5
    %v4879 = vmul.f32 %v4875, 0.5
    %v4880 = vmul.f32 %v4872, 0.70710677
    %v4881 = vmul.f32 %v4875, 0.70710677
    %v4882 = verf.f32.pop %v4880
    %v4883 = verf.f32.pop %v4881
    %v4884 = vadd.f32 %v4882, 1.0
    %v4885 = vadd.f32 %v4883, 1.0
    %v4886 = vmul.f32 %v4878, %v4884
    %v4887 = vmul.f32 %v4879, %v4885
    %v4888 = vpack.c.bf16 %v4887, %v4886
    %v4890 = vlaneseq
    %v4891 = vshrl.u32 %v4890, 7
    %v4892 = vsub.s32 0, %v4891
    %v4893 = vrot.slane %v4781, %v4892
    %v4911 = vunpack.c.l.b16 %v4764
    %v4912 = vunpack.c.l.b16 %v4765
    %v4913 = vunpack.c.l.b16 %v4766
    %v4914 = vunpack.c.l.b16 %v4767
    %v4915 = vunpack.c.l.b16 %v4768
    %v4916 = vunpack.c.l.b16 %v4769
    %v4917 = vunpack.c.l.b16 %v4770
    %v4918 = vunpack.c.l.b16 %v4771
    %v4919 = vunpack.c.l.b16 %v4772
    %v4920 = vunpack.c.l.b16 %v4773
    %v4921 = vunpack.c.l.b16 %v4774
    %v4922 = vunpack.c.l.b16 %v4775
    %v4923 = vunpack.c.l.b16 %v4776
    %v4924 = vunpack.c.l.b16 %v4777
    %v4925 = vunpack.c.l.b16 %v4778
    %v4926 = vunpack.c.l.b16 %v4779
    %v4927 = vpack.c.b16 %v4912, %v4911
    %v4928 = vpack.c.b16 %v4914, %v4913
    %v4929 = vpack.c.b16 %v4916, %v4915
    %v4930 = vpack.c.b16 %v4918, %v4917
    %v4931 = vpack.c.b16 %v4920, %v4919
    %v4932 = vpack.c.b16 %v4922, %v4921
    %v4933 = vpack.c.b16 %v4924, %v4923
    %v4934 = vpack.c.b16 %v4926, %v4925
    %4943 = vmatprep.subr.bf16.mxu0 0
    %4944 = vmatpush1.bf16.msra.mxu0 %v4927
    %4945 = vmatprep.subr.bf16.mxu0 0
    %4946 = vmatpush1.bf16.msra.mxu0 %v4928
    %4947 = vmatprep.subr.bf16.mxu0 0
    %4948 = vmatpush1.bf16.msra.mxu0 %v4929
    %4949 = vmatprep.subr.bf16.mxu0 0
    %4950 = vmatpush1.bf16.msra.mxu0 %v4930
    %4951 = vmatprep.subr.bf16.mxu0 0
    %4952 = vmatpush1.bf16.msra.mxu0 %v4931
    %4953 = vmatprep.subr.bf16.mxu0 0
    %4954 = vmatpush1.bf16.msra.mxu0 %v4932
    %4955 = vmatprep.subr.bf16.mxu0 0
    %4956 = vmatpush1.bf16.msra.mxu0 %v4933
    %4957 = vmatprep.subr.bf16.mxu0 0
    %4958 = vmatpush1.bf16.msra.mxu0 %v4934
    %4959 = vmatprep.subr.bf16.mxu0 0
    %4960 = vmatpush1.bf16.msra.mxu0 0
    %4961 = vmatprep.subr.bf16.mxu0 0
    %4962 = vmatpush1.bf16.msra.mxu0 0
    %4963 = vmatprep.subr.bf16.mxu0 0
    %4964 = vmatpush1.bf16.msra.mxu0 0
    %4965 = vmatprep.subr.bf16.mxu0 0
    %4966 = vmatpush1.bf16.msra.mxu0 0
    %4967 = vmatprep.subr.bf16.mxu0 0
    %4968 = vmatpush1.bf16.msra.mxu0 0
    %4969 = vmatprep.subr.bf16.mxu0 0
    %4970 = vmatpush1.bf16.msra.mxu0 0
    %4971 = vmatprep.subr.bf16.mxu0 0
    %4972 = vmatpush1.bf16.msra.mxu0 0
    %4973 = vmatprep.subr.bf16.mxu0 0
    %4974 = vmatpush1.bf16.msra.mxu0 0
    %4975 = vmatprep.mubr.bf16.mxu0 0
    %4976 = vmatmul.mubr.bf16.gmra.mrb[0].mxu0 %v4888
    %v4977 = vpop.f32.mrb[0].mxu0
    %v4978 = vadd.f32 %v4893, %v4977
    %v4979 = vpop.f32.mrb[0].mxu0
    %v4980 = vpop.f32.mrb[0].mxu0
    %v4981 = vadd.f32 %v4893, %v4980
    %v4982 = vpop.f32.mrb[0].mxu0
    %4983 = vdwg.mxu0
    %v4984 = vadd.f32 %v4978, %v4697
    %v4985 = vadd.f32 %v4981, %v4698
    %v4986 = vmul.f32 %v4984, %v570
    %v4987 = vmul.f32 %v4985, %v575
    %v4988 = vpack.c.bf16 %v4987, %v4986
    %4989 = vmatprep.subr.bf16.mxu0 0
    %4990 = vmatpush1.bf16.msra.mxu0 %v4988
    %4991 = vmatprep.subr.bf16.mxu0 0
    %4992 = vmatpush1.bf16.msra.mxu0 0
    %4993 = vmatprep.subr.bf16.mxu0 0
    %4994 = vmatpush1.bf16.msra.mxu0 0
    %4995 = vmatprep.subr.bf16.mxu0 0
    %4996 = vmatpush1.bf16.msra.mxu0 0
    %4997 = vmatprep.subr.bf16.mxu0 0
    %4998 = vmatpush1.bf16.msra.mxu0 0
    %4999 = vmatprep.subr.bf16.mxu0 0
    %5000 = vmatpush1.bf16.msra.mxu0 0
    %5001 = vmatprep.subr.bf16.mxu0 0
    %5002 = vmatpush1.bf16.msra.mxu0 0
    %5003 = vmatprep.subr.bf16.mxu0 0
    %5004 = vmatpush1.bf16.msra.mxu0 0
    %5005 = vmatprep.subr.bf16.mxu0 0
    %5006 = vmatpush1.bf16.msra.mxu0 0
    %5007 = vmatprep.subr.bf16.mxu0 0
    %5008 = vmatpush1.bf16.msra.mxu0 0
    %5009 = vmatprep.subr.bf16.mxu0 0
    %5010 = vmatpush1.bf16.msra.mxu0 0
    %5011 = vmatprep.subr.bf16.mxu0 0
    %5012 = vmatpush1.bf16.msra.mxu0 0
    %5013 = vmatprep.subr.bf16.mxu0 0
    %5014 = vmatpush1.bf16.msra.mxu0 0
    %5015 = vmatprep.subr.bf16.mxu0 0
    %5016 = vmatpush1.bf16.msra.mxu0 0
    %5017 = vmatprep.subr.bf16.mxu0 0
    %5018 = vmatpush1.bf16.msra.mxu0 0
    %5019 = vmatprep.subr.bf16.mxu0 0
    %5020 = vmatpush1.bf16.msra.mxu0 0
    %5021 = vmatprep.mubr.bf16.mxu0 0
    %5022 = vmatmul.mubr.bf16.gmra.mrb[0].mxu0 %v590
    %v5023 = vpop.f32.mrb[0].mxu0
    %v5024 = vadd.f32 0.0, %v5023
    %v5025 = vpop.f32.mrb[0].mxu0
    %v5026 = vpop.f32.mrb[0].mxu0
    %v5027 = vadd.f32 0.0, %v5026
    %v5028 = vpop.f32.mrb[0].mxu0
    %5029 = vmatprep.mubr.bf16.mxu0 0
    %5030 = vmatmul.mubr.bf16.gmra.mrb[0].mxu0 %v593
    %v5031 = vpop.f32.mrb[0].mxu0
    %v5032 = vadd.f32 0.0, %v5031
    %v5033 = vpop.f32.mrb[0].mxu0
    %v5034 = vpop.f32.mrb[0].mxu0
    %v5035 = vpop.f32.mrb[0].mxu0
    %5036 = vdwg.mxu0
    %s5037 = scalar_lea.vmem [#allocation6], 256
    %v5038 = vld [vmem:[%s5037] sm:$0xf]
    %v5039 = vld [vmem:[%s5037 + $0x4] sm:$0xf]
    %v5040 = vld [vmem:[%s5037 + $0x8] sm:$0xf]
    %v5041 = vld [vmem:[%s5037 + $0xc] sm:$0xf]
    %v5042 = vld [vmem:[%s5037 + $0x10] sm:$0xf]
    %v5043 = vld [vmem:[%s5037 + $0x14] sm:$0xf]
    %v5044 = vld [vmem:[%s5037 + $0x18] sm:$0xf]
    %v5045 = vld [vmem:[%s5037 + $0x1c] sm:$0xf]
    %v5046 = vld [vmem:[%s5037 + $0x20] sm:$0xf]
    %v5047 = vld [vmem:[%s5037 + $0x24] sm:$0xf]
    %v5048 = vld [vmem:[%s5037 + $0x28] sm:$0xf]
    %v5049 = vld [vmem:[%s5037 + $0x2c] sm:$0xf]
    %v5050 = vld [vmem:[%s5037 + $0x30] sm:$0xf]
    %v5051 = vld [vmem:[%s5037 + $0x34] sm:$0xf]
    %v5052 = vld [vmem:[%s5037 + $0x38] sm:$0xf]
    %v5053 = vld [vmem:[%s5037 + $0x3c] sm:$0xf]
    %s5054 = scalar_lea.vmem %s29, 4
    %v5055 = vld [vmem:[%s5054] sm:$0x1]
    %s5056 = scalar_lea.vmem [#allocation7], 256
    %v5057 = vld [vmem:[%s5056] sm:$0xf]
    %v5058 = vld [vmem:[%s5056 + $0x4] sm:$0xf]
    %v5059 = vld [vmem:[%s5056 + $0x8] sm:$0xf]
    %v5060 = vld [vmem:[%s5056 + $0xc] sm:$0xf]
    %v5061 = vld [vmem:[%s5056 + $0x10] sm:$0xf]
    %v5062 = vld [vmem:[%s5056 + $0x14] sm:$0xf]
    %v5063 = vld [vmem:[%s5056 + $0x18] sm:$0xf]
    %v5064 = vld [vmem:[%s5056 + $0x1c] sm:$0xf]
    %v5065 = vld [vmem:[%s5056 + $0x20] sm:$0xf]
    %v5066 = vld [vmem:[%s5056 + $0x24] sm:$0xf]
    %v5067 = vld [vmem:[%s5056 + $0x28] sm:$0xf]
    %v5068 = vld [vmem:[%s5056 + $0x2c] sm:$0xf]
    %v5069 = vld [vmem:[%s5056 + $0x30] sm:$0xf]
    %v5070 = vld [vmem:[%s5056 + $0x34] sm:$0xf]
    %v5071 = vld [vmem:[%s5056 + $0x38] sm:$0xf]
    %v5072 = vld [vmem:[%s5056 + $0x3c] sm:$0xf]
    %s5073 = scalar_lea.vmem %s33, 4
    %v5074 = vld [vmem:[%s5073] sm:$0x1]
    %v5075 = vpack.c.bf16 %v5024, %v5024
    %v5077 = vlaneseq
    %v5078 = vshrl.u32 %v5077, 7
    %v5079 = vsub.s32 0, %v5078
    %v5080 = vrot.slane %v5055, %v5079
    %v5098 = vunpack.c.l.b16 %v5038
    %v5099 = vunpack.c.l.b16 %v5039
    %v5100 = vunpack.c.l.b16 %v5040
    %v5101 = vunpack.c.l.b16 %v5041
    %v5102 = vunpack.c.l.b16 %v5042
    %v5103 = vunpack.c.l.b16 %v5043
    %v5104 = vunpack.c.l.b16 %v5044
    %v5105 = vunpack.c.l.b16 %v5045
    %v5106 = vunpack.c.l.b16 %v5046
    %v5107 = vunpack.c.l.b16 %v5047
    %v5108 = vunpack.c.l.b16 %v5048
    %v5109 = vunpack.c.l.b16 %v5049
    %v5110 = vunpack.c.l.b16 %v5050
    %v5111 = vunpack.c.l.b16 %v5051
    %v5112 = vunpack.c.l.b16 %v5052
    %v5113 = vunpack.c.l.b16 %v5053
    %v5114 = vpack.c.b16 %v5099, %v5098
    %v5115 = vpack.c.b16 %v5101, %v5100
    %v5116 = vpack.c.b16 %v5103, %v5102
    %v5117 = vpack.c.b16 %v5105, %v5104
    %v5118 = vpack.c.b16 %v5107, %v5106
    %v5119 = vpack.c.b16 %v5109, %v5108
    %v5120 = vpack.c.b16 %v5111, %v5110
    %v5121 = vpack.c.b16 %v5113, %v5112
    %5130 = vmatprep.subr.bf16.mxu0 0
    %5131 = vmatpush1.bf16.msra.mxu0 %v5114
    %5132 = vmatprep.subr.bf16.mxu0 0
    %5133 = vmatpush1.bf16.msra.mxu0 %v5115
    %5134 = vmatprep.subr.bf16.mxu0 0
    %5135 = vmatpush1.bf16.msra.mxu0 %v5116
    %5136 = vmatprep.subr.bf16.mxu0 0
    %5137 = vmatpush1.bf16.msra.mxu0 %v5117
    %5138 = vmatprep.subr.bf16.mxu0 0
    %5139 = vmatpush1.bf16.msra.mxu0 %v5118
    %5140 = vmatprep.subr.bf16.mxu0 0
    %5141 = vmatpush1.bf16.msra.mxu0 %v5119
    %5142 = vmatprep.subr.bf16.mxu0 0
    %5143 = vmatpush1.bf16.msra.mxu0 %v5120
    %5144 = vmatprep.subr.bf16.mxu0 0
    %5145 = vmatpush1.bf16.msra.mxu0 %v5121
    %5146 = vmatprep.subr.bf16.mxu0 0
    %5147 = vmatpush1.bf16.msra.mxu0 0
    %5148 = vmatprep.subr.bf16.mxu0 0
    %5149 = vmatpush1.bf16.msra.mxu0 0
    %5150 = vmatprep.subr.bf16.mxu0 0
    %5151 = vmatpush1.bf16.msra.mxu0 0
    %5152 = vmatprep.subr.bf16.mxu0 0
    %5153 = vmatpush1.bf16.msra.mxu0 0
    %5154 = vmatprep.subr.bf16.mxu0 0
    %5155 = vmatpush1.bf16.msra.mxu0 0
    %5156 = vmatprep.subr.bf16.mxu0 0
    %5157 = vmatpush1.bf16.msra.mxu0 0
    %5158 = vmatprep.subr.bf16.mxu0 0
    %5159 = vmatpush1.bf16.msra.mxu0 0
    %5160 = vmatprep.subr.bf16.mxu0 0
    %5161 = vmatpush1.bf16.msra.mxu0 0
    %5162 = vmatprep.mubr.bf16.mxu0 0
    %5163 = vmatmul.mubr.bf16.gmra.mrb[0].mxu0 %v5075
    %v5164 = vpop.f32.mrb[0].mxu0
    %v5165 = vadd.f32 %v5080, %v5164
    %v5166 = vpop.f32.mrb[0].mxu0
    %v5167 = vpop.f32.mrb[0].mxu0
    %v5168 = vpop.f32.mrb[0].mxu0
    %5169 = vdwg.mxu0
    %v5170 = vmul.f32 %v5165, 0.5
    %v5171 = vmul.f32 %v5165, 0.70710677
    %v5172 = verf.f32.pop %v5171
    %v5173 = vadd.f32 %v5172, 1.0
    %v5174 = vmul.f32 %v5170, %v5173
    %v5175 = vpack.c.bf16 %v5174, %v5174
    %v5177 = vlaneseq
    %v5178 = vshrl.u32 %v5177, 7
    %v5179 = vsub.s32 0, %v5178
    %v5180 = vrot.slane %v5074, %v5179
    %v5198 = vunpack.c.l.b16 %v5057
    %v5199 = vunpack.c.l.b16 %v5058
    %v5200 = vunpack.c.l.b16 %v5059
    %v5201 = vunpack.c.l.b16 %v5060
    %v5202 = vunpack.c.l.b16 %v5061
    %v5203 = vunpack.c.l.b16 %v5062
    %v5204 = vunpack.c.l.b16 %v5063
    %v5205 = vunpack.c.l.b16 %v5064
    %v5206 = vunpack.c.l.b16 %v5065
    %v5207 = vunpack.c.l.b16 %v5066
    %v5208 = vunpack.c.l.b16 %v5067
    %v5209 = vunpack.c.l.b16 %v5068
    %v5210 = vunpack.c.l.b16 %v5069
    %v5211 = vunpack.c.l.b16 %v5070
    %v5212 = vunpack.c.l.b16 %v5071
    %v5213 = vunpack.c.l.b16 %v5072
    %v5214 = vpack.c.b16 %v5199, %v5198
    %v5215 = vpack.c.b16 %v5201, %v5200
    %v5216 = vpack.c.b16 %v5203, %v5202
    %v5217 = vpack.c.b16 %v5205, %v5204
    %v5218 = vpack.c.b16 %v5207, %v5206
    %v5219 = vpack.c.b16 %v5209, %v5208
    %v5220 = vpack.c.b16 %v5211, %v5210
    %v5221 = vpack.c.b16 %v5213, %v5212
    %5230 = vmatprep.subr.bf16.mxu0 0
    %5231 = vmatpush1.bf16.msra.mxu0 %v5214
    %5232 = vmatprep.subr.bf16.mxu0 0
    %5233 = vmatpush1.bf16.msra.mxu0 %v5215
    %5234 = vmatprep.subr.bf16.mxu0 0
    %5235 = vmatpush1.bf16.msra.mxu0 %v5216
    %5236 = vmatprep.subr.bf16.mxu0 0
    %5237 = vmatpush1.bf16.msra.mxu0 %v5217
    %5238 = vmatprep.subr.bf16.mxu0 0
    %5239 = vmatpush1.bf16.msra.mxu0 %v5218
    %5240 = vmatprep.subr.bf16.mxu0 0
    %5241 = vmatpush1.bf16.msra.mxu0 %v5219
    %5242 = vmatprep.subr.bf16.mxu0 0
    %5243 = vmatpush1.bf16.msra.mxu0 %v5220
    %5244 = vmatprep.subr.bf16.mxu0 0
    %5245 = vmatpush1.bf16.msra.mxu0 %v5221
    %5246 = vmatprep.subr.bf16.mxu0 0
    %5247 = vmatpush1.bf16.msra.mxu0 0
    %5248 = vmatprep.subr.bf16.mxu0 0
    %5249 = vmatpush1.bf16.msra.mxu0 0
    %5250 = vmatprep.subr.bf16.mxu0 0
    %5251 = vmatpush1.bf16.msra.mxu0 0
    %5252 = vmatprep.subr.bf16.mxu0 0
    %5253 = vmatpush1.bf16.msra.mxu0 0
    %5254 = vmatprep.subr.bf16.mxu0 0
    %5255 = vmatpush1.bf16.msra.mxu0 0
    %5256 = vmatprep.subr.bf16.mxu0 0
    %5257 = vmatpush1.bf16.msra.mxu0 0
    %5258 = vmatprep.subr.bf16.mxu0 0
    %5259 = vmatpush1.bf16.msra.mxu0 0
    %5260 = vmatprep.subr.bf16.mxu0 0
    %5261 = vmatpush1.bf16.msra.mxu0 0
    %5262 = vmatprep.mubr.bf16.mxu0 0
    %5263 = vmatmul.mubr.bf16.gmra.mrb[0].mxu0 %v5175
    %v5264 = vpop.f32.mrb[0].mxu0
    %v5265 = vadd.f32 %v5180, %v5264
    %v5266 = vpop.f32.mrb[0].mxu0
    %v5267 = vpop.f32.mrb[0].mxu0
    %v5268 = vpop.f32.mrb[0].mxu0
    %5269 = vdwg.mxu0
    %v5270 = vadd.f32 %v876, %v5265
    %s5271 = scalar_lea.vmem [#allocation9], 256
    %v5272 = vld [vmem:[%s5271] sm:$0xf]
    %v5273 = vld [vmem:[%s5271 + $0x4] sm:$0xf]
    %v5274 = vld [vmem:[%s5271 + $0x8] sm:$0xf]
    %v5275 = vld [vmem:[%s5271 + $0xc] sm:$0xf]
    %v5276 = vld [vmem:[%s5271 + $0x10] sm:$0xf]
    %v5277 = vld [vmem:[%s5271 + $0x14] sm:$0xf]
    %v5278 = vld [vmem:[%s5271 + $0x18] sm:$0xf]
    %v5279 = vld [vmem:[%s5271 + $0x1c] sm:$0xf]
    %v5280 = vld [vmem:[%s5271 + $0x20] sm:$0xf]
    %v5281 = vld [vmem:[%s5271 + $0x24] sm:$0xf]
    %v5282 = vld [vmem:[%s5271 + $0x28] sm:$0xf]
    %v5283 = vld [vmem:[%s5271 + $0x2c] sm:$0xf]
    %v5284 = vld [vmem:[%s5271 + $0x30] sm:$0xf]
    %v5285 = vld [vmem:[%s5271 + $0x34] sm:$0xf]
    %v5286 = vld [vmem:[%s5271 + $0x38] sm:$0xf]
    %v5287 = vld [vmem:[%s5271 + $0x3c] sm:$0xf]
    %s5288 = scalar_lea.vmem %s37, 4
    %v5289 = vld [vmem:[%s5288] sm:$0x1]
    %s5290 = scalar_lea.vmem [#allocation10], 256
    %v5291 = vld [vmem:[%s5290] sm:$0xf]
    %v5292 = vld [vmem:[%s5290 + $0x4] sm:$0xf]
    %v5293 = vld [vmem:[%s5290 + $0x8] sm:$0xf]
    %v5294 = vld [vmem:[%s5290 + $0xc] sm:$0xf]
    %v5295 = vld [vmem:[%s5290 + $0x10] sm:$0xf]
    %v5296 = vld [vmem:[%s5290 + $0x14] sm:$0xf]
    %v5297 = vld [vmem:[%s5290 + $0x18] sm:$0xf]
    %v5298 = vld [vmem:[%s5290 + $0x1c] sm:$0xf]
    %v5299 = vld [vmem:[%s5290 + $0x20] sm:$0xf]
    %v5300 = vld [vmem:[%s5290 + $0x24] sm:$0xf]
    %v5301 = vld [vmem:[%s5290 + $0x28] sm:$0xf]
    %v5302 = vld [vmem:[%s5290 + $0x2c] sm:$0xf]
    %v5303 = vld [vmem:[%s5290 + $0x30] sm:$0xf]
    %v5304 = vld [vmem:[%s5290 + $0x34] sm:$0xf]
    %v5305 = vld [vmem:[%s5290 + $0x38] sm:$0xf]
    %v5306 = vld [vmem:[%s5290 + $0x3c] sm:$0xf]
    %s5307 = scalar_lea.vmem %s41, 4
    %v5308 = vld [vmem:[%s5307] sm:$0x1]
    %v5309 = vpack.c.bf16 %v5270, %v5270
    %v5311 = vlaneseq
    %v5312 = vshrl.u32 %v5311, 7
    %v5313 = vsub.s32 0, %v5312
    %v5314 = vrot.slane %v5289, %v5313
    %v5332 = vunpack.c.l.b16 %v5272
    %v5333 = vunpack.c.l.b16 %v5273
    %v5334 = vunpack.c.l.b16 %v5274
    %v5335 = vunpack.c.l.b16 %v5275
    %v5336 = vunpack.c.l.b16 %v5276
    %v5337 = vunpack.c.l.b16 %v5277
    %v5338 = vunpack.c.l.b16 %v5278
    %v5339 = vunpack.c.l.b16 %v5279
    %v5340 = vunpack.c.l.b16 %v5280
    %v5341 = vunpack.c.l.b16 %v5281
    %v5342 = vunpack.c.l.b16 %v5282
    %v5343 = vunpack.c.l.b16 %v5283
    %v5344 = vunpack.c.l.b16 %v5284
    %v5345 = vunpack.c.l.b16 %v5285
    %v5346 = vunpack.c.l.b16 %v5286
    %v5347 = vunpack.c.l.b16 %v5287
    %v5348 = vpack.c.b16 %v5333, %v5332
    %v5349 = vpack.c.b16 %v5335, %v5334
    %v5350 = vpack.c.b16 %v5337, %v5336
    %v5351 = vpack.c.b16 %v5339, %v5338
    %v5352 = vpack.c.b16 %v5341, %v5340
    %v5353 = vpack.c.b16 %v5343, %v5342
    %v5354 = vpack.c.b16 %v5345, %v5344
    %v5355 = vpack.c.b16 %v5347, %v5346
    %5364 = vmatprep.subr.bf16.mxu0 0
    %5365 = vmatpush1.bf16.msra.mxu0 %v5348
    %5366 = vmatprep.subr.bf16.mxu0 0
    %5367 = vmatpush1.bf16.msra.mxu0 %v5349
    %5368 = vmatprep.subr.bf16.mxu0 0
    %5369 = vmatpush1.bf16.msra.mxu0 %v5350
    %5370 = vmatprep.subr.bf16.mxu0 0
    %5371 = vmatpush1.bf16.msra.mxu0 %v5351
    %5372 = vmatprep.subr.bf16.mxu0 0
    %5373 = vmatpush1.bf16.msra.mxu0 %v5352
    %5374 = vmatprep.subr.bf16.mxu0 0
    %5375 = vmatpush1.bf16.msra.mxu0 %v5353
    %5376 = vmatprep.subr.bf16.mxu0 0
    %5377 = vmatpush1.bf16.msra.mxu0 %v5354
    %5378 = vmatprep.subr.bf16.mxu0 0
    %5379 = vmatpush1.bf16.msra.mxu0 %v5355
    %5380 = vmatprep.subr.bf16.mxu0 0
    %5381 = vmatpush1.bf16.msra.mxu0 0
    %5382 = vmatprep.subr.bf16.mxu0 0
    %5383 = vmatpush1.bf16.msra.mxu0 0
    %5384 = vmatprep.subr.bf16.mxu0 0
    %5385 = vmatpush1.bf16.msra.mxu0 0
    %5386 = vmatprep.subr.bf16.mxu0 0
    %5387 = vmatpush1.bf16.msra.mxu0 0
    %5388 = vmatprep.subr.bf16.mxu0 0
    %5389 = vmatpush1.bf16.msra.mxu0 0
    %5390 = vmatprep.subr.bf16.mxu0 0
    %5391 = vmatpush1.bf16.msra.mxu0 0
    %5392 = vmatprep.subr.bf16.mxu0 0
    %5393 = vmatpush1.bf16.msra.mxu0 0
    %5394 = vmatprep.subr.bf16.mxu0 0
    %5395 = vmatpush1.bf16.msra.mxu0 0
    %5396 = vmatprep.mubr.bf16.mxu0 0
    %5397 = vmatmul.mubr.bf16.gmra.mrb[0].mxu0 %v5309
    %v5398 = vpop.f32.mrb[0].mxu0
    %v5399 = vadd.f32 %v5314, %v5398
    %v5400 = vpop.f32.mrb[0].mxu0
    %v5401 = vpop.f32.mrb[0].mxu0
    %v5402 = vpop.f32.mrb[0].mxu0
    %5403 = vdwg.mxu0
    %v5404 = vmul.f32 %v5399, 0.5
    %v5405 = vmul.f32 %v5399, 0.70710677
    %v5406 = verf.f32.pop %v5405
    %v5407 = vadd.f32 %v5406, 1.0
    %v5408 = vmul.f32 %v5404, %v5407
    %v5409 = vpack.c.bf16 %v5408, %v5408
    %v5411 = vlaneseq
    %v5412 = vshrl.u32 %v5411, 7
    %v5413 = vsub.s32 0, %v5412
    %v5414 = vrot.slane %v5308, %v5413
    %v5432 = vunpack.c.l.b16 %v5291
    %v5433 = vunpack.c.l.b16 %v5292
    %v5434 = vunpack.c.l.b16 %v5293
    %v5435 = vunpack.c.l.b16 %v5294
    %v5436 = vunpack.c.l.b16 %v5295
    %v5437 = vunpack.c.l.b16 %v5296
    %v5438 = vunpack.c.l.b16 %v5297
    %v5439 = vunpack.c.l.b16 %v5298
    %v5440 = vunpack.c.l.b16 %v5299
    %v5441 = vunpack.c.l.b16 %v5300
    %v5442 = vunpack.c.l.b16 %v5301
    %v5443 = vunpack.c.l.b16 %v5302
    %v5444 = vunpack.c.l.b16 %v5303
    %v5445 = vunpack.c.l.b16 %v5304
    %v5446 = vunpack.c.l.b16 %v5305
    %v5447 = vunpack.c.l.b16 %v5306
    %v5448 = vpack.c.b16 %v5433, %v5432
    %v5449 = vpack.c.b16 %v5435, %v5434
    %v5450 = vpack.c.b16 %v5437, %v5436
    %v5451 = vpack.c.b16 %v5439, %v5438
    %v5452 = vpack.c.b16 %v5441, %v5440
    %v5453 = vpack.c.b16 %v5443, %v5442
    %v5454 = vpack.c.b16 %v5445, %v5444
    %v5455 = vpack.c.b16 %v5447, %v5446
    %5464 = vmatprep.subr.bf16.mxu0 0
    %5465 = vmatpush1.bf16.msra.mxu0 %v5448
    %5466 = vmatprep.subr.bf16.mxu0 0
    %5467 = vmatpush1.bf16.msra.mxu0 %v5449
    %5468 = vmatprep.subr.bf16.mxu0 0
    %5469 = vmatpush1.bf16.msra.mxu0 %v5450
    %5470 = vmatprep.subr.bf16.mxu0 0
    %5471 = vmatpush1.bf16.msra.mxu0 %v5451
    %5472 = vmatprep.subr.bf16.mxu0 0
    %5473 = vmatpush1.bf16.msra.mxu0 %v5452
    %5474 = vmatprep.subr.bf16.mxu0 0
    %5475 = vmatpush1.bf16.msra.mxu0 %v5453
    %5476 = vmatprep.subr.bf16.mxu0 0
    %5477 = vmatpush1.bf16.msra.mxu0 %v5454
    %5478 = vmatprep.subr.bf16.mxu0 0
    %5479 = vmatpush1.bf16.msra.mxu0 %v5455
    %5480 = vmatprep.subr.bf16.mxu0 0
    %5481 = vmatpush1.bf16.msra.mxu0 0
    %5482 = vmatprep.subr.bf16.mxu0 0
    %5483 = vmatpush1.bf16.msra.mxu0 0
    %5484 = vmatprep.subr.bf16.mxu0 0
    %5485 = vmatpush1.bf16.msra.mxu0 0
    %5486 = vmatprep.subr.bf16.mxu0 0
    %5487 = vmatpush1.bf16.msra.mxu0 0
    %5488 = vmatprep.subr.bf16.mxu0 0
    %5489 = vmatpush1.bf16.msra.mxu0 0
    %5490 = vmatprep.subr.bf16.mxu0 0
    %5491 = vmatpush1.bf16.msra.mxu0 0
    %5492 = vmatprep.subr.bf16.mxu0 0
    %5493 = vmatpush1.bf16.msra.mxu0 0
    %5494 = vmatprep.subr.bf16.mxu0 0
    %5495 = vmatpush1.bf16.msra.mxu0 0
    %5496 = vmatprep.mubr.bf16.mxu0 0
    %5497 = vmatmul.mubr.bf16.gmra.mrb[0].mxu0 %v5409
    %v5498 = vpop.f32.mrb[0].mxu0
    %v5499 = vadd.f32 %v5414, %v5498
    %v5500 = vpop.f32.mrb[0].mxu0
    %v5501 = vpop.f32.mrb[0].mxu0
    %v5502 = vpop.f32.mrb[0].mxu0
    %5503 = vdwg.mxu0
    %v5504 = vadd.f32 %v4986, %v5027
    %v5505 = vadd.f32 %v4987, %v5032
    %s5506 = scalar_lea.vmem [#allocation12], 256
    %v5507 = vld [vmem:[%s5506] sm:$0xf]
    %v5508 = vld [vmem:[%s5506 + $0x4] sm:$0xf]
    %v5509 = vld [vmem:[%s5506 + $0x8] sm:$0xf]
    %v5510 = vld [vmem:[%s5506 + $0xc] sm:$0xf]
    %v5511 = vld [vmem:[%s5506 + $0x10] sm:$0xf]
    %v5512 = vld [vmem:[%s5506 + $0x14] sm:$0xf]
    %v5513 = vld [vmem:[%s5506 + $0x18] sm:$0xf]
    %v5514 = vld [vmem:[%s5506 + $0x1c] sm:$0xf]
    %v5515 = vld [vmem:[%s5506 + $0x20] sm:$0xf]
    %v5516 = vld [vmem:[%s5506 + $0x24] sm:$0xf]
    %v5517 = vld [vmem:[%s5506 + $0x28] sm:$0xf]
    %v5518 = vld [vmem:[%s5506 + $0x2c] sm:$0xf]
    %v5519 = vld [vmem:[%s5506 + $0x30] sm:$0xf]
    %v5520 = vld [vmem:[%s5506 + $0x34] sm:$0xf]
    %v5521 = vld [vmem:[%s5506 + $0x38] sm:$0xf]
    %v5522 = vld [vmem:[%s5506 + $0x3c] sm:$0xf]
    %s5523 = scalar_lea.vmem %s45, 4
    %v5524 = vld [vmem:[%s5523] sm:$0x1]
    %s5525 = scalar_lea.vmem [#allocation13], 256
    %v5526 = vld [vmem:[%s5525] sm:$0xf]
    %v5527 = vld [vmem:[%s5525 + $0x4] sm:$0xf]
    %v5528 = vld [vmem:[%s5525 + $0x8] sm:$0xf]
    %v5529 = vld [vmem:[%s5525 + $0xc] sm:$0xf]
    %v5530 = vld [vmem:[%s5525 + $0x10] sm:$0xf]
    %v5531 = vld [vmem:[%s5525 + $0x14] sm:$0xf]
    %v5532 = vld [vmem:[%s5525 + $0x18] sm:$0xf]
    %v5533 = vld [vmem:[%s5525 + $0x1c] sm:$0xf]
    %v5534 = vld [vmem:[%s5525 + $0x20] sm:$0xf]
    %v5535 = vld [vmem:[%s5525 + $0x24] sm:$0xf]
    %v5536 = vld [vmem:[%s5525 + $0x28] sm:$0xf]
    %v5537 = vld [vmem:[%s5525 + $0x2c] sm:$0xf]
    %v5538 = vld [vmem:[%s5525 + $0x30] sm:$0xf]
    %v5539 = vld [vmem:[%s5525 + $0x34] sm:$0xf]
    %v5540 = vld [vmem:[%s5525 + $0x38] sm:$0xf]
    %v5541 = vld [vmem:[%s5525 + $0x3c] sm:$0xf]
    %s5542 = scalar_lea.vmem %s49, 4
    %v5543 = vld [vmem:[%s5542] sm:$0x1]
    %v5544 = vpack.c.bf16 %v5505, %v5504
    %v5546 = vlaneseq
    %v5547 = vshrl.u32 %v5546, 7
    %v5548 = vsub.s32 0, %v5547
    %v5549 = vrot.slane %v5524, %v5548
    %v5567 = vunpack.c.l.b16 %v5507
    %v5568 = vunpack.c.l.b16 %v5508
    %v5569 = vunpack.c.l.b16 %v5509
    %v5570 = vunpack.c.l.b16 %v5510
    %v5571 = vunpack.c.l.b16 %v5511
    %v5572 = vunpack.c.l.b16 %v5512
    %v5573 = vunpack.c.l.b16 %v5513
    %v5574 = vunpack.c.l.b16 %v5514
    %v5575 = vunpack.c.l.b16 %v5515
    %v5576 = vunpack.c.l.b16 %v5516
    %v5577 = vunpack.c.l.b16 %v5517
    %v5578 = vunpack.c.l.b16 %v5518
    %v5579 = vunpack.c.l.b16 %v5519
    %v5580 = vunpack.c.l.b16 %v5520
    %v5581 = vunpack.c.l.b16 %v5521
    %v5582 = vunpack.c.l.b16 %v5522
    %v5583 = vpack.c.b16 %v5568, %v5567
    %v5584 = vpack.c.b16 %v5570, %v5569
    %v5585 = vpack.c.b16 %v5572, %v5571
    %v5586 = vpack.c.b16 %v5574, %v5573
    %v5587 = vpack.c.b16 %v5576, %v5575
    %v5588 = vpack.c.b16 %v5578, %v5577
    %v5589 = vpack.c.b16 %v5580, %v5579
    %v5590 = vpack.c.b16 %v5582, %v5581
    %5599 = vmatprep.subr.bf16.mxu0 0
    %5600 = vmatpush1.bf16.msra.mxu0 %v5583
    %5601 = vmatprep.subr.bf16.mxu0 0
    %5602 = vmatpush1.bf16.msra.mxu0 %v5584
    %5603 = vmatprep.subr.bf16.mxu0 0
    %5604 = vmatpush1.bf16.msra.mxu0 %v5585
    %5605 = vmatprep.subr.bf16.mxu0 0
    %5606 = vmatpush1.bf16.msra.mxu0 %v5586
    %5607 = vmatprep.subr.bf16.mxu0 0
    %5608 = vmatpush1.bf16.msra.mxu0 %v5587
    %5609 = vmatprep.subr.bf16.mxu0 0
    %5610 = vmatpush1.bf16.msra.mxu0 %v5588
    %5611 = vmatprep.subr.bf16.mxu0 0
    %5612 = vmatpush1.bf16.msra.mxu0 %v5589
    %5613 = vmatprep.subr.bf16.mxu0 0
    %5614 = vmatpush1.bf16.msra.mxu0 %v5590
    %5615 = vmatprep.subr.bf16.mxu0 0
    %5616 = vmatpush1.bf16.msra.mxu0 0
    %5617 = vmatprep.subr.bf16.mxu0 0
    %5618 = vmatpush1.bf16.msra.mxu0 0
    %5619 = vmatprep.subr.bf16.mxu0 0
    %5620 = vmatpush1.bf16.msra.mxu0 0
    %5621 = vmatprep.subr.bf16.mxu0 0
    %5622 = vmatpush1.bf16.msra.mxu0 0
    %5623 = vmatprep.subr.bf16.mxu0 0
    %5624 = vmatpush1.bf16.msra.mxu0 0
    %5625 = vmatprep.subr.bf16.mxu0 0
    %5626 = vmatpush1.bf16.msra.mxu0 0
    %5627 = vmatprep.subr.bf16.mxu0 0
    %5628 = vmatpush1.bf16.msra.mxu0 0
    %5629 = vmatprep.subr.bf16.mxu0 0
    %5630 = vmatpush1.bf16.msra.mxu0 0
    %5631 = vmatprep.mubr.bf16.mxu0 0
    %5632 = vmatmul.mubr.bf16.gmra.mrb[0].mxu0 %v5544
    %v5633 = vpop.f32.mrb[0].mxu0
    %v5634 = vadd.f32 %v5549, %v5633
    %v5635 = vpop.f32.mrb[0].mxu0
    %v5636 = vpop.f32.mrb[0].mxu0
    %v5637 = vadd.f32 %v5549, %v5636
    %v5638 = vpop.f32.mrb[0].mxu0
    %5639 = vdwg.mxu0
    %v5640 = vmul.f32 %v5634, 0.5
    %v5641 = vmul.f32 %v5637, 0.5
    %v5642 = vmul.f32 %v5634, 0.70710677
    %v5643 = vmul.f32 %v5637, 0.70710677
    %v5644 = verf.f32.pop %v5642
    %v5645 = verf.f32.pop %v5643
    %v5646 = vadd.f32 %v5644, 1.0
    %v5647 = vadd.f32 %v5645, 1.0
    %v5648 = vmul.f32 %v5640, %v5646
    %v5649 = vmul.f32 %v5641, %v5647
    %v5650 = vpack.c.bf16 %v5649, %v5648
    %v5652 = vlaneseq
    %v5653 = vshrl.u32 %v5652, 7
    %v5654 = vsub.s32 0, %v5653
    %v5655 = vrot.slane %v5543, %v5654
    %v5673 = vunpack.c.l.b16 %v5526
    %v5674 = vunpack.c.l.b16 %v5527
    %v5675 = vunpack.c.l.b16 %v5528
    %v5676 = vunpack.c.l.b16 %v5529
    %v5677 = vunpack.c.l.b16 %v5530
    %v5678 = vunpack.c.l.b16 %v5531
    %v5679 = vunpack.c.l.b16 %v5532
    %v5680 = vunpack.c.l.b16 %v5533
    %v5681 = vunpack.c.l.b16 %v5534
    %v5682 = vunpack.c.l.b16 %v5535
    %v5683 = vunpack.c.l.b16 %v5536
    %v5684 = vunpack.c.l.b16 %v5537
    %v5685 = vunpack.c.l.b16 %v5538
    %v5686 = vunpack.c.l.b16 %v5539
    %v5687 = vunpack.c.l.b16 %v5540
    %v5688 = vunpack.c.l.b16 %v5541
    %v5689 = vpack.c.b16 %v5674, %v5673
    %v5690 = vpack.c.b16 %v5676, %v5675
    %v5691 = vpack.c.b16 %v5678, %v5677
    %v5692 = vpack.c.b16 %v5680, %v5679
    %v5693 = vpack.c.b16 %v5682, %v5681
    %v5694 = vpack.c.b16 %v5684, %v5683
    %v5695 = vpack.c.b16 %v5686, %v5685
    %v5696 = vpack.c.b16 %v5688, %v5687
    %5705 = vmatprep.subr.bf16.mxu0 0
    %5706 = vmatpush1.bf16.msra.mxu0 %v5689
    %5707 = vmatprep.subr.bf16.mxu0 0
    %5708 = vmatpush1.bf16.msra.mxu0 %v5690
    %5709 = vmatprep.subr.bf16.mxu0 0
    %5710 = vmatpush1.bf16.msra.mxu0 %v5691
    %5711 = vmatprep.subr.bf16.mxu0 0
    %5712 = vmatpush1.bf16.msra.mxu0 %v5692
    %5713 = vmatprep.subr.bf16.mxu0 0
    %5714 = vmatpush1.bf16.msra.mxu0 %v5693
    %5715 = vmatprep.subr.bf16.mxu0 0
    %5716 = vmatpush1.bf16.msra.mxu0 %v5694
    %5717 = vmatprep.subr.bf16.mxu0 0
    %5718 = vmatpush1.bf16.msra.mxu0 %v5695
    %5719 = vmatprep.subr.bf16.mxu0 0
    %5720 = vmatpush1.bf16.msra.mxu0 %v5696
    %5721 = vmatprep.subr.bf16.mxu0 0
    %5722 = vmatpush1.bf16.msra.mxu0 0
    %5723 = vmatprep.subr.bf16.mxu0 0
    %5724 = vmatpush1.bf16.msra.mxu0 0
    %5725 = vmatprep.subr.bf16.mxu0 0
    %5726 = vmatpush1.bf16.msra.mxu0 0
    %5727 = vmatprep.subr.bf16.mxu0 0
    %5728 = vmatpush1.bf16.msra.mxu0 0
    %5729 = vmatprep.subr.bf16.mxu0 0
    %5730 = vmatpush1.bf16.msra.mxu0 0
    %5731 = vmatprep.subr.bf16.mxu0 0
    %5732 = vmatpush1.bf16.msra.mxu0 0
    %5733 = vmatprep.subr.bf16.mxu0 0
    %5734 = vmatpush1.bf16.msra.mxu0 0
    %5735 = vmatprep.subr.bf16.mxu0 0
    %5736 = vmatpush1.bf16.msra.mxu0 0
    %5737 = vmatprep.mubr.bf16.mxu0 0
    %5738 = vmatmul.mubr.bf16.gmra.mrb[0].mxu0 %v5650
    %v5739 = vpop.f32.mrb[0].mxu0
    %v5740 = vadd.f32 %v5655, %v5739
    %v5741 = vpop.f32.mrb[0].mxu0
    %v5742 = vpop.f32.mrb[0].mxu0
    %v5743 = vadd.f32 %v5655, %v5742
    %v5744 = vpop.f32.mrb[0].mxu0
    %5745 = vdwg.mxu0
    %v5746 = vadd.f32 %v5740, %v4986
    %v5747 = vadd.f32 %v5743, %v4987
    %v5748 = vmul.f32 %v5746, %v570
    %v5749 = vmul.f32 %v5747, %v575
    %v5750 = vadd.f32 %v5748, %v5749
    %v5751 = vrot.slane %v5750, 4
    %v5752 = vadd.f32 %v5750, %v5751
    %v5753 = vrot.slane %v5752, 2
    %v5754 = vadd.f32 %v5752, %v5753
    %v5755 = vrot.slane %v5754, 1
    %v5756 = vadd.f32 %v5754, %v5755
    %v5757 = vmul.f32 %v5756, 0.0625
    %v5758 = vsub.f32 %v5748, %v5757
    %v5759 = vsub.f32 %v5749, %v5757
    %v5760 = vmul.f32 %v5758, %v5758
    %v5761 = vmul.f32 %v5759, %v5759
    %v5762 = vmul.f32 %v5760, %v570
    %v5763 = vmul.f32 %v5761, %v575
    %v5764 = vadd.f32 %v5762, %v5763
    %v5765 = vrot.slane %v5764, 4
    %v5766 = vadd.f32 %v5764, %v5765
    %v5767 = vrot.slane %v5766, 2
    %v5768 = vadd.f32 %v5766, %v5767
    %v5769 = vrot.slane %v5768, 1
    %v5770 = vadd.f32 %v5768, %v5769
    %v5771 = vmul.f32 %v5770, 0.0625
    %v5772 = vadd.f32 %v5771, 1e-05
    %v5773 = vrsqrt.pop %v5772
    %v5774 = vmul.f32 %v5758, %v5773
    %v5775 = vmul.f32 %v5759, %v5773
    %s5776 = scalar_lea.vmem [#allocation21], 4
    %v5777 = vld [vmem:[%s5776] sm:$0x1]
    %v5779 = vlaneseq
    %v5780 = vshrl.u32 %v5779, 7
    %v5781 = vsub.s32 0, %v5780
    %v5782 = vrot.slane %v5777, %v5781
    %v5784 = vmul.f32 %v5774, %v5782
    %v5785 = vmul.f32 %v5775, %v5782
    %s5786 = scalar_lea.vmem [#allocation22], 4
    %v5787 = vld [vmem:[%s5786] sm:$0x1]
    %v5789 = vlaneseq
    %v5790 = vshrl.u32 %v5789, 7
    %v5791 = vsub.s32 0, %v5790
    %v5792 = vrot.slane %v5787, %v5791
    %v5794 = vadd.f32 %v5784, %v5792
    %v5795 = vadd.f32 %v5785, %v5792
    %v5796 = vmul.f32 %v5794, %v570
    %v5797 = vmul.f32 %v5795, %v575
    %v5798 = vpack.c.bf16 %v5499, %v5499
    %v5800 = vsel %vm1406, %v5798, 0
    %5802 = vmatprep.subr.bf16.mxu0 0
    %5803 = vmatpush1.bf16.msra.mxu0 %v5800
    %5804 = vmatprep.subr.bf16.mxu0 0
    %5805 = vmatpush1.bf16.msra.mxu0 0
    %5806 = vmatprep.subr.bf16.mxu0 0
    %5807 = vmatpush1.bf16.msra.mxu0 0
    %5808 = vmatprep.subr.bf16.mxu0 0
    %5809 = vmatpush1.bf16.msra.mxu0 0
    %5810 = vmatprep.subr.bf16.mxu0 0
    %5811 = vmatpush1.bf16.msra.mxu0 0
    %5812 = vmatprep.subr.bf16.mxu0 0
    %5813 = vmatpush1.bf16.msra.mxu0 0
    %5814 = vmatprep.subr.bf16.mxu0 0
    %5815 = vmatpush1.bf16.msra.mxu0 0
    %5816 = vmatprep.subr.bf16.mxu0 0
    %5817 = vmatpush1.bf16.msra.mxu0 0
    %5818 = vmatprep.subr.bf16.mxu0 0
    %5819 = vmatpush1.bf16.msra.mxu0 0
    %5820 = vmatprep.subr.bf16.mxu0 0
    %5821 = vmatpush1.bf16.msra.mxu0 0
    %5822 = vmatprep.subr.bf16.mxu0 0
    %5823 = vmatpush1.bf16.msra.mxu0 0
    %5824 = vmatprep.subr.bf16.mxu0 0
    %5825 = vmatpush1.bf16.msra.mxu0 0
    %5826 = vmatprep.subr.bf16.mxu0 0
    %5827 = vmatpush1.bf16.msra.mxu0 0
    %5828 = vmatprep.subr.bf16.mxu0 0
    %5829 = vmatpush1.bf16.msra.mxu0 0
    %5830 = vmatprep.subr.bf16.mxu0 0
    %5831 = vmatpush1.bf16.msra.mxu0 0
    %5832 = vmatprep.subr.bf16.mxu0 0
    %5833 = vmatpush1.bf16.msra.mxu0 0
    %5834 = vmatprep.mubr.bf16.mxu0 0
    %5835 = vmatmul.mubr.bf16.gmra.mrb[0].mxu0 %v1404
    %v5836 = vpop.f32.mrb[0].mxu0
    %v5837 = vadd.f32 %v5796, %v5836
    %v5838 = vpop.f32.mrb[0].mxu0
    %v5839 = vpop.f32.mrb[0].mxu0
    %v5840 = vadd.f32 %v5797, %v5839
    %v5841 = vpop.f32.mrb[0].mxu0
    %5842 = vdwg.mxu0
    %s5843 = scalar_lea.vmem [#allocation15], 256
    %v5844 = vld [vmem:[%s5843] sm:$0xf]
    %v5845 = vld [vmem:[%s5843 + $0x4] sm:$0xf]
    %v5846 = vld [vmem:[%s5843 + $0x8] sm:$0xf]
    %v5847 = vld [vmem:[%s5843 + $0xc] sm:$0xf]
    %v5848 = vld [vmem:[%s5843 + $0x10] sm:$0xf]
    %v5849 = vld [vmem:[%s5843 + $0x14] sm:$0xf]
    %v5850 = vld [vmem:[%s5843 + $0x18] sm:$0xf]
    %v5851 = vld [vmem:[%s5843 + $0x1c] sm:$0xf]
    %v5852 = vld [vmem:[%s5843 + $0x20] sm:$0xf]
    %v5853 = vld [vmem:[%s5843 + $0x24] sm:$0xf]
    %v5854 = vld [vmem:[%s5843 + $0x28] sm:$0xf]
    %v5855 = vld [vmem:[%s5843 + $0x2c] sm:$0xf]
    %v5856 = vld [vmem:[%s5843 + $0x30] sm:$0xf]
    %v5857 = vld [vmem:[%s5843 + $0x34] sm:$0xf]
    %v5858 = vld [vmem:[%s5843 + $0x38] sm:$0xf]
    %v5859 = vld [vmem:[%s5843 + $0x3c] sm:$0xf]
    %s5860 = scalar_lea.vmem [#allocation16], 4
    %v5861 = vld [vmem:[%s5860] sm:$0x1]
    %s5862 = scalar_lea.vmem [#allocation18], 256
    %v5863 = vld [vmem:[%s5862] sm:$0xf]
    %v5864 = vld [vmem:[%s5862 + $0x4] sm:$0xf]
    %v5865 = vld [vmem:[%s5862 + $0x8] sm:$0xf]
    %v5866 = vld [vmem:[%s5862 + $0xc] sm:$0xf]
    %v5867 = vld [vmem:[%s5862 + $0x10] sm:$0xf]
    %v5868 = vld [vmem:[%s5862 + $0x14] sm:$0xf]
    %v5869 = vld [vmem:[%s5862 + $0x18] sm:$0xf]
    %v5870 = vld [vmem:[%s5862 + $0x1c] sm:$0xf]
    %v5871 = vld [vmem:[%s5862 + $0x20] sm:$0xf]
    %v5872 = vld [vmem:[%s5862 + $0x24] sm:$0xf]
    %v5873 = vld [vmem:[%s5862 + $0x28] sm:$0xf]
    %v5874 = vld [vmem:[%s5862 + $0x2c] sm:$0xf]
    %v5875 = vld [vmem:[%s5862 + $0x30] sm:$0xf]
    %v5876 = vld [vmem:[%s5862 + $0x34] sm:$0xf]
    %v5877 = vld [vmem:[%s5862 + $0x38] sm:$0xf]
    %v5878 = vld [vmem:[%s5862 + $0x3c] sm:$0xf]
    %s5879 = scalar_lea.vmem [#allocation19], 4
    %v5880 = vld [vmem:[%s5879] sm:$0x1]
    %v5881 = vpack.c.bf16 %v5840, %v5837
    %v5883 = vlaneseq
    %v5884 = vshrl.u32 %v5883, 7
    %v5885 = vsub.s32 0, %v5884
    %v5886 = vrot.slane %v5861, %v5885
    %v5904 = vunpack.c.l.b16 %v5844
    %v5905 = vunpack.c.l.b16 %v5845
    %v5906 = vunpack.c.l.b16 %v5846
    %v5907 = vunpack.c.l.b16 %v5847
    %v5908 = vunpack.c.l.b16 %v5848
    %v5909 = vunpack.c.l.b16 %v5849
    %v5910 = vunpack.c.l.b16 %v5850
    %v5911 = vunpack.c.l.b16 %v5851
    %v5912 = vunpack.c.l.b16 %v5852
    %v5913 = vunpack.c.l.b16 %v5853
    %v5914 = vunpack.c.l.b16 %v5854
    %v5915 = vunpack.c.l.b16 %v5855
    %v5916 = vunpack.c.l.b16 %v5856
    %v5917 = vunpack.c.l.b16 %v5857
    %v5918 = vunpack.c.l.b16 %v5858
    %v5919 = vunpack.c.l.b16 %v5859
    %v5920 = vpack.c.b16 %v5905, %v5904
    %v5921 = vpack.c.b16 %v5907, %v5906
    %v5922 = vpack.c.b16 %v5909, %v5908
    %v5923 = vpack.c.b16 %v5911, %v5910
    %v5924 = vpack.c.b16 %v5913, %v5912
    %v5925 = vpack.c.b16 %v5915, %v5914
    %v5926 = vpack.c.b16 %v5917, %v5916
    %v5927 = vpack.c.b16 %v5919, %v5918
    %5936 = vmatprep.subr.bf16.mxu0 0
    %5937 = vmatpush1.bf16.msra.mxu0 %v5920
    %5938 = vmatprep.subr.bf16.mxu0 0
    %5939 = vmatpush1.bf16.msra.mxu0 %v5921
    %5940 = vmatprep.subr.bf16.mxu0 0
    %5941 = vmatpush1.bf16.msra.mxu0 %v5922
    %5942 = vmatprep.subr.bf16.mxu0 0
    %5943 = vmatpush1.bf16.msra.mxu0 %v5923
    %5944 = vmatprep.subr.bf16.mxu0 0
    %5945 = vmatpush1.bf16.msra.mxu0 %v5924
    %5946 = vmatprep.subr.bf16.mxu0 0
    %5947 = vmatpush1.bf16.msra.mxu0 %v5925
    %5948 = vmatprep.subr.bf16.mxu0 0
    %5949 = vmatpush1.bf16.msra.mxu0 %v5926
    %5950 = vmatprep.subr.bf16.mxu0 0
    %5951 = vmatpush1.bf16.msra.mxu0 %v5927
    %5952 = vmatprep.subr.bf16.mxu0 0
    %5953 = vmatpush1.bf16.msra.mxu0 0
    %5954 = vmatprep.subr.bf16.mxu0 0
    %5955 = vmatpush1.bf16.msra.mxu0 0
    %5956 = vmatprep.subr.bf16.mxu0 0
    %5957 = vmatpush1.bf16.msra.mxu0 0
    %5958 = vmatprep.subr.bf16.mxu0 0
    %5959 = vmatpush1.bf16.msra.mxu0 0
    %5960 = vmatprep.subr.bf16.mxu0 0
    %5961 = vmatpush1.bf16.msra.mxu0 0
    %5962 = vmatprep.subr.bf16.mxu0 0
    %5963 = vmatpush1.bf16.msra.mxu0 0
    %5964 = vmatprep.subr.bf16.mxu0 0
    %5965 = vmatpush1.bf16.msra.mxu0 0
    %5966 = vmatprep.subr.bf16.mxu0 0
    %5967 = vmatpush1.bf16.msra.mxu0 0
    %5968 = vmatprep.mubr.bf16.mxu0 0
    %5969 = vmatmul.mubr.bf16.gmra.mrb[0].mxu0 %v5881
    %v5970 = vpop.f32.mrb[0].mxu0
    %v5971 = vadd.f32 %v5886, %v5970
    %v5972 = vpop.f32.mrb[0].mxu0
    %v5973 = vpop.f32.mrb[0].mxu0
    %v5974 = vadd.f32 %v5886, %v5973
    %v5975 = vpop.f32.mrb[0].mxu0
    %5976 = vdwg.mxu0
    %v5977 = vmul.f32 %v5971, 0.5
    %v5978 = vmul.f32 %v5974, 0.5
    %v5979 = vmul.f32 %v5971, 0.70710677
    %v5980 = vmul.f32 %v5974, 0.70710677
    %v5981 = verf.f32.pop %v5979
    %v5982 = verf.f32.pop %v5980
    %v5983 = vadd.f32 %v5981, 1.0
    %v5984 = vadd.f32 %v5982, 1.0
    %v5985 = vmul.f32 %v5977, %v5983
    %v5986 = vmul.f32 %v5978, %v5984
    %v5987 = vpack.c.bf16 %v5986, %v5985
    %v5989 = vlaneseq
    %v5990 = vshrl.u32 %v5989, 7
    %v5991 = vsub.s32 0, %v5990
    %v5992 = vrot.slane %v5880, %v5991
    %v6010 = vunpack.c.l.b16 %v5863
    %v6011 = vunpack.c.l.b16 %v5864
    %v6012 = vunpack.c.l.b16 %v5865
    %v6013 = vunpack.c.l.b16 %v5866
    %v6014 = vunpack.c.l.b16 %v5867
    %v6015 = vunpack.c.l.b16 %v5868
    %v6016 = vunpack.c.l.b16 %v5869
    %v6017 = vunpack.c.l.b16 %v5870
    %v6018 = vunpack.c.l.b16 %v5871
    %v6019 = vunpack.c.l.b16 %v5872
    %v6020 = vunpack.c.l.b16 %v5873
    %v6021 = vunpack.c.l.b16 %v5874
    %v6022 = vunpack.c.l.b16 %v5875
    %v6023 = vunpack.c.l.b16 %v5876
    %v6024 = vunpack.c.l.b16 %v5877
    %v6025 = vunpack.c.l.b16 %v5878
    %v6026 = vpack.c.b16 %v6011, %v6010
    %v6027 = vpack.c.b16 %v6013, %v6012
    %v6028 = vpack.c.b16 %v6015, %v6014
    %v6029 = vpack.c.b16 %v6017, %v6016
    %v6030 = vpack.c.b16 %v6019, %v6018
    %v6031 = vpack.c.b16 %v6021, %v6020
    %v6032 = vpack.c.b16 %v6023, %v6022
    %v6033 = vpack.c.b16 %v6025, %v6024
    %6042 = vmatprep.subr.bf16.mxu0 0
    %6043 = vmatpush1.bf16.msra.mxu0 %v6026
    %6044 = vmatprep.subr.bf16.mxu0 0
    %6045 = vmatpush1.bf16.msra.mxu0 %v6027
    %6046 = vmatprep.subr.bf16.mxu0 0
    %6047 = vmatpush1.bf16.msra.mxu0 %v6028
    %6048 = vmatprep.subr.bf16.mxu0 0
    %6049 = vmatpush1.bf16.msra.mxu0 %v6029
    %6050 = vmatprep.subr.bf16.mxu0 0
    %6051 = vmatpush1.bf16.msra.mxu0 %v6030
    %6052 = vmatprep.subr.bf16.mxu0 0
    %6053 = vmatpush1.bf16.msra.mxu0 %v6031
    %6054 = vmatprep.subr.bf16.mxu0 0
    %6055 = vmatpush1.bf16.msra.mxu0 %v6032
    %6056 = vmatprep.subr.bf16.mxu0 0
    %6057 = vmatpush1.bf16.msra.mxu0 %v6033
    %6058 = vmatprep.subr.bf16.mxu0 0
    %6059 = vmatpush1.bf16.msra.mxu0 0
    %6060 = vmatprep.subr.bf16.mxu0 0
    %6061 = vmatpush1.bf16.msra.mxu0 0
    %6062 = vmatprep.subr.bf16.mxu0 0
    %6063 = vmatpush1.bf16.msra.mxu0 0
    %6064 = vmatprep.subr.bf16.mxu0 0
    %6065 = vmatpush1.bf16.msra.mxu0 0
    %6066 = vmatprep.subr.bf16.mxu0 0
    %6067 = vmatpush1.bf16.msra.mxu0 0
    %6068 = vmatprep.subr.bf16.mxu0 0
    %6069 = vmatpush1.bf16.msra.mxu0 0
    %6070 = vmatprep.subr.bf16.mxu0 0
    %6071 = vmatpush1.bf16.msra.mxu0 0
    %6072 = vmatprep.subr.bf16.mxu0 0
    %6073 = vmatpush1.bf16.msra.mxu0 0
    %6074 = vmatprep.mubr.bf16.mxu0 0
    %6075 = vmatmul.mubr.bf16.gmra.mrb[0].mxu0 %v5987
    %v6076 = vpop.f32.mrb[0].mxu0
    %v6077 = vadd.f32 %v5992, %v6076
    %v6078 = vpop.f32.mrb[0].mxu0
    %v6079 = vpop.f32.mrb[0].mxu0
    %v6080 = vadd.f32 %v5992, %v6079
    %v6081 = vpop.f32.mrb[0].mxu0
    %6082 = vdwg.mxu0
    %v6083 = vadd.f32 %v6077, %v5796
    %v6084 = vadd.f32 %v6080, %v5797
    %v6085 = vmul.f32 %v6083, %v570
    %v6086 = vmul.f32 %v6084, %v575
    %v6087 = vpack.c.bf16 %v6086, %v6085
    %6088 = vmatprep.subr.bf16.mxu0 0
    %6089 = vmatpush1.bf16.msra.mxu0 %v6087
    %6090 = vmatprep.subr.bf16.mxu0 0
    %6091 = vmatpush1.bf16.msra.mxu0 0
    %6092 = vmatprep.subr.bf16.mxu0 0
    %6093 = vmatpush1.bf16.msra.mxu0 0
    %6094 = vmatprep.subr.bf16.mxu0 0
    %6095 = vmatpush1.bf16.msra.mxu0 0
    %6096 = vmatprep.subr.bf16.mxu0 0
    %6097 = vmatpush1.bf16.msra.mxu0 0
    %6098 = vmatprep.subr.bf16.mxu0 0
    %6099 = vmatpush1.bf16.msra.mxu0 0
    %6100 = vmatprep.subr.bf16.mxu0 0
    %6101 = vmatpush1.bf16.msra.mxu0 0
    %6102 = vmatprep.subr.bf16.mxu0 0
    %6103 = vmatpush1.bf16.msra.mxu0 0
    %6104 = vmatprep.subr.bf16.mxu0 0
    %6105 = vmatpush1.bf16.msra.mxu0 0
    %6106 = vmatprep.subr.bf16.mxu0 0
    %6107 = vmatpush1.bf16.msra.mxu0 0
    %6108 = vmatprep.subr.bf16.mxu0 0
    %6109 = vmatpush1.bf16.msra.mxu0 0
    %6110 = vmatprep.subr.bf16.mxu0 0
    %6111 = vmatpush1.bf16.msra.mxu0 0
    %6112 = vmatprep.subr.bf16.mxu0 0
    %6113 = vmatpush1.bf16.msra.mxu0 0
    %6114 = vmatprep.subr.bf16.mxu0 0
    %6115 = vmatpush1.bf16.msra.mxu0 0
    %6116 = vmatprep.subr.bf16.mxu0 0
    %6117 = vmatpush1.bf16.msra.mxu0 0
    %6118 = vmatprep.subr.bf16.mxu0 0
    %6119 = vmatpush1.bf16.msra.mxu0 0
    %6120 = vmatprep.mubr.bf16.mxu0 0
    %6121 = vmatmul.mubr.bf16.gmra.mrb[0].mxu0 %v590
    %v6122 = vpop.f32.mrb[0].mxu0
    %v6123 = vadd.f32 0.0, %v6122
    %v6124 = vpop.f32.mrb[0].mxu0
    %v6125 = vpop.f32.mrb[0].mxu0
    %v6126 = vpop.f32.mrb[0].mxu0
    %6127 = vmatprep.mubr.bf16.mxu0 0
    %6128 = vmatmul.mubr.bf16.gmra.mrb[0].mxu0 %v593
    %v6129 = vpop.f32.mrb[0].mxu0
    %v6130 = vpop.f32.mrb[0].mxu0
    %v6131 = vpop.f32.mrb[0].mxu0
    %v6132 = vpop.f32.mrb[0].mxu0
    %6133 = vdwg.mxu0
    %v6134 = vld [vmem:[#allocation2] sm:$0xf]
    %v6135 = vld [vmem:[#allocation2 + $0x4] sm:$0xf]
    %v6136 = vld [vmem:[#allocation2 + $0x8] sm:$0xf]
    %v6137 = vld [vmem:[#allocation2 + $0xc] sm:$0xf]
    %v6138 = vld [vmem:[#allocation2 + $0x10] sm:$0xf]
    %v6139 = vld [vmem:[#allocation2 + $0x14] sm:$0xf]
    %v6140 = vld [vmem:[#allocation2 + $0x18] sm:$0xf]
    %v6141 = vld [vmem:[#allocation2 + $0x1c] sm:$0xf]
    %v6142 = vld [vmem:[#allocation2 + $0x20] sm:$0xf]
    %v6143 = vld [vmem:[#allocation2 + $0x24] sm:$0xf]
    %v6144 = vld [vmem:[#allocation2 + $0x28] sm:$0xf]
    %v6145 = vld [vmem:[#allocation2 + $0x2c] sm:$0xf]
    %v6146 = vld [vmem:[#allocation2 + $0x30] sm:$0xf]
    %v6147 = vld [vmem:[#allocation2 + $0x34] sm:$0xf]
    %v6148 = vld [vmem:[#allocation2 + $0x38] sm:$0xf]
    %v6149 = vld [vmem:[#allocation2 + $0x3c] sm:$0xf]
    %v6150 = vld [vmem:[%s21] sm:$0x1]
    %v6151 = vld [vmem:[#allocation4] sm:$0xf]
    %v6152 = vld [vmem:[#allocation4 + $0x4] sm:$0xf]
    %v6153 = vld [vmem:[#allocation4 + $0x8] sm:$0xf]
    %v6154 = vld [vmem:[#allocation4 + $0xc] sm:$0xf]
    %v6155 = vld [vmem:[#allocation4 + $0x10] sm:$0xf]
    %v6156 = vld [vmem:[#allocation4 + $0x14] sm:$0xf]
    %v6157 = vld [vmem:[#allocation4 + $0x18] sm:$0xf]
    %v6158 = vld [vmem:[#allocation4 + $0x1c] sm:$0xf]
    %v6159 = vld [vmem:[#allocation4 + $0x20] sm:$0xf]
    %v6160 = vld [vmem:[#allocation4 + $0x24] sm:$0xf]
    %v6161 = vld [vmem:[#allocation4 + $0x28] sm:$0xf]
    %v6162 = vld [vmem:[#allocation4 + $0x2c] sm:$0xf]
    %v6163 = vld [vmem:[#allocation4 + $0x30] sm:$0xf]
    %v6164 = vld [vmem:[#allocation4 + $0x34] sm:$0xf]
    %v6165 = vld [vmem:[#allocation4 + $0x38] sm:$0xf]
    %v6166 = vld [vmem:[#allocation4 + $0x3c] sm:$0xf]
    %v6167 = vld [vmem:[%s25] sm:$0x1]
    %v6168 = vpack.c.bf16 %v6123, %v6123
    %v6170 = vlaneseq
    %v6171 = vshrl.u32 %v6170, 7
    %v6172 = vsub.s32 0, %v6171
    %v6173 = vrot.slane %v6150, %v6172
    %v6191 = vunpack.c.l.b16 %v6134
    %v6192 = vunpack.c.l.b16 %v6135
    %v6193 = vunpack.c.l.b16 %v6136
    %v6194 = vunpack.c.l.b16 %v6137
    %v6195 = vunpack.c.l.b16 %v6138
    %v6196 = vunpack.c.l.b16 %v6139
    %v6197 = vunpack.c.l.b16 %v6140
    %v6198 = vunpack.c.l.b16 %v6141
    %v6199 = vunpack.c.l.b16 %v6142
    %v6200 = vunpack.c.l.b16 %v6143
    %v6201 = vunpack.c.l.b16 %v6144
    %v6202 = vunpack.c.l.b16 %v6145
    %v6203 = vunpack.c.l.b16 %v6146
    %v6204 = vunpack.c.l.b16 %v6147
    %v6205 = vunpack.c.l.b16 %v6148
    %v6206 = vunpack.c.l.b16 %v6149
    %v6207 = vpack.c.b16 %v6192, %v6191
    %v6208 = vpack.c.b16 %v6194, %v6193
    %v6209 = vpack.c.b16 %v6196, %v6195
    %v6210 = vpack.c.b16 %v6198, %v6197
    %v6211 = vpack.c.b16 %v6200, %v6199
    %v6212 = vpack.c.b16 %v6202, %v6201
    %v6213 = vpack.c.b16 %v6204, %v6203
    %v6214 = vpack.c.b16 %v6206, %v6205
    %6223 = vmatprep.subr.bf16.mxu0 0
    %6224 = vmatpush1.bf16.msra.mxu0 %v6207
    %6225 = vmatprep.subr.bf16.mxu0 0
    %6226 = vmatpush1.bf16.msra.mxu0 %v6208
    %6227 = vmatprep.subr.bf16.mxu0 0
    %6228 = vmatpush1.bf16.msra.mxu0 %v6209
    %6229 = vmatprep.subr.bf16.mxu0 0
    %6230 = vmatpush1.bf16.msra.mxu0 %v6210
    %6231 = vmatprep.subr.bf16.mxu0 0
    %6232 = vmatpush1.bf16.msra.mxu0 %v6211
    %6233 = vmatprep.subr.bf16.mxu0 0
    %6234 = vmatpush1.bf16.msra.mxu0 %v6212
    %6235 = vmatprep.subr.bf16.mxu0 0
    %6236 = vmatpush1.bf16.msra.mxu0 %v6213
    %6237 = vmatprep.subr.bf16.mxu0 0
    %6238 = vmatpush1.bf16.msra.mxu0 %v6214
    %6239 = vmatprep.subr.bf16.mxu0 0
    %6240 = vmatpush1.bf16.msra.mxu0 0
    %6241 = vmatprep.subr.bf16.mxu0 0
    %6242 = vmatpush1.bf16.msra.mxu0 0
    %6243 = vmatprep.subr.bf16.mxu0 0
    %6244 = vmatpush1.bf16.msra.mxu0 0
    %6245 = vmatprep.subr.bf16.mxu0 0
    %6246 = vmatpush1.bf16.msra.mxu0 0
    %6247 = vmatprep.subr.bf16.mxu0 0
    %6248 = vmatpush1.bf16.msra.mxu0 0
    %6249 = vmatprep.subr.bf16.mxu0 0
    %6250 = vmatpush1.bf16.msra.mxu0 0
    %6251 = vmatprep.subr.bf16.mxu0 0
    %6252 = vmatpush1.bf16.msra.mxu0 0
    %6253 = vmatprep.subr.bf16.mxu0 0
    %6254 = vmatpush1.bf16.msra.mxu0 0
    %6255 = vmatprep.mubr.bf16.mxu0 0
    %6256 = vmatmul.mubr.bf16.gmra.mrb[0].mxu0 %v6168
    %v6257 = vpop.f32.mrb[0].mxu0
    %v6258 = vadd.f32 %v6173, %v6257
    %v6259 = vpop.f32.mrb[0].mxu0
    %v6260 = vpop.f32.mrb[0].mxu0
    %v6261 = vpop.f32.mrb[0].mxu0
    %6262 = vdwg.mxu0
    %v6263 = vmul.f32 %v6258, 0.5
    %v6264 = vmul.f32 %v6258, 0.70710677
    %v6265 = verf.f32.pop %v6264
    %v6266 = vadd.f32 %v6265, 1.0
    %v6267 = vmul.f32 %v6263, %v6266
    %v6268 = vpack.c.bf16 %v6267, %v6267
    %v6270 = vlaneseq
    %v6271 = vshrl.u32 %v6270, 7
    %v6272 = vsub.s32 0, %v6271
    %v6273 = vrot.slane %v6167, %v6272
    %v6291 = vunpack.c.l.b16 %v6151
    %v6292 = vunpack.c.l.b16 %v6152
    %v6293 = vunpack.c.l.b16 %v6153
    %v6294 = vunpack.c.l.b16 %v6154
    %v6295 = vunpack.c.l.b16 %v6155
    %v6296 = vunpack.c.l.b16 %v6156
    %v6297 = vunpack.c.l.b16 %v6157
    %v6298 = vunpack.c.l.b16 %v6158
    %v6299 = vunpack.c.l.b16 %v6159
    %v6300 = vunpack.c.l.b16 %v6160
    %v6301 = vunpack.c.l.b16 %v6161
    %v6302 = vunpack.c.l.b16 %v6162
    %v6303 = vunpack.c.l.b16 %v6163
    %v6304 = vunpack.c.l.b16 %v6164
    %v6305 = vunpack.c.l.b16 %v6165
    %v6306 = vunpack.c.l.b16 %v6166
    %v6307 = vpack.c.b16 %v6292, %v6291
    %v6308 = vpack.c.b16 %v6294, %v6293
    %v6309 = vpack.c.b16 %v6296, %v6295
    %v6310 = vpack.c.b16 %v6298, %v6297
    %v6311 = vpack.c.b16 %v6300, %v6299
    %v6312 = vpack.c.b16 %v6302, %v6301
    %v6313 = vpack.c.b16 %v6304, %v6303
    %v6314 = vpack.c.b16 %v6306, %v6305
    %6323 = vmatprep.subr.bf16.mxu0 0
    %6324 = vmatpush1.bf16.msra.mxu0 %v6307
    %6325 = vmatprep.subr.bf16.mxu0 0
    %6326 = vmatpush1.bf16.msra.mxu0 %v6308
    %6327 = vmatprep.subr.bf16.mxu0 0
    %6328 = vmatpush1.bf16.msra.mxu0 %v6309
    %6329 = vmatprep.subr.bf16.mxu0 0
    %6330 = vmatpush1.bf16.msra.mxu0 %v6310
    %6331 = vmatprep.subr.bf16.mxu0 0
    %6332 = vmatpush1.bf16.msra.mxu0 %v6311
    %6333 = vmatprep.subr.bf16.mxu0 0
    %6334 = vmatpush1.bf16.msra.mxu0 %v6312
    %6335 = vmatprep.subr.bf16.mxu0 0
    %6336 = vmatpush1.bf16.msra.mxu0 %v6313
    %6337 = vmatprep.subr.bf16.mxu0 0
    %6338 = vmatpush1.bf16.msra.mxu0 %v6314
    %6339 = vmatprep.subr.bf16.mxu0 0
    %6340 = vmatpush1.bf16.msra.mxu0 0
    %6341 = vmatprep.subr.bf16.mxu0 0
    %6342 = vmatpush1.bf16.msra.mxu0 0
    %6343 = vmatprep.subr.bf16.mxu0 0
    %6344 = vmatpush1.bf16.msra.mxu0 0
    %6345 = vmatprep.subr.bf16.mxu0 0
    %6346 = vmatpush1.bf16.msra.mxu0 0
    %6347 = vmatprep.subr.bf16.mxu0 0
    %6348 = vmatpush1.bf16.msra.mxu0 0
    %6349 = vmatprep.subr.bf16.mxu0 0
    %6350 = vmatpush1.bf16.msra.mxu0 0
    %6351 = vmatprep.subr.bf16.mxu0 0
    %6352 = vmatpush1.bf16.msra.mxu0 0
    %6353 = vmatprep.subr.bf16.mxu0 0
    %6354 = vmatpush1.bf16.msra.mxu0 0
    %6355 = vmatprep.mubr.bf16.mxu0 0
    %6356 = vmatmul.mubr.bf16.gmra.mrb[0].mxu0 %v6268
    %v6357 = vpop.f32.mrb[0].mxu0
    %v6358 = vadd.f32 %v6273, %v6357
    %v6359 = vpop.f32.mrb[0].mxu0
    %v6360 = vpop.f32.mrb[0].mxu0
    %v6361 = vpop.f32.mrb[0].mxu0
    %6362 = vdwg.mxu0
    %6363 = vst [vmem:[%s63] sm:$0xff] %v6358
    // Predicated region
    $region182: #{gin_vn_forward.1} parent=1 // pred_check
      _
    $region183: #{gin_vn_forward.1} parent=1 // pred_check_branch
      %6365 = sbr.rel (0) target = $region185
    $region184: #{gin_vn_forward.1} parent=1 // pred_region
      _
    $region185: #{gin_vn_forward.1} parent=1 // pred_fallthru
      _
    // Predicated region
    $region186: #{gin_vn_forward.1} parent=1 // pred_check
      _
    $region187: #{gin_vn_forward.1} parent=1 // pred_check_branch
      %6367 = sbr.rel (0) target = $region189
    $region188: #{gin_vn_forward.1} parent=1 // pred_region
      _
    $region189: #{gin_vn_forward.1} parent=1 // pred_fallthru
      _
    %6368 = vsyncpa [#allocation3], 1
    %6369 = vsyncpa [#allocation5], 1
    %6370 = vsyncpa [#allocation8], 1
    %6371 = vsyncpa [#allocation11], 1
    %6372 = vsyncpa [#allocation14], 1
    %6373 = vsyncpa [#allocation17], 1
    %6374 = vsyncpa [#allocation20], 1
    %6375 = vsyncpa [#allocation23], 1

</llo_original>
